<compile_context>
chip_gen: v7x
topology: tpu7x:2x2x1
jax: 0.10.0
libtpu: 0.0.40
codegen_flags: <defaults>
</compile_context>

<pallas_src>
import jax
import jax.numpy as jnp
from jax import lax
from jax.experimental import pallas as pl
from jax.experimental.pallas import tpu as pltpu

IN_FEATURES = 196608   # fixed by the module definition (Linear(196608, 10))
OUT_FEATURES = 10


def linear_kernel(x_ref, w_ref, o_ref):
    """One grid step handles one K-tile of the reduction for one K-split.

    x_ref: (B, tk)   input K-tile
    w_ref: (N, tk)   weight K-tile (PyTorch-native [out, in] layout)
    o_ref: (B, N)    resident f32 partial-sum block for this K-split
    """
    k = pl.program_id(1)

    @pl.when(k == 0)
    def _():
        o_ref[...] = jnp.zeros_like(o_ref)

    # (B, tk) x (N, tk) -> (B, N), contracting the last dims on the MXU.
    o_ref[...] += lax.dot_general(
        x_ref[...],
        w_ref[...],
        dimension_numbers=(((1,), (1,)), ((), ())),
        preferred_element_type=jnp.float32,
    )


def linear_pallas(x, w, b, *, tk=24576, num_splits=2):
    """y = x @ w.T + b with w in PyTorch layout [N, K]; K tiled in chunks of tk.

    The leading `num_splits` grid axis is marked "parallel" so v7x can shard
    the K stream across its two TensorCores; partial sums are reduced here.
    """
    B, K = x.shape
    N, Kw = w.shape
    assert K == Kw
    inner = K // (num_splits * tk)
    assert num_splits * inner * tk == K, "K must divide evenly into splits*tk"

    x_map = lambda c, k: (0, c * inner + k)
    w_map = lambda c, k: (0, c * inner + k)

    partials = pl.pallas_call(
        linear_kernel,
        out_shape=jax.ShapeDtypeStruct((num_splits, B, N), jnp.float32),
        grid_spec=pltpu.PrefetchScalarGridSpec(
            num_scalar_prefetch=0,
            grid=(num_splits, inner),
            in_specs=[
                pl.BlockSpec((B, tk), x_map),     # x K-tile (contiguous rows)
                pl.BlockSpec((N, tk), w_map),     # weight K-tile (lane-dense)
            ],
            # One resident (B, N) partial-sum block per K-split.
            out_specs=pl.BlockSpec((None, B, N), lambda c, k: (c, 0, 0)),
        ),
        compiler_params=pltpu.CompilerParams(
            dimension_semantics=("parallel", "arbitrary"),
            vmem_limit_bytes=64 * 1024 * 1024,
        ),
        cost_estimate=pl.CostEstimate(
            flops=2 * B * K * N,
            transcendentals=0,
            bytes_accessed=(B * K + N * K + num_splits * B * N) * 4,
        ),
    )(x, w)

    # Reduce the per-core partial sums and add the bias once (tiny XLA op).
    return (partials.sum(axis=0) + b).astype(x.dtype)


def init_params(key):
    """Deterministic init mimicking PyTorch Linear default (uniform ±1/sqrt(fan_in))."""
    kw, kb = jax.random.split(key)
    bound = 1.0 / jnp.sqrt(jnp.float32(IN_FEATURES))
    # PyTorch-native layout: weight is [out_features, in_features].
    w = jax.random.uniform(
        kw, (OUT_FEATURES, IN_FEATURES), jnp.float32, -bound, bound
    )
    b = jax.random.uniform(kb, (OUT_FEATURES,), jnp.float32, -bound, bound)
    return w, b


if __name__ == "__main__":
    key = jax.random.PRNGKey(0)
    k_in, k_param = jax.random.split(key)

    batch = 2  # small batch; feature dim is fixed at 196608 by the module
    x = jax.random.normal(k_in, (batch, IN_FEATURES), jnp.float32)
    w, b = init_params(k_param)

    y = linear_pallas(x, w, b)
    y = jax.block_until_ready(y)

    # correctness check against plain-JAX reference (same math as PyTorch Linear)
    y_ref = x @ w.T + b
    assert y.shape == (batch, OUT_FEATURES)
    assert jnp.allclose(y, y_ref, atol=1e-3, rtol=1e-3), "mismatch vs reference"

    print("KERNEL_OK")
</pallas_src>

<mosaic_0001>
module attributes {stable_mosaic.version = 11 : i64} {
  func.func @linear_kernel(%arg0: i32, %arg1: i32, %arg2: memref<2x24576xf32, #tpu.memory_space<vmem>>, %arg3: memref<10x24576xf32, #tpu.memory_space<vmem>>, %arg4: memref<1x2x10xf32, #tpu.memory_space<vmem>>) attributes {dimension_semantics = [#tpu.dimension_semantics<parallel>, #tpu.dimension_semantics<arbitrary>], iteration_bounds = array<i64: 2, 4>, scalar_prefetch = 0 : i64, scratch_operands = 0 : i64, tpu.core_type = #tpu.core_type<tc>, window_params = [{transform_indices = @transform_0, window_bounds = array<i64: 2, 24576>}, {transform_indices = @transform_1, window_bounds = array<i64: 10, 24576>}, {transform_indices = @transform_2, window_bounds = array<i64: 1, 2, 10>}]} {
    %c0_i32 = arith.constant 0 : i32
    %0 = arith.cmpi eq, %arg1, %c0_i32 : i32
    %1 = arith.extui %0 : i1 to i32
    %c0_i32_0 = arith.constant 0 : i32
    %2 = arith.cmpi ne, %1, %c0_i32_0 : i32
    scf.if %2 {
      %cst_10 = arith.constant 0.000000e+00 : f32
      %12 = vector.broadcast %cst_10 : f32 to vector<2x10xf32>
      %c0_11 = arith.constant 0 : index
      %c0_12 = arith.constant 0 : index
      %c0_13 = arith.constant 0 : index
      %13 = vector.load %arg4[%c0_11, %c0_12, %c0_13] : memref<1x2x10xf32, #tpu.memory_space<vmem>>, vector<1x2x10xf32>
      %14 = vector.shape_cast %13 : vector<1x2x10xf32> to vector<2x10xf32>
      %15 = vector.shape_cast %12 : vector<2x10xf32> to vector<1x2x10xf32>
      tpu.vector_store %arg4[%c0_11, %c0_12, %c0_13], %15 {strides = array<i32>} : memref<1x2x10xf32, #tpu.memory_space<vmem>>, vector<1x2x10xf32>,
    } else {
    }
    %c0 = arith.constant 0 : index
    %c0_1 = arith.constant 0 : index
    %c0_2 = arith.constant 0 : index
    %3 = vector.load %arg4[%c0, %c0_1, %c0_2] : memref<1x2x10xf32, #tpu.memory_space<vmem>>, vector<1x2x10xf32>
    %4 = vector.shape_cast %3 : vector<1x2x10xf32> to vector<2x10xf32>
    %c0_3 = arith.constant 0 : index
    %c0_4 = arith.constant 0 : index
    %5 = vector.load %arg2[%c0_3, %c0_4] : memref<2x24576xf32, #tpu.memory_space<vmem>>, vector<2x24576xf32>
    %c0_5 = arith.constant 0 : index
    %c0_6 = arith.constant 0 : index
    %6 = vector.load %arg3[%c0_5, %c0_6] : memref<10x24576xf32, #tpu.memory_space<vmem>>, vector<10x24576xf32>
    %cst = arith.constant dense<0.000000e+00> : vector<2x10xf32>
    %7 = tpu.matmul %5, %6, %cst {dimension_numbers = #tpu.dot_dimension_numbers<[1], [1], [0], [0], [0, 0, 1, 0], [], []>} : vector<2x24576xf32>, vector<10x24576xf32>, vector<2x10xf32> -> vector<2x10xf32>
    %8 = arith.addf %4, %7 : vector<2x10xf32>
    %c0_7 = arith.constant 0 : index
    %c0_8 = arith.constant 0 : index
    %c0_9 = arith.constant 0 : index
    %9 = vector.load %arg4[%c0_7, %c0_8, %c0_9] : memref<1x2x10xf32, #tpu.memory_space<vmem>>, vector<1x2x10xf32>
    %10 = vector.shape_cast %9 : vector<1x2x10xf32> to vector<2x10xf32>
    %11 = vector.shape_cast %8 : vector<2x10xf32> to vector<1x2x10xf32>
    tpu.vector_store %arg4[%c0_7, %c0_8, %c0_9], %11 {strides = array<i32>} : memref<1x2x10xf32, #tpu.memory_space<vmem>>, vector<1x2x10xf32>,
    return
  }
  func.func @transform_0(%arg0: i32, %arg1: i32) -> (i32, i32) {
    %c4_i32 = arith.constant 4 : i32
    %0 = arith.muli %arg0, %c4_i32 : i32
    %1 = arith.addi %0, %arg1 : i32
    %c0_i32 = arith.constant 0 : i32
    %c0_i32_0 = arith.constant 0 : i32
    return %c0_i32, %1 : i32, i32
  }
  func.func @transform_1(%arg0: i32, %arg1: i32) -> (i32, i32) {
    %c4_i32 = arith.constant 4 : i32
    %0 = arith.muli %arg0, %c4_i32 : i32
    %1 = arith.addi %0, %arg1 : i32
    %c0_i32 = arith.constant 0 : i32
    %c0_i32_0 = arith.constant 0 : i32
    return %c0_i32, %1 : i32, i32
  }
  func.func @transform_2(%arg0: i32, %arg1: i32) -> (i32, i32, i32) {
    %c0_i32 = arith.constant 0 : i32
    %c0_i32_0 = arith.constant 0 : i32
    %c0_i32_1 = arith.constant 0 : i32
    return %arg0, %c0_i32, %c0_i32_0 : i32, i32, i32
  }
}

</mosaic_0001>

<llo_original>
// kernel: tpu_custom_call.1
$region0: #{tpu_custom_call.1}
  #allocation0 [shape = 'u32[]', space=smem, size = 0x4, offset = 0x4, fixed_abs, tag = 'smem constant byte address 0x4 - core index']
  #allocation1 [shape = 'u32[144,128]{1,0:T(1,128)}', space=vmem, size = 0x12000, scoped, tag = 'internal scratch']
  %s0 = inlined_call_operand.hbm [shape: f32[2,196608], index: 0, kind: input, shape index: {}]
  %s1 = inlined_call_operand.hbm [shape: f32[10,196608], index: 1, kind: input, shape index: {}]
  %s2 = inlined_call_operand.hbm [shape: f32[2,2,10], index: 2, kind: output, shape index: {}]
  %s3 = sld [smem:[#allocation0]]
  $region53: #{tpu_custom_call.1} parent=0
    _
  %s5 = ssub.s32 1, %s3
  %s6 = scalar_select 0, %s5, %s3
  $region1: #{tpu_custom_call.1} parent=0
    #allocation2 [shape = 'u8[393216]{0}', space=vmem, size = 0x60000, scoped, tag = 'input window, operand 0']
    #allocation3 [shape = 's32[2]{0}', space=sflag, size = 0x8, scoped, tag = 'scoped memory for tpu_custom_call.1']
    #allocation4 [shape = 's32[2]{0}', space=sflag, size = 0x8, scoped, tag = 'scoped memory for tpu_custom_call.1']
    #allocation5 [shape = 'u8[3145728]{0}', space=vmem, size = 0x300000, scoped, tag = 'input window, operand 1']
    #allocation6 [shape = 's32[2]{0}', space=sflag, size = 0x8, scoped, tag = 'scoped memory for tpu_custom_call.1']
    #allocation7 [shape = 'u8[2048]{0}', space=vmem, size = 0x800, scoped, tag = 'output window, operand 0']
    %7 = vsyncpa [#allocation3], 0
    %s8 = scalar_lea.sflag [#allocation3], 1
    %9 = vsyncpa %s8, 0
    %10 = vsyncpa [#allocation6], 0
    %s11 = scalar_lea.sflag [#allocation6], 1
    %12 = vsyncpa %s11, 0
    %13 = vsyncpa [#allocation4], 0
    %s14 = scalar_lea.sflag [#allocation4], 1
    %15 = vsyncpa %s14, 0
    loop: start=0, step=1, limit=10
    $region2: #{tpu_custom_call.1} parent=1 // loop_pre_header
      _
    $region3: #{tpu_custom_call.1} parent=1 // loop_header
      %s17 = sphi 0, %s21
      %p18 = scmp.ge.s32.totalorder %s17, 10
      %s24 = sphi 0, %s36
      %s25 = sphi 0, %s32
      %s26 = sphi 0, %s24
      %s27 = sphi 0, %s25
      %s28 = sphi 0, %s26
      %s29 = sphi 0, %s27
      %s43 = sphi 0, %s45
      %s46 = sphi 0, %s43
      %s47 = sphi 0, %s46
      %s63 = sphi 0, %s47
      %s73 = sphi 0, %s75
      %s76 = sphi 0, %s73
      %s77 = sphi 0, %s76
      %s93 = sphi 0, %s77
      %s99 = sphi 0, %s101
      %s102 = sphi 0, %s99
      %s103 = sphi 0, %s102
      %s119 = sphi 0, %s103
    $region4: #{tpu_custom_call.1} parent=1 // loop_header_branch
      %20 = sbr.rel (%p18) target = $region8
    $region5: #{tpu_custom_call.1} parent=1 // loop_body
      %s22 = ssub.s32 %s17, 1
      %s23 = ssub.s32 %s17, 2
      %s30 = sadd.s32 1, %s25
      %p31 = scmp.ge.s32.totalorder %s30, 4
      %s32 = scalar_select %p31, 0, %s30
      %s33 = sadd.s32 1, %s24
      %s34 = scalar_select %p31, %s33, %s24
      %p35 = scmp.ge.s32.totalorder %s34, 2
      %s36 = scalar_select %p35, 0, %s34
      %s37 = smul.u32 %s24, 4
      %s38 = sadd.s32 %s37, %s25
      %s39 = smul.u32 %s36, 4
      %s40 = sadd.s32 %s39, %s32
      %s41 = ssub.s32 %s38, %s40
      %p42 = scmp.eq.s32.totalorder %s41, 0
      %s44 = sadd.s32 %s43, 1
      %s45 = scalar_select %p42, %s43, %s44
      %p48 = pneg %p42
      %p49 = scmp.eq.s32.totalorder %s17, 7
      %p50 = por %p48, %p49
      %p51 = scmp.ne.s32.totalorder %s43, %s46
      %p52 = scmp.eq.s32.totalorder %s17, 0
      %p53 = por %p51, %p52
      %p54 = scmp.ne.s32.totalorder %s43, %s46
      %p55 = scmp.eq.s32.totalorder %s22, 7
      %p56 = por %p54, %p55
      %p57 = scmp.ne.s32.totalorder %s46, %s47
      %p58 = scmp.eq.s32.totalorder %s22, 0
      %p59 = por %p57, %p58
      %p60 = scmp.ne.s32.totalorder %s46, %s47
      %p61 = scmp.eq.s32.totalorder %s23, 7
      %p62 = por %p60, %p61
      %p64 = scmp.ne.s32.totalorder %s47, %s63
      %p65 = scmp.eq.s32.totalorder %s23, 0
      %p66 = por %p64, %p65
      %s67 = smul.u32 %s24, 4
      %s68 = sadd.s32 %s67, %s25
      %s69 = smul.u32 %s36, 4
      %s70 = sadd.s32 %s69, %s32
      %s71 = ssub.s32 %s68, %s70
      %p72 = scmp.eq.s32.totalorder %s71, 0
      %s74 = sadd.s32 %s73, 1
      %s75 = scalar_select %p72, %s73, %s74
      %p78 = pneg %p72
      %p79 = scmp.eq.s32.totalorder %s17, 7
      %p80 = por %p78, %p79
      %p81 = scmp.ne.s32.totalorder %s73, %s76
      %p82 = scmp.eq.s32.totalorder %s17, 0
      %p83 = por %p81, %p82
      %p84 = scmp.ne.s32.totalorder %s73, %s76
      %p85 = scmp.eq.s32.totalorder %s22, 7
      %p86 = por %p84, %p85
      %p87 = scmp.ne.s32.totalorder %s76, %s77
      %p88 = scmp.eq.s32.totalorder %s22, 0
      %p89 = por %p87, %p88
      %p90 = scmp.ne.s32.totalorder %s76, %s77
      %p91 = scmp.eq.s32.totalorder %s23, 7
      %p92 = por %p90, %p91
      %p94 = scmp.ne.s32.totalorder %s77, %s93
      %p95 = scmp.eq.s32.totalorder %s23, 0
      %p96 = por %p94, %p95
      %s97 = ssub.s32 %s24, %s36
      %p98 = scmp.eq.s32.totalorder %s97, 0
      %s100 = sadd.s32 %s99, 1
      %s101 = scalar_select %p98, %s99, %s100
      %p104 = pneg %p98
      %p105 = scmp.eq.s32.totalorder %s17, 7
      %p106 = por %p104, %p105
      %p107 = scmp.ne.s32.totalorder %s99, %s102
      %p108 = scmp.eq.s32.totalorder %s17, 0
      %p109 = por %p107, %p108
      %p110 = scmp.ne.s32.totalorder %s99, %s102
      %p111 = scmp.eq.s32.totalorder %s22, 7
      %p112 = por %p110, %p111
      %p113 = scmp.ne.s32.totalorder %s102, %s103
      %p114 = scmp.eq.s32.totalorder %s22, 0
      %p115 = por %p113, %p114
      %p116 = scmp.ne.s32.totalorder %s102, %s103
      %p117 = scmp.eq.s32.totalorder %s23, 7
      %p118 = por %p116, %p117
      %p120 = scmp.ne.s32.totalorder %s103, %s119
      %p121 = scmp.eq.s32.totalorder %s23, 0
      %p122 = por %p120, %p121
      %p123 = scmp.le.s32.totalorder 1, %s17
      %p124 = scmp.lt.s32.totalorder %s17, 9
      %p125 = pnand %p123, %p124
      %p126 = pneg %p125
      // Predicated region
      $region9: #{tpu_custom_call.1} parent=5 // pred_check
        _
      $region10: #{tpu_custom_call.1} parent=5 // pred_check_branch
        %128 = sbr.rel (%p125) target = $region12
      $region11: #{tpu_custom_call.1} parent=5 // pred_region
        %s129 = ssub.s32 %s17, 1
      $region12: #{tpu_custom_call.1} parent=5 // pred_fallthru
        _
      %p130 = scmp.lt.s32.totalorder %s17, 8
      // Predicated region
      $region13: #{tpu_custom_call.1} parent=5 // pred_check
        %p131 = pneg %p130
      $region14: #{tpu_custom_call.1} parent=5 // pred_check_branch
        %133 = sbr.rel (%p131) target = $region16
      $region15: #{tpu_custom_call.1} parent=5 // pred_region
        // Predicated region
        $region17: #{tpu_custom_call.1} parent=15 // pred_check
          %p134 = pneg %p53
        $region18: #{tpu_custom_call.1} parent=15 // pred_check_branch
          %136 = sbr.rel (%p134) target = $region20
        $region19: #{tpu_custom_call.1} parent=15 // pred_region
          %s137 = sand.u32 %s43, 1
          %s138 = scalar_lea.sflag [#allocation3], %s137
          %s139 = sand.u32 %s43, 1
          %s140 = smul.addr %s139, 384
          %s141 = scalar_lea.vmem [#allocation2], %s140
          %s142 = smul.u32 %s24, 4
          %s143 = sadd.s32 %s142, %s25
          %s144 = smul.u32 192, %s143
          %s146 = ssub.s32 6144, 6144
          %147 = vsyncadd %s138, %s146
          %s148 = smul.addr %s144, 32
          %s149 = scalar_lea.hbm %s0, %s148
          %s151 = sshll.u32 %s141, 4
          %s152 = int_to_ptr.vmem [resolvable:$true] %s151
          %154 = dma.hbm_to_vmem [thread:$0]  %s149, 6144, %s152, %s138
        $region20: #{tpu_custom_call.1} parent=15 // pred_fallthru
          _
        // Predicated region
        $region21: #{tpu_custom_call.1} parent=15 // pred_check
          %p155 = pneg %p83
        $region22: #{tpu_custom_call.1} parent=15 // pred_check_branch
          %157 = sbr.rel (%p155) target = $region24
        $region23: #{tpu_custom_call.1} parent=15 // pred_region
          %s158 = sand.u32 %s73, 1
          %s159 = scalar_lea.sflag [#allocation6], %s158
          %s160 = sand.u32 %s73, 1
          %s161 = smul.addr %s160, 3072
          %s162 = scalar_lea.vmem [#allocation5], %s161
          %s163 = smul.u32 %s24, 4
          %s164 = sadd.s32 %s163, %s25
          %s165 = smul.u32 192, %s164
          %s167 = ssub.s32 49152, 49152
          %168 = vsyncadd %s159, %s167
          %s169 = smul.addr %s165, 128
          %s170 = scalar_lea.hbm %s1, %s169
          %s171 = sshll.u32 %s162, 4
          %s172 = int_to_ptr.vmem [resolvable:$true] %s171
          %177 = dma.hbm_to_vmem [thread:$0]  %s170, 49152, %s172, %s159, 196608, 24576, 1536
        $region24: #{tpu_custom_call.1} parent=15 // pred_fallthru
          _
      $region16: #{tpu_custom_call.1} parent=5 // pred_fallthru
        _
      %p178 = scmp.le.s32.totalorder 1, %s17
      %p179 = scmp.lt.s32.totalorder %s17, 9
      %p180 = pnand %p178, %p179
      %p181 = pneg %p180
      // Predicated region
      $region25: #{tpu_custom_call.1} parent=5 // pred_check
        _
      $region26: #{tpu_custom_call.1} parent=5 // pred_check_branch
        %183 = sbr.rel (%p180) target = $region28
      $region27: #{tpu_custom_call.1} parent=5 // pred_region
        %s184 = ssub.s32 %s17, 1
        %s185 = sand.u32 %s46, 1
        %s186 = scalar_lea.sflag [#allocation3], %s185
        %s187 = sand.u32 %s46, 1
        %s188 = smul.addr %s187, 384
        %s189 = scalar_lea.vmem [#allocation2], %s188
        // Predicated region
        $region29: #{tpu_custom_call.1} parent=27 // pred_check
          %p190 = pneg %p59
        $region30: #{tpu_custom_call.1} parent=27 // pred_check_branch
          %192 = sbr.rel (%p190) target = $region32
        $region31: #{tpu_custom_call.1} parent=27 // pred_region
          %193 = dma.done %s186, 6144
        $region32: #{tpu_custom_call.1} parent=27 // pred_fallthru
          _
        %s194 = sand.u32 %s76, 1
        %s195 = scalar_lea.sflag [#allocation6], %s194
        %s196 = sand.u32 %s76, 1
        %s197 = smul.addr %s196, 3072
        %s198 = scalar_lea.vmem [#allocation5], %s197
        // Predicated region
        $region33: #{tpu_custom_call.1} parent=27 // pred_check
          %p199 = pneg %p89
        $region34: #{tpu_custom_call.1} parent=27 // pred_check_branch
          %201 = sbr.rel (%p199) target = $region36
        $region35: #{tpu_custom_call.1} parent=27 // pred_region
          %202 = dma.done %s195, 49152
        $region36: #{tpu_custom_call.1} parent=27 // pred_fallthru
          _
        %s203 = sand.u32 %s46, 1
        %s204 = scalar_lea.sflag [#allocation3], %s203
        %s205 = sand.u32 %s46, 1
        %s206 = smul.addr %s205, 384
        %s207 = scalar_lea.vmem [#allocation2], %s206
        %p208 = pneg %p59
        %p209 = pneg %p56
        %s210 = sand.u32 %s76, 1
        %s211 = scalar_lea.sflag [#allocation6], %s210
        %s212 = sand.u32 %s76, 1
        %s213 = smul.addr %s212, 3072
        %s214 = scalar_lea.vmem [#allocation5], %s213
        %p215 = pneg %p89
        %p216 = pneg %p86
        %p217 = pneg %p115
        %p218 = pneg %p112
        %s219 = sand.u32 %s102, 1
        %s220 = scalar_lea.sflag [#allocation4], %s219
        %s221 = sand.u32 %s102, 1
        %s222 = smul.addr %s221, 2
        %s223 = scalar_lea.vmem [#allocation7], %s222
        %s224 = smul.u32 %s26, 4
        %s225 = sadd.s32 %s224, %s27
        %s226 = smul.u32 192, %s225
        %s227 = smul.u32 %s26, 4
        %s228 = sadd.s32 %s227, %s27
        %s229 = smul.u32 192, %s228
        %p230 = scmp.eq.s32.totalorder %s27, 0
        // Predicated region
        $region37: #{tpu_custom_call.1} parent=27 // pred_check
          %p231 = pneg %p230
        $region38: #{tpu_custom_call.1} parent=27 // pred_check_branch
          %233 = sbr.rel (%p231) target = $region40
        $region39: #{tpu_custom_call.1} parent=27 // pred_region
          %vm234 = vcmask 74752
          %235 = vst.msk [vmem:[%s223] sm:$0x3] %vm234, 0.0
        $region40: #{tpu_custom_call.1} parent=27 // pred_fallthru
          _
        %v236 = vld [vmem:[%s223] sm:$0x3]
        %v237 = vld [vmem:[%s189] sm:$0xff]
        %v238 = vld [vmem:[%s189 + $0x8] sm:$0xff]
        %v239 = vld [vmem:[%s189 + $0x10] sm:$0xff]
        %v240 = vld [vmem:[%s189 + $0x18] sm:$0xff]
        %v241 = vld [vmem:[%s189 + $0x20] sm:$0xff]
        %v242 = vld [vmem:[%s189 + $0x28] sm:$0xff]
        %v243 = vld [vmem:[%s189 + $0x30] sm:$0xff]
        %v244 = vld [vmem:[%s189 + $0x38] sm:$0xff]
        %v245 = vld [vmem:[%s189 + $0x40] sm:$0xff]
        %v246 = vld [vmem:[%s189 + $0x48] sm:$0xff]
        %v247 = vld [vmem:[%s189 + $0x50] sm:$0xff]
        %v248 = vld [vmem:[%s189 + $0x58] sm:$0xff]
        %v249 = vld [vmem:[%s189 + $0x60] sm:$0xff]
        %v250 = vld [vmem:[%s189 + $0x68] sm:$0xff]
        %v251 = vld [vmem:[%s189 + $0x70] sm:$0xff]
        %v252 = vld [vmem:[%s189 + $0x78] sm:$0xff]
        %v253 = vld [vmem:[%s189 + $0x80] sm:$0xff]
        %v254 = vld [vmem:[%s189 + $0x88] sm:$0xff]
        %v255 = vld [vmem:[%s189 + $0x90] sm:$0xff]
        %v256 = vld [vmem:[%s189 + $0x98] sm:$0xff]
        %v257 = vld [vmem:[%s189 + $0xa0] sm:$0xff]
        %v258 = vld [vmem:[%s189 + $0xa8] sm:$0xff]
        %v259 = vld [vmem:[%s189 + $0xb0] sm:$0xff]
        %v260 = vld [vmem:[%s189 + $0xb8] sm:$0xff]
        %v261 = vld [vmem:[%s189 + $0xc0] sm:$0xff]
        %v262 = vld [vmem:[%s189 + $0xc8] sm:$0xff]
        %v263 = vld [vmem:[%s189 + $0xd0] sm:$0xff]
        %v264 = vld [vmem:[%s189 + $0xd8] sm:$0xff]
        %v265 = vld [vmem:[%s189 + $0xe0] sm:$0xff]
        %v266 = vld [vmem:[%s189 + $0xe8] sm:$0xff]
        %v267 = vld [vmem:[%s189 + $0xf0] sm:$0xff]
        %v268 = vld [vmem:[%s189 + $0xf8] sm:$0xff]
        %v269 = vld [vmem:[%s189 + $0x100] sm:$0xff]
        %v270 = vld [vmem:[%s189 + $0x108] sm:$0xff]
        %v271 = vld [vmem:[%s189 + $0x110] sm:$0xff]
        %v272 = vld [vmem:[%s189 + $0x118] sm:$0xff]
        %v273 = vld [vmem:[%s189 + $0x120] sm:$0xff]
        %v274 = vld [vmem:[%s189 + $0x128] sm:$0xff]
        %v275 = vld [vmem:[%s189 + $0x130] sm:$0xff]
        %v276 = vld [vmem:[%s189 + $0x138] sm:$0xff]
        %v277 = vld [vmem:[%s189 + $0x140] sm:$0xff]
        %v278 = vld [vmem:[%s189 + $0x148] sm:$0xff]
        %v279 = vld [vmem:[%s189 + $0x150] sm:$0xff]
        %v280 = vld [vmem:[%s189 + $0x158] sm:$0xff]
        %v281 = vld [vmem:[%s189 + $0x160] sm:$0xff]
        %v282 = vld [vmem:[%s189 + $0x168] sm:$0xff]
        %v283 = vld [vmem:[%s189 + $0x170] sm:$0xff]
        %v284 = vld [vmem:[%s189 + $0x178] sm:$0xff]
        %v285 = vld [vmem:[%s198] sm:$0xff]
        %v286 = vld [vmem:[%s198 + $0x8] sm:$0xff]
        %v287 = vld [vmem:[%s198 + $0x10] sm:$0xff]
        %v288 = vld [vmem:[%s198 + $0x18] sm:$0xff]
        %v289 = vld [vmem:[%s198 + $0x20] sm:$0xff]
        %v290 = vld [vmem:[%s198 + $0x28] sm:$0xff]
        %v291 = vld [vmem:[%s198 + $0x30] sm:$0xff]
        %v292 = vld [vmem:[%s198 + $0x38] sm:$0xff]
        %v293 = vld [vmem:[%s198 + $0x40] sm:$0xff]
        %v294 = vld [vmem:[%s198 + $0x48] sm:$0xff]
        %v295 = vld [vmem:[%s198 + $0x50] sm:$0xff]
        %v296 = vld [vmem:[%s198 + $0x58] sm:$0xff]
        %v297 = vld [vmem:[%s198 + $0x60] sm:$0xff]
        %v298 = vld [vmem:[%s198 + $0x68] sm:$0xff]
        %v299 = vld [vmem:[%s198 + $0x70] sm:$0xff]
        %v300 = vld [vmem:[%s198 + $0x78] sm:$0xff]
        %v301 = vld [vmem:[%s198 + $0x80] sm:$0xff]
        %v302 = vld [vmem:[%s198 + $0x88] sm:$0xff]
        %v303 = vld [vmem:[%s198 + $0x90] sm:$0xff]
        %v304 = vld [vmem:[%s198 + $0x98] sm:$0xff]
        %v305 = vld [vmem:[%s198 + $0xa0] sm:$0xff]
        %v306 = vld [vmem:[%s198 + $0xa8] sm:$0xff]
        %v307 = vld [vmem:[%s198 + $0xb0] sm:$0xff]
        %v308 = vld [vmem:[%s198 + $0xb8] sm:$0xff]
        %v309 = vld [vmem:[%s198 + $0xc0] sm:$0xff]
        %v310 = vld [vmem:[%s198 + $0xc8] sm:$0xff]
        %v311 = vld [vmem:[%s198 + $0xd0] sm:$0xff]
        %v312 = vld [vmem:[%s198 + $0xd8] sm:$0xff]
        %v313 = vld [vmem:[%s198 + $0xe0] sm:$0xff]
        %v314 = vld [vmem:[%s198 + $0xe8] sm:$0xff]
        %v315 = vld [vmem:[%s198 + $0xf0] sm:$0xff]
        %v316 = vld [vmem:[%s198 + $0xf8] sm:$0xff]
        %v317 = vld [vmem:[%s198 + $0x100] sm:$0xff]
        %v318 = vld [vmem:[%s198 + $0x108] sm:$0xff]
        %v319 = vld [vmem:[%s198 + $0x110] sm:$0xff]
        %v320 = vld [vmem:[%s198 + $0x118] sm:$0xff]
        %v321 = vld [vmem:[%s198 + $0x120] sm:$0xff]
        %v322 = vld [vmem:[%s198 + $0x128] sm:$0xff]
        %v323 = vld [vmem:[%s198 + $0x130] sm:$0xff]
        %v324 = vld [vmem:[%s198 + $0x138] sm:$0xff]
        %v325 = vld [vmem:[%s198 + $0x140] sm:$0xff]
        %v326 = vld [vmem:[%s198 + $0x148] sm:$0xff]
        %v327 = vld [vmem:[%s198 + $0x150] sm:$0xff]
        %v328 = vld [vmem:[%s198 + $0x158] sm:$0xff]
        %v329 = vld [vmem:[%s198 + $0x160] sm:$0xff]
        %v330 = vld [vmem:[%s198 + $0x168] sm:$0xff]
        %v331 = vld [vmem:[%s198 + $0x170] sm:$0xff]
        %v332 = vld [vmem:[%s198 + $0x178] sm:$0xff]
        %v333 = vld [vmem:[%s198 + $0x180] sm:$0xff]
        %v334 = vld [vmem:[%s198 + $0x188] sm:$0xff]
        %v335 = vld [vmem:[%s198 + $0x190] sm:$0xff]
        %v336 = vld [vmem:[%s198 + $0x198] sm:$0xff]
        %v337 = vld [vmem:[%s198 + $0x1a0] sm:$0xff]
        %v338 = vld [vmem:[%s198 + $0x1a8] sm:$0xff]
        %v339 = vld [vmem:[%s198 + $0x1b0] sm:$0xff]
        %v340 = vld [vmem:[%s198 + $0x1b8] sm:$0xff]
        %v341 = vld [vmem:[%s198 + $0x1c0] sm:$0xff]
        %v342 = vld [vmem:[%s198 + $0x1c8] sm:$0xff]
        %v343 = vld [vmem:[%s198 + $0x1d0] sm:$0xff]
        %v344 = vld [vmem:[%s198 + $0x1d8] sm:$0xff]
        %v345 = vld [vmem:[%s198 + $0x1e0] sm:$0xff]
        %v346 = vld [vmem:[%s198 + $0x1e8] sm:$0xff]
        %v347 = vld [vmem:[%s198 + $0x1f0] sm:$0xff]
        %v348 = vld [vmem:[%s198 + $0x1f8] sm:$0xff]
        %v349 = vld [vmem:[%s198 + $0x200] sm:$0xff]
        %v350 = vld [vmem:[%s198 + $0x208] sm:$0xff]
        %v351 = vld [vmem:[%s198 + $0x210] sm:$0xff]
        %v352 = vld [vmem:[%s198 + $0x218] sm:$0xff]
        %v353 = vld [vmem:[%s198 + $0x220] sm:$0xff]
        %v354 = vld [vmem:[%s198 + $0x228] sm:$0xff]
        %v355 = vld [vmem:[%s198 + $0x230] sm:$0xff]
        %v356 = vld [vmem:[%s198 + $0x238] sm:$0xff]
        %v357 = vld [vmem:[%s198 + $0x240] sm:$0xff]
        %v358 = vld [vmem:[%s198 + $0x248] sm:$0xff]
        %v359 = vld [vmem:[%s198 + $0x250] sm:$0xff]
        %v360 = vld [vmem:[%s198 + $0x258] sm:$0xff]
        %v361 = vld [vmem:[%s198 + $0x260] sm:$0xff]
        %v362 = vld [vmem:[%s198 + $0x268] sm:$0xff]
        %v363 = vld [vmem:[%s198 + $0x270] sm:$0xff]
        %v364 = vld [vmem:[%s198 + $0x278] sm:$0xff]
        %v365 = vld [vmem:[%s198 + $0x280] sm:$0xff]
        %v366 = vld [vmem:[%s198 + $0x288] sm:$0xff]
        %v367 = vld [vmem:[%s198 + $0x290] sm:$0xff]
        %v368 = vld [vmem:[%s198 + $0x298] sm:$0xff]
        %v369 = vld [vmem:[%s198 + $0x2a0] sm:$0xff]
        %v370 = vld [vmem:[%s198 + $0x2a8] sm:$0xff]
        %v371 = vld [vmem:[%s198 + $0x2b0] sm:$0xff]
        %v372 = vld [vmem:[%s198 + $0x2b8] sm:$0xff]
        %v373 = vld [vmem:[%s198 + $0x2c0] sm:$0xff]
        %v374 = vld [vmem:[%s198 + $0x2c8] sm:$0xff]
        %v375 = vld [vmem:[%s198 + $0x2d0] sm:$0xff]
        %v376 = vld [vmem:[%s198 + $0x2d8] sm:$0xff]
        %v377 = vld [vmem:[%s198 + $0x2e0] sm:$0xff]
        %v378 = vld [vmem:[%s198 + $0x2e8] sm:$0xff]
        %v379 = vld [vmem:[%s198 + $0x2f0] sm:$0xff]
        %v380 = vld [vmem:[%s198 + $0x2f8] sm:$0xff]
        %v381 = vld [vmem:[%s198 + $0x300] sm:$0xff]
        %v382 = vld [vmem:[%s198 + $0x308] sm:$0xff]
        %v383 = vld [vmem:[%s198 + $0x310] sm:$0xff]
        %v384 = vld [vmem:[%s198 + $0x318] sm:$0xff]
        %v385 = vld [vmem:[%s198 + $0x320] sm:$0xff]
        %v386 = vld [vmem:[%s198 + $0x328] sm:$0xff]
        %v387 = vld [vmem:[%s198 + $0x330] sm:$0xff]
        %v388 = vld [vmem:[%s198 + $0x338] sm:$0xff]
        %v389 = vld [vmem:[%s198 + $0x340] sm:$0xff]
        %v390 = vld [vmem:[%s198 + $0x348] sm:$0xff]
        %v391 = vld [vmem:[%s198 + $0x350] sm:$0xff]
        %v392 = vld [vmem:[%s198 + $0x358] sm:$0xff]
        %v393 = vld [vmem:[%s198 + $0x360] sm:$0xff]
        %v394 = vld [vmem:[%s198 + $0x368] sm:$0xff]
        %v395 = vld [vmem:[%s198 + $0x370] sm:$0xff]
        %v396 = vld [vmem:[%s198 + $0x378] sm:$0xff]
        %v397 = vld [vmem:[%s198 + $0x380] sm:$0xff]
        %v398 = vld [vmem:[%s198 + $0x388] sm:$0xff]
        %v399 = vld [vmem:[%s198 + $0x390] sm:$0xff]
        %v400 = vld [vmem:[%s198 + $0x398] sm:$0xff]
        %v401 = vld [vmem:[%s198 + $0x3a0] sm:$0xff]
        %v402 = vld [vmem:[%s198 + $0x3a8] sm:$0xff]
        %v403 = vld [vmem:[%s198 + $0x3b0] sm:$0xff]
        %v404 = vld [vmem:[%s198 + $0x3b8] sm:$0xff]
        %v405 = vld [vmem:[%s198 + $0x3c0] sm:$0xff]
        %v406 = vld [vmem:[%s198 + $0x3c8] sm:$0xff]
        %v407 = vld [vmem:[%s198 + $0x3d0] sm:$0xff]
        %v408 = vld [vmem:[%s198 + $0x3d8] sm:$0xff]
        %v409 = vld [vmem:[%s198 + $0x3e0] sm:$0xff]
        %v410 = vld [vmem:[%s198 + $0x3e8] sm:$0xff]
        %v411 = vld [vmem:[%s198 + $0x3f0] sm:$0xff]
        %v412 = vld [vmem:[%s198 + $0x3f8] sm:$0xff]
        %v413 = vld [vmem:[%s198 + $0x400] sm:$0xff]
        %v414 = vld [vmem:[%s198 + $0x408] sm:$0xff]
        %v415 = vld [vmem:[%s198 + $0x410] sm:$0xff]
        %v416 = vld [vmem:[%s198 + $0x418] sm:$0xff]
        %v417 = vld [vmem:[%s198 + $0x420] sm:$0xff]
        %v418 = vld [vmem:[%s198 + $0x428] sm:$0xff]
        %v419 = vld [vmem:[%s198 + $0x430] sm:$0xff]
        %v420 = vld [vmem:[%s198 + $0x438] sm:$0xff]
        %v421 = vld [vmem:[%s198 + $0x440] sm:$0xff]
        %v422 = vld [vmem:[%s198 + $0x448] sm:$0xff]
        %v423 = vld [vmem:[%s198 + $0x450] sm:$0xff]
        %v424 = vld [vmem:[%s198 + $0x458] sm:$0xff]
        %v425 = vld [vmem:[%s198 + $0x460] sm:$0xff]
        %v426 = vld [vmem:[%s198 + $0x468] sm:$0xff]
        %v427 = vld [vmem:[%s198 + $0x470] sm:$0xff]
        %v428 = vld [vmem:[%s198 + $0x478] sm:$0xff]
        %v429 = vld [vmem:[%s198 + $0x480] sm:$0xff]
        %v430 = vld [vmem:[%s198 + $0x488] sm:$0xff]
        %v431 = vld [vmem:[%s198 + $0x490] sm:$0xff]
        %v432 = vld [vmem:[%s198 + $0x498] sm:$0xff]
        %v433 = vld [vmem:[%s198 + $0x4a0] sm:$0xff]
        %v434 = vld [vmem:[%s198 + $0x4a8] sm:$0xff]
        %v435 = vld [vmem:[%s198 + $0x4b0] sm:$0xff]
        %v436 = vld [vmem:[%s198 + $0x4b8] sm:$0xff]
        %v437 = vld [vmem:[%s198 + $0x4c0] sm:$0xff]
        %v438 = vld [vmem:[%s198 + $0x4c8] sm:$0xff]
        %v439 = vld [vmem:[%s198 + $0x4d0] sm:$0xff]
        %v440 = vld [vmem:[%s198 + $0x4d8] sm:$0xff]
        %v441 = vld [vmem:[%s198 + $0x4e0] sm:$0xff]
        %v442 = vld [vmem:[%s198 + $0x4e8] sm:$0xff]
        %v443 = vld [vmem:[%s198 + $0x4f0] sm:$0xff]
        %v444 = vld [vmem:[%s198 + $0x4f8] sm:$0xff]
        %v445 = vld [vmem:[%s198 + $0x500] sm:$0xff]
        %v446 = vld [vmem:[%s198 + $0x508] sm:$0xff]
        %v447 = vld [vmem:[%s198 + $0x510] sm:$0xff]
        %v448 = vld [vmem:[%s198 + $0x518] sm:$0xff]
        %v449 = vld [vmem:[%s198 + $0x520] sm:$0xff]
        %v450 = vld [vmem:[%s198 + $0x528] sm:$0xff]
        %v451 = vld [vmem:[%s198 + $0x530] sm:$0xff]
        %v452 = vld [vmem:[%s198 + $0x538] sm:$0xff]
        %v453 = vld [vmem:[%s198 + $0x540] sm:$0xff]
        %v454 = vld [vmem:[%s198 + $0x548] sm:$0xff]
        %v455 = vld [vmem:[%s198 + $0x550] sm:$0xff]
        %v456 = vld [vmem:[%s198 + $0x558] sm:$0xff]
        %v457 = vld [vmem:[%s198 + $0x560] sm:$0xff]
        %v458 = vld [vmem:[%s198 + $0x568] sm:$0xff]
        %v459 = vld [vmem:[%s198 + $0x570] sm:$0xff]
        %v460 = vld [vmem:[%s198 + $0x578] sm:$0xff]
        %v461 = vld [vmem:[%s198 + $0x580] sm:$0xff]
        %v462 = vld [vmem:[%s198 + $0x588] sm:$0xff]
        %v463 = vld [vmem:[%s198 + $0x590] sm:$0xff]
        %v464 = vld [vmem:[%s198 + $0x598] sm:$0xff]
        %v465 = vld [vmem:[%s198 + $0x5a0] sm:$0xff]
        %v466 = vld [vmem:[%s198 + $0x5a8] sm:$0xff]
        %v467 = vld [vmem:[%s198 + $0x5b0] sm:$0xff]
        %v468 = vld [vmem:[%s198 + $0x5b8] sm:$0xff]
        %v469 = vld [vmem:[%s198 + $0x5c0] sm:$0xff]
        %v470 = vld [vmem:[%s198 + $0x5c8] sm:$0xff]
        %v471 = vld [vmem:[%s198 + $0x5d0] sm:$0xff]
        %v472 = vld [vmem:[%s198 + $0x5d8] sm:$0xff]
        %v473 = vld [vmem:[%s198 + $0x5e0] sm:$0xff]
        %v474 = vld [vmem:[%s198 + $0x5e8] sm:$0xff]
        %v475 = vld [vmem:[%s198 + $0x5f0] sm:$0xff]
        %v476 = vld [vmem:[%s198 + $0x5f8] sm:$0xff]
        %v477 = vld [vmem:[%s198 + $0x600] sm:$0x3]
        %v478 = vld [vmem:[%s198 + $0x608] sm:$0x3]
        %v479 = vld [vmem:[%s198 + $0x610] sm:$0x3]
        %v480 = vld [vmem:[%s198 + $0x618] sm:$0x3]
        %v481 = vld [vmem:[%s198 + $0x620] sm:$0x3]
        %v482 = vld [vmem:[%s198 + $0x628] sm:$0x3]
        %v483 = vld [vmem:[%s198 + $0x630] sm:$0x3]
        %v484 = vld [vmem:[%s198 + $0x638] sm:$0x3]
        %v485 = vld [vmem:[%s198 + $0x640] sm:$0x3]
        %v486 = vld [vmem:[%s198 + $0x648] sm:$0x3]
        %v487 = vld [vmem:[%s198 + $0x650] sm:$0x3]
        %v488 = vld [vmem:[%s198 + $0x658] sm:$0x3]
        %v489 = vld [vmem:[%s198 + $0x660] sm:$0x3]
        %v490 = vld [vmem:[%s198 + $0x668] sm:$0x3]
        %v491 = vld [vmem:[%s198 + $0x670] sm:$0x3]
        %v492 = vld [vmem:[%s198 + $0x678] sm:$0x3]
        %v493 = vld [vmem:[%s198 + $0x680] sm:$0x3]
        %v494 = vld [vmem:[%s198 + $0x688] sm:$0x3]
        %v495 = vld [vmem:[%s198 + $0x690] sm:$0x3]
        %v496 = vld [vmem:[%s198 + $0x698] sm:$0x3]
        %v497 = vld [vmem:[%s198 + $0x6a0] sm:$0x3]
        %v498 = vld [vmem:[%s198 + $0x6a8] sm:$0x3]
        %v499 = vld [vmem:[%s198 + $0x6b0] sm:$0x3]
        %v500 = vld [vmem:[%s198 + $0x6b8] sm:$0x3]
        %v501 = vld [vmem:[%s198 + $0x6c0] sm:$0x3]
        %v502 = vld [vmem:[%s198 + $0x6c8] sm:$0x3]
        %v503 = vld [vmem:[%s198 + $0x6d0] sm:$0x3]
        %v504 = vld [vmem:[%s198 + $0x6d8] sm:$0x3]
        %v505 = vld [vmem:[%s198 + $0x6e0] sm:$0x3]
        %v506 = vld [vmem:[%s198 + $0x6e8] sm:$0x3]
        %v507 = vld [vmem:[%s198 + $0x6f0] sm:$0x3]
        %v508 = vld [vmem:[%s198 + $0x6f8] sm:$0x3]
        %v509 = vld [vmem:[%s198 + $0x700] sm:$0x3]
        %v510 = vld [vmem:[%s198 + $0x708] sm:$0x3]
        %v511 = vld [vmem:[%s198 + $0x710] sm:$0x3]
        %v512 = vld [vmem:[%s198 + $0x718] sm:$0x3]
        %v513 = vld [vmem:[%s198 + $0x720] sm:$0x3]
        %v514 = vld [vmem:[%s198 + $0x728] sm:$0x3]
        %v515 = vld [vmem:[%s198 + $0x730] sm:$0x3]
        %v516 = vld [vmem:[%s198 + $0x738] sm:$0x3]
        %v517 = vld [vmem:[%s198 + $0x740] sm:$0x3]
        %v518 = vld [vmem:[%s198 + $0x748] sm:$0x3]
        %v519 = vld [vmem:[%s198 + $0x750] sm:$0x3]
        %v520 = vld [vmem:[%s198 + $0x758] sm:$0x3]
        %v521 = vld [vmem:[%s198 + $0x760] sm:$0x3]
        %v522 = vld [vmem:[%s198 + $0x768] sm:$0x3]
        %v523 = vld [vmem:[%s198 + $0x770] sm:$0x3]
        %v524 = vld [vmem:[%s198 + $0x778] sm:$0x3]
        %v525 = vld [vmem:[%s198 + $0x780] sm:$0x3]
        %v526 = vld [vmem:[%s198 + $0x788] sm:$0x3]
        %v527 = vld [vmem:[%s198 + $0x790] sm:$0x3]
        %v528 = vld [vmem:[%s198 + $0x798] sm:$0x3]
        %v529 = vld [vmem:[%s198 + $0x7a0] sm:$0x3]
        %v530 = vld [vmem:[%s198 + $0x7a8] sm:$0x3]
        %v531 = vld [vmem:[%s198 + $0x7b0] sm:$0x3]
        %v532 = vld [vmem:[%s198 + $0x7b8] sm:$0x3]
        %v533 = vld [vmem:[%s198 + $0x7c0] sm:$0x3]
        %v534 = vld [vmem:[%s198 + $0x7c8] sm:$0x3]
        %v535 = vld [vmem:[%s198 + $0x7d0] sm:$0x3]
        %v536 = vld [vmem:[%s198 + $0x7d8] sm:$0x3]
        %v537 = vld [vmem:[%s198 + $0x7e0] sm:$0x3]
        %v538 = vld [vmem:[%s198 + $0x7e8] sm:$0x3]
        %v539 = vld [vmem:[%s198 + $0x7f0] sm:$0x3]
        %v540 = vld [vmem:[%s198 + $0x7f8] sm:$0x3]
        %v541 = vld [vmem:[%s198 + $0x800] sm:$0x3]
        %v542 = vld [vmem:[%s198 + $0x808] sm:$0x3]
        %v543 = vld [vmem:[%s198 + $0x810] sm:$0x3]
        %v544 = vld [vmem:[%s198 + $0x818] sm:$0x3]
        %v545 = vld [vmem:[%s198 + $0x820] sm:$0x3]
        %v546 = vld [vmem:[%s198 + $0x828] sm:$0x3]
        %v547 = vld [vmem:[%s198 + $0x830] sm:$0x3]
        %v548 = vld [vmem:[%s198 + $0x838] sm:$0x3]
        %v549 = vld [vmem:[%s198 + $0x840] sm:$0x3]
        %v550 = vld [vmem:[%s198 + $0x848] sm:$0x3]
        %v551 = vld [vmem:[%s198 + $0x850] sm:$0x3]
        %v552 = vld [vmem:[%s198 + $0x858] sm:$0x3]
        %v553 = vld [vmem:[%s198 + $0x860] sm:$0x3]
        %v554 = vld [vmem:[%s198 + $0x868] sm:$0x3]
        %v555 = vld [vmem:[%s198 + $0x870] sm:$0x3]
        %v556 = vld [vmem:[%s198 + $0x878] sm:$0x3]
        %v557 = vld [vmem:[%s198 + $0x880] sm:$0x3]
        %v558 = vld [vmem:[%s198 + $0x888] sm:$0x3]
        %v559 = vld [vmem:[%s198 + $0x890] sm:$0x3]
        %v560 = vld [vmem:[%s198 + $0x898] sm:$0x3]
        %v561 = vld [vmem:[%s198 + $0x8a0] sm:$0x3]
        %v562 = vld [vmem:[%s198 + $0x8a8] sm:$0x3]
        %v563 = vld [vmem:[%s198 + $0x8b0] sm:$0x3]
        %v564 = vld [vmem:[%s198 + $0x8b8] sm:$0x3]
        %v565 = vld [vmem:[%s198 + $0x8c0] sm:$0x3]
        %v566 = vld [vmem:[%s198 + $0x8c8] sm:$0x3]
        %v567 = vld [vmem:[%s198 + $0x8d0] sm:$0x3]
        %v568 = vld [vmem:[%s198 + $0x8d8] sm:$0x3]
        %v569 = vld [vmem:[%s198 + $0x8e0] sm:$0x3]
        %v570 = vld [vmem:[%s198 + $0x8e8] sm:$0x3]
        %v571 = vld [vmem:[%s198 + $0x8f0] sm:$0x3]
        %v572 = vld [vmem:[%s198 + $0x8f8] sm:$0x3]
        %v573 = vld [vmem:[%s198 + $0x900] sm:$0x3]
        %v574 = vld [vmem:[%s198 + $0x908] sm:$0x3]
        %v575 = vld [vmem:[%s198 + $0x910] sm:$0x3]
        %v576 = vld [vmem:[%s198 + $0x918] sm:$0x3]
        %v577 = vld [vmem:[%s198 + $0x920] sm:$0x3]
        %v578 = vld [vmem:[%s198 + $0x928] sm:$0x3]
        %v579 = vld [vmem:[%s198 + $0x930] sm:$0x3]
        %v580 = vld [vmem:[%s198 + $0x938] sm:$0x3]
        %v581 = vld [vmem:[%s198 + $0x940] sm:$0x3]
        %v582 = vld [vmem:[%s198 + $0x948] sm:$0x3]
        %v583 = vld [vmem:[%s198 + $0x950] sm:$0x3]
        %v584 = vld [vmem:[%s198 + $0x958] sm:$0x3]
        %v585 = vld [vmem:[%s198 + $0x960] sm:$0x3]
        %v586 = vld [vmem:[%s198 + $0x968] sm:$0x3]
        %v587 = vld [vmem:[%s198 + $0x970] sm:$0x3]
        %v588 = vld [vmem:[%s198 + $0x978] sm:$0x3]
        %v589 = vld [vmem:[%s198 + $0x980] sm:$0x3]
        %v590 = vld [vmem:[%s198 + $0x988] sm:$0x3]
        %v591 = vld [vmem:[%s198 + $0x990] sm:$0x3]
        %v592 = vld [vmem:[%s198 + $0x998] sm:$0x3]
        %v593 = vld [vmem:[%s198 + $0x9a0] sm:$0x3]
        %v594 = vld [vmem:[%s198 + $0x9a8] sm:$0x3]
        %v595 = vld [vmem:[%s198 + $0x9b0] sm:$0x3]
        %v596 = vld [vmem:[%s198 + $0x9b8] sm:$0x3]
        %v597 = vld [vmem:[%s198 + $0x9c0] sm:$0x3]
        %v598 = vld [vmem:[%s198 + $0x9c8] sm:$0x3]
        %v599 = vld [vmem:[%s198 + $0x9d0] sm:$0x3]
        %v600 = vld [vmem:[%s198 + $0x9d8] sm:$0x3]
        %v601 = vld [vmem:[%s198 + $0x9e0] sm:$0x3]
        %v602 = vld [vmem:[%s198 + $0x9e8] sm:$0x3]
        %v603 = vld [vmem:[%s198 + $0x9f0] sm:$0x3]
        %v604 = vld [vmem:[%s198 + $0x9f8] sm:$0x3]
        %v605 = vld [vmem:[%s198 + $0xa00] sm:$0x3]
        %v606 = vld [vmem:[%s198 + $0xa08] sm:$0x3]
        %v607 = vld [vmem:[%s198 + $0xa10] sm:$0x3]
        %v608 = vld [vmem:[%s198 + $0xa18] sm:$0x3]
        %v609 = vld [vmem:[%s198 + $0xa20] sm:$0x3]
        %v610 = vld [vmem:[%s198 + $0xa28] sm:$0x3]
        %v611 = vld [vmem:[%s198 + $0xa30] sm:$0x3]
        %v612 = vld [vmem:[%s198 + $0xa38] sm:$0x3]
        %v613 = vld [vmem:[%s198 + $0xa40] sm:$0x3]
        %v614 = vld [vmem:[%s198 + $0xa48] sm:$0x3]
        %v615 = vld [vmem:[%s198 + $0xa50] sm:$0x3]
        %v616 = vld [vmem:[%s198 + $0xa58] sm:$0x3]
        %v617 = vld [vmem:[%s198 + $0xa60] sm:$0x3]
        %v618 = vld [vmem:[%s198 + $0xa68] sm:$0x3]
        %v619 = vld [vmem:[%s198 + $0xa70] sm:$0x3]
        %v620 = vld [vmem:[%s198 + $0xa78] sm:$0x3]
        %v621 = vld [vmem:[%s198 + $0xa80] sm:$0x3]
        %v622 = vld [vmem:[%s198 + $0xa88] sm:$0x3]
        %v623 = vld [vmem:[%s198 + $0xa90] sm:$0x3]
        %v624 = vld [vmem:[%s198 + $0xa98] sm:$0x3]
        %v625 = vld [vmem:[%s198 + $0xaa0] sm:$0x3]
        %v626 = vld [vmem:[%s198 + $0xaa8] sm:$0x3]
        %v627 = vld [vmem:[%s198 + $0xab0] sm:$0x3]
        %v628 = vld [vmem:[%s198 + $0xab8] sm:$0x3]
        %v629 = vld [vmem:[%s198 + $0xac0] sm:$0x3]
        %v630 = vld [vmem:[%s198 + $0xac8] sm:$0x3]
        %v631 = vld [vmem:[%s198 + $0xad0] sm:$0x3]
        %v632 = vld [vmem:[%s198 + $0xad8] sm:$0x3]
        %v633 = vld [vmem:[%s198 + $0xae0] sm:$0x3]
        %v634 = vld [vmem:[%s198 + $0xae8] sm:$0x3]
        %v635 = vld [vmem:[%s198 + $0xaf0] sm:$0x3]
        %v636 = vld [vmem:[%s198 + $0xaf8] sm:$0x3]
        %v637 = vld [vmem:[%s198 + $0xb00] sm:$0x3]
        %v638 = vld [vmem:[%s198 + $0xb08] sm:$0x3]
        %v639 = vld [vmem:[%s198 + $0xb10] sm:$0x3]
        %v640 = vld [vmem:[%s198 + $0xb18] sm:$0x3]
        %v641 = vld [vmem:[%s198 + $0xb20] sm:$0x3]
        %v642 = vld [vmem:[%s198 + $0xb28] sm:$0x3]
        %v643 = vld [vmem:[%s198 + $0xb30] sm:$0x3]
        %v644 = vld [vmem:[%s198 + $0xb38] sm:$0x3]
        %v645 = vld [vmem:[%s198 + $0xb40] sm:$0x3]
        %v646 = vld [vmem:[%s198 + $0xb48] sm:$0x3]
        %v647 = vld [vmem:[%s198 + $0xb50] sm:$0x3]
        %v648 = vld [vmem:[%s198 + $0xb58] sm:$0x3]
        %v649 = vld [vmem:[%s198 + $0xb60] sm:$0x3]
        %v650 = vld [vmem:[%s198 + $0xb68] sm:$0x3]
        %v651 = vld [vmem:[%s198 + $0xb70] sm:$0x3]
        %v652 = vld [vmem:[%s198 + $0xb78] sm:$0x3]
        %v653 = vld [vmem:[%s198 + $0xb80] sm:$0x3]
        %v654 = vld [vmem:[%s198 + $0xb88] sm:$0x3]
        %v655 = vld [vmem:[%s198 + $0xb90] sm:$0x3]
        %v656 = vld [vmem:[%s198 + $0xb98] sm:$0x3]
        %v657 = vld [vmem:[%s198 + $0xba0] sm:$0x3]
        %v658 = vld [vmem:[%s198 + $0xba8] sm:$0x3]
        %v659 = vld [vmem:[%s198 + $0xbb0] sm:$0x3]
        %v660 = vld [vmem:[%s198 + $0xbb8] sm:$0x3]
        %v661 = vld [vmem:[%s198 + $0xbc0] sm:$0x3]
        %v662 = vld [vmem:[%s198 + $0xbc8] sm:$0x3]
        %v663 = vld [vmem:[%s198 + $0xbd0] sm:$0x3]
        %v664 = vld [vmem:[%s198 + $0xbd8] sm:$0x3]
        %v665 = vld [vmem:[%s198 + $0xbe0] sm:$0x3]
        %v666 = vld [vmem:[%s198 + $0xbe8] sm:$0x3]
        %v667 = vld [vmem:[%s198 + $0xbf0] sm:$0x3]
        %v668 = vld [vmem:[%s198 + $0xbf8] sm:$0x3]
        %v717 = vcombine.high %v237, %v237
        %v719 = vunpack.c.l.s4 1983009808
        %v720 = vunpack.c.0.s8 %v719
        %v721 = vlaneseq
        %v722 = vshrl.u32 %v721, 7
        %v723 = vsub.s32 %v720, %v722
        %v724 = vrot.slane %v237, %v723
        %v726 = vunpack.c.l.s4 1983009808
        %v727 = vunpack.c.0.s8 %v726
        %v728 = vlaneseq
        %v729 = vshrl.u32 %v728, 7
        %v730 = vsub.s32 %v727, %v729
        %v731 = vrot.slane %v717, %v730
        %v732 = vcombine.high %v724, %v724
        %v733 = vcombine.high %v731, %v731
        %v734 = vcombine.high %v238, %v238
        %v736 = vunpack.c.l.s4 1983009808
        %v737 = vunpack.c.0.s8 %v736
        %v738 = vlaneseq
        %v739 = vshrl.u32 %v738, 7
        %v740 = vsub.s32 %v737, %v739
        %v741 = vrot.slane %v238, %v740
        %v743 = vunpack.c.l.s4 1983009808
        %v744 = vunpack.c.0.s8 %v743
        %v745 = vlaneseq
        %v746 = vshrl.u32 %v745, 7
        %v747 = vsub.s32 %v744, %v746
        %v748 = vrot.slane %v734, %v747
        %v749 = vcombine.high %v741, %v741
        %v750 = vcombine.high %v748, %v748
        %v751 = vcombine.high %v239, %v239
        %v753 = vunpack.c.l.s4 1983009808
        %v754 = vunpack.c.0.s8 %v753
        %v755 = vlaneseq
        %v756 = vshrl.u32 %v755, 7
        %v757 = vsub.s32 %v754, %v756
        %v758 = vrot.slane %v239, %v757
        %v760 = vunpack.c.l.s4 1983009808
        %v761 = vunpack.c.0.s8 %v760
        %v762 = vlaneseq
        %v763 = vshrl.u32 %v762, 7
        %v764 = vsub.s32 %v761, %v763
        %v765 = vrot.slane %v751, %v764
        %v766 = vcombine.high %v758, %v758
        %v767 = vcombine.high %v765, %v765
        %v768 = vcombine.high %v240, %v240
        %v770 = vunpack.c.l.s4 1983009808
        %v771 = vunpack.c.0.s8 %v770
        %v772 = vlaneseq
        %v773 = vshrl.u32 %v772, 7
        %v774 = vsub.s32 %v771, %v773
        %v775 = vrot.slane %v240, %v774
        %v777 = vunpack.c.l.s4 1983009808
        %v778 = vunpack.c.0.s8 %v777
        %v779 = vlaneseq
        %v780 = vshrl.u32 %v779, 7
        %v781 = vsub.s32 %v778, %v780
        %v782 = vrot.slane %v768, %v781
        %v783 = vcombine.high %v775, %v775
        %v784 = vcombine.high %v782, %v782
        %v785 = vcombine.high %v241, %v241
        %v787 = vunpack.c.l.s4 1983009808
        %v788 = vunpack.c.0.s8 %v787
        %v789 = vlaneseq
        %v790 = vshrl.u32 %v789, 7
        %v791 = vsub.s32 %v788, %v790
        %v792 = vrot.slane %v241, %v791
        %v794 = vunpack.c.l.s4 1983009808
        %v795 = vunpack.c.0.s8 %v794
        %v796 = vlaneseq
        %v797 = vshrl.u32 %v796, 7
        %v798 = vsub.s32 %v795, %v797
        %v799 = vrot.slane %v785, %v798
        %v800 = vcombine.high %v792, %v792
        %v801 = vcombine.high %v799, %v799
        %v802 = vcombine.high %v242, %v242
        %v804 = vunpack.c.l.s4 1983009808
        %v805 = vunpack.c.0.s8 %v804
        %v806 = vlaneseq
        %v807 = vshrl.u32 %v806, 7
        %v808 = vsub.s32 %v805, %v807
        %v809 = vrot.slane %v242, %v808
        %v811 = vunpack.c.l.s4 1983009808
        %v812 = vunpack.c.0.s8 %v811
        %v813 = vlaneseq
        %v814 = vshrl.u32 %v813, 7
        %v815 = vsub.s32 %v812, %v814
        %v816 = vrot.slane %v802, %v815
        %v817 = vcombine.high %v809, %v809
        %v818 = vcombine.high %v816, %v816
        %v819 = vcombine.high %v243, %v243
        %v821 = vunpack.c.l.s4 1983009808
        %v822 = vunpack.c.0.s8 %v821
        %v823 = vlaneseq
        %v824 = vshrl.u32 %v823, 7
        %v825 = vsub.s32 %v822, %v824
        %v826 = vrot.slane %v243, %v825
        %v828 = vunpack.c.l.s4 1983009808
        %v829 = vunpack.c.0.s8 %v828
        %v830 = vlaneseq
        %v831 = vshrl.u32 %v830, 7
        %v832 = vsub.s32 %v829, %v831
        %v833 = vrot.slane %v819, %v832
        %v834 = vcombine.high %v826, %v826
        %v835 = vcombine.high %v833, %v833
        %v836 = vcombine.high %v244, %v244
        %v838 = vunpack.c.l.s4 1983009808
        %v839 = vunpack.c.0.s8 %v838
        %v840 = vlaneseq
        %v841 = vshrl.u32 %v840, 7
        %v842 = vsub.s32 %v839, %v841
        %v843 = vrot.slane %v244, %v842
        %v845 = vunpack.c.l.s4 1983009808
        %v846 = vunpack.c.0.s8 %v845
        %v847 = vlaneseq
        %v848 = vshrl.u32 %v847, 7
        %v849 = vsub.s32 %v846, %v848
        %v850 = vrot.slane %v836, %v849
        %v851 = vcombine.high %v843, %v843
        %v852 = vcombine.high %v850, %v850
        %v853 = vcombine.high %v245, %v245
        %v855 = vunpack.c.l.s4 1983009808
        %v856 = vunpack.c.0.s8 %v855
        %v857 = vlaneseq
        %v858 = vshrl.u32 %v857, 7
        %v859 = vsub.s32 %v856, %v858
        %v860 = vrot.slane %v245, %v859
        %v862 = vunpack.c.l.s4 1983009808
        %v863 = vunpack.c.0.s8 %v862
        %v864 = vlaneseq
        %v865 = vshrl.u32 %v864, 7
        %v866 = vsub.s32 %v863, %v865
        %v867 = vrot.slane %v853, %v866
        %v868 = vcombine.high %v860, %v860
        %v869 = vcombine.high %v867, %v867
        %v870 = vcombine.high %v246, %v246
        %v872 = vunpack.c.l.s4 1983009808
        %v873 = vunpack.c.0.s8 %v872
        %v874 = vlaneseq
        %v875 = vshrl.u32 %v874, 7
        %v876 = vsub.s32 %v873, %v875
        %v877 = vrot.slane %v246, %v876
        %v879 = vunpack.c.l.s4 1983009808
        %v880 = vunpack.c.0.s8 %v879
        %v881 = vlaneseq
        %v882 = vshrl.u32 %v881, 7
        %v883 = vsub.s32 %v880, %v882
        %v884 = vrot.slane %v870, %v883
        %v885 = vcombine.high %v877, %v877
        %v886 = vcombine.high %v884, %v884
        %v887 = vcombine.high %v247, %v247
        %v889 = vunpack.c.l.s4 1983009808
        %v890 = vunpack.c.0.s8 %v889
        %v891 = vlaneseq
        %v892 = vshrl.u32 %v891, 7
        %v893 = vsub.s32 %v890, %v892
        %v894 = vrot.slane %v247, %v893
        %v896 = vunpack.c.l.s4 1983009808
        %v897 = vunpack.c.0.s8 %v896
        %v898 = vlaneseq
        %v899 = vshrl.u32 %v898, 7
        %v900 = vsub.s32 %v897, %v899
        %v901 = vrot.slane %v887, %v900
        %v902 = vcombine.high %v894, %v894
        %v903 = vcombine.high %v901, %v901
        %v904 = vcombine.high %v248, %v248
        %v906 = vunpack.c.l.s4 1983009808
        %v907 = vunpack.c.0.s8 %v906
        %v908 = vlaneseq
        %v909 = vshrl.u32 %v908, 7
        %v910 = vsub.s32 %v907, %v909
        %v911 = vrot.slane %v248, %v910
        %v913 = vunpack.c.l.s4 1983009808
        %v914 = vunpack.c.0.s8 %v913
        %v915 = vlaneseq
        %v916 = vshrl.u32 %v915, 7
        %v917 = vsub.s32 %v914, %v916
        %v918 = vrot.slane %v904, %v917
        %v919 = vcombine.high %v911, %v911
        %v920 = vcombine.high %v918, %v918
        %v921 = vcombine.high %v249, %v249
        %v923 = vunpack.c.l.s4 1983009808
        %v924 = vunpack.c.0.s8 %v923
        %v925 = vlaneseq
        %v926 = vshrl.u32 %v925, 7
        %v927 = vsub.s32 %v924, %v926
        %v928 = vrot.slane %v249, %v927
        %v930 = vunpack.c.l.s4 1983009808
        %v931 = vunpack.c.0.s8 %v930
        %v932 = vlaneseq
        %v933 = vshrl.u32 %v932, 7
        %v934 = vsub.s32 %v931, %v933
        %v935 = vrot.slane %v921, %v934
        %v936 = vcombine.high %v928, %v928
        %v937 = vcombine.high %v935, %v935
        %v938 = vcombine.high %v250, %v250
        %v940 = vunpack.c.l.s4 1983009808
        %v941 = vunpack.c.0.s8 %v940
        %v942 = vlaneseq
        %v943 = vshrl.u32 %v942, 7
        %v944 = vsub.s32 %v941, %v943
        %v945 = vrot.slane %v250, %v944
        %v947 = vunpack.c.l.s4 1983009808
        %v948 = vunpack.c.0.s8 %v947
        %v949 = vlaneseq
        %v950 = vshrl.u32 %v949, 7
        %v951 = vsub.s32 %v948, %v950
        %v952 = vrot.slane %v938, %v951
        %v953 = vcombine.high %v945, %v945
        %v954 = vcombine.high %v952, %v952
        %v955 = vcombine.high %v251, %v251
        %v957 = vunpack.c.l.s4 1983009808
        %v958 = vunpack.c.0.s8 %v957
        %v959 = vlaneseq
        %v960 = vshrl.u32 %v959, 7
        %v961 = vsub.s32 %v958, %v960
        %v962 = vrot.slane %v251, %v961
        %v964 = vunpack.c.l.s4 1983009808
        %v965 = vunpack.c.0.s8 %v964
        %v966 = vlaneseq
        %v967 = vshrl.u32 %v966, 7
        %v968 = vsub.s32 %v965, %v967
        %v969 = vrot.slane %v955, %v968
        %v970 = vcombine.high %v962, %v962
        %v971 = vcombine.high %v969, %v969
        %v972 = vcombine.high %v252, %v252
        %v974 = vunpack.c.l.s4 1983009808
        %v975 = vunpack.c.0.s8 %v974
        %v976 = vlaneseq
        %v977 = vshrl.u32 %v976, 7
        %v978 = vsub.s32 %v975, %v977
        %v979 = vrot.slane %v252, %v978
        %v981 = vunpack.c.l.s4 1983009808
        %v982 = vunpack.c.0.s8 %v981
        %v983 = vlaneseq
        %v984 = vshrl.u32 %v983, 7
        %v985 = vsub.s32 %v982, %v984
        %v986 = vrot.slane %v972, %v985
        %v987 = vcombine.high %v979, %v979
        %v988 = vcombine.high %v986, %v986
        %v989 = vcombine.high %v253, %v253
        %v991 = vunpack.c.l.s4 1983009808
        %v992 = vunpack.c.0.s8 %v991
        %v993 = vlaneseq
        %v994 = vshrl.u32 %v993, 7
        %v995 = vsub.s32 %v992, %v994
        %v996 = vrot.slane %v253, %v995
        %v998 = vunpack.c.l.s4 1983009808
        %v999 = vunpack.c.0.s8 %v998
        %v1000 = vlaneseq
        %v1001 = vshrl.u32 %v1000, 7
        %v1002 = vsub.s32 %v999, %v1001
        %v1003 = vrot.slane %v989, %v1002
        %v1004 = vcombine.high %v996, %v996
        %v1005 = vcombine.high %v1003, %v1003
        %v1006 = vcombine.high %v254, %v254
        %v1008 = vunpack.c.l.s4 1983009808
        %v1009 = vunpack.c.0.s8 %v1008
        %v1010 = vlaneseq
        %v1011 = vshrl.u32 %v1010, 7
        %v1012 = vsub.s32 %v1009, %v1011
        %v1013 = vrot.slane %v254, %v1012
        %v1015 = vunpack.c.l.s4 1983009808
        %v1016 = vunpack.c.0.s8 %v1015
        %v1017 = vlaneseq
        %v1018 = vshrl.u32 %v1017, 7
        %v1019 = vsub.s32 %v1016, %v1018
        %v1020 = vrot.slane %v1006, %v1019
        %v1021 = vcombine.high %v1013, %v1013
        %v1022 = vcombine.high %v1020, %v1020
        %v1023 = vcombine.high %v255, %v255
        %v1025 = vunpack.c.l.s4 1983009808
        %v1026 = vunpack.c.0.s8 %v1025
        %v1027 = vlaneseq
        %v1028 = vshrl.u32 %v1027, 7
        %v1029 = vsub.s32 %v1026, %v1028
        %v1030 = vrot.slane %v255, %v1029
        %v1032 = vunpack.c.l.s4 1983009808
        %v1033 = vunpack.c.0.s8 %v1032
        %v1034 = vlaneseq
        %v1035 = vshrl.u32 %v1034, 7
        %v1036 = vsub.s32 %v1033, %v1035
        %v1037 = vrot.slane %v1023, %v1036
        %v1038 = vcombine.high %v1030, %v1030
        %v1039 = vcombine.high %v1037, %v1037
        %v1040 = vcombine.high %v256, %v256
        %v1042 = vunpack.c.l.s4 1983009808
        %v1043 = vunpack.c.0.s8 %v1042
        %v1044 = vlaneseq
        %v1045 = vshrl.u32 %v1044, 7
        %v1046 = vsub.s32 %v1043, %v1045
        %v1047 = vrot.slane %v256, %v1046
        %v1049 = vunpack.c.l.s4 1983009808
        %v1050 = vunpack.c.0.s8 %v1049
        %v1051 = vlaneseq
        %v1052 = vshrl.u32 %v1051, 7
        %v1053 = vsub.s32 %v1050, %v1052
        %v1054 = vrot.slane %v1040, %v1053
        %v1055 = vcombine.high %v1047, %v1047
        %v1056 = vcombine.high %v1054, %v1054
        %v1057 = vcombine.high %v257, %v257
        %v1059 = vunpack.c.l.s4 1983009808
        %v1060 = vunpack.c.0.s8 %v1059
        %v1061 = vlaneseq
        %v1062 = vshrl.u32 %v1061, 7
        %v1063 = vsub.s32 %v1060, %v1062
        %v1064 = vrot.slane %v257, %v1063
        %v1066 = vunpack.c.l.s4 1983009808
        %v1067 = vunpack.c.0.s8 %v1066
        %v1068 = vlaneseq
        %v1069 = vshrl.u32 %v1068, 7
        %v1070 = vsub.s32 %v1067, %v1069
        %v1071 = vrot.slane %v1057, %v1070
        %v1072 = vcombine.high %v1064, %v1064
        %v1073 = vcombine.high %v1071, %v1071
        %v1074 = vcombine.high %v258, %v258
        %v1076 = vunpack.c.l.s4 1983009808
        %v1077 = vunpack.c.0.s8 %v1076
        %v1078 = vlaneseq
        %v1079 = vshrl.u32 %v1078, 7
        %v1080 = vsub.s32 %v1077, %v1079
        %v1081 = vrot.slane %v258, %v1080
        %v1083 = vunpack.c.l.s4 1983009808
        %v1084 = vunpack.c.0.s8 %v1083
        %v1085 = vlaneseq
        %v1086 = vshrl.u32 %v1085, 7
        %v1087 = vsub.s32 %v1084, %v1086
        %v1088 = vrot.slane %v1074, %v1087
        %v1089 = vcombine.high %v1081, %v1081
        %v1090 = vcombine.high %v1088, %v1088
        %v1091 = vcombine.high %v259, %v259
        %v1093 = vunpack.c.l.s4 1983009808
        %v1094 = vunpack.c.0.s8 %v1093
        %v1095 = vlaneseq
        %v1096 = vshrl.u32 %v1095, 7
        %v1097 = vsub.s32 %v1094, %v1096
        %v1098 = vrot.slane %v259, %v1097
        %v1100 = vunpack.c.l.s4 1983009808
        %v1101 = vunpack.c.0.s8 %v1100
        %v1102 = vlaneseq
        %v1103 = vshrl.u32 %v1102, 7
        %v1104 = vsub.s32 %v1101, %v1103
        %v1105 = vrot.slane %v1091, %v1104
        %v1106 = vcombine.high %v1098, %v1098
        %v1107 = vcombine.high %v1105, %v1105
        %v1108 = vcombine.high %v260, %v260
        %v1110 = vunpack.c.l.s4 1983009808
        %v1111 = vunpack.c.0.s8 %v1110
        %v1112 = vlaneseq
        %v1113 = vshrl.u32 %v1112, 7
        %v1114 = vsub.s32 %v1111, %v1113
        %v1115 = vrot.slane %v260, %v1114
        %v1117 = vunpack.c.l.s4 1983009808
        %v1118 = vunpack.c.0.s8 %v1117
        %v1119 = vlaneseq
        %v1120 = vshrl.u32 %v1119, 7
        %v1121 = vsub.s32 %v1118, %v1120
        %v1122 = vrot.slane %v1108, %v1121
        %v1123 = vcombine.high %v1115, %v1115
        %v1124 = vcombine.high %v1122, %v1122
        %v1125 = vcombine.high %v261, %v261
        %v1127 = vunpack.c.l.s4 1983009808
        %v1128 = vunpack.c.0.s8 %v1127
        %v1129 = vlaneseq
        %v1130 = vshrl.u32 %v1129, 7
        %v1131 = vsub.s32 %v1128, %v1130
        %v1132 = vrot.slane %v261, %v1131
        %v1134 = vunpack.c.l.s4 1983009808
        %v1135 = vunpack.c.0.s8 %v1134
        %v1136 = vlaneseq
        %v1137 = vshrl.u32 %v1136, 7
        %v1138 = vsub.s32 %v1135, %v1137
        %v1139 = vrot.slane %v1125, %v1138
        %v1140 = vcombine.high %v1132, %v1132
        %v1141 = vcombine.high %v1139, %v1139
        %v1142 = vcombine.high %v262, %v262
        %v1144 = vunpack.c.l.s4 1983009808
        %v1145 = vunpack.c.0.s8 %v1144
        %v1146 = vlaneseq
        %v1147 = vshrl.u32 %v1146, 7
        %v1148 = vsub.s32 %v1145, %v1147
        %v1149 = vrot.slane %v262, %v1148
        %v1151 = vunpack.c.l.s4 1983009808
        %v1152 = vunpack.c.0.s8 %v1151
        %v1153 = vlaneseq
        %v1154 = vshrl.u32 %v1153, 7
        %v1155 = vsub.s32 %v1152, %v1154
        %v1156 = vrot.slane %v1142, %v1155
        %v1157 = vcombine.high %v1149, %v1149
        %v1158 = vcombine.high %v1156, %v1156
        %v1159 = vcombine.high %v263, %v263
        %v1161 = vunpack.c.l.s4 1983009808
        %v1162 = vunpack.c.0.s8 %v1161
        %v1163 = vlaneseq
        %v1164 = vshrl.u32 %v1163, 7
        %v1165 = vsub.s32 %v1162, %v1164
        %v1166 = vrot.slane %v263, %v1165
        %v1168 = vunpack.c.l.s4 1983009808
        %v1169 = vunpack.c.0.s8 %v1168
        %v1170 = vlaneseq
        %v1171 = vshrl.u32 %v1170, 7
        %v1172 = vsub.s32 %v1169, %v1171
        %v1173 = vrot.slane %v1159, %v1172
        %v1174 = vcombine.high %v1166, %v1166
        %v1175 = vcombine.high %v1173, %v1173
        %v1176 = vcombine.high %v264, %v264
        %v1178 = vunpack.c.l.s4 1983009808
        %v1179 = vunpack.c.0.s8 %v1178
        %v1180 = vlaneseq
        %v1181 = vshrl.u32 %v1180, 7
        %v1182 = vsub.s32 %v1179, %v1181
        %v1183 = vrot.slane %v264, %v1182
        %v1185 = vunpack.c.l.s4 1983009808
        %v1186 = vunpack.c.0.s8 %v1185
        %v1187 = vlaneseq
        %v1188 = vshrl.u32 %v1187, 7
        %v1189 = vsub.s32 %v1186, %v1188
        %v1190 = vrot.slane %v1176, %v1189
        %v1191 = vcombine.high %v1183, %v1183
        %v1192 = vcombine.high %v1190, %v1190
        %v1193 = vcombine.high %v265, %v265
        %v1195 = vunpack.c.l.s4 1983009808
        %v1196 = vunpack.c.0.s8 %v1195
        %v1197 = vlaneseq
        %v1198 = vshrl.u32 %v1197, 7
        %v1199 = vsub.s32 %v1196, %v1198
        %v1200 = vrot.slane %v265, %v1199
        %v1202 = vunpack.c.l.s4 1983009808
        %v1203 = vunpack.c.0.s8 %v1202
        %v1204 = vlaneseq
        %v1205 = vshrl.u32 %v1204, 7
        %v1206 = vsub.s32 %v1203, %v1205
        %v1207 = vrot.slane %v1193, %v1206
        %v1208 = vcombine.high %v1200, %v1200
        %v1209 = vcombine.high %v1207, %v1207
        %v1210 = vcombine.high %v266, %v266
        %v1212 = vunpack.c.l.s4 1983009808
        %v1213 = vunpack.c.0.s8 %v1212
        %v1214 = vlaneseq
        %v1215 = vshrl.u32 %v1214, 7
        %v1216 = vsub.s32 %v1213, %v1215
        %v1217 = vrot.slane %v266, %v1216
        %v1219 = vunpack.c.l.s4 1983009808
        %v1220 = vunpack.c.0.s8 %v1219
        %v1221 = vlaneseq
        %v1222 = vshrl.u32 %v1221, 7
        %v1223 = vsub.s32 %v1220, %v1222
        %v1224 = vrot.slane %v1210, %v1223
        %v1225 = vcombine.high %v1217, %v1217
        %v1226 = vcombine.high %v1224, %v1224
        %v1227 = vcombine.high %v267, %v267
        %v1229 = vunpack.c.l.s4 1983009808
        %v1230 = vunpack.c.0.s8 %v1229
        %v1231 = vlaneseq
        %v1232 = vshrl.u32 %v1231, 7
        %v1233 = vsub.s32 %v1230, %v1232
        %v1234 = vrot.slane %v267, %v1233
        %v1236 = vunpack.c.l.s4 1983009808
        %v1237 = vunpack.c.0.s8 %v1236
        %v1238 = vlaneseq
        %v1239 = vshrl.u32 %v1238, 7
        %v1240 = vsub.s32 %v1237, %v1239
        %v1241 = vrot.slane %v1227, %v1240
        %v1242 = vcombine.high %v1234, %v1234
        %v1243 = vcombine.high %v1241, %v1241
        %v1244 = vcombine.high %v268, %v268
        %v1246 = vunpack.c.l.s4 1983009808
        %v1247 = vunpack.c.0.s8 %v1246
        %v1248 = vlaneseq
        %v1249 = vshrl.u32 %v1248, 7
        %v1250 = vsub.s32 %v1247, %v1249
        %v1251 = vrot.slane %v268, %v1250
        %v1253 = vunpack.c.l.s4 1983009808
        %v1254 = vunpack.c.0.s8 %v1253
        %v1255 = vlaneseq
        %v1256 = vshrl.u32 %v1255, 7
        %v1257 = vsub.s32 %v1254, %v1256
        %v1258 = vrot.slane %v1244, %v1257
        %v1259 = vcombine.high %v1251, %v1251
        %v1260 = vcombine.high %v1258, %v1258
        %v1261 = vcombine.high %v269, %v269
        %v1263 = vunpack.c.l.s4 1983009808
        %v1264 = vunpack.c.0.s8 %v1263
        %v1265 = vlaneseq
        %v1266 = vshrl.u32 %v1265, 7
        %v1267 = vsub.s32 %v1264, %v1266
        %v1268 = vrot.slane %v269, %v1267
        %v1270 = vunpack.c.l.s4 1983009808
        %v1271 = vunpack.c.0.s8 %v1270
        %v1272 = vlaneseq
        %v1273 = vshrl.u32 %v1272, 7
        %v1274 = vsub.s32 %v1271, %v1273
        %v1275 = vrot.slane %v1261, %v1274
        %v1276 = vcombine.high %v1268, %v1268
        %v1277 = vcombine.high %v1275, %v1275
        %v1278 = vcombine.high %v270, %v270
        %v1280 = vunpack.c.l.s4 1983009808
        %v1281 = vunpack.c.0.s8 %v1280
        %v1282 = vlaneseq
        %v1283 = vshrl.u32 %v1282, 7
        %v1284 = vsub.s32 %v1281, %v1283
        %v1285 = vrot.slane %v270, %v1284
        %v1287 = vunpack.c.l.s4 1983009808
        %v1288 = vunpack.c.0.s8 %v1287
        %v1289 = vlaneseq
        %v1290 = vshrl.u32 %v1289, 7
        %v1291 = vsub.s32 %v1288, %v1290
        %v1292 = vrot.slane %v1278, %v1291
        %v1293 = vcombine.high %v1285, %v1285
        %v1294 = vcombine.high %v1292, %v1292
        %v1295 = vcombine.high %v271, %v271
        %v1297 = vunpack.c.l.s4 1983009808
        %v1298 = vunpack.c.0.s8 %v1297
        %v1299 = vlaneseq
        %v1300 = vshrl.u32 %v1299, 7
        %v1301 = vsub.s32 %v1298, %v1300
        %v1302 = vrot.slane %v271, %v1301
        %v1304 = vunpack.c.l.s4 1983009808
        %v1305 = vunpack.c.0.s8 %v1304
        %v1306 = vlaneseq
        %v1307 = vshrl.u32 %v1306, 7
        %v1308 = vsub.s32 %v1305, %v1307
        %v1309 = vrot.slane %v1295, %v1308
        %v1310 = vcombine.high %v1302, %v1302
        %v1311 = vcombine.high %v1309, %v1309
        %v1312 = vcombine.high %v272, %v272
        %v1314 = vunpack.c.l.s4 1983009808
        %v1315 = vunpack.c.0.s8 %v1314
        %v1316 = vlaneseq
        %v1317 = vshrl.u32 %v1316, 7
        %v1318 = vsub.s32 %v1315, %v1317
        %v1319 = vrot.slane %v272, %v1318
        %v1321 = vunpack.c.l.s4 1983009808
        %v1322 = vunpack.c.0.s8 %v1321
        %v1323 = vlaneseq
        %v1324 = vshrl.u32 %v1323, 7
        %v1325 = vsub.s32 %v1322, %v1324
        %v1326 = vrot.slane %v1312, %v1325
        %v1327 = vcombine.high %v1319, %v1319
        %v1328 = vcombine.high %v1326, %v1326
        %v1329 = vcombine.high %v273, %v273
        %v1331 = vunpack.c.l.s4 1983009808
        %v1332 = vunpack.c.0.s8 %v1331
        %v1333 = vlaneseq
        %v1334 = vshrl.u32 %v1333, 7
        %v1335 = vsub.s32 %v1332, %v1334
        %v1336 = vrot.slane %v273, %v1335
        %v1338 = vunpack.c.l.s4 1983009808
        %v1339 = vunpack.c.0.s8 %v1338
        %v1340 = vlaneseq
        %v1341 = vshrl.u32 %v1340, 7
        %v1342 = vsub.s32 %v1339, %v1341
        %v1343 = vrot.slane %v1329, %v1342
        %v1344 = vcombine.high %v1336, %v1336
        %v1345 = vcombine.high %v1343, %v1343
        %v1346 = vcombine.high %v274, %v274
        %v1348 = vunpack.c.l.s4 1983009808
        %v1349 = vunpack.c.0.s8 %v1348
        %v1350 = vlaneseq
        %v1351 = vshrl.u32 %v1350, 7
        %v1352 = vsub.s32 %v1349, %v1351
        %v1353 = vrot.slane %v274, %v1352
        %v1355 = vunpack.c.l.s4 1983009808
        %v1356 = vunpack.c.0.s8 %v1355
        %v1357 = vlaneseq
        %v1358 = vshrl.u32 %v1357, 7
        %v1359 = vsub.s32 %v1356, %v1358
        %v1360 = vrot.slane %v1346, %v1359
        %v1361 = vcombine.high %v1353, %v1353
        %v1362 = vcombine.high %v1360, %v1360
        %v1363 = vcombine.high %v275, %v275
        %v1365 = vunpack.c.l.s4 1983009808
        %v1366 = vunpack.c.0.s8 %v1365
        %v1367 = vlaneseq
        %v1368 = vshrl.u32 %v1367, 7
        %v1369 = vsub.s32 %v1366, %v1368
        %v1370 = vrot.slane %v275, %v1369
        %v1372 = vunpack.c.l.s4 1983009808
        %v1373 = vunpack.c.0.s8 %v1372
        %v1374 = vlaneseq
        %v1375 = vshrl.u32 %v1374, 7
        %v1376 = vsub.s32 %v1373, %v1375
        %v1377 = vrot.slane %v1363, %v1376
        %v1378 = vcombine.high %v1370, %v1370
        %v1379 = vcombine.high %v1377, %v1377
        %v1380 = vcombine.high %v276, %v276
        %v1382 = vunpack.c.l.s4 1983009808
        %v1383 = vunpack.c.0.s8 %v1382
        %v1384 = vlaneseq
        %v1385 = vshrl.u32 %v1384, 7
        %v1386 = vsub.s32 %v1383, %v1385
        %v1387 = vrot.slane %v276, %v1386
        %v1389 = vunpack.c.l.s4 1983009808
        %v1390 = vunpack.c.0.s8 %v1389
        %v1391 = vlaneseq
        %v1392 = vshrl.u32 %v1391, 7
        %v1393 = vsub.s32 %v1390, %v1392
        %v1394 = vrot.slane %v1380, %v1393
        %v1395 = vcombine.high %v1387, %v1387
        %v1396 = vcombine.high %v1394, %v1394
        %v1397 = vcombine.high %v277, %v277
        %v1399 = vunpack.c.l.s4 1983009808
        %v1400 = vunpack.c.0.s8 %v1399
        %v1401 = vlaneseq
        %v1402 = vshrl.u32 %v1401, 7
        %v1403 = vsub.s32 %v1400, %v1402
        %v1404 = vrot.slane %v277, %v1403
        %v1406 = vunpack.c.l.s4 1983009808
        %v1407 = vunpack.c.0.s8 %v1406
        %v1408 = vlaneseq
        %v1409 = vshrl.u32 %v1408, 7
        %v1410 = vsub.s32 %v1407, %v1409
        %v1411 = vrot.slane %v1397, %v1410
        %v1412 = vcombine.high %v1404, %v1404
        %v1413 = vcombine.high %v1411, %v1411
        %v1414 = vcombine.high %v278, %v278
        %v1416 = vunpack.c.l.s4 1983009808
        %v1417 = vunpack.c.0.s8 %v1416
        %v1418 = vlaneseq
        %v1419 = vshrl.u32 %v1418, 7
        %v1420 = vsub.s32 %v1417, %v1419
        %v1421 = vrot.slane %v278, %v1420
        %v1423 = vunpack.c.l.s4 1983009808
        %v1424 = vunpack.c.0.s8 %v1423
        %v1425 = vlaneseq
        %v1426 = vshrl.u32 %v1425, 7
        %v1427 = vsub.s32 %v1424, %v1426
        %v1428 = vrot.slane %v1414, %v1427
        %v1429 = vcombine.high %v1421, %v1421
        %v1430 = vcombine.high %v1428, %v1428
        %v1431 = vcombine.high %v279, %v279
        %v1433 = vunpack.c.l.s4 1983009808
        %v1434 = vunpack.c.0.s8 %v1433
        %v1435 = vlaneseq
        %v1436 = vshrl.u32 %v1435, 7
        %v1437 = vsub.s32 %v1434, %v1436
        %v1438 = vrot.slane %v279, %v1437
        %v1440 = vunpack.c.l.s4 1983009808
        %v1441 = vunpack.c.0.s8 %v1440
        %v1442 = vlaneseq
        %v1443 = vshrl.u32 %v1442, 7
        %v1444 = vsub.s32 %v1441, %v1443
        %v1445 = vrot.slane %v1431, %v1444
        %v1446 = vcombine.high %v1438, %v1438
        %v1447 = vcombine.high %v1445, %v1445
        %v1448 = vcombine.high %v280, %v280
        %v1450 = vunpack.c.l.s4 1983009808
        %v1451 = vunpack.c.0.s8 %v1450
        %v1452 = vlaneseq
        %v1453 = vshrl.u32 %v1452, 7
        %v1454 = vsub.s32 %v1451, %v1453
        %v1455 = vrot.slane %v280, %v1454
        %v1457 = vunpack.c.l.s4 1983009808
        %v1458 = vunpack.c.0.s8 %v1457
        %v1459 = vlaneseq
        %v1460 = vshrl.u32 %v1459, 7
        %v1461 = vsub.s32 %v1458, %v1460
        %v1462 = vrot.slane %v1448, %v1461
        %v1463 = vcombine.high %v1455, %v1455
        %v1464 = vcombine.high %v1462, %v1462
        %v1465 = vcombine.high %v281, %v281
        %v1467 = vunpack.c.l.s4 1983009808
        %v1468 = vunpack.c.0.s8 %v1467
        %v1469 = vlaneseq
        %v1470 = vshrl.u32 %v1469, 7
        %v1471 = vsub.s32 %v1468, %v1470
        %v1472 = vrot.slane %v281, %v1471
        %v1474 = vunpack.c.l.s4 1983009808
        %v1475 = vunpack.c.0.s8 %v1474
        %v1476 = vlaneseq
        %v1477 = vshrl.u32 %v1476, 7
        %v1478 = vsub.s32 %v1475, %v1477
        %v1479 = vrot.slane %v1465, %v1478
        %v1480 = vcombine.high %v1472, %v1472
        %v1481 = vcombine.high %v1479, %v1479
        %v1482 = vcombine.high %v282, %v282
        %v1484 = vunpack.c.l.s4 1983009808
        %v1485 = vunpack.c.0.s8 %v1484
        %v1486 = vlaneseq
        %v1487 = vshrl.u32 %v1486, 7
        %v1488 = vsub.s32 %v1485, %v1487
        %v1489 = vrot.slane %v282, %v1488
        %v1491 = vunpack.c.l.s4 1983009808
        %v1492 = vunpack.c.0.s8 %v1491
        %v1493 = vlaneseq
        %v1494 = vshrl.u32 %v1493, 7
        %v1495 = vsub.s32 %v1492, %v1494
        %v1496 = vrot.slane %v1482, %v1495
        %v1497 = vcombine.high %v1489, %v1489
        %v1498 = vcombine.high %v1496, %v1496
        %v1499 = vcombine.high %v283, %v283
        %v1501 = vunpack.c.l.s4 1983009808
        %v1502 = vunpack.c.0.s8 %v1501
        %v1503 = vlaneseq
        %v1504 = vshrl.u32 %v1503, 7
        %v1505 = vsub.s32 %v1502, %v1504
        %v1506 = vrot.slane %v283, %v1505
        %v1508 = vunpack.c.l.s4 1983009808
        %v1509 = vunpack.c.0.s8 %v1508
        %v1510 = vlaneseq
        %v1511 = vshrl.u32 %v1510, 7
        %v1512 = vsub.s32 %v1509, %v1511
        %v1513 = vrot.slane %v1499, %v1512
        %v1514 = vcombine.high %v1506, %v1506
        %v1515 = vcombine.high %v1513, %v1513
        %v1516 = vcombine.high %v284, %v284
        %v1518 = vunpack.c.l.s4 1983009808
        %v1519 = vunpack.c.0.s8 %v1518
        %v1520 = vlaneseq
        %v1521 = vshrl.u32 %v1520, 7
        %v1522 = vsub.s32 %v1519, %v1521
        %v1523 = vrot.slane %v284, %v1522
        %v1525 = vunpack.c.l.s4 1983009808
        %v1526 = vunpack.c.0.s8 %v1525
        %v1527 = vlaneseq
        %v1528 = vshrl.u32 %v1527, 7
        %v1529 = vsub.s32 %v1526, %v1528
        %v1530 = vrot.slane %v1516, %v1529
        %v1531 = vcombine.high %v1523, %v1523
        %v1532 = vcombine.high %v1530, %v1530
        %1725 = vmatprep.subr.mxu0 %v286
        %1726 = vmatpush1.xpose.msra.mxu0 %v285
        %1727 = vmatprep.subr.mxu0 %v478
        %1728 = vmatpush1.xpose.msra.mxu0 %v477
        %1729 = vmatprep.subr.mxu0 0.0
        %1730 = vmatpush1.xpose.msra.mxu0 0.0
        %1731 = vmatprep.subr.mxu0 0.0
        %1732 = vmatpush1.xpose.msra.mxu0 0.0
        %1733 = vmatprep.subr.mxu0 0.0
        %1734 = vmatpush1.xpose.msra.mxu0 0.0
        %1735 = vmatprep.subr.mxu0 0.0
        %1736 = vmatpush1.xpose.msra.mxu0 0.0
        %1737 = vmatprep.subr.mxu0 0.0
        %1738 = vmatpush1.xpose.msra.mxu0 0.0
        %1739 = vmatprep.subr.mxu0 0.0
        %1740 = vmatpush1.xpose.msra.mxu0 0.0
        %1741 = vmatprep.subr.mxu0 0.0
        %1742 = vmatpush1.xpose.msra.mxu0 0.0
        %1743 = vmatprep.subr.mxu0 0.0
        %1744 = vmatpush1.xpose.msra.mxu0 0.0
        %1745 = vmatprep.subr.mxu0 0.0
        %1746 = vmatpush1.xpose.msra.mxu0 0.0
        %1747 = vmatprep.subr.mxu0 0.0
        %1748 = vmatpush1.xpose.msra.mxu0 0.0
        %1749 = vmatprep.subr.mxu0 0.0
        %1750 = vmatpush1.xpose.msra.mxu0 0.0
        %1751 = vmatprep.subr.mxu0 0.0
        %1752 = vmatpush1.xpose.msra.mxu0 0.0
        %1753 = vmatprep.subr.mxu0 0.0
        %1754 = vmatpush1.xpose.msra.mxu0 0.0
        %1755 = vmatprep.subr.mxu0 0.0
        %1756 = vmatpush1.xpose.msra.mxu0 0.0
        %1757 = vmatprep.subr.mxu0 0.0
        %1758 = vmatpush1.xpose.msra.mxu0 0.0
        %1759 = vmatprep.subr.mxu0 0.0
        %1760 = vmatpush1.xpose.msra.mxu0 0.0
        %1761 = vmatprep.subr.mxu0 0.0
        %1762 = vmatpush1.xpose.msra.mxu0 0.0
        %1763 = vmatprep.subr.mxu0 0.0
        %1764 = vmatpush1.xpose.msra.mxu0 0.0
        %1765 = vmatprep.subr.mxu0 0.0
        %1766 = vmatpush1.xpose.msra.mxu0 0.0
        %1767 = vmatprep.subr.mxu0 0.0
        %1768 = vmatpush1.xpose.msra.mxu0 0.0
        %1769 = vmatprep.subr.mxu0 0.0
        %1770 = vmatpush1.xpose.msra.mxu0 0.0
        %1771 = vmatprep.subr.mxu0 0.0
        %1772 = vmatpush1.xpose.msra.mxu0 0.0
        %1773 = vmatprep.subr.mxu0 0.0
        %1774 = vmatpush1.xpose.msra.mxu0 0.0
        %1775 = vmatprep.subr.mxu0 0.0
        %1776 = vmatpush1.xpose.msra.mxu0 0.0
        %1777 = vmatprep.subr.mxu0 0.0
        %1778 = vmatpush1.xpose.msra.mxu0 0.0
        %1779 = vmatprep.subr.mxu0 0.0
        %1780 = vmatpush1.xpose.msra.mxu0 0.0
        %1781 = vmatprep.subr.mxu0 0.0
        %1782 = vmatpush1.xpose.msra.mxu0 0.0
        %1783 = vmatprep.subr.mxu0 0.0
        %1784 = vmatpush1.xpose.msra.mxu0 0.0
        %1785 = vmatprep.subr.mxu0 0.0
        %1786 = vmatpush1.xpose.msra.mxu0 0.0
        %1787 = vmatprep.subr.mxu0 0.0
        %1788 = vmatpush1.xpose.msra.mxu0 0.0
        %1789 = vmatprep.mubr.f32.mxu0 %v732
        %1790 = vmatmul.mubr.f32.gmra.mrb[0].mxu0 %v724
        %v1791 = vpop.f32.mrb[0].mxu0
        %v1792 = vadd.f32 0.0, %v1791
        %v1793 = vpop.f32.mrb[0].mxu0
        %1794 = vdwg.mxu0
        %1795 = vmatprep.subr.mxu0 %v288
        %1796 = vmatpush1.xpose.msra.mxu0 %v287
        %1797 = vmatprep.subr.mxu0 %v480
        %1798 = vmatpush1.xpose.msra.mxu0 %v479
        %1799 = vmatprep.subr.mxu0 0.0
        %1800 = vmatpush1.xpose.msra.mxu0 0.0
        %1801 = vmatprep.subr.mxu0 0.0
        %1802 = vmatpush1.xpose.msra.mxu0 0.0
        %1803 = vmatprep.subr.mxu0 0.0
        %1804 = vmatpush1.xpose.msra.mxu0 0.0
        %1805 = vmatprep.subr.mxu0 0.0
        %1806 = vmatpush1.xpose.msra.mxu0 0.0
        %1807 = vmatprep.subr.mxu0 0.0
        %1808 = vmatpush1.xpose.msra.mxu0 0.0
        %1809 = vmatprep.subr.mxu0 0.0
        %1810 = vmatpush1.xpose.msra.mxu0 0.0
        %1811 = vmatprep.subr.mxu0 0.0
        %1812 = vmatpush1.xpose.msra.mxu0 0.0
        %1813 = vmatprep.subr.mxu0 0.0
        %1814 = vmatpush1.xpose.msra.mxu0 0.0
        %1815 = vmatprep.subr.mxu0 0.0
        %1816 = vmatpush1.xpose.msra.mxu0 0.0
        %1817 = vmatprep.subr.mxu0 0.0
        %1818 = vmatpush1.xpose.msra.mxu0 0.0
        %1819 = vmatprep.subr.mxu0 0.0
        %1820 = vmatpush1.xpose.msra.mxu0 0.0
        %1821 = vmatprep.subr.mxu0 0.0
        %1822 = vmatpush1.xpose.msra.mxu0 0.0
        %1823 = vmatprep.subr.mxu0 0.0
        %1824 = vmatpush1.xpose.msra.mxu0 0.0
        %1825 = vmatprep.subr.mxu0 0.0
        %1826 = vmatpush1.xpose.msra.mxu0 0.0
        %1827 = vmatprep.subr.mxu0 0.0
        %1828 = vmatpush1.xpose.msra.mxu0 0.0
        %1829 = vmatprep.subr.mxu0 0.0
        %1830 = vmatpush1.xpose.msra.mxu0 0.0
        %1831 = vmatprep.subr.mxu0 0.0
        %1832 = vmatpush1.xpose.msra.mxu0 0.0
        %1833 = vmatprep.subr.mxu0 0.0
        %1834 = vmatpush1.xpose.msra.mxu0 0.0
        %1835 = vmatprep.subr.mxu0 0.0
        %1836 = vmatpush1.xpose.msra.mxu0 0.0
        %1837 = vmatprep.subr.mxu0 0.0
        %1838 = vmatpush1.xpose.msra.mxu0 0.0
        %1839 = vmatprep.subr.mxu0 0.0
        %1840 = vmatpush1.xpose.msra.mxu0 0.0
        %1841 = vmatprep.subr.mxu0 0.0
        %1842 = vmatpush1.xpose.msra.mxu0 0.0
        %1843 = vmatprep.subr.mxu0 0.0
        %1844 = vmatpush1.xpose.msra.mxu0 0.0
        %1845 = vmatprep.subr.mxu0 0.0
        %1846 = vmatpush1.xpose.msra.mxu0 0.0
        %1847 = vmatprep.subr.mxu0 0.0
        %1848 = vmatpush1.xpose.msra.mxu0 0.0
        %1849 = vmatprep.subr.mxu0 0.0
        %1850 = vmatpush1.xpose.msra.mxu0 0.0
        %1851 = vmatprep.subr.mxu0 0.0
        %1852 = vmatpush1.xpose.msra.mxu0 0.0
        %1853 = vmatprep.subr.mxu0 0.0
        %1854 = vmatpush1.xpose.msra.mxu0 0.0
        %1855 = vmatprep.subr.mxu0 0.0
        %1856 = vmatpush1.xpose.msra.mxu0 0.0
        %1857 = vmatprep.subr.mxu0 0.0
        %1858 = vmatpush1.xpose.msra.mxu0 0.0
        %1859 = vmatprep.mubr.f32.mxu0 %v733
        %1860 = vmatmul.mubr.f32.gmra.mrb[0].mxu0 %v731
        %v1861 = vpop.f32.mrb[0].mxu0
        %v1862 = vadd.f32 %v1792, %v1861
        %v1863 = vpop.f32.mrb[0].mxu0
        %1864 = vdwg.mxu0
        %1865 = vmatprep.subr.mxu0 %v290
        %1866 = vmatpush1.xpose.msra.mxu0 %v289
        %1867 = vmatprep.subr.mxu0 %v482
        %1868 = vmatpush1.xpose.msra.mxu0 %v481
        %1869 = vmatprep.subr.mxu0 0.0
        %1870 = vmatpush1.xpose.msra.mxu0 0.0
        %1871 = vmatprep.subr.mxu0 0.0
        %1872 = vmatpush1.xpose.msra.mxu0 0.0
        %1873 = vmatprep.subr.mxu0 0.0
        %1874 = vmatpush1.xpose.msra.mxu0 0.0
        %1875 = vmatprep.subr.mxu0 0.0
        %1876 = vmatpush1.xpose.msra.mxu0 0.0
        %1877 = vmatprep.subr.mxu0 0.0
        %1878 = vmatpush1.xpose.msra.mxu0 0.0
        %1879 = vmatprep.subr.mxu0 0.0
        %1880 = vmatpush1.xpose.msra.mxu0 0.0
        %1881 = vmatprep.subr.mxu0 0.0
        %1882 = vmatpush1.xpose.msra.mxu0 0.0
        %1883 = vmatprep.subr.mxu0 0.0
        %1884 = vmatpush1.xpose.msra.mxu0 0.0
        %1885 = vmatprep.subr.mxu0 0.0
        %1886 = vmatpush1.xpose.msra.mxu0 0.0
        %1887 = vmatprep.subr.mxu0 0.0
        %1888 = vmatpush1.xpose.msra.mxu0 0.0
        %1889 = vmatprep.subr.mxu0 0.0
        %1890 = vmatpush1.xpose.msra.mxu0 0.0
        %1891 = vmatprep.subr.mxu0 0.0
        %1892 = vmatpush1.xpose.msra.mxu0 0.0
        %1893 = vmatprep.subr.mxu0 0.0
        %1894 = vmatpush1.xpose.msra.mxu0 0.0
        %1895 = vmatprep.subr.mxu0 0.0
        %1896 = vmatpush1.xpose.msra.mxu0 0.0
        %1897 = vmatprep.subr.mxu0 0.0
        %1898 = vmatpush1.xpose.msra.mxu0 0.0
        %1899 = vmatprep.subr.mxu0 0.0
        %1900 = vmatpush1.xpose.msra.mxu0 0.0
        %1901 = vmatprep.subr.mxu0 0.0
        %1902 = vmatpush1.xpose.msra.mxu0 0.0
        %1903 = vmatprep.subr.mxu0 0.0
        %1904 = vmatpush1.xpose.msra.mxu0 0.0
        %1905 = vmatprep.subr.mxu0 0.0
        %1906 = vmatpush1.xpose.msra.mxu0 0.0
        %1907 = vmatprep.subr.mxu0 0.0
        %1908 = vmatpush1.xpose.msra.mxu0 0.0
        %1909 = vmatprep.subr.mxu0 0.0
        %1910 = vmatpush1.xpose.msra.mxu0 0.0
        %1911 = vmatprep.subr.mxu0 0.0
        %1912 = vmatpush1.xpose.msra.mxu0 0.0
        %1913 = vmatprep.subr.mxu0 0.0
        %1914 = vmatpush1.xpose.msra.mxu0 0.0
        %1915 = vmatprep.subr.mxu0 0.0
        %1916 = vmatpush1.xpose.msra.mxu0 0.0
        %1917 = vmatprep.subr.mxu0 0.0
        %1918 = vmatpush1.xpose.msra.mxu0 0.0
        %1919 = vmatprep.subr.mxu0 0.0
        %1920 = vmatpush1.xpose.msra.mxu0 0.0
        %1921 = vmatprep.subr.mxu0 0.0
        %1922 = vmatpush1.xpose.msra.mxu0 0.0
        %1923 = vmatprep.subr.mxu0 0.0
        %1924 = vmatpush1.xpose.msra.mxu0 0.0
        %1925 = vmatprep.subr.mxu0 0.0
        %1926 = vmatpush1.xpose.msra.mxu0 0.0
        %1927 = vmatprep.subr.mxu0 0.0
        %1928 = vmatpush1.xpose.msra.mxu0 0.0
        %1929 = vmatprep.mubr.f32.mxu0 %v749
        %1930 = vmatmul.mubr.f32.gmra.mrb[0].mxu0 %v741
        %v1931 = vpop.f32.mrb[0].mxu0
        %v1932 = vadd.f32 %v1862, %v1931
        %v1933 = vpop.f32.mrb[0].mxu0
        %1934 = vdwg.mxu0
        %1935 = vmatprep.subr.mxu0 %v292
        %1936 = vmatpush1.xpose.msra.mxu0 %v291
        %1937 = vmatprep.subr.mxu0 %v484
        %1938 = vmatpush1.xpose.msra.mxu0 %v483
        %1939 = vmatprep.subr.mxu0 0.0
        %1940 = vmatpush1.xpose.msra.mxu0 0.0
        %1941 = vmatprep.subr.mxu0 0.0
        %1942 = vmatpush1.xpose.msra.mxu0 0.0
        %1943 = vmatprep.subr.mxu0 0.0
        %1944 = vmatpush1.xpose.msra.mxu0 0.0
        %1945 = vmatprep.subr.mxu0 0.0
        %1946 = vmatpush1.xpose.msra.mxu0 0.0
        %1947 = vmatprep.subr.mxu0 0.0
        %1948 = vmatpush1.xpose.msra.mxu0 0.0
        %1949 = vmatprep.subr.mxu0 0.0
        %1950 = vmatpush1.xpose.msra.mxu0 0.0
        %1951 = vmatprep.subr.mxu0 0.0
        %1952 = vmatpush1.xpose.msra.mxu0 0.0
        %1953 = vmatprep.subr.mxu0 0.0
        %1954 = vmatpush1.xpose.msra.mxu0 0.0
        %1955 = vmatprep.subr.mxu0 0.0
        %1956 = vmatpush1.xpose.msra.mxu0 0.0
        %1957 = vmatprep.subr.mxu0 0.0
        %1958 = vmatpush1.xpose.msra.mxu0 0.0
        %1959 = vmatprep.subr.mxu0 0.0
        %1960 = vmatpush1.xpose.msra.mxu0 0.0
        %1961 = vmatprep.subr.mxu0 0.0
        %1962 = vmatpush1.xpose.msra.mxu0 0.0
        %1963 = vmatprep.subr.mxu0 0.0
        %1964 = vmatpush1.xpose.msra.mxu0 0.0
        %1965 = vmatprep.subr.mxu0 0.0
        %1966 = vmatpush1.xpose.msra.mxu0 0.0
        %1967 = vmatprep.subr.mxu0 0.0
        %1968 = vmatpush1.xpose.msra.mxu0 0.0
        %1969 = vmatprep.subr.mxu0 0.0
        %1970 = vmatpush1.xpose.msra.mxu0 0.0
        %1971 = vmatprep.subr.mxu0 0.0
        %1972 = vmatpush1.xpose.msra.mxu0 0.0
        %1973 = vmatprep.subr.mxu0 0.0
        %1974 = vmatpush1.xpose.msra.mxu0 0.0
        %1975 = vmatprep.subr.mxu0 0.0
        %1976 = vmatpush1.xpose.msra.mxu0 0.0
        %1977 = vmatprep.subr.mxu0 0.0
        %1978 = vmatpush1.xpose.msra.mxu0 0.0
        %1979 = vmatprep.subr.mxu0 0.0
        %1980 = vmatpush1.xpose.msra.mxu0 0.0
        %1981 = vmatprep.subr.mxu0 0.0
        %1982 = vmatpush1.xpose.msra.mxu0 0.0
        %1983 = vmatprep.subr.mxu0 0.0
        %1984 = vmatpush1.xpose.msra.mxu0 0.0
        %1985 = vmatprep.subr.mxu0 0.0
        %1986 = vmatpush1.xpose.msra.mxu0 0.0
        %1987 = vmatprep.subr.mxu0 0.0
        %1988 = vmatpush1.xpose.msra.mxu0 0.0
        %1989 = vmatprep.subr.mxu0 0.0
        %1990 = vmatpush1.xpose.msra.mxu0 0.0
        %1991 = vmatprep.subr.mxu0 0.0
        %1992 = vmatpush1.xpose.msra.mxu0 0.0
        %1993 = vmatprep.subr.mxu0 0.0
        %1994 = vmatpush1.xpose.msra.mxu0 0.0
        %1995 = vmatprep.subr.mxu0 0.0
        %1996 = vmatpush1.xpose.msra.mxu0 0.0
        %1997 = vmatprep.subr.mxu0 0.0
        %1998 = vmatpush1.xpose.msra.mxu0 0.0
        %1999 = vmatprep.mubr.f32.mxu0 %v750
        %2000 = vmatmul.mubr.f32.gmra.mrb[0].mxu0 %v748
        %v2001 = vpop.f32.mrb[0].mxu0
        %v2002 = vadd.f32 %v1932, %v2001
        %v2003 = vpop.f32.mrb[0].mxu0
        %2004 = vdwg.mxu0
        %2005 = vmatprep.subr.mxu0 %v294
        %2006 = vmatpush1.xpose.msra.mxu0 %v293
        %2007 = vmatprep.subr.mxu0 %v486
        %2008 = vmatpush1.xpose.msra.mxu0 %v485
        %2009 = vmatprep.subr.mxu0 0.0
        %2010 = vmatpush1.xpose.msra.mxu0 0.0
        %2011 = vmatprep.subr.mxu0 0.0
        %2012 = vmatpush1.xpose.msra.mxu0 0.0
        %2013 = vmatprep.subr.mxu0 0.0
        %2014 = vmatpush1.xpose.msra.mxu0 0.0
        %2015 = vmatprep.subr.mxu0 0.0
        %2016 = vmatpush1.xpose.msra.mxu0 0.0
        %2017 = vmatprep.subr.mxu0 0.0
        %2018 = vmatpush1.xpose.msra.mxu0 0.0
        %2019 = vmatprep.subr.mxu0 0.0
        %2020 = vmatpush1.xpose.msra.mxu0 0.0
        %2021 = vmatprep.subr.mxu0 0.0
        %2022 = vmatpush1.xpose.msra.mxu0 0.0
        %2023 = vmatprep.subr.mxu0 0.0
        %2024 = vmatpush1.xpose.msra.mxu0 0.0
        %2025 = vmatprep.subr.mxu0 0.0
        %2026 = vmatpush1.xpose.msra.mxu0 0.0
        %2027 = vmatprep.subr.mxu0 0.0
        %2028 = vmatpush1.xpose.msra.mxu0 0.0
        %2029 = vmatprep.subr.mxu0 0.0
        %2030 = vmatpush1.xpose.msra.mxu0 0.0
        %2031 = vmatprep.subr.mxu0 0.0
        %2032 = vmatpush1.xpose.msra.mxu0 0.0
        %2033 = vmatprep.subr.mxu0 0.0
        %2034 = vmatpush1.xpose.msra.mxu0 0.0
        %2035 = vmatprep.subr.mxu0 0.0
        %2036 = vmatpush1.xpose.msra.mxu0 0.0
        %2037 = vmatprep.subr.mxu0 0.0
        %2038 = vmatpush1.xpose.msra.mxu0 0.0
        %2039 = vmatprep.subr.mxu0 0.0
        %2040 = vmatpush1.xpose.msra.mxu0 0.0
        %2041 = vmatprep.subr.mxu0 0.0
        %2042 = vmatpush1.xpose.msra.mxu0 0.0
        %2043 = vmatprep.subr.mxu0 0.0
        %2044 = vmatpush1.xpose.msra.mxu0 0.0
        %2045 = vmatprep.subr.mxu0 0.0
        %2046 = vmatpush1.xpose.msra.mxu0 0.0
        %2047 = vmatprep.subr.mxu0 0.0
        %2048 = vmatpush1.xpose.msra.mxu0 0.0
        %2049 = vmatprep.subr.mxu0 0.0
        %2050 = vmatpush1.xpose.msra.mxu0 0.0
        %2051 = vmatprep.subr.mxu0 0.0
        %2052 = vmatpush1.xpose.msra.mxu0 0.0
        %2053 = vmatprep.subr.mxu0 0.0
        %2054 = vmatpush1.xpose.msra.mxu0 0.0
        %2055 = vmatprep.subr.mxu0 0.0
        %2056 = vmatpush1.xpose.msra.mxu0 0.0
        %2057 = vmatprep.subr.mxu0 0.0
        %2058 = vmatpush1.xpose.msra.mxu0 0.0
        %2059 = vmatprep.subr.mxu0 0.0
        %2060 = vmatpush1.xpose.msra.mxu0 0.0
        %2061 = vmatprep.subr.mxu0 0.0
        %2062 = vmatpush1.xpose.msra.mxu0 0.0
        %2063 = vmatprep.subr.mxu0 0.0
        %2064 = vmatpush1.xpose.msra.mxu0 0.0
        %2065 = vmatprep.subr.mxu0 0.0
        %2066 = vmatpush1.xpose.msra.mxu0 0.0
        %2067 = vmatprep.subr.mxu0 0.0
        %2068 = vmatpush1.xpose.msra.mxu0 0.0
        %2069 = vmatprep.mubr.f32.mxu0 %v766
        %2070 = vmatmul.mubr.f32.gmra.mrb[0].mxu0 %v758
        %v2071 = vpop.f32.mrb[0].mxu0
        %v2072 = vadd.f32 %v2002, %v2071
        %v2073 = vpop.f32.mrb[0].mxu0
        %2074 = vdwg.mxu0
        %2075 = vmatprep.subr.mxu0 %v296
        %2076 = vmatpush1.xpose.msra.mxu0 %v295
        %2077 = vmatprep.subr.mxu0 %v488
        %2078 = vmatpush1.xpose.msra.mxu0 %v487
        %2079 = vmatprep.subr.mxu0 0.0
        %2080 = vmatpush1.xpose.msra.mxu0 0.0
        %2081 = vmatprep.subr.mxu0 0.0
        %2082 = vmatpush1.xpose.msra.mxu0 0.0
        %2083 = vmatprep.subr.mxu0 0.0
        %2084 = vmatpush1.xpose.msra.mxu0 0.0
        %2085 = vmatprep.subr.mxu0 0.0
        %2086 = vmatpush1.xpose.msra.mxu0 0.0
        %2087 = vmatprep.subr.mxu0 0.0
        %2088 = vmatpush1.xpose.msra.mxu0 0.0
        %2089 = vmatprep.subr.mxu0 0.0
        %2090 = vmatpush1.xpose.msra.mxu0 0.0
        %2091 = vmatprep.subr.mxu0 0.0
        %2092 = vmatpush1.xpose.msra.mxu0 0.0
        %2093 = vmatprep.subr.mxu0 0.0
        %2094 = vmatpush1.xpose.msra.mxu0 0.0
        %2095 = vmatprep.subr.mxu0 0.0
        %2096 = vmatpush1.xpose.msra.mxu0 0.0
        %2097 = vmatprep.subr.mxu0 0.0
        %2098 = vmatpush1.xpose.msra.mxu0 0.0
        %2099 = vmatprep.subr.mxu0 0.0
        %2100 = vmatpush1.xpose.msra.mxu0 0.0
        %2101 = vmatprep.subr.mxu0 0.0
        %2102 = vmatpush1.xpose.msra.mxu0 0.0
        %2103 = vmatprep.subr.mxu0 0.0
        %2104 = vmatpush1.xpose.msra.mxu0 0.0
        %2105 = vmatprep.subr.mxu0 0.0
        %2106 = vmatpush1.xpose.msra.mxu0 0.0
        %2107 = vmatprep.subr.mxu0 0.0
        %2108 = vmatpush1.xpose.msra.mxu0 0.0
        %2109 = vmatprep.subr.mxu0 0.0
        %2110 = vmatpush1.xpose.msra.mxu0 0.0
        %2111 = vmatprep.subr.mxu0 0.0
        %2112 = vmatpush1.xpose.msra.mxu0 0.0
        %2113 = vmatprep.subr.mxu0 0.0
        %2114 = vmatpush1.xpose.msra.mxu0 0.0
        %2115 = vmatprep.subr.mxu0 0.0
        %2116 = vmatpush1.xpose.msra.mxu0 0.0
        %2117 = vmatprep.subr.mxu0 0.0
        %2118 = vmatpush1.xpose.msra.mxu0 0.0
        %2119 = vmatprep.subr.mxu0 0.0
        %2120 = vmatpush1.xpose.msra.mxu0 0.0
        %2121 = vmatprep.subr.mxu0 0.0
        %2122 = vmatpush1.xpose.msra.mxu0 0.0
        %2123 = vmatprep.subr.mxu0 0.0
        %2124 = vmatpush1.xpose.msra.mxu0 0.0
        %2125 = vmatprep.subr.mxu0 0.0
        %2126 = vmatpush1.xpose.msra.mxu0 0.0
        %2127 = vmatprep.subr.mxu0 0.0
        %2128 = vmatpush1.xpose.msra.mxu0 0.0
        %2129 = vmatprep.subr.mxu0 0.0
        %2130 = vmatpush1.xpose.msra.mxu0 0.0
        %2131 = vmatprep.subr.mxu0 0.0
        %2132 = vmatpush1.xpose.msra.mxu0 0.0
        %2133 = vmatprep.subr.mxu0 0.0
        %2134 = vmatpush1.xpose.msra.mxu0 0.0
        %2135 = vmatprep.subr.mxu0 0.0
        %2136 = vmatpush1.xpose.msra.mxu0 0.0
        %2137 = vmatprep.subr.mxu0 0.0
        %2138 = vmatpush1.xpose.msra.mxu0 0.0
        %2139 = vmatprep.mubr.f32.mxu0 %v767
        %2140 = vmatmul.mubr.f32.gmra.mrb[0].mxu0 %v765
        %v2141 = vpop.f32.mrb[0].mxu0
        %v2142 = vadd.f32 %v2072, %v2141
        %v2143 = vpop.f32.mrb[0].mxu0
        %2144 = vdwg.mxu0
        %2145 = vmatprep.subr.mxu0 %v298
        %2146 = vmatpush1.xpose.msra.mxu0 %v297
        %2147 = vmatprep.subr.mxu0 %v490
        %2148 = vmatpush1.xpose.msra.mxu0 %v489
        %2149 = vmatprep.subr.mxu0 0.0
        %2150 = vmatpush1.xpose.msra.mxu0 0.0
        %2151 = vmatprep.subr.mxu0 0.0
        %2152 = vmatpush1.xpose.msra.mxu0 0.0
        %2153 = vmatprep.subr.mxu0 0.0
        %2154 = vmatpush1.xpose.msra.mxu0 0.0
        %2155 = vmatprep.subr.mxu0 0.0
        %2156 = vmatpush1.xpose.msra.mxu0 0.0
        %2157 = vmatprep.subr.mxu0 0.0
        %2158 = vmatpush1.xpose.msra.mxu0 0.0
        %2159 = vmatprep.subr.mxu0 0.0
        %2160 = vmatpush1.xpose.msra.mxu0 0.0
        %2161 = vmatprep.subr.mxu0 0.0
        %2162 = vmatpush1.xpose.msra.mxu0 0.0
        %2163 = vmatprep.subr.mxu0 0.0
        %2164 = vmatpush1.xpose.msra.mxu0 0.0
        %2165 = vmatprep.subr.mxu0 0.0
        %2166 = vmatpush1.xpose.msra.mxu0 0.0
        %2167 = vmatprep.subr.mxu0 0.0
        %2168 = vmatpush1.xpose.msra.mxu0 0.0
        %2169 = vmatprep.subr.mxu0 0.0
        %2170 = vmatpush1.xpose.msra.mxu0 0.0
        %2171 = vmatprep.subr.mxu0 0.0
        %2172 = vmatpush1.xpose.msra.mxu0 0.0
        %2173 = vmatprep.subr.mxu0 0.0
        %2174 = vmatpush1.xpose.msra.mxu0 0.0
        %2175 = vmatprep.subr.mxu0 0.0
        %2176 = vmatpush1.xpose.msra.mxu0 0.0
        %2177 = vmatprep.subr.mxu0 0.0
        %2178 = vmatpush1.xpose.msra.mxu0 0.0
        %2179 = vmatprep.subr.mxu0 0.0
        %2180 = vmatpush1.xpose.msra.mxu0 0.0
        %2181 = vmatprep.subr.mxu0 0.0
        %2182 = vmatpush1.xpose.msra.mxu0 0.0
        %2183 = vmatprep.subr.mxu0 0.0
        %2184 = vmatpush1.xpose.msra.mxu0 0.0
        %2185 = vmatprep.subr.mxu0 0.0
        %2186 = vmatpush1.xpose.msra.mxu0 0.0
        %2187 = vmatprep.subr.mxu0 0.0
        %2188 = vmatpush1.xpose.msra.mxu0 0.0
        %2189 = vmatprep.subr.mxu0 0.0
        %2190 = vmatpush1.xpose.msra.mxu0 0.0
        %2191 = vmatprep.subr.mxu0 0.0
        %2192 = vmatpush1.xpose.msra.mxu0 0.0
        %2193 = vmatprep.subr.mxu0 0.0
        %2194 = vmatpush1.xpose.msra.mxu0 0.0
        %2195 = vmatprep.subr.mxu0 0.0
        %2196 = vmatpush1.xpose.msra.mxu0 0.0
        %2197 = vmatprep.subr.mxu0 0.0
        %2198 = vmatpush1.xpose.msra.mxu0 0.0
        %2199 = vmatprep.subr.mxu0 0.0
        %2200 = vmatpush1.xpose.msra.mxu0 0.0
        %2201 = vmatprep.subr.mxu0 0.0
        %2202 = vmatpush1.xpose.msra.mxu0 0.0
        %2203 = vmatprep.subr.mxu0 0.0
        %2204 = vmatpush1.xpose.msra.mxu0 0.0
        %2205 = vmatprep.subr.mxu0 0.0
        %2206 = vmatpush1.xpose.msra.mxu0 0.0
        %2207 = vmatprep.subr.mxu0 0.0
        %2208 = vmatpush1.xpose.msra.mxu0 0.0
        %2209 = vmatprep.mubr.f32.mxu0 %v783
        %2210 = vmatmul.mubr.f32.gmra.mrb[0].mxu0 %v775
        %v2211 = vpop.f32.mrb[0].mxu0
        %v2212 = vadd.f32 %v2142, %v2211
        %v2213 = vpop.f32.mrb[0].mxu0
        %2214 = vdwg.mxu0
        %2215 = vmatprep.subr.mxu0 %v300
        %2216 = vmatpush1.xpose.msra.mxu0 %v299
        %2217 = vmatprep.subr.mxu0 %v492
        %2218 = vmatpush1.xpose.msra.mxu0 %v491
        %2219 = vmatprep.subr.mxu0 0.0
        %2220 = vmatpush1.xpose.msra.mxu0 0.0
        %2221 = vmatprep.subr.mxu0 0.0
        %2222 = vmatpush1.xpose.msra.mxu0 0.0
        %2223 = vmatprep.subr.mxu0 0.0
        %2224 = vmatpush1.xpose.msra.mxu0 0.0
        %2225 = vmatprep.subr.mxu0 0.0
        %2226 = vmatpush1.xpose.msra.mxu0 0.0
        %2227 = vmatprep.subr.mxu0 0.0
        %2228 = vmatpush1.xpose.msra.mxu0 0.0
        %2229 = vmatprep.subr.mxu0 0.0
        %2230 = vmatpush1.xpose.msra.mxu0 0.0
        %2231 = vmatprep.subr.mxu0 0.0
        %2232 = vmatpush1.xpose.msra.mxu0 0.0
        %2233 = vmatprep.subr.mxu0 0.0
        %2234 = vmatpush1.xpose.msra.mxu0 0.0
        %2235 = vmatprep.subr.mxu0 0.0
        %2236 = vmatpush1.xpose.msra.mxu0 0.0
        %2237 = vmatprep.subr.mxu0 0.0
        %2238 = vmatpush1.xpose.msra.mxu0 0.0
        %2239 = vmatprep.subr.mxu0 0.0
        %2240 = vmatpush1.xpose.msra.mxu0 0.0
        %2241 = vmatprep.subr.mxu0 0.0
        %2242 = vmatpush1.xpose.msra.mxu0 0.0
        %2243 = vmatprep.subr.mxu0 0.0
        %2244 = vmatpush1.xpose.msra.mxu0 0.0
        %2245 = vmatprep.subr.mxu0 0.0
        %2246 = vmatpush1.xpose.msra.mxu0 0.0
        %2247 = vmatprep.subr.mxu0 0.0
        %2248 = vmatpush1.xpose.msra.mxu0 0.0
        %2249 = vmatprep.subr.mxu0 0.0
        %2250 = vmatpush1.xpose.msra.mxu0 0.0
        %2251 = vmatprep.subr.mxu0 0.0
        %2252 = vmatpush1.xpose.msra.mxu0 0.0
        %2253 = vmatprep.subr.mxu0 0.0
        %2254 = vmatpush1.xpose.msra.mxu0 0.0
        %2255 = vmatprep.subr.mxu0 0.0
        %2256 = vmatpush1.xpose.msra.mxu0 0.0
        %2257 = vmatprep.subr.mxu0 0.0
        %2258 = vmatpush1.xpose.msra.mxu0 0.0
        %2259 = vmatprep.subr.mxu0 0.0
        %2260 = vmatpush1.xpose.msra.mxu0 0.0
        %2261 = vmatprep.subr.mxu0 0.0
        %2262 = vmatpush1.xpose.msra.mxu0 0.0
        %2263 = vmatprep.subr.mxu0 0.0
        %2264 = vmatpush1.xpose.msra.mxu0 0.0
        %2265 = vmatprep.subr.mxu0 0.0
        %2266 = vmatpush1.xpose.msra.mxu0 0.0
        %2267 = vmatprep.subr.mxu0 0.0
        %2268 = vmatpush1.xpose.msra.mxu0 0.0
        %2269 = vmatprep.subr.mxu0 0.0
        %2270 = vmatpush1.xpose.msra.mxu0 0.0
        %2271 = vmatprep.subr.mxu0 0.0
        %2272 = vmatpush1.xpose.msra.mxu0 0.0
        %2273 = vmatprep.subr.mxu0 0.0
        %2274 = vmatpush1.xpose.msra.mxu0 0.0
        %2275 = vmatprep.subr.mxu0 0.0
        %2276 = vmatpush1.xpose.msra.mxu0 0.0
        %2277 = vmatprep.subr.mxu0 0.0
        %2278 = vmatpush1.xpose.msra.mxu0 0.0
        %2279 = vmatprep.mubr.f32.mxu0 %v784
        %2280 = vmatmul.mubr.f32.gmra.mrb[0].mxu0 %v782
        %v2281 = vpop.f32.mrb[0].mxu0
        %v2282 = vadd.f32 %v2212, %v2281
        %v2283 = vpop.f32.mrb[0].mxu0
        %2284 = vdwg.mxu0
        %2285 = vmatprep.subr.mxu0 %v302
        %2286 = vmatpush1.xpose.msra.mxu0 %v301
        %2287 = vmatprep.subr.mxu0 %v494
        %2288 = vmatpush1.xpose.msra.mxu0 %v493
        %2289 = vmatprep.subr.mxu0 0.0
        %2290 = vmatpush1.xpose.msra.mxu0 0.0
        %2291 = vmatprep.subr.mxu0 0.0
        %2292 = vmatpush1.xpose.msra.mxu0 0.0
        %2293 = vmatprep.subr.mxu0 0.0
        %2294 = vmatpush1.xpose.msra.mxu0 0.0
        %2295 = vmatprep.subr.mxu0 0.0
        %2296 = vmatpush1.xpose.msra.mxu0 0.0
        %2297 = vmatprep.subr.mxu0 0.0
        %2298 = vmatpush1.xpose.msra.mxu0 0.0
        %2299 = vmatprep.subr.mxu0 0.0
        %2300 = vmatpush1.xpose.msra.mxu0 0.0
        %2301 = vmatprep.subr.mxu0 0.0
        %2302 = vmatpush1.xpose.msra.mxu0 0.0
        %2303 = vmatprep.subr.mxu0 0.0
        %2304 = vmatpush1.xpose.msra.mxu0 0.0
        %2305 = vmatprep.subr.mxu0 0.0
        %2306 = vmatpush1.xpose.msra.mxu0 0.0
        %2307 = vmatprep.subr.mxu0 0.0
        %2308 = vmatpush1.xpose.msra.mxu0 0.0
        %2309 = vmatprep.subr.mxu0 0.0
        %2310 = vmatpush1.xpose.msra.mxu0 0.0
        %2311 = vmatprep.subr.mxu0 0.0
        %2312 = vmatpush1.xpose.msra.mxu0 0.0
        %2313 = vmatprep.subr.mxu0 0.0
        %2314 = vmatpush1.xpose.msra.mxu0 0.0
        %2315 = vmatprep.subr.mxu0 0.0
        %2316 = vmatpush1.xpose.msra.mxu0 0.0
        %2317 = vmatprep.subr.mxu0 0.0
        %2318 = vmatpush1.xpose.msra.mxu0 0.0
        %2319 = vmatprep.subr.mxu0 0.0
        %2320 = vmatpush1.xpose.msra.mxu0 0.0
        %2321 = vmatprep.subr.mxu0 0.0
        %2322 = vmatpush1.xpose.msra.mxu0 0.0
        %2323 = vmatprep.subr.mxu0 0.0
        %2324 = vmatpush1.xpose.msra.mxu0 0.0
        %2325 = vmatprep.subr.mxu0 0.0
        %2326 = vmatpush1.xpose.msra.mxu0 0.0
        %2327 = vmatprep.subr.mxu0 0.0
        %2328 = vmatpush1.xpose.msra.mxu0 0.0
        %2329 = vmatprep.subr.mxu0 0.0
        %2330 = vmatpush1.xpose.msra.mxu0 0.0
        %2331 = vmatprep.subr.mxu0 0.0
        %2332 = vmatpush1.xpose.msra.mxu0 0.0
        %2333 = vmatprep.subr.mxu0 0.0
        %2334 = vmatpush1.xpose.msra.mxu0 0.0
        %2335 = vmatprep.subr.mxu0 0.0
        %2336 = vmatpush1.xpose.msra.mxu0 0.0
        %2337 = vmatprep.subr.mxu0 0.0
        %2338 = vmatpush1.xpose.msra.mxu0 0.0
        %2339 = vmatprep.subr.mxu0 0.0
        %2340 = vmatpush1.xpose.msra.mxu0 0.0
        %2341 = vmatprep.subr.mxu0 0.0
        %2342 = vmatpush1.xpose.msra.mxu0 0.0
        %2343 = vmatprep.subr.mxu0 0.0
        %2344 = vmatpush1.xpose.msra.mxu0 0.0
        %2345 = vmatprep.subr.mxu0 0.0
        %2346 = vmatpush1.xpose.msra.mxu0 0.0
        %2347 = vmatprep.subr.mxu0 0.0
        %2348 = vmatpush1.xpose.msra.mxu0 0.0
        %2349 = vmatprep.mubr.f32.mxu0 %v800
        %2350 = vmatmul.mubr.f32.gmra.mrb[0].mxu0 %v792
        %v2351 = vpop.f32.mrb[0].mxu0
        %v2352 = vadd.f32 %v2282, %v2351
        %v2353 = vpop.f32.mrb[0].mxu0
        %2354 = vdwg.mxu0
        %2355 = vmatprep.subr.mxu0 %v304
        %2356 = vmatpush1.xpose.msra.mxu0 %v303
        %2357 = vmatprep.subr.mxu0 %v496
        %2358 = vmatpush1.xpose.msra.mxu0 %v495
        %2359 = vmatprep.subr.mxu0 0.0
        %2360 = vmatpush1.xpose.msra.mxu0 0.0
        %2361 = vmatprep.subr.mxu0 0.0
        %2362 = vmatpush1.xpose.msra.mxu0 0.0
        %2363 = vmatprep.subr.mxu0 0.0
        %2364 = vmatpush1.xpose.msra.mxu0 0.0
        %2365 = vmatprep.subr.mxu0 0.0
        %2366 = vmatpush1.xpose.msra.mxu0 0.0
        %2367 = vmatprep.subr.mxu0 0.0
        %2368 = vmatpush1.xpose.msra.mxu0 0.0
        %2369 = vmatprep.subr.mxu0 0.0
        %2370 = vmatpush1.xpose.msra.mxu0 0.0
        %2371 = vmatprep.subr.mxu0 0.0
        %2372 = vmatpush1.xpose.msra.mxu0 0.0
        %2373 = vmatprep.subr.mxu0 0.0
        %2374 = vmatpush1.xpose.msra.mxu0 0.0
        %2375 = vmatprep.subr.mxu0 0.0
        %2376 = vmatpush1.xpose.msra.mxu0 0.0
        %2377 = vmatprep.subr.mxu0 0.0
        %2378 = vmatpush1.xpose.msra.mxu0 0.0
        %2379 = vmatprep.subr.mxu0 0.0
        %2380 = vmatpush1.xpose.msra.mxu0 0.0
        %2381 = vmatprep.subr.mxu0 0.0
        %2382 = vmatpush1.xpose.msra.mxu0 0.0
        %2383 = vmatprep.subr.mxu0 0.0
        %2384 = vmatpush1.xpose.msra.mxu0 0.0
        %2385 = vmatprep.subr.mxu0 0.0
        %2386 = vmatpush1.xpose.msra.mxu0 0.0
        %2387 = vmatprep.subr.mxu0 0.0
        %2388 = vmatpush1.xpose.msra.mxu0 0.0
        %2389 = vmatprep.subr.mxu0 0.0
        %2390 = vmatpush1.xpose.msra.mxu0 0.0
        %2391 = vmatprep.subr.mxu0 0.0
        %2392 = vmatpush1.xpose.msra.mxu0 0.0
        %2393 = vmatprep.subr.mxu0 0.0
        %2394 = vmatpush1.xpose.msra.mxu0 0.0
        %2395 = vmatprep.subr.mxu0 0.0
        %2396 = vmatpush1.xpose.msra.mxu0 0.0
        %2397 = vmatprep.subr.mxu0 0.0
        %2398 = vmatpush1.xpose.msra.mxu0 0.0
        %2399 = vmatprep.subr.mxu0 0.0
        %2400 = vmatpush1.xpose.msra.mxu0 0.0
        %2401 = vmatprep.subr.mxu0 0.0
        %2402 = vmatpush1.xpose.msra.mxu0 0.0
        %2403 = vmatprep.subr.mxu0 0.0
        %2404 = vmatpush1.xpose.msra.mxu0 0.0
        %2405 = vmatprep.subr.mxu0 0.0
        %2406 = vmatpush1.xpose.msra.mxu0 0.0
        %2407 = vmatprep.subr.mxu0 0.0
        %2408 = vmatpush1.xpose.msra.mxu0 0.0
        %2409 = vmatprep.subr.mxu0 0.0
        %2410 = vmatpush1.xpose.msra.mxu0 0.0
        %2411 = vmatprep.subr.mxu0 0.0
        %2412 = vmatpush1.xpose.msra.mxu0 0.0
        %2413 = vmatprep.subr.mxu0 0.0
        %2414 = vmatpush1.xpose.msra.mxu0 0.0
        %2415 = vmatprep.subr.mxu0 0.0
        %2416 = vmatpush1.xpose.msra.mxu0 0.0
        %2417 = vmatprep.subr.mxu0 0.0
        %2418 = vmatpush1.xpose.msra.mxu0 0.0
        %2419 = vmatprep.mubr.f32.mxu0 %v801
        %2420 = vmatmul.mubr.f32.gmra.mrb[0].mxu0 %v799
        %v2421 = vpop.f32.mrb[0].mxu0
        %v2422 = vadd.f32 %v2352, %v2421
        %v2423 = vpop.f32.mrb[0].mxu0
        %2424 = vdwg.mxu0
        %2425 = vmatprep.subr.mxu0 %v306
        %2426 = vmatpush1.xpose.msra.mxu0 %v305
        %2427 = vmatprep.subr.mxu0 %v498
        %2428 = vmatpush1.xpose.msra.mxu0 %v497
        %2429 = vmatprep.subr.mxu0 0.0
        %2430 = vmatpush1.xpose.msra.mxu0 0.0
        %2431 = vmatprep.subr.mxu0 0.0
        %2432 = vmatpush1.xpose.msra.mxu0 0.0
        %2433 = vmatprep.subr.mxu0 0.0
        %2434 = vmatpush1.xpose.msra.mxu0 0.0
        %2435 = vmatprep.subr.mxu0 0.0
        %2436 = vmatpush1.xpose.msra.mxu0 0.0
        %2437 = vmatprep.subr.mxu0 0.0
        %2438 = vmatpush1.xpose.msra.mxu0 0.0
        %2439 = vmatprep.subr.mxu0 0.0
        %2440 = vmatpush1.xpose.msra.mxu0 0.0
        %2441 = vmatprep.subr.mxu0 0.0
        %2442 = vmatpush1.xpose.msra.mxu0 0.0
        %2443 = vmatprep.subr.mxu0 0.0
        %2444 = vmatpush1.xpose.msra.mxu0 0.0
        %2445 = vmatprep.subr.mxu0 0.0
        %2446 = vmatpush1.xpose.msra.mxu0 0.0
        %2447 = vmatprep.subr.mxu0 0.0
        %2448 = vmatpush1.xpose.msra.mxu0 0.0
        %2449 = vmatprep.subr.mxu0 0.0
        %2450 = vmatpush1.xpose.msra.mxu0 0.0
        %2451 = vmatprep.subr.mxu0 0.0
        %2452 = vmatpush1.xpose.msra.mxu0 0.0
        %2453 = vmatprep.subr.mxu0 0.0
        %2454 = vmatpush1.xpose.msra.mxu0 0.0
        %2455 = vmatprep.subr.mxu0 0.0
        %2456 = vmatpush1.xpose.msra.mxu0 0.0
        %2457 = vmatprep.subr.mxu0 0.0
        %2458 = vmatpush1.xpose.msra.mxu0 0.0
        %2459 = vmatprep.subr.mxu0 0.0
        %2460 = vmatpush1.xpose.msra.mxu0 0.0
        %2461 = vmatprep.subr.mxu0 0.0
        %2462 = vmatpush1.xpose.msra.mxu0 0.0
        %2463 = vmatprep.subr.mxu0 0.0
        %2464 = vmatpush1.xpose.msra.mxu0 0.0
        %2465 = vmatprep.subr.mxu0 0.0
        %2466 = vmatpush1.xpose.msra.mxu0 0.0
        %2467 = vmatprep.subr.mxu0 0.0
        %2468 = vmatpush1.xpose.msra.mxu0 0.0
        %2469 = vmatprep.subr.mxu0 0.0
        %2470 = vmatpush1.xpose.msra.mxu0 0.0
        %2471 = vmatprep.subr.mxu0 0.0
        %2472 = vmatpush1.xpose.msra.mxu0 0.0
        %2473 = vmatprep.subr.mxu0 0.0
        %2474 = vmatpush1.xpose.msra.mxu0 0.0
        %2475 = vmatprep.subr.mxu0 0.0
        %2476 = vmatpush1.xpose.msra.mxu0 0.0
        %2477 = vmatprep.subr.mxu0 0.0
        %2478 = vmatpush1.xpose.msra.mxu0 0.0
        %2479 = vmatprep.subr.mxu0 0.0
        %2480 = vmatpush1.xpose.msra.mxu0 0.0
        %2481 = vmatprep.subr.mxu0 0.0
        %2482 = vmatpush1.xpose.msra.mxu0 0.0
        %2483 = vmatprep.subr.mxu0 0.0
        %2484 = vmatpush1.xpose.msra.mxu0 0.0
        %2485 = vmatprep.subr.mxu0 0.0
        %2486 = vmatpush1.xpose.msra.mxu0 0.0
        %2487 = vmatprep.subr.mxu0 0.0
        %2488 = vmatpush1.xpose.msra.mxu0 0.0
        %2489 = vmatprep.mubr.f32.mxu0 %v817
        %2490 = vmatmul.mubr.f32.gmra.mrb[0].mxu0 %v809
        %v2491 = vpop.f32.mrb[0].mxu0
        %v2492 = vadd.f32 %v2422, %v2491
        %v2493 = vpop.f32.mrb[0].mxu0
        %2494 = vdwg.mxu0
        %2495 = vmatprep.subr.mxu0 %v308
        %2496 = vmatpush1.xpose.msra.mxu0 %v307
        %2497 = vmatprep.subr.mxu0 %v500
        %2498 = vmatpush1.xpose.msra.mxu0 %v499
        %2499 = vmatprep.subr.mxu0 0.0
        %2500 = vmatpush1.xpose.msra.mxu0 0.0
        %2501 = vmatprep.subr.mxu0 0.0
        %2502 = vmatpush1.xpose.msra.mxu0 0.0
        %2503 = vmatprep.subr.mxu0 0.0
        %2504 = vmatpush1.xpose.msra.mxu0 0.0
        %2505 = vmatprep.subr.mxu0 0.0
        %2506 = vmatpush1.xpose.msra.mxu0 0.0
        %2507 = vmatprep.subr.mxu0 0.0
        %2508 = vmatpush1.xpose.msra.mxu0 0.0
        %2509 = vmatprep.subr.mxu0 0.0
        %2510 = vmatpush1.xpose.msra.mxu0 0.0
        %2511 = vmatprep.subr.mxu0 0.0
        %2512 = vmatpush1.xpose.msra.mxu0 0.0
        %2513 = vmatprep.subr.mxu0 0.0
        %2514 = vmatpush1.xpose.msra.mxu0 0.0
        %2515 = vmatprep.subr.mxu0 0.0
        %2516 = vmatpush1.xpose.msra.mxu0 0.0
        %2517 = vmatprep.subr.mxu0 0.0
        %2518 = vmatpush1.xpose.msra.mxu0 0.0
        %2519 = vmatprep.subr.mxu0 0.0
        %2520 = vmatpush1.xpose.msra.mxu0 0.0
        %2521 = vmatprep.subr.mxu0 0.0
        %2522 = vmatpush1.xpose.msra.mxu0 0.0
        %2523 = vmatprep.subr.mxu0 0.0
        %2524 = vmatpush1.xpose.msra.mxu0 0.0
        %2525 = vmatprep.subr.mxu0 0.0
        %2526 = vmatpush1.xpose.msra.mxu0 0.0
        %2527 = vmatprep.subr.mxu0 0.0
        %2528 = vmatpush1.xpose.msra.mxu0 0.0
        %2529 = vmatprep.subr.mxu0 0.0
        %2530 = vmatpush1.xpose.msra.mxu0 0.0
        %2531 = vmatprep.subr.mxu0 0.0
        %2532 = vmatpush1.xpose.msra.mxu0 0.0
        %2533 = vmatprep.subr.mxu0 0.0
        %2534 = vmatpush1.xpose.msra.mxu0 0.0
        %2535 = vmatprep.subr.mxu0 0.0
        %2536 = vmatpush1.xpose.msra.mxu0 0.0
        %2537 = vmatprep.subr.mxu0 0.0
        %2538 = vmatpush1.xpose.msra.mxu0 0.0
        %2539 = vmatprep.subr.mxu0 0.0
        %2540 = vmatpush1.xpose.msra.mxu0 0.0
        %2541 = vmatprep.subr.mxu0 0.0
        %2542 = vmatpush1.xpose.msra.mxu0 0.0
        %2543 = vmatprep.subr.mxu0 0.0
        %2544 = vmatpush1.xpose.msra.mxu0 0.0
        %2545 = vmatprep.subr.mxu0 0.0
        %2546 = vmatpush1.xpose.msra.mxu0 0.0
        %2547 = vmatprep.subr.mxu0 0.0
        %2548 = vmatpush1.xpose.msra.mxu0 0.0
        %2549 = vmatprep.subr.mxu0 0.0
        %2550 = vmatpush1.xpose.msra.mxu0 0.0
        %2551 = vmatprep.subr.mxu0 0.0
        %2552 = vmatpush1.xpose.msra.mxu0 0.0
        %2553 = vmatprep.subr.mxu0 0.0
        %2554 = vmatpush1.xpose.msra.mxu0 0.0
        %2555 = vmatprep.subr.mxu0 0.0
        %2556 = vmatpush1.xpose.msra.mxu0 0.0
        %2557 = vmatprep.subr.mxu0 0.0
        %2558 = vmatpush1.xpose.msra.mxu0 0.0
        %2559 = vmatprep.mubr.f32.mxu0 %v818
        %2560 = vmatmul.mubr.f32.gmra.mrb[0].mxu0 %v816
        %v2561 = vpop.f32.mrb[0].mxu0
        %v2562 = vadd.f32 %v2492, %v2561
        %v2563 = vpop.f32.mrb[0].mxu0
        %2564 = vdwg.mxu0
        %2565 = vmatprep.subr.mxu0 %v310
        %2566 = vmatpush1.xpose.msra.mxu0 %v309
        %2567 = vmatprep.subr.mxu0 %v502
        %2568 = vmatpush1.xpose.msra.mxu0 %v501
        %2569 = vmatprep.subr.mxu0 0.0
        %2570 = vmatpush1.xpose.msra.mxu0 0.0
        %2571 = vmatprep.subr.mxu0 0.0
        %2572 = vmatpush1.xpose.msra.mxu0 0.0
        %2573 = vmatprep.subr.mxu0 0.0
        %2574 = vmatpush1.xpose.msra.mxu0 0.0
        %2575 = vmatprep.subr.mxu0 0.0
        %2576 = vmatpush1.xpose.msra.mxu0 0.0
        %2577 = vmatprep.subr.mxu0 0.0
        %2578 = vmatpush1.xpose.msra.mxu0 0.0
        %2579 = vmatprep.subr.mxu0 0.0
        %2580 = vmatpush1.xpose.msra.mxu0 0.0
        %2581 = vmatprep.subr.mxu0 0.0
        %2582 = vmatpush1.xpose.msra.mxu0 0.0
        %2583 = vmatprep.subr.mxu0 0.0
        %2584 = vmatpush1.xpose.msra.mxu0 0.0
        %2585 = vmatprep.subr.mxu0 0.0
        %2586 = vmatpush1.xpose.msra.mxu0 0.0
        %2587 = vmatprep.subr.mxu0 0.0
        %2588 = vmatpush1.xpose.msra.mxu0 0.0
        %2589 = vmatprep.subr.mxu0 0.0
        %2590 = vmatpush1.xpose.msra.mxu0 0.0
        %2591 = vmatprep.subr.mxu0 0.0
        %2592 = vmatpush1.xpose.msra.mxu0 0.0
        %2593 = vmatprep.subr.mxu0 0.0
        %2594 = vmatpush1.xpose.msra.mxu0 0.0
        %2595 = vmatprep.subr.mxu0 0.0
        %2596 = vmatpush1.xpose.msra.mxu0 0.0
        %2597 = vmatprep.subr.mxu0 0.0
        %2598 = vmatpush1.xpose.msra.mxu0 0.0
        %2599 = vmatprep.subr.mxu0 0.0
        %2600 = vmatpush1.xpose.msra.mxu0 0.0
        %2601 = vmatprep.subr.mxu0 0.0
        %2602 = vmatpush1.xpose.msra.mxu0 0.0
        %2603 = vmatprep.subr.mxu0 0.0
        %2604 = vmatpush1.xpose.msra.mxu0 0.0
        %2605 = vmatprep.subr.mxu0 0.0
        %2606 = vmatpush1.xpose.msra.mxu0 0.0
        %2607 = vmatprep.subr.mxu0 0.0
        %2608 = vmatpush1.xpose.msra.mxu0 0.0
        %2609 = vmatprep.subr.mxu0 0.0
        %2610 = vmatpush1.xpose.msra.mxu0 0.0
        %2611 = vmatprep.subr.mxu0 0.0
        %2612 = vmatpush1.xpose.msra.mxu0 0.0
        %2613 = vmatprep.subr.mxu0 0.0
        %2614 = vmatpush1.xpose.msra.mxu0 0.0
        %2615 = vmatprep.subr.mxu0 0.0
        %2616 = vmatpush1.xpose.msra.mxu0 0.0
        %2617 = vmatprep.subr.mxu0 0.0
        %2618 = vmatpush1.xpose.msra.mxu0 0.0
        %2619 = vmatprep.subr.mxu0 0.0
        %2620 = vmatpush1.xpose.msra.mxu0 0.0
        %2621 = vmatprep.subr.mxu0 0.0
        %2622 = vmatpush1.xpose.msra.mxu0 0.0
        %2623 = vmatprep.subr.mxu0 0.0
        %2624 = vmatpush1.xpose.msra.mxu0 0.0
        %2625 = vmatprep.subr.mxu0 0.0
        %2626 = vmatpush1.xpose.msra.mxu0 0.0
        %2627 = vmatprep.subr.mxu0 0.0
        %2628 = vmatpush1.xpose.msra.mxu0 0.0
        %2629 = vmatprep.mubr.f32.mxu0 %v834
        %2630 = vmatmul.mubr.f32.gmra.mrb[0].mxu0 %v826
        %v2631 = vpop.f32.mrb[0].mxu0
        %v2632 = vadd.f32 %v2562, %v2631
        %v2633 = vpop.f32.mrb[0].mxu0
        %2634 = vdwg.mxu0
        %2635 = vmatprep.subr.mxu0 %v312
        %2636 = vmatpush1.xpose.msra.mxu0 %v311
        %2637 = vmatprep.subr.mxu0 %v504
        %2638 = vmatpush1.xpose.msra.mxu0 %v503
        %2639 = vmatprep.subr.mxu0 0.0
        %2640 = vmatpush1.xpose.msra.mxu0 0.0
        %2641 = vmatprep.subr.mxu0 0.0
        %2642 = vmatpush1.xpose.msra.mxu0 0.0
        %2643 = vmatprep.subr.mxu0 0.0
        %2644 = vmatpush1.xpose.msra.mxu0 0.0
        %2645 = vmatprep.subr.mxu0 0.0
        %2646 = vmatpush1.xpose.msra.mxu0 0.0
        %2647 = vmatprep.subr.mxu0 0.0
        %2648 = vmatpush1.xpose.msra.mxu0 0.0
        %2649 = vmatprep.subr.mxu0 0.0
        %2650 = vmatpush1.xpose.msra.mxu0 0.0
        %2651 = vmatprep.subr.mxu0 0.0
        %2652 = vmatpush1.xpose.msra.mxu0 0.0
        %2653 = vmatprep.subr.mxu0 0.0
        %2654 = vmatpush1.xpose.msra.mxu0 0.0
        %2655 = vmatprep.subr.mxu0 0.0
        %2656 = vmatpush1.xpose.msra.mxu0 0.0
        %2657 = vmatprep.subr.mxu0 0.0
        %2658 = vmatpush1.xpose.msra.mxu0 0.0
        %2659 = vmatprep.subr.mxu0 0.0
        %2660 = vmatpush1.xpose.msra.mxu0 0.0
        %2661 = vmatprep.subr.mxu0 0.0
        %2662 = vmatpush1.xpose.msra.mxu0 0.0
        %2663 = vmatprep.subr.mxu0 0.0
        %2664 = vmatpush1.xpose.msra.mxu0 0.0
        %2665 = vmatprep.subr.mxu0 0.0
        %2666 = vmatpush1.xpose.msra.mxu0 0.0
        %2667 = vmatprep.subr.mxu0 0.0
        %2668 = vmatpush1.xpose.msra.mxu0 0.0
        %2669 = vmatprep.subr.mxu0 0.0
        %2670 = vmatpush1.xpose.msra.mxu0 0.0
        %2671 = vmatprep.subr.mxu0 0.0
        %2672 = vmatpush1.xpose.msra.mxu0 0.0
        %2673 = vmatprep.subr.mxu0 0.0
        %2674 = vmatpush1.xpose.msra.mxu0 0.0
        %2675 = vmatprep.subr.mxu0 0.0
        %2676 = vmatpush1.xpose.msra.mxu0 0.0
        %2677 = vmatprep.subr.mxu0 0.0
        %2678 = vmatpush1.xpose.msra.mxu0 0.0
        %2679 = vmatprep.subr.mxu0 0.0
        %2680 = vmatpush1.xpose.msra.mxu0 0.0
        %2681 = vmatprep.subr.mxu0 0.0
        %2682 = vmatpush1.xpose.msra.mxu0 0.0
        %2683 = vmatprep.subr.mxu0 0.0
        %2684 = vmatpush1.xpose.msra.mxu0 0.0
        %2685 = vmatprep.subr.mxu0 0.0
        %2686 = vmatpush1.xpose.msra.mxu0 0.0
        %2687 = vmatprep.subr.mxu0 0.0
        %2688 = vmatpush1.xpose.msra.mxu0 0.0
        %2689 = vmatprep.subr.mxu0 0.0
        %2690 = vmatpush1.xpose.msra.mxu0 0.0
        %2691 = vmatprep.subr.mxu0 0.0
        %2692 = vmatpush1.xpose.msra.mxu0 0.0
        %2693 = vmatprep.subr.mxu0 0.0
        %2694 = vmatpush1.xpose.msra.mxu0 0.0
        %2695 = vmatprep.subr.mxu0 0.0
        %2696 = vmatpush1.xpose.msra.mxu0 0.0
        %2697 = vmatprep.subr.mxu0 0.0
        %2698 = vmatpush1.xpose.msra.mxu0 0.0
        %2699 = vmatprep.mubr.f32.mxu0 %v835
        %2700 = vmatmul.mubr.f32.gmra.mrb[0].mxu0 %v833
        %v2701 = vpop.f32.mrb[0].mxu0
        %v2702 = vadd.f32 %v2632, %v2701
        %v2703 = vpop.f32.mrb[0].mxu0
        %2704 = vdwg.mxu0
        %2705 = vmatprep.subr.mxu0 %v314
        %2706 = vmatpush1.xpose.msra.mxu0 %v313
        %2707 = vmatprep.subr.mxu0 %v506
        %2708 = vmatpush1.xpose.msra.mxu0 %v505
        %2709 = vmatprep.subr.mxu0 0.0
        %2710 = vmatpush1.xpose.msra.mxu0 0.0
        %2711 = vmatprep.subr.mxu0 0.0
        %2712 = vmatpush1.xpose.msra.mxu0 0.0
        %2713 = vmatprep.subr.mxu0 0.0
        %2714 = vmatpush1.xpose.msra.mxu0 0.0
        %2715 = vmatprep.subr.mxu0 0.0
        %2716 = vmatpush1.xpose.msra.mxu0 0.0
        %2717 = vmatprep.subr.mxu0 0.0
        %2718 = vmatpush1.xpose.msra.mxu0 0.0
        %2719 = vmatprep.subr.mxu0 0.0
        %2720 = vmatpush1.xpose.msra.mxu0 0.0
        %2721 = vmatprep.subr.mxu0 0.0
        %2722 = vmatpush1.xpose.msra.mxu0 0.0
        %2723 = vmatprep.subr.mxu0 0.0
        %2724 = vmatpush1.xpose.msra.mxu0 0.0
        %2725 = vmatprep.subr.mxu0 0.0
        %2726 = vmatpush1.xpose.msra.mxu0 0.0
        %2727 = vmatprep.subr.mxu0 0.0
        %2728 = vmatpush1.xpose.msra.mxu0 0.0
        %2729 = vmatprep.subr.mxu0 0.0
        %2730 = vmatpush1.xpose.msra.mxu0 0.0
        %2731 = vmatprep.subr.mxu0 0.0
        %2732 = vmatpush1.xpose.msra.mxu0 0.0
        %2733 = vmatprep.subr.mxu0 0.0
        %2734 = vmatpush1.xpose.msra.mxu0 0.0
        %2735 = vmatprep.subr.mxu0 0.0
        %2736 = vmatpush1.xpose.msra.mxu0 0.0
        %2737 = vmatprep.subr.mxu0 0.0
        %2738 = vmatpush1.xpose.msra.mxu0 0.0
        %2739 = vmatprep.subr.mxu0 0.0
        %2740 = vmatpush1.xpose.msra.mxu0 0.0
        %2741 = vmatprep.subr.mxu0 0.0
        %2742 = vmatpush1.xpose.msra.mxu0 0.0
        %2743 = vmatprep.subr.mxu0 0.0
        %2744 = vmatpush1.xpose.msra.mxu0 0.0
        %2745 = vmatprep.subr.mxu0 0.0
        %2746 = vmatpush1.xpose.msra.mxu0 0.0
        %2747 = vmatprep.subr.mxu0 0.0
        %2748 = vmatpush1.xpose.msra.mxu0 0.0
        %2749 = vmatprep.subr.mxu0 0.0
        %2750 = vmatpush1.xpose.msra.mxu0 0.0
        %2751 = vmatprep.subr.mxu0 0.0
        %2752 = vmatpush1.xpose.msra.mxu0 0.0
        %2753 = vmatprep.subr.mxu0 0.0
        %2754 = vmatpush1.xpose.msra.mxu0 0.0
        %2755 = vmatprep.subr.mxu0 0.0
        %2756 = vmatpush1.xpose.msra.mxu0 0.0
        %2757 = vmatprep.subr.mxu0 0.0
        %2758 = vmatpush1.xpose.msra.mxu0 0.0
        %2759 = vmatprep.subr.mxu0 0.0
        %2760 = vmatpush1.xpose.msra.mxu0 0.0
        %2761 = vmatprep.subr.mxu0 0.0
        %2762 = vmatpush1.xpose.msra.mxu0 0.0
        %2763 = vmatprep.subr.mxu0 0.0
        %2764 = vmatpush1.xpose.msra.mxu0 0.0
        %2765 = vmatprep.subr.mxu0 0.0
        %2766 = vmatpush1.xpose.msra.mxu0 0.0
        %2767 = vmatprep.subr.mxu0 0.0
        %2768 = vmatpush1.xpose.msra.mxu0 0.0
        %2769 = vmatprep.mubr.f32.mxu0 %v851
        %2770 = vmatmul.mubr.f32.gmra.mrb[0].mxu0 %v843
        %v2771 = vpop.f32.mrb[0].mxu0
        %v2772 = vadd.f32 %v2702, %v2771
        %v2773 = vpop.f32.mrb[0].mxu0
        %2774 = vdwg.mxu0
        %2775 = vmatprep.subr.mxu0 %v316
        %2776 = vmatpush1.xpose.msra.mxu0 %v315
        %2777 = vmatprep.subr.mxu0 %v508
        %2778 = vmatpush1.xpose.msra.mxu0 %v507
        %2779 = vmatprep.subr.mxu0 0.0
        %2780 = vmatpush1.xpose.msra.mxu0 0.0
        %2781 = vmatprep.subr.mxu0 0.0
        %2782 = vmatpush1.xpose.msra.mxu0 0.0
        %2783 = vmatprep.subr.mxu0 0.0
        %2784 = vmatpush1.xpose.msra.mxu0 0.0
        %2785 = vmatprep.subr.mxu0 0.0
        %2786 = vmatpush1.xpose.msra.mxu0 0.0
        %2787 = vmatprep.subr.mxu0 0.0
        %2788 = vmatpush1.xpose.msra.mxu0 0.0
        %2789 = vmatprep.subr.mxu0 0.0
        %2790 = vmatpush1.xpose.msra.mxu0 0.0
        %2791 = vmatprep.subr.mxu0 0.0
        %2792 = vmatpush1.xpose.msra.mxu0 0.0
        %2793 = vmatprep.subr.mxu0 0.0
        %2794 = vmatpush1.xpose.msra.mxu0 0.0
        %2795 = vmatprep.subr.mxu0 0.0
        %2796 = vmatpush1.xpose.msra.mxu0 0.0
        %2797 = vmatprep.subr.mxu0 0.0
        %2798 = vmatpush1.xpose.msra.mxu0 0.0
        %2799 = vmatprep.subr.mxu0 0.0
        %2800 = vmatpush1.xpose.msra.mxu0 0.0
        %2801 = vmatprep.subr.mxu0 0.0
        %2802 = vmatpush1.xpose.msra.mxu0 0.0
        %2803 = vmatprep.subr.mxu0 0.0
        %2804 = vmatpush1.xpose.msra.mxu0 0.0
        %2805 = vmatprep.subr.mxu0 0.0
        %2806 = vmatpush1.xpose.msra.mxu0 0.0
        %2807 = vmatprep.subr.mxu0 0.0
        %2808 = vmatpush1.xpose.msra.mxu0 0.0
        %2809 = vmatprep.subr.mxu0 0.0
        %2810 = vmatpush1.xpose.msra.mxu0 0.0
        %2811 = vmatprep.subr.mxu0 0.0
        %2812 = vmatpush1.xpose.msra.mxu0 0.0
        %2813 = vmatprep.subr.mxu0 0.0
        %2814 = vmatpush1.xpose.msra.mxu0 0.0
        %2815 = vmatprep.subr.mxu0 0.0
        %2816 = vmatpush1.xpose.msra.mxu0 0.0
        %2817 = vmatprep.subr.mxu0 0.0
        %2818 = vmatpush1.xpose.msra.mxu0 0.0
        %2819 = vmatprep.subr.mxu0 0.0
        %2820 = vmatpush1.xpose.msra.mxu0 0.0
        %2821 = vmatprep.subr.mxu0 0.0
        %2822 = vmatpush1.xpose.msra.mxu0 0.0
        %2823 = vmatprep.subr.mxu0 0.0
        %2824 = vmatpush1.xpose.msra.mxu0 0.0
        %2825 = vmatprep.subr.mxu0 0.0
        %2826 = vmatpush1.xpose.msra.mxu0 0.0
        %2827 = vmatprep.subr.mxu0 0.0
        %2828 = vmatpush1.xpose.msra.mxu0 0.0
        %2829 = vmatprep.subr.mxu0 0.0
        %2830 = vmatpush1.xpose.msra.mxu0 0.0
        %2831 = vmatprep.subr.mxu0 0.0
        %2832 = vmatpush1.xpose.msra.mxu0 0.0
        %2833 = vmatprep.subr.mxu0 0.0
        %2834 = vmatpush1.xpose.msra.mxu0 0.0
        %2835 = vmatprep.subr.mxu0 0.0
        %2836 = vmatpush1.xpose.msra.mxu0 0.0
        %2837 = vmatprep.subr.mxu0 0.0
        %2838 = vmatpush1.xpose.msra.mxu0 0.0
        %2839 = vmatprep.mubr.f32.mxu0 %v852
        %2840 = vmatmul.mubr.f32.gmra.mrb[0].mxu0 %v850
        %v2841 = vpop.f32.mrb[0].mxu0
        %v2842 = vadd.f32 %v2772, %v2841
        %v2843 = vpop.f32.mrb[0].mxu0
        %2844 = vdwg.mxu0
        %2845 = vmatprep.subr.mxu0 %v318
        %2846 = vmatpush1.xpose.msra.mxu0 %v317
        %2847 = vmatprep.subr.mxu0 %v510
        %2848 = vmatpush1.xpose.msra.mxu0 %v509
        %2849 = vmatprep.subr.mxu0 0.0
        %2850 = vmatpush1.xpose.msra.mxu0 0.0
        %2851 = vmatprep.subr.mxu0 0.0
        %2852 = vmatpush1.xpose.msra.mxu0 0.0
        %2853 = vmatprep.subr.mxu0 0.0
        %2854 = vmatpush1.xpose.msra.mxu0 0.0
        %2855 = vmatprep.subr.mxu0 0.0
        %2856 = vmatpush1.xpose.msra.mxu0 0.0
        %2857 = vmatprep.subr.mxu0 0.0
        %2858 = vmatpush1.xpose.msra.mxu0 0.0
        %2859 = vmatprep.subr.mxu0 0.0
        %2860 = vmatpush1.xpose.msra.mxu0 0.0
        %2861 = vmatprep.subr.mxu0 0.0
        %2862 = vmatpush1.xpose.msra.mxu0 0.0
        %2863 = vmatprep.subr.mxu0 0.0
        %2864 = vmatpush1.xpose.msra.mxu0 0.0
        %2865 = vmatprep.subr.mxu0 0.0
        %2866 = vmatpush1.xpose.msra.mxu0 0.0
        %2867 = vmatprep.subr.mxu0 0.0
        %2868 = vmatpush1.xpose.msra.mxu0 0.0
        %2869 = vmatprep.subr.mxu0 0.0
        %2870 = vmatpush1.xpose.msra.mxu0 0.0
        %2871 = vmatprep.subr.mxu0 0.0
        %2872 = vmatpush1.xpose.msra.mxu0 0.0
        %2873 = vmatprep.subr.mxu0 0.0
        %2874 = vmatpush1.xpose.msra.mxu0 0.0
        %2875 = vmatprep.subr.mxu0 0.0
        %2876 = vmatpush1.xpose.msra.mxu0 0.0
        %2877 = vmatprep.subr.mxu0 0.0
        %2878 = vmatpush1.xpose.msra.mxu0 0.0
        %2879 = vmatprep.subr.mxu0 0.0
        %2880 = vmatpush1.xpose.msra.mxu0 0.0
        %2881 = vmatprep.subr.mxu0 0.0
        %2882 = vmatpush1.xpose.msra.mxu0 0.0
        %2883 = vmatprep.subr.mxu0 0.0
        %2884 = vmatpush1.xpose.msra.mxu0 0.0
        %2885 = vmatprep.subr.mxu0 0.0
        %2886 = vmatpush1.xpose.msra.mxu0 0.0
        %2887 = vmatprep.subr.mxu0 0.0
        %2888 = vmatpush1.xpose.msra.mxu0 0.0
        %2889 = vmatprep.subr.mxu0 0.0
        %2890 = vmatpush1.xpose.msra.mxu0 0.0
        %2891 = vmatprep.subr.mxu0 0.0
        %2892 = vmatpush1.xpose.msra.mxu0 0.0
        %2893 = vmatprep.subr.mxu0 0.0
        %2894 = vmatpush1.xpose.msra.mxu0 0.0
        %2895 = vmatprep.subr.mxu0 0.0
        %2896 = vmatpush1.xpose.msra.mxu0 0.0
        %2897 = vmatprep.subr.mxu0 0.0
        %2898 = vmatpush1.xpose.msra.mxu0 0.0
        %2899 = vmatprep.subr.mxu0 0.0
        %2900 = vmatpush1.xpose.msra.mxu0 0.0
        %2901 = vmatprep.subr.mxu0 0.0
        %2902 = vmatpush1.xpose.msra.mxu0 0.0
        %2903 = vmatprep.subr.mxu0 0.0
        %2904 = vmatpush1.xpose.msra.mxu0 0.0
        %2905 = vmatprep.subr.mxu0 0.0
        %2906 = vmatpush1.xpose.msra.mxu0 0.0
        %2907 = vmatprep.subr.mxu0 0.0
        %2908 = vmatpush1.xpose.msra.mxu0 0.0
        %2909 = vmatprep.mubr.f32.mxu0 %v868
        %2910 = vmatmul.mubr.f32.gmra.mrb[0].mxu0 %v860
        %v2911 = vpop.f32.mrb[0].mxu0
        %v2912 = vadd.f32 %v2842, %v2911
        %v2913 = vpop.f32.mrb[0].mxu0
        %2914 = vdwg.mxu0
        %2915 = vmatprep.subr.mxu0 %v320
        %2916 = vmatpush1.xpose.msra.mxu0 %v319
        %2917 = vmatprep.subr.mxu0 %v512
        %2918 = vmatpush1.xpose.msra.mxu0 %v511
        %2919 = vmatprep.subr.mxu0 0.0
        %2920 = vmatpush1.xpose.msra.mxu0 0.0
        %2921 = vmatprep.subr.mxu0 0.0
        %2922 = vmatpush1.xpose.msra.mxu0 0.0
        %2923 = vmatprep.subr.mxu0 0.0
        %2924 = vmatpush1.xpose.msra.mxu0 0.0
        %2925 = vmatprep.subr.mxu0 0.0
        %2926 = vmatpush1.xpose.msra.mxu0 0.0
        %2927 = vmatprep.subr.mxu0 0.0
        %2928 = vmatpush1.xpose.msra.mxu0 0.0
        %2929 = vmatprep.subr.mxu0 0.0
        %2930 = vmatpush1.xpose.msra.mxu0 0.0
        %2931 = vmatprep.subr.mxu0 0.0
        %2932 = vmatpush1.xpose.msra.mxu0 0.0
        %2933 = vmatprep.subr.mxu0 0.0
        %2934 = vmatpush1.xpose.msra.mxu0 0.0
        %2935 = vmatprep.subr.mxu0 0.0
        %2936 = vmatpush1.xpose.msra.mxu0 0.0
        %2937 = vmatprep.subr.mxu0 0.0
        %2938 = vmatpush1.xpose.msra.mxu0 0.0
        %2939 = vmatprep.subr.mxu0 0.0
        %2940 = vmatpush1.xpose.msra.mxu0 0.0
        %2941 = vmatprep.subr.mxu0 0.0
        %2942 = vmatpush1.xpose.msra.mxu0 0.0
        %2943 = vmatprep.subr.mxu0 0.0
        %2944 = vmatpush1.xpose.msra.mxu0 0.0
        %2945 = vmatprep.subr.mxu0 0.0
        %2946 = vmatpush1.xpose.msra.mxu0 0.0
        %2947 = vmatprep.subr.mxu0 0.0
        %2948 = vmatpush1.xpose.msra.mxu0 0.0
        %2949 = vmatprep.subr.mxu0 0.0
        %2950 = vmatpush1.xpose.msra.mxu0 0.0
        %2951 = vmatprep.subr.mxu0 0.0
        %2952 = vmatpush1.xpose.msra.mxu0 0.0
        %2953 = vmatprep.subr.mxu0 0.0
        %2954 = vmatpush1.xpose.msra.mxu0 0.0
        %2955 = vmatprep.subr.mxu0 0.0
        %2956 = vmatpush1.xpose.msra.mxu0 0.0
        %2957 = vmatprep.subr.mxu0 0.0
        %2958 = vmatpush1.xpose.msra.mxu0 0.0
        %2959 = vmatprep.subr.mxu0 0.0
        %2960 = vmatpush1.xpose.msra.mxu0 0.0
        %2961 = vmatprep.subr.mxu0 0.0
        %2962 = vmatpush1.xpose.msra.mxu0 0.0
        %2963 = vmatprep.subr.mxu0 0.0
        %2964 = vmatpush1.xpose.msra.mxu0 0.0
        %2965 = vmatprep.subr.mxu0 0.0
        %2966 = vmatpush1.xpose.msra.mxu0 0.0
        %2967 = vmatprep.subr.mxu0 0.0
        %2968 = vmatpush1.xpose.msra.mxu0 0.0
        %2969 = vmatprep.subr.mxu0 0.0
        %2970 = vmatpush1.xpose.msra.mxu0 0.0
        %2971 = vmatprep.subr.mxu0 0.0
        %2972 = vmatpush1.xpose.msra.mxu0 0.0
        %2973 = vmatprep.subr.mxu0 0.0
        %2974 = vmatpush1.xpose.msra.mxu0 0.0
        %2975 = vmatprep.subr.mxu0 0.0
        %2976 = vmatpush1.xpose.msra.mxu0 0.0
        %2977 = vmatprep.subr.mxu0 0.0
        %2978 = vmatpush1.xpose.msra.mxu0 0.0
        %2979 = vmatprep.mubr.f32.mxu0 %v869
        %2980 = vmatmul.mubr.f32.gmra.mrb[0].mxu0 %v867
        %v2981 = vpop.f32.mrb[0].mxu0
        %v2982 = vadd.f32 %v2912, %v2981
        %v2983 = vpop.f32.mrb[0].mxu0
        %2984 = vdwg.mxu0
        %2985 = vmatprep.subr.mxu0 %v322
        %2986 = vmatpush1.xpose.msra.mxu0 %v321
        %2987 = vmatprep.subr.mxu0 %v514
        %2988 = vmatpush1.xpose.msra.mxu0 %v513
        %2989 = vmatprep.subr.mxu0 0.0
        %2990 = vmatpush1.xpose.msra.mxu0 0.0
        %2991 = vmatprep.subr.mxu0 0.0
        %2992 = vmatpush1.xpose.msra.mxu0 0.0
        %2993 = vmatprep.subr.mxu0 0.0
        %2994 = vmatpush1.xpose.msra.mxu0 0.0
        %2995 = vmatprep.subr.mxu0 0.0
        %2996 = vmatpush1.xpose.msra.mxu0 0.0
        %2997 = vmatprep.subr.mxu0 0.0
        %2998 = vmatpush1.xpose.msra.mxu0 0.0
        %2999 = vmatprep.subr.mxu0 0.0
        %3000 = vmatpush1.xpose.msra.mxu0 0.0
        %3001 = vmatprep.subr.mxu0 0.0
        %3002 = vmatpush1.xpose.msra.mxu0 0.0
        %3003 = vmatprep.subr.mxu0 0.0
        %3004 = vmatpush1.xpose.msra.mxu0 0.0
        %3005 = vmatprep.subr.mxu0 0.0
        %3006 = vmatpush1.xpose.msra.mxu0 0.0
        %3007 = vmatprep.subr.mxu0 0.0
        %3008 = vmatpush1.xpose.msra.mxu0 0.0
        %3009 = vmatprep.subr.mxu0 0.0
        %3010 = vmatpush1.xpose.msra.mxu0 0.0
        %3011 = vmatprep.subr.mxu0 0.0
        %3012 = vmatpush1.xpose.msra.mxu0 0.0
        %3013 = vmatprep.subr.mxu0 0.0
        %3014 = vmatpush1.xpose.msra.mxu0 0.0
        %3015 = vmatprep.subr.mxu0 0.0
        %3016 = vmatpush1.xpose.msra.mxu0 0.0
        %3017 = vmatprep.subr.mxu0 0.0
        %3018 = vmatpush1.xpose.msra.mxu0 0.0
        %3019 = vmatprep.subr.mxu0 0.0
        %3020 = vmatpush1.xpose.msra.mxu0 0.0
        %3021 = vmatprep.subr.mxu0 0.0
        %3022 = vmatpush1.xpose.msra.mxu0 0.0
        %3023 = vmatprep.subr.mxu0 0.0
        %3024 = vmatpush1.xpose.msra.mxu0 0.0
        %3025 = vmatprep.subr.mxu0 0.0
        %3026 = vmatpush1.xpose.msra.mxu0 0.0
        %3027 = vmatprep.subr.mxu0 0.0
        %3028 = vmatpush1.xpose.msra.mxu0 0.0
        %3029 = vmatprep.subr.mxu0 0.0
        %3030 = vmatpush1.xpose.msra.mxu0 0.0
        %3031 = vmatprep.subr.mxu0 0.0
        %3032 = vmatpush1.xpose.msra.mxu0 0.0
        %3033 = vmatprep.subr.mxu0 0.0
        %3034 = vmatpush1.xpose.msra.mxu0 0.0
        %3035 = vmatprep.subr.mxu0 0.0
        %3036 = vmatpush1.xpose.msra.mxu0 0.0
        %3037 = vmatprep.subr.mxu0 0.0
        %3038 = vmatpush1.xpose.msra.mxu0 0.0
        %3039 = vmatprep.subr.mxu0 0.0
        %3040 = vmatpush1.xpose.msra.mxu0 0.0
        %3041 = vmatprep.subr.mxu0 0.0
        %3042 = vmatpush1.xpose.msra.mxu0 0.0
        %3043 = vmatprep.subr.mxu0 0.0
        %3044 = vmatpush1.xpose.msra.mxu0 0.0
        %3045 = vmatprep.subr.mxu0 0.0
        %3046 = vmatpush1.xpose.msra.mxu0 0.0
        %3047 = vmatprep.subr.mxu0 0.0
        %3048 = vmatpush1.xpose.msra.mxu0 0.0
        %3049 = vmatprep.mubr.f32.mxu0 %v885
        %3050 = vmatmul.mubr.f32.gmra.mrb[0].mxu0 %v877
        %v3051 = vpop.f32.mrb[0].mxu0
        %v3052 = vadd.f32 %v2982, %v3051
        %v3053 = vpop.f32.mrb[0].mxu0
        %3054 = vdwg.mxu0
        %3055 = vmatprep.subr.mxu0 %v324
        %3056 = vmatpush1.xpose.msra.mxu0 %v323
        %3057 = vmatprep.subr.mxu0 %v516
        %3058 = vmatpush1.xpose.msra.mxu0 %v515
        %3059 = vmatprep.subr.mxu0 0.0
        %3060 = vmatpush1.xpose.msra.mxu0 0.0
        %3061 = vmatprep.subr.mxu0 0.0
        %3062 = vmatpush1.xpose.msra.mxu0 0.0
        %3063 = vmatprep.subr.mxu0 0.0
        %3064 = vmatpush1.xpose.msra.mxu0 0.0
        %3065 = vmatprep.subr.mxu0 0.0
        %3066 = vmatpush1.xpose.msra.mxu0 0.0
        %3067 = vmatprep.subr.mxu0 0.0
        %3068 = vmatpush1.xpose.msra.mxu0 0.0
        %3069 = vmatprep.subr.mxu0 0.0
        %3070 = vmatpush1.xpose.msra.mxu0 0.0
        %3071 = vmatprep.subr.mxu0 0.0
        %3072 = vmatpush1.xpose.msra.mxu0 0.0
        %3073 = vmatprep.subr.mxu0 0.0
        %3074 = vmatpush1.xpose.msra.mxu0 0.0
        %3075 = vmatprep.subr.mxu0 0.0
        %3076 = vmatpush1.xpose.msra.mxu0 0.0
        %3077 = vmatprep.subr.mxu0 0.0
        %3078 = vmatpush1.xpose.msra.mxu0 0.0
        %3079 = vmatprep.subr.mxu0 0.0
        %3080 = vmatpush1.xpose.msra.mxu0 0.0
        %3081 = vmatprep.subr.mxu0 0.0
        %3082 = vmatpush1.xpose.msra.mxu0 0.0
        %3083 = vmatprep.subr.mxu0 0.0
        %3084 = vmatpush1.xpose.msra.mxu0 0.0
        %3085 = vmatprep.subr.mxu0 0.0
        %3086 = vmatpush1.xpose.msra.mxu0 0.0
        %3087 = vmatprep.subr.mxu0 0.0
        %3088 = vmatpush1.xpose.msra.mxu0 0.0
        %3089 = vmatprep.subr.mxu0 0.0
        %3090 = vmatpush1.xpose.msra.mxu0 0.0
        %3091 = vmatprep.subr.mxu0 0.0
        %3092 = vmatpush1.xpose.msra.mxu0 0.0
        %3093 = vmatprep.subr.mxu0 0.0
        %3094 = vmatpush1.xpose.msra.mxu0 0.0
        %3095 = vmatprep.subr.mxu0 0.0
        %3096 = vmatpush1.xpose.msra.mxu0 0.0
        %3097 = vmatprep.subr.mxu0 0.0
        %3098 = vmatpush1.xpose.msra.mxu0 0.0
        %3099 = vmatprep.subr.mxu0 0.0
        %3100 = vmatpush1.xpose.msra.mxu0 0.0
        %3101 = vmatprep.subr.mxu0 0.0
        %3102 = vmatpush1.xpose.msra.mxu0 0.0
        %3103 = vmatprep.subr.mxu0 0.0
        %3104 = vmatpush1.xpose.msra.mxu0 0.0
        %3105 = vmatprep.subr.mxu0 0.0
        %3106 = vmatpush1.xpose.msra.mxu0 0.0
        %3107 = vmatprep.subr.mxu0 0.0
        %3108 = vmatpush1.xpose.msra.mxu0 0.0
        %3109 = vmatprep.subr.mxu0 0.0
        %3110 = vmatpush1.xpose.msra.mxu0 0.0
        %3111 = vmatprep.subr.mxu0 0.0
        %3112 = vmatpush1.xpose.msra.mxu0 0.0
        %3113 = vmatprep.subr.mxu0 0.0
        %3114 = vmatpush1.xpose.msra.mxu0 0.0
        %3115 = vmatprep.subr.mxu0 0.0
        %3116 = vmatpush1.xpose.msra.mxu0 0.0
        %3117 = vmatprep.subr.mxu0 0.0
        %3118 = vmatpush1.xpose.msra.mxu0 0.0
        %3119 = vmatprep.mubr.f32.mxu0 %v886
        %3120 = vmatmul.mubr.f32.gmra.mrb[0].mxu0 %v884
        %v3121 = vpop.f32.mrb[0].mxu0
        %v3122 = vadd.f32 %v3052, %v3121
        %v3123 = vpop.f32.mrb[0].mxu0
        %3124 = vdwg.mxu0
        %3125 = vmatprep.subr.mxu0 %v326
        %3126 = vmatpush1.xpose.msra.mxu0 %v325
        %3127 = vmatprep.subr.mxu0 %v518
        %3128 = vmatpush1.xpose.msra.mxu0 %v517
        %3129 = vmatprep.subr.mxu0 0.0
        %3130 = vmatpush1.xpose.msra.mxu0 0.0
        %3131 = vmatprep.subr.mxu0 0.0
        %3132 = vmatpush1.xpose.msra.mxu0 0.0
        %3133 = vmatprep.subr.mxu0 0.0
        %3134 = vmatpush1.xpose.msra.mxu0 0.0
        %3135 = vmatprep.subr.mxu0 0.0
        %3136 = vmatpush1.xpose.msra.mxu0 0.0
        %3137 = vmatprep.subr.mxu0 0.0
        %3138 = vmatpush1.xpose.msra.mxu0 0.0
        %3139 = vmatprep.subr.mxu0 0.0
        %3140 = vmatpush1.xpose.msra.mxu0 0.0
        %3141 = vmatprep.subr.mxu0 0.0
        %3142 = vmatpush1.xpose.msra.mxu0 0.0
        %3143 = vmatprep.subr.mxu0 0.0
        %3144 = vmatpush1.xpose.msra.mxu0 0.0
        %3145 = vmatprep.subr.mxu0 0.0
        %3146 = vmatpush1.xpose.msra.mxu0 0.0
        %3147 = vmatprep.subr.mxu0 0.0
        %3148 = vmatpush1.xpose.msra.mxu0 0.0
        %3149 = vmatprep.subr.mxu0 0.0
        %3150 = vmatpush1.xpose.msra.mxu0 0.0
        %3151 = vmatprep.subr.mxu0 0.0
        %3152 = vmatpush1.xpose.msra.mxu0 0.0
        %3153 = vmatprep.subr.mxu0 0.0
        %3154 = vmatpush1.xpose.msra.mxu0 0.0
        %3155 = vmatprep.subr.mxu0 0.0
        %3156 = vmatpush1.xpose.msra.mxu0 0.0
        %3157 = vmatprep.subr.mxu0 0.0
        %3158 = vmatpush1.xpose.msra.mxu0 0.0
        %3159 = vmatprep.subr.mxu0 0.0
        %3160 = vmatpush1.xpose.msra.mxu0 0.0
        %3161 = vmatprep.subr.mxu0 0.0
        %3162 = vmatpush1.xpose.msra.mxu0 0.0
        %3163 = vmatprep.subr.mxu0 0.0
        %3164 = vmatpush1.xpose.msra.mxu0 0.0
        %3165 = vmatprep.subr.mxu0 0.0
        %3166 = vmatpush1.xpose.msra.mxu0 0.0
        %3167 = vmatprep.subr.mxu0 0.0
        %3168 = vmatpush1.xpose.msra.mxu0 0.0
        %3169 = vmatprep.subr.mxu0 0.0
        %3170 = vmatpush1.xpose.msra.mxu0 0.0
        %3171 = vmatprep.subr.mxu0 0.0
        %3172 = vmatpush1.xpose.msra.mxu0 0.0
        %3173 = vmatprep.subr.mxu0 0.0
        %3174 = vmatpush1.xpose.msra.mxu0 0.0
        %3175 = vmatprep.subr.mxu0 0.0
        %3176 = vmatpush1.xpose.msra.mxu0 0.0
        %3177 = vmatprep.subr.mxu0 0.0
        %3178 = vmatpush1.xpose.msra.mxu0 0.0
        %3179 = vmatprep.subr.mxu0 0.0
        %3180 = vmatpush1.xpose.msra.mxu0 0.0
        %3181 = vmatprep.subr.mxu0 0.0
        %3182 = vmatpush1.xpose.msra.mxu0 0.0
        %3183 = vmatprep.subr.mxu0 0.0
        %3184 = vmatpush1.xpose.msra.mxu0 0.0
        %3185 = vmatprep.subr.mxu0 0.0
        %3186 = vmatpush1.xpose.msra.mxu0 0.0
        %3187 = vmatprep.subr.mxu0 0.0
        %3188 = vmatpush1.xpose.msra.mxu0 0.0
        %3189 = vmatprep.mubr.f32.mxu0 %v902
        %3190 = vmatmul.mubr.f32.gmra.mrb[0].mxu0 %v894
        %v3191 = vpop.f32.mrb[0].mxu0
        %v3192 = vadd.f32 %v3122, %v3191
        %v3193 = vpop.f32.mrb[0].mxu0
        %3194 = vdwg.mxu0
        %3195 = vmatprep.subr.mxu0 %v328
        %3196 = vmatpush1.xpose.msra.mxu0 %v327
        %3197 = vmatprep.subr.mxu0 %v520
        %3198 = vmatpush1.xpose.msra.mxu0 %v519
        %3199 = vmatprep.subr.mxu0 0.0
        %3200 = vmatpush1.xpose.msra.mxu0 0.0
        %3201 = vmatprep.subr.mxu0 0.0
        %3202 = vmatpush1.xpose.msra.mxu0 0.0
        %3203 = vmatprep.subr.mxu0 0.0
        %3204 = vmatpush1.xpose.msra.mxu0 0.0
        %3205 = vmatprep.subr.mxu0 0.0
        %3206 = vmatpush1.xpose.msra.mxu0 0.0
        %3207 = vmatprep.subr.mxu0 0.0
        %3208 = vmatpush1.xpose.msra.mxu0 0.0
        %3209 = vmatprep.subr.mxu0 0.0
        %3210 = vmatpush1.xpose.msra.mxu0 0.0
        %3211 = vmatprep.subr.mxu0 0.0
        %3212 = vmatpush1.xpose.msra.mxu0 0.0
        %3213 = vmatprep.subr.mxu0 0.0
        %3214 = vmatpush1.xpose.msra.mxu0 0.0
        %3215 = vmatprep.subr.mxu0 0.0
        %3216 = vmatpush1.xpose.msra.mxu0 0.0
        %3217 = vmatprep.subr.mxu0 0.0
        %3218 = vmatpush1.xpose.msra.mxu0 0.0
        %3219 = vmatprep.subr.mxu0 0.0
        %3220 = vmatpush1.xpose.msra.mxu0 0.0
        %3221 = vmatprep.subr.mxu0 0.0
        %3222 = vmatpush1.xpose.msra.mxu0 0.0
        %3223 = vmatprep.subr.mxu0 0.0
        %3224 = vmatpush1.xpose.msra.mxu0 0.0
        %3225 = vmatprep.subr.mxu0 0.0
        %3226 = vmatpush1.xpose.msra.mxu0 0.0
        %3227 = vmatprep.subr.mxu0 0.0
        %3228 = vmatpush1.xpose.msra.mxu0 0.0
        %3229 = vmatprep.subr.mxu0 0.0
        %3230 = vmatpush1.xpose.msra.mxu0 0.0
        %3231 = vmatprep.subr.mxu0 0.0
        %3232 = vmatpush1.xpose.msra.mxu0 0.0
        %3233 = vmatprep.subr.mxu0 0.0
        %3234 = vmatpush1.xpose.msra.mxu0 0.0
        %3235 = vmatprep.subr.mxu0 0.0
        %3236 = vmatpush1.xpose.msra.mxu0 0.0
        %3237 = vmatprep.subr.mxu0 0.0
        %3238 = vmatpush1.xpose.msra.mxu0 0.0
        %3239 = vmatprep.subr.mxu0 0.0
        %3240 = vmatpush1.xpose.msra.mxu0 0.0
        %3241 = vmatprep.subr.mxu0 0.0
        %3242 = vmatpush1.xpose.msra.mxu0 0.0
        %3243 = vmatprep.subr.mxu0 0.0
        %3244 = vmatpush1.xpose.msra.mxu0 0.0
        %3245 = vmatprep.subr.mxu0 0.0
        %3246 = vmatpush1.xpose.msra.mxu0 0.0
        %3247 = vmatprep.subr.mxu0 0.0
        %3248 = vmatpush1.xpose.msra.mxu0 0.0
        %3249 = vmatprep.subr.mxu0 0.0
        %3250 = vmatpush1.xpose.msra.mxu0 0.0
        %3251 = vmatprep.subr.mxu0 0.0
        %3252 = vmatpush1.xpose.msra.mxu0 0.0
        %3253 = vmatprep.subr.mxu0 0.0
        %3254 = vmatpush1.xpose.msra.mxu0 0.0
        %3255 = vmatprep.subr.mxu0 0.0
        %3256 = vmatpush1.xpose.msra.mxu0 0.0
        %3257 = vmatprep.subr.mxu0 0.0
        %3258 = vmatpush1.xpose.msra.mxu0 0.0
        %3259 = vmatprep.mubr.f32.mxu0 %v903
        %3260 = vmatmul.mubr.f32.gmra.mrb[0].mxu0 %v901
        %v3261 = vpop.f32.mrb[0].mxu0
        %v3262 = vadd.f32 %v3192, %v3261
        %v3263 = vpop.f32.mrb[0].mxu0
        %3264 = vdwg.mxu0
        %3265 = vmatprep.subr.mxu0 %v330
        %3266 = vmatpush1.xpose.msra.mxu0 %v329
        %3267 = vmatprep.subr.mxu0 %v522
        %3268 = vmatpush1.xpose.msra.mxu0 %v521
        %3269 = vmatprep.subr.mxu0 0.0
        %3270 = vmatpush1.xpose.msra.mxu0 0.0
        %3271 = vmatprep.subr.mxu0 0.0
        %3272 = vmatpush1.xpose.msra.mxu0 0.0
        %3273 = vmatprep.subr.mxu0 0.0
        %3274 = vmatpush1.xpose.msra.mxu0 0.0
        %3275 = vmatprep.subr.mxu0 0.0
        %3276 = vmatpush1.xpose.msra.mxu0 0.0
        %3277 = vmatprep.subr.mxu0 0.0
        %3278 = vmatpush1.xpose.msra.mxu0 0.0
        %3279 = vmatprep.subr.mxu0 0.0
        %3280 = vmatpush1.xpose.msra.mxu0 0.0
        %3281 = vmatprep.subr.mxu0 0.0
        %3282 = vmatpush1.xpose.msra.mxu0 0.0
        %3283 = vmatprep.subr.mxu0 0.0
        %3284 = vmatpush1.xpose.msra.mxu0 0.0
        %3285 = vmatprep.subr.mxu0 0.0
        %3286 = vmatpush1.xpose.msra.mxu0 0.0
        %3287 = vmatprep.subr.mxu0 0.0
        %3288 = vmatpush1.xpose.msra.mxu0 0.0
        %3289 = vmatprep.subr.mxu0 0.0
        %3290 = vmatpush1.xpose.msra.mxu0 0.0
        %3291 = vmatprep.subr.mxu0 0.0
        %3292 = vmatpush1.xpose.msra.mxu0 0.0
        %3293 = vmatprep.subr.mxu0 0.0
        %3294 = vmatpush1.xpose.msra.mxu0 0.0
        %3295 = vmatprep.subr.mxu0 0.0
        %3296 = vmatpush1.xpose.msra.mxu0 0.0
        %3297 = vmatprep.subr.mxu0 0.0
        %3298 = vmatpush1.xpose.msra.mxu0 0.0
        %3299 = vmatprep.subr.mxu0 0.0
        %3300 = vmatpush1.xpose.msra.mxu0 0.0
        %3301 = vmatprep.subr.mxu0 0.0
        %3302 = vmatpush1.xpose.msra.mxu0 0.0
        %3303 = vmatprep.subr.mxu0 0.0
        %3304 = vmatpush1.xpose.msra.mxu0 0.0
        %3305 = vmatprep.subr.mxu0 0.0
        %3306 = vmatpush1.xpose.msra.mxu0 0.0
        %3307 = vmatprep.subr.mxu0 0.0
        %3308 = vmatpush1.xpose.msra.mxu0 0.0
        %3309 = vmatprep.subr.mxu0 0.0
        %3310 = vmatpush1.xpose.msra.mxu0 0.0
        %3311 = vmatprep.subr.mxu0 0.0
        %3312 = vmatpush1.xpose.msra.mxu0 0.0
        %3313 = vmatprep.subr.mxu0 0.0
        %3314 = vmatpush1.xpose.msra.mxu0 0.0
        %3315 = vmatprep.subr.mxu0 0.0
        %3316 = vmatpush1.xpose.msra.mxu0 0.0
        %3317 = vmatprep.subr.mxu0 0.0
        %3318 = vmatpush1.xpose.msra.mxu0 0.0
        %3319 = vmatprep.subr.mxu0 0.0
        %3320 = vmatpush1.xpose.msra.mxu0 0.0
        %3321 = vmatprep.subr.mxu0 0.0
        %3322 = vmatpush1.xpose.msra.mxu0 0.0
        %3323 = vmatprep.subr.mxu0 0.0
        %3324 = vmatpush1.xpose.msra.mxu0 0.0
        %3325 = vmatprep.subr.mxu0 0.0
        %3326 = vmatpush1.xpose.msra.mxu0 0.0
        %3327 = vmatprep.subr.mxu0 0.0
        %3328 = vmatpush1.xpose.msra.mxu0 0.0
        %3329 = vmatprep.mubr.f32.mxu0 %v919
        %3330 = vmatmul.mubr.f32.gmra.mrb[0].mxu0 %v911
        %v3331 = vpop.f32.mrb[0].mxu0
        %v3332 = vadd.f32 %v3262, %v3331
        %v3333 = vpop.f32.mrb[0].mxu0
        %3334 = vdwg.mxu0
        %3335 = vmatprep.subr.mxu0 %v332
        %3336 = vmatpush1.xpose.msra.mxu0 %v331
        %3337 = vmatprep.subr.mxu0 %v524
        %3338 = vmatpush1.xpose.msra.mxu0 %v523
        %3339 = vmatprep.subr.mxu0 0.0
        %3340 = vmatpush1.xpose.msra.mxu0 0.0
        %3341 = vmatprep.subr.mxu0 0.0
        %3342 = vmatpush1.xpose.msra.mxu0 0.0
        %3343 = vmatprep.subr.mxu0 0.0
        %3344 = vmatpush1.xpose.msra.mxu0 0.0
        %3345 = vmatprep.subr.mxu0 0.0
        %3346 = vmatpush1.xpose.msra.mxu0 0.0
        %3347 = vmatprep.subr.mxu0 0.0
        %3348 = vmatpush1.xpose.msra.mxu0 0.0
        %3349 = vmatprep.subr.mxu0 0.0
        %3350 = vmatpush1.xpose.msra.mxu0 0.0
        %3351 = vmatprep.subr.mxu0 0.0
        %3352 = vmatpush1.xpose.msra.mxu0 0.0
        %3353 = vmatprep.subr.mxu0 0.0
        %3354 = vmatpush1.xpose.msra.mxu0 0.0
        %3355 = vmatprep.subr.mxu0 0.0
        %3356 = vmatpush1.xpose.msra.mxu0 0.0
        %3357 = vmatprep.subr.mxu0 0.0
        %3358 = vmatpush1.xpose.msra.mxu0 0.0
        %3359 = vmatprep.subr.mxu0 0.0
        %3360 = vmatpush1.xpose.msra.mxu0 0.0
        %3361 = vmatprep.subr.mxu0 0.0
        %3362 = vmatpush1.xpose.msra.mxu0 0.0
        %3363 = vmatprep.subr.mxu0 0.0
        %3364 = vmatpush1.xpose.msra.mxu0 0.0
        %3365 = vmatprep.subr.mxu0 0.0
        %3366 = vmatpush1.xpose.msra.mxu0 0.0
        %3367 = vmatprep.subr.mxu0 0.0
        %3368 = vmatpush1.xpose.msra.mxu0 0.0
        %3369 = vmatprep.subr.mxu0 0.0
        %3370 = vmatpush1.xpose.msra.mxu0 0.0
        %3371 = vmatprep.subr.mxu0 0.0
        %3372 = vmatpush1.xpose.msra.mxu0 0.0
        %3373 = vmatprep.subr.mxu0 0.0
        %3374 = vmatpush1.xpose.msra.mxu0 0.0
        %3375 = vmatprep.subr.mxu0 0.0
        %3376 = vmatpush1.xpose.msra.mxu0 0.0
        %3377 = vmatprep.subr.mxu0 0.0
        %3378 = vmatpush1.xpose.msra.mxu0 0.0
        %3379 = vmatprep.subr.mxu0 0.0
        %3380 = vmatpush1.xpose.msra.mxu0 0.0
        %3381 = vmatprep.subr.mxu0 0.0
        %3382 = vmatpush1.xpose.msra.mxu0 0.0
        %3383 = vmatprep.subr.mxu0 0.0
        %3384 = vmatpush1.xpose.msra.mxu0 0.0
        %3385 = vmatprep.subr.mxu0 0.0
        %3386 = vmatpush1.xpose.msra.mxu0 0.0
        %3387 = vmatprep.subr.mxu0 0.0
        %3388 = vmatpush1.xpose.msra.mxu0 0.0
        %3389 = vmatprep.subr.mxu0 0.0
        %3390 = vmatpush1.xpose.msra.mxu0 0.0
        %3391 = vmatprep.subr.mxu0 0.0
        %3392 = vmatpush1.xpose.msra.mxu0 0.0
        %3393 = vmatprep.subr.mxu0 0.0
        %3394 = vmatpush1.xpose.msra.mxu0 0.0
        %3395 = vmatprep.subr.mxu0 0.0
        %3396 = vmatpush1.xpose.msra.mxu0 0.0
        %3397 = vmatprep.subr.mxu0 0.0
        %3398 = vmatpush1.xpose.msra.mxu0 0.0
        %3399 = vmatprep.mubr.f32.mxu0 %v920
        %3400 = vmatmul.mubr.f32.gmra.mrb[0].mxu0 %v918
        %v3401 = vpop.f32.mrb[0].mxu0
        %v3402 = vadd.f32 %v3332, %v3401
        %v3403 = vpop.f32.mrb[0].mxu0
        %3404 = vdwg.mxu0
        %3405 = vmatprep.subr.mxu0 %v334
        %3406 = vmatpush1.xpose.msra.mxu0 %v333
        %3407 = vmatprep.subr.mxu0 %v526
        %3408 = vmatpush1.xpose.msra.mxu0 %v525
        %3409 = vmatprep.subr.mxu0 0.0
        %3410 = vmatpush1.xpose.msra.mxu0 0.0
        %3411 = vmatprep.subr.mxu0 0.0
        %3412 = vmatpush1.xpose.msra.mxu0 0.0
        %3413 = vmatprep.subr.mxu0 0.0
        %3414 = vmatpush1.xpose.msra.mxu0 0.0
        %3415 = vmatprep.subr.mxu0 0.0
        %3416 = vmatpush1.xpose.msra.mxu0 0.0
        %3417 = vmatprep.subr.mxu0 0.0
        %3418 = vmatpush1.xpose.msra.mxu0 0.0
        %3419 = vmatprep.subr.mxu0 0.0
        %3420 = vmatpush1.xpose.msra.mxu0 0.0
        %3421 = vmatprep.subr.mxu0 0.0
        %3422 = vmatpush1.xpose.msra.mxu0 0.0
        %3423 = vmatprep.subr.mxu0 0.0
        %3424 = vmatpush1.xpose.msra.mxu0 0.0
        %3425 = vmatprep.subr.mxu0 0.0
        %3426 = vmatpush1.xpose.msra.mxu0 0.0
        %3427 = vmatprep.subr.mxu0 0.0
        %3428 = vmatpush1.xpose.msra.mxu0 0.0
        %3429 = vmatprep.subr.mxu0 0.0
        %3430 = vmatpush1.xpose.msra.mxu0 0.0
        %3431 = vmatprep.subr.mxu0 0.0
        %3432 = vmatpush1.xpose.msra.mxu0 0.0
        %3433 = vmatprep.subr.mxu0 0.0
        %3434 = vmatpush1.xpose.msra.mxu0 0.0
        %3435 = vmatprep.subr.mxu0 0.0
        %3436 = vmatpush1.xpose.msra.mxu0 0.0
        %3437 = vmatprep.subr.mxu0 0.0
        %3438 = vmatpush1.xpose.msra.mxu0 0.0
        %3439 = vmatprep.subr.mxu0 0.0
        %3440 = vmatpush1.xpose.msra.mxu0 0.0
        %3441 = vmatprep.subr.mxu0 0.0
        %3442 = vmatpush1.xpose.msra.mxu0 0.0
        %3443 = vmatprep.subr.mxu0 0.0
        %3444 = vmatpush1.xpose.msra.mxu0 0.0
        %3445 = vmatprep.subr.mxu0 0.0
        %3446 = vmatpush1.xpose.msra.mxu0 0.0
        %3447 = vmatprep.subr.mxu0 0.0
        %3448 = vmatpush1.xpose.msra.mxu0 0.0
        %3449 = vmatprep.subr.mxu0 0.0
        %3450 = vmatpush1.xpose.msra.mxu0 0.0
        %3451 = vmatprep.subr.mxu0 0.0
        %3452 = vmatpush1.xpose.msra.mxu0 0.0
        %3453 = vmatprep.subr.mxu0 0.0
        %3454 = vmatpush1.xpose.msra.mxu0 0.0
        %3455 = vmatprep.subr.mxu0 0.0
        %3456 = vmatpush1.xpose.msra.mxu0 0.0
        %3457 = vmatprep.subr.mxu0 0.0
        %3458 = vmatpush1.xpose.msra.mxu0 0.0
        %3459 = vmatprep.subr.mxu0 0.0
        %3460 = vmatpush1.xpose.msra.mxu0 0.0
        %3461 = vmatprep.subr.mxu0 0.0
        %3462 = vmatpush1.xpose.msra.mxu0 0.0
        %3463 = vmatprep.subr.mxu0 0.0
        %3464 = vmatpush1.xpose.msra.mxu0 0.0
        %3465 = vmatprep.subr.mxu0 0.0
        %3466 = vmatpush1.xpose.msra.mxu0 0.0
        %3467 = vmatprep.subr.mxu0 0.0
        %3468 = vmatpush1.xpose.msra.mxu0 0.0
        %3469 = vmatprep.mubr.f32.mxu0 %v936
        %3470 = vmatmul.mubr.f32.gmra.mrb[0].mxu0 %v928
        %v3471 = vpop.f32.mrb[0].mxu0
        %v3472 = vadd.f32 %v3402, %v3471
        %v3473 = vpop.f32.mrb[0].mxu0
        %3474 = vdwg.mxu0
        %3475 = vmatprep.subr.mxu0 %v336
        %3476 = vmatpush1.xpose.msra.mxu0 %v335
        %3477 = vmatprep.subr.mxu0 %v528
        %3478 = vmatpush1.xpose.msra.mxu0 %v527
        %3479 = vmatprep.subr.mxu0 0.0
        %3480 = vmatpush1.xpose.msra.mxu0 0.0
        %3481 = vmatprep.subr.mxu0 0.0
        %3482 = vmatpush1.xpose.msra.mxu0 0.0
        %3483 = vmatprep.subr.mxu0 0.0
        %3484 = vmatpush1.xpose.msra.mxu0 0.0
        %3485 = vmatprep.subr.mxu0 0.0
        %3486 = vmatpush1.xpose.msra.mxu0 0.0
        %3487 = vmatprep.subr.mxu0 0.0
        %3488 = vmatpush1.xpose.msra.mxu0 0.0
        %3489 = vmatprep.subr.mxu0 0.0
        %3490 = vmatpush1.xpose.msra.mxu0 0.0
        %3491 = vmatprep.subr.mxu0 0.0
        %3492 = vmatpush1.xpose.msra.mxu0 0.0
        %3493 = vmatprep.subr.mxu0 0.0
        %3494 = vmatpush1.xpose.msra.mxu0 0.0
        %3495 = vmatprep.subr.mxu0 0.0
        %3496 = vmatpush1.xpose.msra.mxu0 0.0
        %3497 = vmatprep.subr.mxu0 0.0
        %3498 = vmatpush1.xpose.msra.mxu0 0.0
        %3499 = vmatprep.subr.mxu0 0.0
        %3500 = vmatpush1.xpose.msra.mxu0 0.0
        %3501 = vmatprep.subr.mxu0 0.0
        %3502 = vmatpush1.xpose.msra.mxu0 0.0
        %3503 = vmatprep.subr.mxu0 0.0
        %3504 = vmatpush1.xpose.msra.mxu0 0.0
        %3505 = vmatprep.subr.mxu0 0.0
        %3506 = vmatpush1.xpose.msra.mxu0 0.0
        %3507 = vmatprep.subr.mxu0 0.0
        %3508 = vmatpush1.xpose.msra.mxu0 0.0
        %3509 = vmatprep.subr.mxu0 0.0
        %3510 = vmatpush1.xpose.msra.mxu0 0.0
        %3511 = vmatprep.subr.mxu0 0.0
        %3512 = vmatpush1.xpose.msra.mxu0 0.0
        %3513 = vmatprep.subr.mxu0 0.0
        %3514 = vmatpush1.xpose.msra.mxu0 0.0
        %3515 = vmatprep.subr.mxu0 0.0
        %3516 = vmatpush1.xpose.msra.mxu0 0.0
        %3517 = vmatprep.subr.mxu0 0.0
        %3518 = vmatpush1.xpose.msra.mxu0 0.0
        %3519 = vmatprep.subr.mxu0 0.0
        %3520 = vmatpush1.xpose.msra.mxu0 0.0
        %3521 = vmatprep.subr.mxu0 0.0
        %3522 = vmatpush1.xpose.msra.mxu0 0.0
        %3523 = vmatprep.subr.mxu0 0.0
        %3524 = vmatpush1.xpose.msra.mxu0 0.0
        %3525 = vmatprep.subr.mxu0 0.0
        %3526 = vmatpush1.xpose.msra.mxu0 0.0
        %3527 = vmatprep.subr.mxu0 0.0
        %3528 = vmatpush1.xpose.msra.mxu0 0.0
        %3529 = vmatprep.subr.mxu0 0.0
        %3530 = vmatpush1.xpose.msra.mxu0 0.0
        %3531 = vmatprep.subr.mxu0 0.0
        %3532 = vmatpush1.xpose.msra.mxu0 0.0
        %3533 = vmatprep.subr.mxu0 0.0
        %3534 = vmatpush1.xpose.msra.mxu0 0.0
        %3535 = vmatprep.subr.mxu0 0.0
        %3536 = vmatpush1.xpose.msra.mxu0 0.0
        %3537 = vmatprep.subr.mxu0 0.0
        %3538 = vmatpush1.xpose.msra.mxu0 0.0
        %3539 = vmatprep.mubr.f32.mxu0 %v937
        %3540 = vmatmul.mubr.f32.gmra.mrb[0].mxu0 %v935
        %v3541 = vpop.f32.mrb[0].mxu0
        %v3542 = vadd.f32 %v3472, %v3541
        %v3543 = vpop.f32.mrb[0].mxu0
        %3544 = vdwg.mxu0
        %3545 = vmatprep.subr.mxu0 %v338
        %3546 = vmatpush1.xpose.msra.mxu0 %v337
        %3547 = vmatprep.subr.mxu0 %v530
        %3548 = vmatpush1.xpose.msra.mxu0 %v529
        %3549 = vmatprep.subr.mxu0 0.0
        %3550 = vmatpush1.xpose.msra.mxu0 0.0
        %3551 = vmatprep.subr.mxu0 0.0
        %3552 = vmatpush1.xpose.msra.mxu0 0.0
        %3553 = vmatprep.subr.mxu0 0.0
        %3554 = vmatpush1.xpose.msra.mxu0 0.0
        %3555 = vmatprep.subr.mxu0 0.0
        %3556 = vmatpush1.xpose.msra.mxu0 0.0
        %3557 = vmatprep.subr.mxu0 0.0
        %3558 = vmatpush1.xpose.msra.mxu0 0.0
        %3559 = vmatprep.subr.mxu0 0.0
        %3560 = vmatpush1.xpose.msra.mxu0 0.0
        %3561 = vmatprep.subr.mxu0 0.0
        %3562 = vmatpush1.xpose.msra.mxu0 0.0
        %3563 = vmatprep.subr.mxu0 0.0
        %3564 = vmatpush1.xpose.msra.mxu0 0.0
        %3565 = vmatprep.subr.mxu0 0.0
        %3566 = vmatpush1.xpose.msra.mxu0 0.0
        %3567 = vmatprep.subr.mxu0 0.0
        %3568 = vmatpush1.xpose.msra.mxu0 0.0
        %3569 = vmatprep.subr.mxu0 0.0
        %3570 = vmatpush1.xpose.msra.mxu0 0.0
        %3571 = vmatprep.subr.mxu0 0.0
        %3572 = vmatpush1.xpose.msra.mxu0 0.0
        %3573 = vmatprep.subr.mxu0 0.0
        %3574 = vmatpush1.xpose.msra.mxu0 0.0
        %3575 = vmatprep.subr.mxu0 0.0
        %3576 = vmatpush1.xpose.msra.mxu0 0.0
        %3577 = vmatprep.subr.mxu0 0.0
        %3578 = vmatpush1.xpose.msra.mxu0 0.0
        %3579 = vmatprep.subr.mxu0 0.0
        %3580 = vmatpush1.xpose.msra.mxu0 0.0
        %3581 = vmatprep.subr.mxu0 0.0
        %3582 = vmatpush1.xpose.msra.mxu0 0.0
        %3583 = vmatprep.subr.mxu0 0.0
        %3584 = vmatpush1.xpose.msra.mxu0 0.0
        %3585 = vmatprep.subr.mxu0 0.0
        %3586 = vmatpush1.xpose.msra.mxu0 0.0
        %3587 = vmatprep.subr.mxu0 0.0
        %3588 = vmatpush1.xpose.msra.mxu0 0.0
        %3589 = vmatprep.subr.mxu0 0.0
        %3590 = vmatpush1.xpose.msra.mxu0 0.0
        %3591 = vmatprep.subr.mxu0 0.0
        %3592 = vmatpush1.xpose.msra.mxu0 0.0
        %3593 = vmatprep.subr.mxu0 0.0
        %3594 = vmatpush1.xpose.msra.mxu0 0.0
        %3595 = vmatprep.subr.mxu0 0.0
        %3596 = vmatpush1.xpose.msra.mxu0 0.0
        %3597 = vmatprep.subr.mxu0 0.0
        %3598 = vmatpush1.xpose.msra.mxu0 0.0
        %3599 = vmatprep.subr.mxu0 0.0
        %3600 = vmatpush1.xpose.msra.mxu0 0.0
        %3601 = vmatprep.subr.mxu0 0.0
        %3602 = vmatpush1.xpose.msra.mxu0 0.0
        %3603 = vmatprep.subr.mxu0 0.0
        %3604 = vmatpush1.xpose.msra.mxu0 0.0
        %3605 = vmatprep.subr.mxu0 0.0
        %3606 = vmatpush1.xpose.msra.mxu0 0.0
        %3607 = vmatprep.subr.mxu0 0.0
        %3608 = vmatpush1.xpose.msra.mxu0 0.0
        %3609 = vmatprep.mubr.f32.mxu0 %v953
        %3610 = vmatmul.mubr.f32.gmra.mrb[0].mxu0 %v945
        %v3611 = vpop.f32.mrb[0].mxu0
        %v3612 = vadd.f32 %v3542, %v3611
        %v3613 = vpop.f32.mrb[0].mxu0
        %3614 = vdwg.mxu0
        %3615 = vmatprep.subr.mxu0 %v340
        %3616 = vmatpush1.xpose.msra.mxu0 %v339
        %3617 = vmatprep.subr.mxu0 %v532
        %3618 = vmatpush1.xpose.msra.mxu0 %v531
        %3619 = vmatprep.subr.mxu0 0.0
        %3620 = vmatpush1.xpose.msra.mxu0 0.0
        %3621 = vmatprep.subr.mxu0 0.0
        %3622 = vmatpush1.xpose.msra.mxu0 0.0
        %3623 = vmatprep.subr.mxu0 0.0
        %3624 = vmatpush1.xpose.msra.mxu0 0.0
        %3625 = vmatprep.subr.mxu0 0.0
        %3626 = vmatpush1.xpose.msra.mxu0 0.0
        %3627 = vmatprep.subr.mxu0 0.0
        %3628 = vmatpush1.xpose.msra.mxu0 0.0
        %3629 = vmatprep.subr.mxu0 0.0
        %3630 = vmatpush1.xpose.msra.mxu0 0.0
        %3631 = vmatprep.subr.mxu0 0.0
        %3632 = vmatpush1.xpose.msra.mxu0 0.0
        %3633 = vmatprep.subr.mxu0 0.0
        %3634 = vmatpush1.xpose.msra.mxu0 0.0
        %3635 = vmatprep.subr.mxu0 0.0
        %3636 = vmatpush1.xpose.msra.mxu0 0.0
        %3637 = vmatprep.subr.mxu0 0.0
        %3638 = vmatpush1.xpose.msra.mxu0 0.0
        %3639 = vmatprep.subr.mxu0 0.0
        %3640 = vmatpush1.xpose.msra.mxu0 0.0
        %3641 = vmatprep.subr.mxu0 0.0
        %3642 = vmatpush1.xpose.msra.mxu0 0.0
        %3643 = vmatprep.subr.mxu0 0.0
        %3644 = vmatpush1.xpose.msra.mxu0 0.0
        %3645 = vmatprep.subr.mxu0 0.0
        %3646 = vmatpush1.xpose.msra.mxu0 0.0
        %3647 = vmatprep.subr.mxu0 0.0
        %3648 = vmatpush1.xpose.msra.mxu0 0.0
        %3649 = vmatprep.subr.mxu0 0.0
        %3650 = vmatpush1.xpose.msra.mxu0 0.0
        %3651 = vmatprep.subr.mxu0 0.0
        %3652 = vmatpush1.xpose.msra.mxu0 0.0
        %3653 = vmatprep.subr.mxu0 0.0
        %3654 = vmatpush1.xpose.msra.mxu0 0.0
        %3655 = vmatprep.subr.mxu0 0.0
        %3656 = vmatpush1.xpose.msra.mxu0 0.0
        %3657 = vmatprep.subr.mxu0 0.0
        %3658 = vmatpush1.xpose.msra.mxu0 0.0
        %3659 = vmatprep.subr.mxu0 0.0
        %3660 = vmatpush1.xpose.msra.mxu0 0.0
        %3661 = vmatprep.subr.mxu0 0.0
        %3662 = vmatpush1.xpose.msra.mxu0 0.0
        %3663 = vmatprep.subr.mxu0 0.0
        %3664 = vmatpush1.xpose.msra.mxu0 0.0
        %3665 = vmatprep.subr.mxu0 0.0
        %3666 = vmatpush1.xpose.msra.mxu0 0.0
        %3667 = vmatprep.subr.mxu0 0.0
        %3668 = vmatpush1.xpose.msra.mxu0 0.0
        %3669 = vmatprep.subr.mxu0 0.0
        %3670 = vmatpush1.xpose.msra.mxu0 0.0
        %3671 = vmatprep.subr.mxu0 0.0
        %3672 = vmatpush1.xpose.msra.mxu0 0.0
        %3673 = vmatprep.subr.mxu0 0.0
        %3674 = vmatpush1.xpose.msra.mxu0 0.0
        %3675 = vmatprep.subr.mxu0 0.0
        %3676 = vmatpush1.xpose.msra.mxu0 0.0
        %3677 = vmatprep.subr.mxu0 0.0
        %3678 = vmatpush1.xpose.msra.mxu0 0.0
        %3679 = vmatprep.mubr.f32.mxu0 %v954
        %3680 = vmatmul.mubr.f32.gmra.mrb[0].mxu0 %v952
        %v3681 = vpop.f32.mrb[0].mxu0
        %v3682 = vadd.f32 %v3612, %v3681
        %v3683 = vpop.f32.mrb[0].mxu0
        %3684 = vdwg.mxu0
        %3685 = vmatprep.subr.mxu0 %v342
        %3686 = vmatpush1.xpose.msra.mxu0 %v341
        %3687 = vmatprep.subr.mxu0 %v534
        %3688 = vmatpush1.xpose.msra.mxu0 %v533
        %3689 = vmatprep.subr.mxu0 0.0
        %3690 = vmatpush1.xpose.msra.mxu0 0.0
        %3691 = vmatprep.subr.mxu0 0.0
        %3692 = vmatpush1.xpose.msra.mxu0 0.0
        %3693 = vmatprep.subr.mxu0 0.0
        %3694 = vmatpush1.xpose.msra.mxu0 0.0
        %3695 = vmatprep.subr.mxu0 0.0
        %3696 = vmatpush1.xpose.msra.mxu0 0.0
        %3697 = vmatprep.subr.mxu0 0.0
        %3698 = vmatpush1.xpose.msra.mxu0 0.0
        %3699 = vmatprep.subr.mxu0 0.0
        %3700 = vmatpush1.xpose.msra.mxu0 0.0
        %3701 = vmatprep.subr.mxu0 0.0
        %3702 = vmatpush1.xpose.msra.mxu0 0.0
        %3703 = vmatprep.subr.mxu0 0.0
        %3704 = vmatpush1.xpose.msra.mxu0 0.0
        %3705 = vmatprep.subr.mxu0 0.0
        %3706 = vmatpush1.xpose.msra.mxu0 0.0
        %3707 = vmatprep.subr.mxu0 0.0
        %3708 = vmatpush1.xpose.msra.mxu0 0.0
        %3709 = vmatprep.subr.mxu0 0.0
        %3710 = vmatpush1.xpose.msra.mxu0 0.0
        %3711 = vmatprep.subr.mxu0 0.0
        %3712 = vmatpush1.xpose.msra.mxu0 0.0
        %3713 = vmatprep.subr.mxu0 0.0
        %3714 = vmatpush1.xpose.msra.mxu0 0.0
        %3715 = vmatprep.subr.mxu0 0.0
        %3716 = vmatpush1.xpose.msra.mxu0 0.0
        %3717 = vmatprep.subr.mxu0 0.0
        %3718 = vmatpush1.xpose.msra.mxu0 0.0
        %3719 = vmatprep.subr.mxu0 0.0
        %3720 = vmatpush1.xpose.msra.mxu0 0.0
        %3721 = vmatprep.subr.mxu0 0.0
        %3722 = vmatpush1.xpose.msra.mxu0 0.0
        %3723 = vmatprep.subr.mxu0 0.0
        %3724 = vmatpush1.xpose.msra.mxu0 0.0
        %3725 = vmatprep.subr.mxu0 0.0
        %3726 = vmatpush1.xpose.msra.mxu0 0.0
        %3727 = vmatprep.subr.mxu0 0.0
        %3728 = vmatpush1.xpose.msra.mxu0 0.0
        %3729 = vmatprep.subr.mxu0 0.0
        %3730 = vmatpush1.xpose.msra.mxu0 0.0
        %3731 = vmatprep.subr.mxu0 0.0
        %3732 = vmatpush1.xpose.msra.mxu0 0.0
        %3733 = vmatprep.subr.mxu0 0.0
        %3734 = vmatpush1.xpose.msra.mxu0 0.0
        %3735 = vmatprep.subr.mxu0 0.0
        %3736 = vmatpush1.xpose.msra.mxu0 0.0
        %3737 = vmatprep.subr.mxu0 0.0
        %3738 = vmatpush1.xpose.msra.mxu0 0.0
        %3739 = vmatprep.subr.mxu0 0.0
        %3740 = vmatpush1.xpose.msra.mxu0 0.0
        %3741 = vmatprep.subr.mxu0 0.0
        %3742 = vmatpush1.xpose.msra.mxu0 0.0
        %3743 = vmatprep.subr.mxu0 0.0
        %3744 = vmatpush1.xpose.msra.mxu0 0.0
        %3745 = vmatprep.subr.mxu0 0.0
        %3746 = vmatpush1.xpose.msra.mxu0 0.0
        %3747 = vmatprep.subr.mxu0 0.0
        %3748 = vmatpush1.xpose.msra.mxu0 0.0
        %3749 = vmatprep.mubr.f32.mxu0 %v970
        %3750 = vmatmul.mubr.f32.gmra.mrb[0].mxu0 %v962
        %v3751 = vpop.f32.mrb[0].mxu0
        %v3752 = vadd.f32 %v3682, %v3751
        %v3753 = vpop.f32.mrb[0].mxu0
        %3754 = vdwg.mxu0
        %3755 = vmatprep.subr.mxu0 %v344
        %3756 = vmatpush1.xpose.msra.mxu0 %v343
        %3757 = vmatprep.subr.mxu0 %v536
        %3758 = vmatpush1.xpose.msra.mxu0 %v535
        %3759 = vmatprep.subr.mxu0 0.0
        %3760 = vmatpush1.xpose.msra.mxu0 0.0
        %3761 = vmatprep.subr.mxu0 0.0
        %3762 = vmatpush1.xpose.msra.mxu0 0.0
        %3763 = vmatprep.subr.mxu0 0.0
        %3764 = vmatpush1.xpose.msra.mxu0 0.0
        %3765 = vmatprep.subr.mxu0 0.0
        %3766 = vmatpush1.xpose.msra.mxu0 0.0
        %3767 = vmatprep.subr.mxu0 0.0
        %3768 = vmatpush1.xpose.msra.mxu0 0.0
        %3769 = vmatprep.subr.mxu0 0.0
        %3770 = vmatpush1.xpose.msra.mxu0 0.0
        %3771 = vmatprep.subr.mxu0 0.0
        %3772 = vmatpush1.xpose.msra.mxu0 0.0
        %3773 = vmatprep.subr.mxu0 0.0
        %3774 = vmatpush1.xpose.msra.mxu0 0.0
        %3775 = vmatprep.subr.mxu0 0.0
        %3776 = vmatpush1.xpose.msra.mxu0 0.0
        %3777 = vmatprep.subr.mxu0 0.0
        %3778 = vmatpush1.xpose.msra.mxu0 0.0
        %3779 = vmatprep.subr.mxu0 0.0
        %3780 = vmatpush1.xpose.msra.mxu0 0.0
        %3781 = vmatprep.subr.mxu0 0.0
        %3782 = vmatpush1.xpose.msra.mxu0 0.0
        %3783 = vmatprep.subr.mxu0 0.0
        %3784 = vmatpush1.xpose.msra.mxu0 0.0
        %3785 = vmatprep.subr.mxu0 0.0
        %3786 = vmatpush1.xpose.msra.mxu0 0.0
        %3787 = vmatprep.subr.mxu0 0.0
        %3788 = vmatpush1.xpose.msra.mxu0 0.0
        %3789 = vmatprep.subr.mxu0 0.0
        %3790 = vmatpush1.xpose.msra.mxu0 0.0
        %3791 = vmatprep.subr.mxu0 0.0
        %3792 = vmatpush1.xpose.msra.mxu0 0.0
        %3793 = vmatprep.subr.mxu0 0.0
        %3794 = vmatpush1.xpose.msra.mxu0 0.0
        %3795 = vmatprep.subr.mxu0 0.0
        %3796 = vmatpush1.xpose.msra.mxu0 0.0
        %3797 = vmatprep.subr.mxu0 0.0
        %3798 = vmatpush1.xpose.msra.mxu0 0.0
        %3799 = vmatprep.subr.mxu0 0.0
        %3800 = vmatpush1.xpose.msra.mxu0 0.0
        %3801 = vmatprep.subr.mxu0 0.0
        %3802 = vmatpush1.xpose.msra.mxu0 0.0
        %3803 = vmatprep.subr.mxu0 0.0
        %3804 = vmatpush1.xpose.msra.mxu0 0.0
        %3805 = vmatprep.subr.mxu0 0.0
        %3806 = vmatpush1.xpose.msra.mxu0 0.0
        %3807 = vmatprep.subr.mxu0 0.0
        %3808 = vmatpush1.xpose.msra.mxu0 0.0
        %3809 = vmatprep.subr.mxu0 0.0
        %3810 = vmatpush1.xpose.msra.mxu0 0.0
        %3811 = vmatprep.subr.mxu0 0.0
        %3812 = vmatpush1.xpose.msra.mxu0 0.0
        %3813 = vmatprep.subr.mxu0 0.0
        %3814 = vmatpush1.xpose.msra.mxu0 0.0
        %3815 = vmatprep.subr.mxu0 0.0
        %3816 = vmatpush1.xpose.msra.mxu0 0.0
        %3817 = vmatprep.subr.mxu0 0.0
        %3818 = vmatpush1.xpose.msra.mxu0 0.0
        %3819 = vmatprep.mubr.f32.mxu0 %v971
        %3820 = vmatmul.mubr.f32.gmra.mrb[0].mxu0 %v969
        %v3821 = vpop.f32.mrb[0].mxu0
        %v3822 = vadd.f32 %v3752, %v3821
        %v3823 = vpop.f32.mrb[0].mxu0
        %3824 = vdwg.mxu0
        %3825 = vmatprep.subr.mxu0 %v346
        %3826 = vmatpush1.xpose.msra.mxu0 %v345
        %3827 = vmatprep.subr.mxu0 %v538
        %3828 = vmatpush1.xpose.msra.mxu0 %v537
        %3829 = vmatprep.subr.mxu0 0.0
        %3830 = vmatpush1.xpose.msra.mxu0 0.0
        %3831 = vmatprep.subr.mxu0 0.0
        %3832 = vmatpush1.xpose.msra.mxu0 0.0
        %3833 = vmatprep.subr.mxu0 0.0
        %3834 = vmatpush1.xpose.msra.mxu0 0.0
        %3835 = vmatprep.subr.mxu0 0.0
        %3836 = vmatpush1.xpose.msra.mxu0 0.0
        %3837 = vmatprep.subr.mxu0 0.0
        %3838 = vmatpush1.xpose.msra.mxu0 0.0
        %3839 = vmatprep.subr.mxu0 0.0
        %3840 = vmatpush1.xpose.msra.mxu0 0.0
        %3841 = vmatprep.subr.mxu0 0.0
        %3842 = vmatpush1.xpose.msra.mxu0 0.0
        %3843 = vmatprep.subr.mxu0 0.0
        %3844 = vmatpush1.xpose.msra.mxu0 0.0
        %3845 = vmatprep.subr.mxu0 0.0
        %3846 = vmatpush1.xpose.msra.mxu0 0.0
        %3847 = vmatprep.subr.mxu0 0.0
        %3848 = vmatpush1.xpose.msra.mxu0 0.0
        %3849 = vmatprep.subr.mxu0 0.0
        %3850 = vmatpush1.xpose.msra.mxu0 0.0
        %3851 = vmatprep.subr.mxu0 0.0
        %3852 = vmatpush1.xpose.msra.mxu0 0.0
        %3853 = vmatprep.subr.mxu0 0.0
        %3854 = vmatpush1.xpose.msra.mxu0 0.0
        %3855 = vmatprep.subr.mxu0 0.0
        %3856 = vmatpush1.xpose.msra.mxu0 0.0
        %3857 = vmatprep.subr.mxu0 0.0
        %3858 = vmatpush1.xpose.msra.mxu0 0.0
        %3859 = vmatprep.subr.mxu0 0.0
        %3860 = vmatpush1.xpose.msra.mxu0 0.0
        %3861 = vmatprep.subr.mxu0 0.0
        %3862 = vmatpush1.xpose.msra.mxu0 0.0
        %3863 = vmatprep.subr.mxu0 0.0
        %3864 = vmatpush1.xpose.msra.mxu0 0.0
        %3865 = vmatprep.subr.mxu0 0.0
        %3866 = vmatpush1.xpose.msra.mxu0 0.0
        %3867 = vmatprep.subr.mxu0 0.0
        %3868 = vmatpush1.xpose.msra.mxu0 0.0
        %3869 = vmatprep.subr.mxu0 0.0
        %3870 = vmatpush1.xpose.msra.mxu0 0.0
        %3871 = vmatprep.subr.mxu0 0.0
        %3872 = vmatpush1.xpose.msra.mxu0 0.0
        %3873 = vmatprep.subr.mxu0 0.0
        %3874 = vmatpush1.xpose.msra.mxu0 0.0
        %3875 = vmatprep.subr.mxu0 0.0
        %3876 = vmatpush1.xpose.msra.mxu0 0.0
        %3877 = vmatprep.subr.mxu0 0.0
        %3878 = vmatpush1.xpose.msra.mxu0 0.0
        %3879 = vmatprep.subr.mxu0 0.0
        %3880 = vmatpush1.xpose.msra.mxu0 0.0
        %3881 = vmatprep.subr.mxu0 0.0
        %3882 = vmatpush1.xpose.msra.mxu0 0.0
        %3883 = vmatprep.subr.mxu0 0.0
        %3884 = vmatpush1.xpose.msra.mxu0 0.0
        %3885 = vmatprep.subr.mxu0 0.0
        %3886 = vmatpush1.xpose.msra.mxu0 0.0
        %3887 = vmatprep.subr.mxu0 0.0
        %3888 = vmatpush1.xpose.msra.mxu0 0.0
        %3889 = vmatprep.mubr.f32.mxu0 %v987
        %3890 = vmatmul.mubr.f32.gmra.mrb[0].mxu0 %v979
        %v3891 = vpop.f32.mrb[0].mxu0
        %v3892 = vadd.f32 %v3822, %v3891
        %v3893 = vpop.f32.mrb[0].mxu0
        %3894 = vdwg.mxu0
        %3895 = vmatprep.subr.mxu0 %v348
        %3896 = vmatpush1.xpose.msra.mxu0 %v347
        %3897 = vmatprep.subr.mxu0 %v540
        %3898 = vmatpush1.xpose.msra.mxu0 %v539
        %3899 = vmatprep.subr.mxu0 0.0
        %3900 = vmatpush1.xpose.msra.mxu0 0.0
        %3901 = vmatprep.subr.mxu0 0.0
        %3902 = vmatpush1.xpose.msra.mxu0 0.0
        %3903 = vmatprep.subr.mxu0 0.0
        %3904 = vmatpush1.xpose.msra.mxu0 0.0
        %3905 = vmatprep.subr.mxu0 0.0
        %3906 = vmatpush1.xpose.msra.mxu0 0.0
        %3907 = vmatprep.subr.mxu0 0.0
        %3908 = vmatpush1.xpose.msra.mxu0 0.0
        %3909 = vmatprep.subr.mxu0 0.0
        %3910 = vmatpush1.xpose.msra.mxu0 0.0
        %3911 = vmatprep.subr.mxu0 0.0
        %3912 = vmatpush1.xpose.msra.mxu0 0.0
        %3913 = vmatprep.subr.mxu0 0.0
        %3914 = vmatpush1.xpose.msra.mxu0 0.0
        %3915 = vmatprep.subr.mxu0 0.0
        %3916 = vmatpush1.xpose.msra.mxu0 0.0
        %3917 = vmatprep.subr.mxu0 0.0
        %3918 = vmatpush1.xpose.msra.mxu0 0.0
        %3919 = vmatprep.subr.mxu0 0.0
        %3920 = vmatpush1.xpose.msra.mxu0 0.0
        %3921 = vmatprep.subr.mxu0 0.0
        %3922 = vmatpush1.xpose.msra.mxu0 0.0
        %3923 = vmatprep.subr.mxu0 0.0
        %3924 = vmatpush1.xpose.msra.mxu0 0.0
        %3925 = vmatprep.subr.mxu0 0.0
        %3926 = vmatpush1.xpose.msra.mxu0 0.0
        %3927 = vmatprep.subr.mxu0 0.0
        %3928 = vmatpush1.xpose.msra.mxu0 0.0
        %3929 = vmatprep.subr.mxu0 0.0
        %3930 = vmatpush1.xpose.msra.mxu0 0.0
        %3931 = vmatprep.subr.mxu0 0.0
        %3932 = vmatpush1.xpose.msra.mxu0 0.0
        %3933 = vmatprep.subr.mxu0 0.0
        %3934 = vmatpush1.xpose.msra.mxu0 0.0
        %3935 = vmatprep.subr.mxu0 0.0
        %3936 = vmatpush1.xpose.msra.mxu0 0.0
        %3937 = vmatprep.subr.mxu0 0.0
        %3938 = vmatpush1.xpose.msra.mxu0 0.0
        %3939 = vmatprep.subr.mxu0 0.0
        %3940 = vmatpush1.xpose.msra.mxu0 0.0
        %3941 = vmatprep.subr.mxu0 0.0
        %3942 = vmatpush1.xpose.msra.mxu0 0.0
        %3943 = vmatprep.subr.mxu0 0.0
        %3944 = vmatpush1.xpose.msra.mxu0 0.0
        %3945 = vmatprep.subr.mxu0 0.0
        %3946 = vmatpush1.xpose.msra.mxu0 0.0
        %3947 = vmatprep.subr.mxu0 0.0
        %3948 = vmatpush1.xpose.msra.mxu0 0.0
        %3949 = vmatprep.subr.mxu0 0.0
        %3950 = vmatpush1.xpose.msra.mxu0 0.0
        %3951 = vmatprep.subr.mxu0 0.0
        %3952 = vmatpush1.xpose.msra.mxu0 0.0
        %3953 = vmatprep.subr.mxu0 0.0
        %3954 = vmatpush1.xpose.msra.mxu0 0.0
        %3955 = vmatprep.subr.mxu0 0.0
        %3956 = vmatpush1.xpose.msra.mxu0 0.0
        %3957 = vmatprep.subr.mxu0 0.0
        %3958 = vmatpush1.xpose.msra.mxu0 0.0
        %3959 = vmatprep.mubr.f32.mxu0 %v988
        %3960 = vmatmul.mubr.f32.gmra.mrb[0].mxu0 %v986
        %v3961 = vpop.f32.mrb[0].mxu0
        %v3962 = vadd.f32 %v3892, %v3961
        %v3963 = vpop.f32.mrb[0].mxu0
        %3964 = vdwg.mxu0
        %3965 = vmatprep.subr.mxu0 %v350
        %3966 = vmatpush1.xpose.msra.mxu0 %v349
        %3967 = vmatprep.subr.mxu0 %v542
        %3968 = vmatpush1.xpose.msra.mxu0 %v541
        %3969 = vmatprep.subr.mxu0 0.0
        %3970 = vmatpush1.xpose.msra.mxu0 0.0
        %3971 = vmatprep.subr.mxu0 0.0
        %3972 = vmatpush1.xpose.msra.mxu0 0.0
        %3973 = vmatprep.subr.mxu0 0.0
        %3974 = vmatpush1.xpose.msra.mxu0 0.0
        %3975 = vmatprep.subr.mxu0 0.0
        %3976 = vmatpush1.xpose.msra.mxu0 0.0
        %3977 = vmatprep.subr.mxu0 0.0
        %3978 = vmatpush1.xpose.msra.mxu0 0.0
        %3979 = vmatprep.subr.mxu0 0.0
        %3980 = vmatpush1.xpose.msra.mxu0 0.0
        %3981 = vmatprep.subr.mxu0 0.0
        %3982 = vmatpush1.xpose.msra.mxu0 0.0
        %3983 = vmatprep.subr.mxu0 0.0
        %3984 = vmatpush1.xpose.msra.mxu0 0.0
        %3985 = vmatprep.subr.mxu0 0.0
        %3986 = vmatpush1.xpose.msra.mxu0 0.0
        %3987 = vmatprep.subr.mxu0 0.0
        %3988 = vmatpush1.xpose.msra.mxu0 0.0
        %3989 = vmatprep.subr.mxu0 0.0
        %3990 = vmatpush1.xpose.msra.mxu0 0.0
        %3991 = vmatprep.subr.mxu0 0.0
        %3992 = vmatpush1.xpose.msra.mxu0 0.0
        %3993 = vmatprep.subr.mxu0 0.0
        %3994 = vmatpush1.xpose.msra.mxu0 0.0
        %3995 = vmatprep.subr.mxu0 0.0
        %3996 = vmatpush1.xpose.msra.mxu0 0.0
        %3997 = vmatprep.subr.mxu0 0.0
        %3998 = vmatpush1.xpose.msra.mxu0 0.0
        %3999 = vmatprep.subr.mxu0 0.0
        %4000 = vmatpush1.xpose.msra.mxu0 0.0
        %4001 = vmatprep.subr.mxu0 0.0
        %4002 = vmatpush1.xpose.msra.mxu0 0.0
        %4003 = vmatprep.subr.mxu0 0.0
        %4004 = vmatpush1.xpose.msra.mxu0 0.0
        %4005 = vmatprep.subr.mxu0 0.0
        %4006 = vmatpush1.xpose.msra.mxu0 0.0
        %4007 = vmatprep.subr.mxu0 0.0
        %4008 = vmatpush1.xpose.msra.mxu0 0.0
        %4009 = vmatprep.subr.mxu0 0.0
        %4010 = vmatpush1.xpose.msra.mxu0 0.0
        %4011 = vmatprep.subr.mxu0 0.0
        %4012 = vmatpush1.xpose.msra.mxu0 0.0
        %4013 = vmatprep.subr.mxu0 0.0
        %4014 = vmatpush1.xpose.msra.mxu0 0.0
        %4015 = vmatprep.subr.mxu0 0.0
        %4016 = vmatpush1.xpose.msra.mxu0 0.0
        %4017 = vmatprep.subr.mxu0 0.0
        %4018 = vmatpush1.xpose.msra.mxu0 0.0
        %4019 = vmatprep.subr.mxu0 0.0
        %4020 = vmatpush1.xpose.msra.mxu0 0.0
        %4021 = vmatprep.subr.mxu0 0.0
        %4022 = vmatpush1.xpose.msra.mxu0 0.0
        %4023 = vmatprep.subr.mxu0 0.0
        %4024 = vmatpush1.xpose.msra.mxu0 0.0
        %4025 = vmatprep.subr.mxu0 0.0
        %4026 = vmatpush1.xpose.msra.mxu0 0.0
        %4027 = vmatprep.subr.mxu0 0.0
        %4028 = vmatpush1.xpose.msra.mxu0 0.0
        %4029 = vmatprep.mubr.f32.mxu0 %v1004
        %4030 = vmatmul.mubr.f32.gmra.mrb[0].mxu0 %v996
        %v4031 = vpop.f32.mrb[0].mxu0
        %v4032 = vadd.f32 %v3962, %v4031
        %v4033 = vpop.f32.mrb[0].mxu0
        %4034 = vdwg.mxu0
        %4035 = vmatprep.subr.mxu0 %v352
        %4036 = vmatpush1.xpose.msra.mxu0 %v351
        %4037 = vmatprep.subr.mxu0 %v544
        %4038 = vmatpush1.xpose.msra.mxu0 %v543
        %4039 = vmatprep.subr.mxu0 0.0
        %4040 = vmatpush1.xpose.msra.mxu0 0.0
        %4041 = vmatprep.subr.mxu0 0.0
        %4042 = vmatpush1.xpose.msra.mxu0 0.0
        %4043 = vmatprep.subr.mxu0 0.0
        %4044 = vmatpush1.xpose.msra.mxu0 0.0
        %4045 = vmatprep.subr.mxu0 0.0
        %4046 = vmatpush1.xpose.msra.mxu0 0.0
        %4047 = vmatprep.subr.mxu0 0.0
        %4048 = vmatpush1.xpose.msra.mxu0 0.0
        %4049 = vmatprep.subr.mxu0 0.0
        %4050 = vmatpush1.xpose.msra.mxu0 0.0
        %4051 = vmatprep.subr.mxu0 0.0
        %4052 = vmatpush1.xpose.msra.mxu0 0.0
        %4053 = vmatprep.subr.mxu0 0.0
        %4054 = vmatpush1.xpose.msra.mxu0 0.0
        %4055 = vmatprep.subr.mxu0 0.0
        %4056 = vmatpush1.xpose.msra.mxu0 0.0
        %4057 = vmatprep.subr.mxu0 0.0
        %4058 = vmatpush1.xpose.msra.mxu0 0.0
        %4059 = vmatprep.subr.mxu0 0.0
        %4060 = vmatpush1.xpose.msra.mxu0 0.0
        %4061 = vmatprep.subr.mxu0 0.0
        %4062 = vmatpush1.xpose.msra.mxu0 0.0
        %4063 = vmatprep.subr.mxu0 0.0
        %4064 = vmatpush1.xpose.msra.mxu0 0.0
        %4065 = vmatprep.subr.mxu0 0.0
        %4066 = vmatpush1.xpose.msra.mxu0 0.0
        %4067 = vmatprep.subr.mxu0 0.0
        %4068 = vmatpush1.xpose.msra.mxu0 0.0
        %4069 = vmatprep.subr.mxu0 0.0
        %4070 = vmatpush1.xpose.msra.mxu0 0.0
        %4071 = vmatprep.subr.mxu0 0.0
        %4072 = vmatpush1.xpose.msra.mxu0 0.0
        %4073 = vmatprep.subr.mxu0 0.0
        %4074 = vmatpush1.xpose.msra.mxu0 0.0
        %4075 = vmatprep.subr.mxu0 0.0
        %4076 = vmatpush1.xpose.msra.mxu0 0.0
        %4077 = vmatprep.subr.mxu0 0.0
        %4078 = vmatpush1.xpose.msra.mxu0 0.0
        %4079 = vmatprep.subr.mxu0 0.0
        %4080 = vmatpush1.xpose.msra.mxu0 0.0
        %4081 = vmatprep.subr.mxu0 0.0
        %4082 = vmatpush1.xpose.msra.mxu0 0.0
        %4083 = vmatprep.subr.mxu0 0.0
        %4084 = vmatpush1.xpose.msra.mxu0 0.0
        %4085 = vmatprep.subr.mxu0 0.0
        %4086 = vmatpush1.xpose.msra.mxu0 0.0
        %4087 = vmatprep.subr.mxu0 0.0
        %4088 = vmatpush1.xpose.msra.mxu0 0.0
        %4089 = vmatprep.subr.mxu0 0.0
        %4090 = vmatpush1.xpose.msra.mxu0 0.0
        %4091 = vmatprep.subr.mxu0 0.0
        %4092 = vmatpush1.xpose.msra.mxu0 0.0
        %4093 = vmatprep.subr.mxu0 0.0
        %4094 = vmatpush1.xpose.msra.mxu0 0.0
        %4095 = vmatprep.subr.mxu0 0.0
        %4096 = vmatpush1.xpose.msra.mxu0 0.0
        %4097 = vmatprep.subr.mxu0 0.0
        %4098 = vmatpush1.xpose.msra.mxu0 0.0
        %4099 = vmatprep.mubr.f32.mxu0 %v1005
        %4100 = vmatmul.mubr.f32.gmra.mrb[0].mxu0 %v1003
        %v4101 = vpop.f32.mrb[0].mxu0
        %v4102 = vadd.f32 %v4032, %v4101
        %v4103 = vpop.f32.mrb[0].mxu0
        %4104 = vdwg.mxu0
        %4105 = vmatprep.subr.mxu0 %v354
        %4106 = vmatpush1.xpose.msra.mxu0 %v353
        %4107 = vmatprep.subr.mxu0 %v546
        %4108 = vmatpush1.xpose.msra.mxu0 %v545
        %4109 = vmatprep.subr.mxu0 0.0
        %4110 = vmatpush1.xpose.msra.mxu0 0.0
        %4111 = vmatprep.subr.mxu0 0.0
        %4112 = vmatpush1.xpose.msra.mxu0 0.0
        %4113 = vmatprep.subr.mxu0 0.0
        %4114 = vmatpush1.xpose.msra.mxu0 0.0
        %4115 = vmatprep.subr.mxu0 0.0
        %4116 = vmatpush1.xpose.msra.mxu0 0.0
        %4117 = vmatprep.subr.mxu0 0.0
        %4118 = vmatpush1.xpose.msra.mxu0 0.0
        %4119 = vmatprep.subr.mxu0 0.0
        %4120 = vmatpush1.xpose.msra.mxu0 0.0
        %4121 = vmatprep.subr.mxu0 0.0
        %4122 = vmatpush1.xpose.msra.mxu0 0.0
        %4123 = vmatprep.subr.mxu0 0.0
        %4124 = vmatpush1.xpose.msra.mxu0 0.0
        %4125 = vmatprep.subr.mxu0 0.0
        %4126 = vmatpush1.xpose.msra.mxu0 0.0
        %4127 = vmatprep.subr.mxu0 0.0
        %4128 = vmatpush1.xpose.msra.mxu0 0.0
        %4129 = vmatprep.subr.mxu0 0.0
        %4130 = vmatpush1.xpose.msra.mxu0 0.0
        %4131 = vmatprep.subr.mxu0 0.0
        %4132 = vmatpush1.xpose.msra.mxu0 0.0
        %4133 = vmatprep.subr.mxu0 0.0
        %4134 = vmatpush1.xpose.msra.mxu0 0.0
        %4135 = vmatprep.subr.mxu0 0.0
        %4136 = vmatpush1.xpose.msra.mxu0 0.0
        %4137 = vmatprep.subr.mxu0 0.0
        %4138 = vmatpush1.xpose.msra.mxu0 0.0
        %4139 = vmatprep.subr.mxu0 0.0
        %4140 = vmatpush1.xpose.msra.mxu0 0.0
        %4141 = vmatprep.subr.mxu0 0.0
        %4142 = vmatpush1.xpose.msra.mxu0 0.0
        %4143 = vmatprep.subr.mxu0 0.0
        %4144 = vmatpush1.xpose.msra.mxu0 0.0
        %4145 = vmatprep.subr.mxu0 0.0
        %4146 = vmatpush1.xpose.msra.mxu0 0.0
        %4147 = vmatprep.subr.mxu0 0.0
        %4148 = vmatpush1.xpose.msra.mxu0 0.0
        %4149 = vmatprep.subr.mxu0 0.0
        %4150 = vmatpush1.xpose.msra.mxu0 0.0
        %4151 = vmatprep.subr.mxu0 0.0
        %4152 = vmatpush1.xpose.msra.mxu0 0.0
        %4153 = vmatprep.subr.mxu0 0.0
        %4154 = vmatpush1.xpose.msra.mxu0 0.0
        %4155 = vmatprep.subr.mxu0 0.0
        %4156 = vmatpush1.xpose.msra.mxu0 0.0
        %4157 = vmatprep.subr.mxu0 0.0
        %4158 = vmatpush1.xpose.msra.mxu0 0.0
        %4159 = vmatprep.subr.mxu0 0.0
        %4160 = vmatpush1.xpose.msra.mxu0 0.0
        %4161 = vmatprep.subr.mxu0 0.0
        %4162 = vmatpush1.xpose.msra.mxu0 0.0
        %4163 = vmatprep.subr.mxu0 0.0
        %4164 = vmatpush1.xpose.msra.mxu0 0.0
        %4165 = vmatprep.subr.mxu0 0.0
        %4166 = vmatpush1.xpose.msra.mxu0 0.0
        %4167 = vmatprep.subr.mxu0 0.0
        %4168 = vmatpush1.xpose.msra.mxu0 0.0
        %4169 = vmatprep.mubr.f32.mxu0 %v1021
        %4170 = vmatmul.mubr.f32.gmra.mrb[0].mxu0 %v1013
        %v4171 = vpop.f32.mrb[0].mxu0
        %v4172 = vadd.f32 %v4102, %v4171
        %v4173 = vpop.f32.mrb[0].mxu0
        %4174 = vdwg.mxu0
        %4175 = vmatprep.subr.mxu0 %v356
        %4176 = vmatpush1.xpose.msra.mxu0 %v355
        %4177 = vmatprep.subr.mxu0 %v548
        %4178 = vmatpush1.xpose.msra.mxu0 %v547
        %4179 = vmatprep.subr.mxu0 0.0
        %4180 = vmatpush1.xpose.msra.mxu0 0.0
        %4181 = vmatprep.subr.mxu0 0.0
        %4182 = vmatpush1.xpose.msra.mxu0 0.0
        %4183 = vmatprep.subr.mxu0 0.0
        %4184 = vmatpush1.xpose.msra.mxu0 0.0
        %4185 = vmatprep.subr.mxu0 0.0
        %4186 = vmatpush1.xpose.msra.mxu0 0.0
        %4187 = vmatprep.subr.mxu0 0.0
        %4188 = vmatpush1.xpose.msra.mxu0 0.0
        %4189 = vmatprep.subr.mxu0 0.0
        %4190 = vmatpush1.xpose.msra.mxu0 0.0
        %4191 = vmatprep.subr.mxu0 0.0
        %4192 = vmatpush1.xpose.msra.mxu0 0.0
        %4193 = vmatprep.subr.mxu0 0.0
        %4194 = vmatpush1.xpose.msra.mxu0 0.0
        %4195 = vmatprep.subr.mxu0 0.0
        %4196 = vmatpush1.xpose.msra.mxu0 0.0
        %4197 = vmatprep.subr.mxu0 0.0
        %4198 = vmatpush1.xpose.msra.mxu0 0.0
        %4199 = vmatprep.subr.mxu0 0.0
        %4200 = vmatpush1.xpose.msra.mxu0 0.0
        %4201 = vmatprep.subr.mxu0 0.0
        %4202 = vmatpush1.xpose.msra.mxu0 0.0
        %4203 = vmatprep.subr.mxu0 0.0
        %4204 = vmatpush1.xpose.msra.mxu0 0.0
        %4205 = vmatprep.subr.mxu0 0.0
        %4206 = vmatpush1.xpose.msra.mxu0 0.0
        %4207 = vmatprep.subr.mxu0 0.0
        %4208 = vmatpush1.xpose.msra.mxu0 0.0
        %4209 = vmatprep.subr.mxu0 0.0
        %4210 = vmatpush1.xpose.msra.mxu0 0.0
        %4211 = vmatprep.subr.mxu0 0.0
        %4212 = vmatpush1.xpose.msra.mxu0 0.0
        %4213 = vmatprep.subr.mxu0 0.0
        %4214 = vmatpush1.xpose.msra.mxu0 0.0
        %4215 = vmatprep.subr.mxu0 0.0
        %4216 = vmatpush1.xpose.msra.mxu0 0.0
        %4217 = vmatprep.subr.mxu0 0.0
        %4218 = vmatpush1.xpose.msra.mxu0 0.0
        %4219 = vmatprep.subr.mxu0 0.0
        %4220 = vmatpush1.xpose.msra.mxu0 0.0
        %4221 = vmatprep.subr.mxu0 0.0
        %4222 = vmatpush1.xpose.msra.mxu0 0.0
        %4223 = vmatprep.subr.mxu0 0.0
        %4224 = vmatpush1.xpose.msra.mxu0 0.0
        %4225 = vmatprep.subr.mxu0 0.0
        %4226 = vmatpush1.xpose.msra.mxu0 0.0
        %4227 = vmatprep.subr.mxu0 0.0
        %4228 = vmatpush1.xpose.msra.mxu0 0.0
        %4229 = vmatprep.subr.mxu0 0.0
        %4230 = vmatpush1.xpose.msra.mxu0 0.0
        %4231 = vmatprep.subr.mxu0 0.0
        %4232 = vmatpush1.xpose.msra.mxu0 0.0
        %4233 = vmatprep.subr.mxu0 0.0
        %4234 = vmatpush1.xpose.msra.mxu0 0.0
        %4235 = vmatprep.subr.mxu0 0.0
        %4236 = vmatpush1.xpose.msra.mxu0 0.0
        %4237 = vmatprep.subr.mxu0 0.0
        %4238 = vmatpush1.xpose.msra.mxu0 0.0
        %4239 = vmatprep.mubr.f32.mxu0 %v1022
        %4240 = vmatmul.mubr.f32.gmra.mrb[0].mxu0 %v1020
        %v4241 = vpop.f32.mrb[0].mxu0
        %v4242 = vadd.f32 %v4172, %v4241
        %v4243 = vpop.f32.mrb[0].mxu0
        %4244 = vdwg.mxu0
        %4245 = vmatprep.subr.mxu0 %v358
        %4246 = vmatpush1.xpose.msra.mxu0 %v357
        %4247 = vmatprep.subr.mxu0 %v550
        %4248 = vmatpush1.xpose.msra.mxu0 %v549
        %4249 = vmatprep.subr.mxu0 0.0
        %4250 = vmatpush1.xpose.msra.mxu0 0.0
        %4251 = vmatprep.subr.mxu0 0.0
        %4252 = vmatpush1.xpose.msra.mxu0 0.0
        %4253 = vmatprep.subr.mxu0 0.0
        %4254 = vmatpush1.xpose.msra.mxu0 0.0
        %4255 = vmatprep.subr.mxu0 0.0
        %4256 = vmatpush1.xpose.msra.mxu0 0.0
        %4257 = vmatprep.subr.mxu0 0.0
        %4258 = vmatpush1.xpose.msra.mxu0 0.0
        %4259 = vmatprep.subr.mxu0 0.0
        %4260 = vmatpush1.xpose.msra.mxu0 0.0
        %4261 = vmatprep.subr.mxu0 0.0
        %4262 = vmatpush1.xpose.msra.mxu0 0.0
        %4263 = vmatprep.subr.mxu0 0.0
        %4264 = vmatpush1.xpose.msra.mxu0 0.0
        %4265 = vmatprep.subr.mxu0 0.0
        %4266 = vmatpush1.xpose.msra.mxu0 0.0
        %4267 = vmatprep.subr.mxu0 0.0
        %4268 = vmatpush1.xpose.msra.mxu0 0.0
        %4269 = vmatprep.subr.mxu0 0.0
        %4270 = vmatpush1.xpose.msra.mxu0 0.0
        %4271 = vmatprep.subr.mxu0 0.0
        %4272 = vmatpush1.xpose.msra.mxu0 0.0
        %4273 = vmatprep.subr.mxu0 0.0
        %4274 = vmatpush1.xpose.msra.mxu0 0.0
        %4275 = vmatprep.subr.mxu0 0.0
        %4276 = vmatpush1.xpose.msra.mxu0 0.0
        %4277 = vmatprep.subr.mxu0 0.0
        %4278 = vmatpush1.xpose.msra.mxu0 0.0
        %4279 = vmatprep.subr.mxu0 0.0
        %4280 = vmatpush1.xpose.msra.mxu0 0.0
        %4281 = vmatprep.subr.mxu0 0.0
        %4282 = vmatpush1.xpose.msra.mxu0 0.0
        %4283 = vmatprep.subr.mxu0 0.0
        %4284 = vmatpush1.xpose.msra.mxu0 0.0
        %4285 = vmatprep.subr.mxu0 0.0
        %4286 = vmatpush1.xpose.msra.mxu0 0.0
        %4287 = vmatprep.subr.mxu0 0.0
        %4288 = vmatpush1.xpose.msra.mxu0 0.0
        %4289 = vmatprep.subr.mxu0 0.0
        %4290 = vmatpush1.xpose.msra.mxu0 0.0
        %4291 = vmatprep.subr.mxu0 0.0
        %4292 = vmatpush1.xpose.msra.mxu0 0.0
        %4293 = vmatprep.subr.mxu0 0.0
        %4294 = vmatpush1.xpose.msra.mxu0 0.0
        %4295 = vmatprep.subr.mxu0 0.0
        %4296 = vmatpush1.xpose.msra.mxu0 0.0
        %4297 = vmatprep.subr.mxu0 0.0
        %4298 = vmatpush1.xpose.msra.mxu0 0.0
        %4299 = vmatprep.subr.mxu0 0.0
        %4300 = vmatpush1.xpose.msra.mxu0 0.0
        %4301 = vmatprep.subr.mxu0 0.0
        %4302 = vmatpush1.xpose.msra.mxu0 0.0
        %4303 = vmatprep.subr.mxu0 0.0
        %4304 = vmatpush1.xpose.msra.mxu0 0.0
        %4305 = vmatprep.subr.mxu0 0.0
        %4306 = vmatpush1.xpose.msra.mxu0 0.0
        %4307 = vmatprep.subr.mxu0 0.0
        %4308 = vmatpush1.xpose.msra.mxu0 0.0
        %4309 = vmatprep.mubr.f32.mxu0 %v1038
        %4310 = vmatmul.mubr.f32.gmra.mrb[0].mxu0 %v1030
        %v4311 = vpop.f32.mrb[0].mxu0
        %v4312 = vadd.f32 %v4242, %v4311
        %v4313 = vpop.f32.mrb[0].mxu0
        %4314 = vdwg.mxu0
        %4315 = vmatprep.subr.mxu0 %v360
        %4316 = vmatpush1.xpose.msra.mxu0 %v359
        %4317 = vmatprep.subr.mxu0 %v552
        %4318 = vmatpush1.xpose.msra.mxu0 %v551
        %4319 = vmatprep.subr.mxu0 0.0
        %4320 = vmatpush1.xpose.msra.mxu0 0.0
        %4321 = vmatprep.subr.mxu0 0.0
        %4322 = vmatpush1.xpose.msra.mxu0 0.0
        %4323 = vmatprep.subr.mxu0 0.0
        %4324 = vmatpush1.xpose.msra.mxu0 0.0
        %4325 = vmatprep.subr.mxu0 0.0
        %4326 = vmatpush1.xpose.msra.mxu0 0.0
        %4327 = vmatprep.subr.mxu0 0.0
        %4328 = vmatpush1.xpose.msra.mxu0 0.0
        %4329 = vmatprep.subr.mxu0 0.0
        %4330 = vmatpush1.xpose.msra.mxu0 0.0
        %4331 = vmatprep.subr.mxu0 0.0
        %4332 = vmatpush1.xpose.msra.mxu0 0.0
        %4333 = vmatprep.subr.mxu0 0.0
        %4334 = vmatpush1.xpose.msra.mxu0 0.0
        %4335 = vmatprep.subr.mxu0 0.0
        %4336 = vmatpush1.xpose.msra.mxu0 0.0
        %4337 = vmatprep.subr.mxu0 0.0
        %4338 = vmatpush1.xpose.msra.mxu0 0.0
        %4339 = vmatprep.subr.mxu0 0.0
        %4340 = vmatpush1.xpose.msra.mxu0 0.0
        %4341 = vmatprep.subr.mxu0 0.0
        %4342 = vmatpush1.xpose.msra.mxu0 0.0
        %4343 = vmatprep.subr.mxu0 0.0
        %4344 = vmatpush1.xpose.msra.mxu0 0.0
        %4345 = vmatprep.subr.mxu0 0.0
        %4346 = vmatpush1.xpose.msra.mxu0 0.0
        %4347 = vmatprep.subr.mxu0 0.0
        %4348 = vmatpush1.xpose.msra.mxu0 0.0
        %4349 = vmatprep.subr.mxu0 0.0
        %4350 = vmatpush1.xpose.msra.mxu0 0.0
        %4351 = vmatprep.subr.mxu0 0.0
        %4352 = vmatpush1.xpose.msra.mxu0 0.0
        %4353 = vmatprep.subr.mxu0 0.0
        %4354 = vmatpush1.xpose.msra.mxu0 0.0
        %4355 = vmatprep.subr.mxu0 0.0
        %4356 = vmatpush1.xpose.msra.mxu0 0.0
        %4357 = vmatprep.subr.mxu0 0.0
        %4358 = vmatpush1.xpose.msra.mxu0 0.0
        %4359 = vmatprep.subr.mxu0 0.0
        %4360 = vmatpush1.xpose.msra.mxu0 0.0
        %4361 = vmatprep.subr.mxu0 0.0
        %4362 = vmatpush1.xpose.msra.mxu0 0.0
        %4363 = vmatprep.subr.mxu0 0.0
        %4364 = vmatpush1.xpose.msra.mxu0 0.0
        %4365 = vmatprep.subr.mxu0 0.0
        %4366 = vmatpush1.xpose.msra.mxu0 0.0
        %4367 = vmatprep.subr.mxu0 0.0
        %4368 = vmatpush1.xpose.msra.mxu0 0.0
        %4369 = vmatprep.subr.mxu0 0.0
        %4370 = vmatpush1.xpose.msra.mxu0 0.0
        %4371 = vmatprep.subr.mxu0 0.0
        %4372 = vmatpush1.xpose.msra.mxu0 0.0
        %4373 = vmatprep.subr.mxu0 0.0
        %4374 = vmatpush1.xpose.msra.mxu0 0.0
        %4375 = vmatprep.subr.mxu0 0.0
        %4376 = vmatpush1.xpose.msra.mxu0 0.0
        %4377 = vmatprep.subr.mxu0 0.0
        %4378 = vmatpush1.xpose.msra.mxu0 0.0
        %4379 = vmatprep.mubr.f32.mxu0 %v1039
        %4380 = vmatmul.mubr.f32.gmra.mrb[0].mxu0 %v1037
        %v4381 = vpop.f32.mrb[0].mxu0
        %v4382 = vadd.f32 %v4312, %v4381
        %v4383 = vpop.f32.mrb[0].mxu0
        %4384 = vdwg.mxu0
        %4385 = vmatprep.subr.mxu0 %v362
        %4386 = vmatpush1.xpose.msra.mxu0 %v361
        %4387 = vmatprep.subr.mxu0 %v554
        %4388 = vmatpush1.xpose.msra.mxu0 %v553
        %4389 = vmatprep.subr.mxu0 0.0
        %4390 = vmatpush1.xpose.msra.mxu0 0.0
        %4391 = vmatprep.subr.mxu0 0.0
        %4392 = vmatpush1.xpose.msra.mxu0 0.0
        %4393 = vmatprep.subr.mxu0 0.0
        %4394 = vmatpush1.xpose.msra.mxu0 0.0
        %4395 = vmatprep.subr.mxu0 0.0
        %4396 = vmatpush1.xpose.msra.mxu0 0.0
        %4397 = vmatprep.subr.mxu0 0.0
        %4398 = vmatpush1.xpose.msra.mxu0 0.0
        %4399 = vmatprep.subr.mxu0 0.0
        %4400 = vmatpush1.xpose.msra.mxu0 0.0
        %4401 = vmatprep.subr.mxu0 0.0
        %4402 = vmatpush1.xpose.msra.mxu0 0.0
        %4403 = vmatprep.subr.mxu0 0.0
        %4404 = vmatpush1.xpose.msra.mxu0 0.0
        %4405 = vmatprep.subr.mxu0 0.0
        %4406 = vmatpush1.xpose.msra.mxu0 0.0
        %4407 = vmatprep.subr.mxu0 0.0
        %4408 = vmatpush1.xpose.msra.mxu0 0.0
        %4409 = vmatprep.subr.mxu0 0.0
        %4410 = vmatpush1.xpose.msra.mxu0 0.0
        %4411 = vmatprep.subr.mxu0 0.0
        %4412 = vmatpush1.xpose.msra.mxu0 0.0
        %4413 = vmatprep.subr.mxu0 0.0
        %4414 = vmatpush1.xpose.msra.mxu0 0.0
        %4415 = vmatprep.subr.mxu0 0.0
        %4416 = vmatpush1.xpose.msra.mxu0 0.0
        %4417 = vmatprep.subr.mxu0 0.0
        %4418 = vmatpush1.xpose.msra.mxu0 0.0
        %4419 = vmatprep.subr.mxu0 0.0
        %4420 = vmatpush1.xpose.msra.mxu0 0.0
        %4421 = vmatprep.subr.mxu0 0.0
        %4422 = vmatpush1.xpose.msra.mxu0 0.0
        %4423 = vmatprep.subr.mxu0 0.0
        %4424 = vmatpush1.xpose.msra.mxu0 0.0
        %4425 = vmatprep.subr.mxu0 0.0
        %4426 = vmatpush1.xpose.msra.mxu0 0.0
        %4427 = vmatprep.subr.mxu0 0.0
        %4428 = vmatpush1.xpose.msra.mxu0 0.0
        %4429 = vmatprep.subr.mxu0 0.0
        %4430 = vmatpush1.xpose.msra.mxu0 0.0
        %4431 = vmatprep.subr.mxu0 0.0
        %4432 = vmatpush1.xpose.msra.mxu0 0.0
        %4433 = vmatprep.subr.mxu0 0.0
        %4434 = vmatpush1.xpose.msra.mxu0 0.0
        %4435 = vmatprep.subr.mxu0 0.0
        %4436 = vmatpush1.xpose.msra.mxu0 0.0
        %4437 = vmatprep.subr.mxu0 0.0
        %4438 = vmatpush1.xpose.msra.mxu0 0.0
        %4439 = vmatprep.subr.mxu0 0.0
        %4440 = vmatpush1.xpose.msra.mxu0 0.0
        %4441 = vmatprep.subr.mxu0 0.0
        %4442 = vmatpush1.xpose.msra.mxu0 0.0
        %4443 = vmatprep.subr.mxu0 0.0
        %4444 = vmatpush1.xpose.msra.mxu0 0.0
        %4445 = vmatprep.subr.mxu0 0.0
        %4446 = vmatpush1.xpose.msra.mxu0 0.0
        %4447 = vmatprep.subr.mxu0 0.0
        %4448 = vmatpush1.xpose.msra.mxu0 0.0
        %4449 = vmatprep.mubr.f32.mxu0 %v1055
        %4450 = vmatmul.mubr.f32.gmra.mrb[0].mxu0 %v1047
        %v4451 = vpop.f32.mrb[0].mxu0
        %v4452 = vadd.f32 %v4382, %v4451
        %v4453 = vpop.f32.mrb[0].mxu0
        %4454 = vdwg.mxu0
        %4455 = vmatprep.subr.mxu0 %v364
        %4456 = vmatpush1.xpose.msra.mxu0 %v363
        %4457 = vmatprep.subr.mxu0 %v556
        %4458 = vmatpush1.xpose.msra.mxu0 %v555
        %4459 = vmatprep.subr.mxu0 0.0
        %4460 = vmatpush1.xpose.msra.mxu0 0.0
        %4461 = vmatprep.subr.mxu0 0.0
        %4462 = vmatpush1.xpose.msra.mxu0 0.0
        %4463 = vmatprep.subr.mxu0 0.0
        %4464 = vmatpush1.xpose.msra.mxu0 0.0
        %4465 = vmatprep.subr.mxu0 0.0
        %4466 = vmatpush1.xpose.msra.mxu0 0.0
        %4467 = vmatprep.subr.mxu0 0.0
        %4468 = vmatpush1.xpose.msra.mxu0 0.0
        %4469 = vmatprep.subr.mxu0 0.0
        %4470 = vmatpush1.xpose.msra.mxu0 0.0
        %4471 = vmatprep.subr.mxu0 0.0
        %4472 = vmatpush1.xpose.msra.mxu0 0.0
        %4473 = vmatprep.subr.mxu0 0.0
        %4474 = vmatpush1.xpose.msra.mxu0 0.0
        %4475 = vmatprep.subr.mxu0 0.0
        %4476 = vmatpush1.xpose.msra.mxu0 0.0
        %4477 = vmatprep.subr.mxu0 0.0
        %4478 = vmatpush1.xpose.msra.mxu0 0.0
        %4479 = vmatprep.subr.mxu0 0.0
        %4480 = vmatpush1.xpose.msra.mxu0 0.0
        %4481 = vmatprep.subr.mxu0 0.0
        %4482 = vmatpush1.xpose.msra.mxu0 0.0
        %4483 = vmatprep.subr.mxu0 0.0
        %4484 = vmatpush1.xpose.msra.mxu0 0.0
        %4485 = vmatprep.subr.mxu0 0.0
        %4486 = vmatpush1.xpose.msra.mxu0 0.0
        %4487 = vmatprep.subr.mxu0 0.0
        %4488 = vmatpush1.xpose.msra.mxu0 0.0
        %4489 = vmatprep.subr.mxu0 0.0
        %4490 = vmatpush1.xpose.msra.mxu0 0.0
        %4491 = vmatprep.subr.mxu0 0.0
        %4492 = vmatpush1.xpose.msra.mxu0 0.0
        %4493 = vmatprep.subr.mxu0 0.0
        %4494 = vmatpush1.xpose.msra.mxu0 0.0
        %4495 = vmatprep.subr.mxu0 0.0
        %4496 = vmatpush1.xpose.msra.mxu0 0.0
        %4497 = vmatprep.subr.mxu0 0.0
        %4498 = vmatpush1.xpose.msra.mxu0 0.0
        %4499 = vmatprep.subr.mxu0 0.0
        %4500 = vmatpush1.xpose.msra.mxu0 0.0
        %4501 = vmatprep.subr.mxu0 0.0
        %4502 = vmatpush1.xpose.msra.mxu0 0.0
        %4503 = vmatprep.subr.mxu0 0.0
        %4504 = vmatpush1.xpose.msra.mxu0 0.0
        %4505 = vmatprep.subr.mxu0 0.0
        %4506 = vmatpush1.xpose.msra.mxu0 0.0
        %4507 = vmatprep.subr.mxu0 0.0
        %4508 = vmatpush1.xpose.msra.mxu0 0.0
        %4509 = vmatprep.subr.mxu0 0.0
        %4510 = vmatpush1.xpose.msra.mxu0 0.0
        %4511 = vmatprep.subr.mxu0 0.0
        %4512 = vmatpush1.xpose.msra.mxu0 0.0
        %4513 = vmatprep.subr.mxu0 0.0
        %4514 = vmatpush1.xpose.msra.mxu0 0.0
        %4515 = vmatprep.subr.mxu0 0.0
        %4516 = vmatpush1.xpose.msra.mxu0 0.0
        %4517 = vmatprep.subr.mxu0 0.0
        %4518 = vmatpush1.xpose.msra.mxu0 0.0
        %4519 = vmatprep.mubr.f32.mxu0 %v1056
        %4520 = vmatmul.mubr.f32.gmra.mrb[0].mxu0 %v1054
        %v4521 = vpop.f32.mrb[0].mxu0
        %v4522 = vadd.f32 %v4452, %v4521
        %v4523 = vpop.f32.mrb[0].mxu0
        %4524 = vdwg.mxu0
        %4525 = vmatprep.subr.mxu0 %v366
        %4526 = vmatpush1.xpose.msra.mxu0 %v365
        %4527 = vmatprep.subr.mxu0 %v558
        %4528 = vmatpush1.xpose.msra.mxu0 %v557
        %4529 = vmatprep.subr.mxu0 0.0
        %4530 = vmatpush1.xpose.msra.mxu0 0.0
        %4531 = vmatprep.subr.mxu0 0.0
        %4532 = vmatpush1.xpose.msra.mxu0 0.0
        %4533 = vmatprep.subr.mxu0 0.0
        %4534 = vmatpush1.xpose.msra.mxu0 0.0
        %4535 = vmatprep.subr.mxu0 0.0
        %4536 = vmatpush1.xpose.msra.mxu0 0.0
        %4537 = vmatprep.subr.mxu0 0.0
        %4538 = vmatpush1.xpose.msra.mxu0 0.0
        %4539 = vmatprep.subr.mxu0 0.0
        %4540 = vmatpush1.xpose.msra.mxu0 0.0
        %4541 = vmatprep.subr.mxu0 0.0
        %4542 = vmatpush1.xpose.msra.mxu0 0.0
        %4543 = vmatprep.subr.mxu0 0.0
        %4544 = vmatpush1.xpose.msra.mxu0 0.0
        %4545 = vmatprep.subr.mxu0 0.0
        %4546 = vmatpush1.xpose.msra.mxu0 0.0
        %4547 = vmatprep.subr.mxu0 0.0
        %4548 = vmatpush1.xpose.msra.mxu0 0.0
        %4549 = vmatprep.subr.mxu0 0.0
        %4550 = vmatpush1.xpose.msra.mxu0 0.0
        %4551 = vmatprep.subr.mxu0 0.0
        %4552 = vmatpush1.xpose.msra.mxu0 0.0
        %4553 = vmatprep.subr.mxu0 0.0
        %4554 = vmatpush1.xpose.msra.mxu0 0.0
        %4555 = vmatprep.subr.mxu0 0.0
        %4556 = vmatpush1.xpose.msra.mxu0 0.0
        %4557 = vmatprep.subr.mxu0 0.0
        %4558 = vmatpush1.xpose.msra.mxu0 0.0
        %4559 = vmatprep.subr.mxu0 0.0
        %4560 = vmatpush1.xpose.msra.mxu0 0.0
        %4561 = vmatprep.subr.mxu0 0.0
        %4562 = vmatpush1.xpose.msra.mxu0 0.0
        %4563 = vmatprep.subr.mxu0 0.0
        %4564 = vmatpush1.xpose.msra.mxu0 0.0
        %4565 = vmatprep.subr.mxu0 0.0
        %4566 = vmatpush1.xpose.msra.mxu0 0.0
        %4567 = vmatprep.subr.mxu0 0.0
        %4568 = vmatpush1.xpose.msra.mxu0 0.0
        %4569 = vmatprep.subr.mxu0 0.0
        %4570 = vmatpush1.xpose.msra.mxu0 0.0
        %4571 = vmatprep.subr.mxu0 0.0
        %4572 = vmatpush1.xpose.msra.mxu0 0.0
        %4573 = vmatprep.subr.mxu0 0.0
        %4574 = vmatpush1.xpose.msra.mxu0 0.0
        %4575 = vmatprep.subr.mxu0 0.0
        %4576 = vmatpush1.xpose.msra.mxu0 0.0
        %4577 = vmatprep.subr.mxu0 0.0
        %4578 = vmatpush1.xpose.msra.mxu0 0.0
        %4579 = vmatprep.subr.mxu0 0.0
        %4580 = vmatpush1.xpose.msra.mxu0 0.0
        %4581 = vmatprep.subr.mxu0 0.0
        %4582 = vmatpush1.xpose.msra.mxu0 0.0
        %4583 = vmatprep.subr.mxu0 0.0
        %4584 = vmatpush1.xpose.msra.mxu0 0.0
        %4585 = vmatprep.subr.mxu0 0.0
        %4586 = vmatpush1.xpose.msra.mxu0 0.0
        %4587 = vmatprep.subr.mxu0 0.0
        %4588 = vmatpush1.xpose.msra.mxu0 0.0
        %4589 = vmatprep.mubr.f32.mxu0 %v1072
        %4590 = vmatmul.mubr.f32.gmra.mrb[0].mxu0 %v1064
        %v4591 = vpop.f32.mrb[0].mxu0
        %v4592 = vadd.f32 %v4522, %v4591
        %v4593 = vpop.f32.mrb[0].mxu0
        %4594 = vdwg.mxu0
        %4595 = vmatprep.subr.mxu0 %v368
        %4596 = vmatpush1.xpose.msra.mxu0 %v367
        %4597 = vmatprep.subr.mxu0 %v560
        %4598 = vmatpush1.xpose.msra.mxu0 %v559
        %4599 = vmatprep.subr.mxu0 0.0
        %4600 = vmatpush1.xpose.msra.mxu0 0.0
        %4601 = vmatprep.subr.mxu0 0.0
        %4602 = vmatpush1.xpose.msra.mxu0 0.0
        %4603 = vmatprep.subr.mxu0 0.0
        %4604 = vmatpush1.xpose.msra.mxu0 0.0
        %4605 = vmatprep.subr.mxu0 0.0
        %4606 = vmatpush1.xpose.msra.mxu0 0.0
        %4607 = vmatprep.subr.mxu0 0.0
        %4608 = vmatpush1.xpose.msra.mxu0 0.0
        %4609 = vmatprep.subr.mxu0 0.0
        %4610 = vmatpush1.xpose.msra.mxu0 0.0
        %4611 = vmatprep.subr.mxu0 0.0
        %4612 = vmatpush1.xpose.msra.mxu0 0.0
        %4613 = vmatprep.subr.mxu0 0.0
        %4614 = vmatpush1.xpose.msra.mxu0 0.0
        %4615 = vmatprep.subr.mxu0 0.0
        %4616 = vmatpush1.xpose.msra.mxu0 0.0
        %4617 = vmatprep.subr.mxu0 0.0
        %4618 = vmatpush1.xpose.msra.mxu0 0.0
        %4619 = vmatprep.subr.mxu0 0.0
        %4620 = vmatpush1.xpose.msra.mxu0 0.0
        %4621 = vmatprep.subr.mxu0 0.0
        %4622 = vmatpush1.xpose.msra.mxu0 0.0
        %4623 = vmatprep.subr.mxu0 0.0
        %4624 = vmatpush1.xpose.msra.mxu0 0.0
        %4625 = vmatprep.subr.mxu0 0.0
        %4626 = vmatpush1.xpose.msra.mxu0 0.0
        %4627 = vmatprep.subr.mxu0 0.0
        %4628 = vmatpush1.xpose.msra.mxu0 0.0
        %4629 = vmatprep.subr.mxu0 0.0
        %4630 = vmatpush1.xpose.msra.mxu0 0.0
        %4631 = vmatprep.subr.mxu0 0.0
        %4632 = vmatpush1.xpose.msra.mxu0 0.0
        %4633 = vmatprep.subr.mxu0 0.0
        %4634 = vmatpush1.xpose.msra.mxu0 0.0
        %4635 = vmatprep.subr.mxu0 0.0
        %4636 = vmatpush1.xpose.msra.mxu0 0.0
        %4637 = vmatprep.subr.mxu0 0.0
        %4638 = vmatpush1.xpose.msra.mxu0 0.0
        %4639 = vmatprep.subr.mxu0 0.0
        %4640 = vmatpush1.xpose.msra.mxu0 0.0
        %4641 = vmatprep.subr.mxu0 0.0
        %4642 = vmatpush1.xpose.msra.mxu0 0.0
        %4643 = vmatprep.subr.mxu0 0.0
        %4644 = vmatpush1.xpose.msra.mxu0 0.0
        %4645 = vmatprep.subr.mxu0 0.0
        %4646 = vmatpush1.xpose.msra.mxu0 0.0
        %4647 = vmatprep.subr.mxu0 0.0
        %4648 = vmatpush1.xpose.msra.mxu0 0.0
        %4649 = vmatprep.subr.mxu0 0.0
        %4650 = vmatpush1.xpose.msra.mxu0 0.0
        %4651 = vmatprep.subr.mxu0 0.0
        %4652 = vmatpush1.xpose.msra.mxu0 0.0
        %4653 = vmatprep.subr.mxu0 0.0
        %4654 = vmatpush1.xpose.msra.mxu0 0.0
        %4655 = vmatprep.subr.mxu0 0.0
        %4656 = vmatpush1.xpose.msra.mxu0 0.0
        %4657 = vmatprep.subr.mxu0 0.0
        %4658 = vmatpush1.xpose.msra.mxu0 0.0
        %4659 = vmatprep.mubr.f32.mxu0 %v1073
        %4660 = vmatmul.mubr.f32.gmra.mrb[0].mxu0 %v1071
        %v4661 = vpop.f32.mrb[0].mxu0
        %v4662 = vadd.f32 %v4592, %v4661
        %v4663 = vpop.f32.mrb[0].mxu0
        %4664 = vdwg.mxu0
        %4665 = vmatprep.subr.mxu0 %v370
        %4666 = vmatpush1.xpose.msra.mxu0 %v369
        %4667 = vmatprep.subr.mxu0 %v562
        %4668 = vmatpush1.xpose.msra.mxu0 %v561
        %4669 = vmatprep.subr.mxu0 0.0
        %4670 = vmatpush1.xpose.msra.mxu0 0.0
        %4671 = vmatprep.subr.mxu0 0.0
        %4672 = vmatpush1.xpose.msra.mxu0 0.0
        %4673 = vmatprep.subr.mxu0 0.0
        %4674 = vmatpush1.xpose.msra.mxu0 0.0
        %4675 = vmatprep.subr.mxu0 0.0
        %4676 = vmatpush1.xpose.msra.mxu0 0.0
        %4677 = vmatprep.subr.mxu0 0.0
        %4678 = vmatpush1.xpose.msra.mxu0 0.0
        %4679 = vmatprep.subr.mxu0 0.0
        %4680 = vmatpush1.xpose.msra.mxu0 0.0
        %4681 = vmatprep.subr.mxu0 0.0
        %4682 = vmatpush1.xpose.msra.mxu0 0.0
        %4683 = vmatprep.subr.mxu0 0.0
        %4684 = vmatpush1.xpose.msra.mxu0 0.0
        %4685 = vmatprep.subr.mxu0 0.0
        %4686 = vmatpush1.xpose.msra.mxu0 0.0
        %4687 = vmatprep.subr.mxu0 0.0
        %4688 = vmatpush1.xpose.msra.mxu0 0.0
        %4689 = vmatprep.subr.mxu0 0.0
        %4690 = vmatpush1.xpose.msra.mxu0 0.0
        %4691 = vmatprep.subr.mxu0 0.0
        %4692 = vmatpush1.xpose.msra.mxu0 0.0
        %4693 = vmatprep.subr.mxu0 0.0
        %4694 = vmatpush1.xpose.msra.mxu0 0.0
        %4695 = vmatprep.subr.mxu0 0.0
        %4696 = vmatpush1.xpose.msra.mxu0 0.0
        %4697 = vmatprep.subr.mxu0 0.0
        %4698 = vmatpush1.xpose.msra.mxu0 0.0
        %4699 = vmatprep.subr.mxu0 0.0
        %4700 = vmatpush1.xpose.msra.mxu0 0.0
        %4701 = vmatprep.subr.mxu0 0.0
        %4702 = vmatpush1.xpose.msra.mxu0 0.0
        %4703 = vmatprep.subr.mxu0 0.0
        %4704 = vmatpush1.xpose.msra.mxu0 0.0
        %4705 = vmatprep.subr.mxu0 0.0
        %4706 = vmatpush1.xpose.msra.mxu0 0.0
        %4707 = vmatprep.subr.mxu0 0.0
        %4708 = vmatpush1.xpose.msra.mxu0 0.0
        %4709 = vmatprep.subr.mxu0 0.0
        %4710 = vmatpush1.xpose.msra.mxu0 0.0
        %4711 = vmatprep.subr.mxu0 0.0
        %4712 = vmatpush1.xpose.msra.mxu0 0.0
        %4713 = vmatprep.subr.mxu0 0.0
        %4714 = vmatpush1.xpose.msra.mxu0 0.0
        %4715 = vmatprep.subr.mxu0 0.0
        %4716 = vmatpush1.xpose.msra.mxu0 0.0
        %4717 = vmatprep.subr.mxu0 0.0
        %4718 = vmatpush1.xpose.msra.mxu0 0.0
        %4719 = vmatprep.subr.mxu0 0.0
        %4720 = vmatpush1.xpose.msra.mxu0 0.0
        %4721 = vmatprep.subr.mxu0 0.0
        %4722 = vmatpush1.xpose.msra.mxu0 0.0
        %4723 = vmatprep.subr.mxu0 0.0
        %4724 = vmatpush1.xpose.msra.mxu0 0.0
        %4725 = vmatprep.subr.mxu0 0.0
        %4726 = vmatpush1.xpose.msra.mxu0 0.0
        %4727 = vmatprep.subr.mxu0 0.0
        %4728 = vmatpush1.xpose.msra.mxu0 0.0
        %4729 = vmatprep.mubr.f32.mxu0 %v1089
        %4730 = vmatmul.mubr.f32.gmra.mrb[0].mxu0 %v1081
        %v4731 = vpop.f32.mrb[0].mxu0
        %v4732 = vadd.f32 %v4662, %v4731
        %v4733 = vpop.f32.mrb[0].mxu0
        %4734 = vdwg.mxu0
        %4735 = vmatprep.subr.mxu0 %v372
        %4736 = vmatpush1.xpose.msra.mxu0 %v371
        %4737 = vmatprep.subr.mxu0 %v564
        %4738 = vmatpush1.xpose.msra.mxu0 %v563
        %4739 = vmatprep.subr.mxu0 0.0
        %4740 = vmatpush1.xpose.msra.mxu0 0.0
        %4741 = vmatprep.subr.mxu0 0.0
        %4742 = vmatpush1.xpose.msra.mxu0 0.0
        %4743 = vmatprep.subr.mxu0 0.0
        %4744 = vmatpush1.xpose.msra.mxu0 0.0
        %4745 = vmatprep.subr.mxu0 0.0
        %4746 = vmatpush1.xpose.msra.mxu0 0.0
        %4747 = vmatprep.subr.mxu0 0.0
        %4748 = vmatpush1.xpose.msra.mxu0 0.0
        %4749 = vmatprep.subr.mxu0 0.0
        %4750 = vmatpush1.xpose.msra.mxu0 0.0
        %4751 = vmatprep.subr.mxu0 0.0
        %4752 = vmatpush1.xpose.msra.mxu0 0.0
        %4753 = vmatprep.subr.mxu0 0.0
        %4754 = vmatpush1.xpose.msra.mxu0 0.0
        %4755 = vmatprep.subr.mxu0 0.0
        %4756 = vmatpush1.xpose.msra.mxu0 0.0
        %4757 = vmatprep.subr.mxu0 0.0
        %4758 = vmatpush1.xpose.msra.mxu0 0.0
        %4759 = vmatprep.subr.mxu0 0.0
        %4760 = vmatpush1.xpose.msra.mxu0 0.0
        %4761 = vmatprep.subr.mxu0 0.0
        %4762 = vmatpush1.xpose.msra.mxu0 0.0
        %4763 = vmatprep.subr.mxu0 0.0
        %4764 = vmatpush1.xpose.msra.mxu0 0.0
        %4765 = vmatprep.subr.mxu0 0.0
        %4766 = vmatpush1.xpose.msra.mxu0 0.0
        %4767 = vmatprep.subr.mxu0 0.0
        %4768 = vmatpush1.xpose.msra.mxu0 0.0
        %4769 = vmatprep.subr.mxu0 0.0
        %4770 = vmatpush1.xpose.msra.mxu0 0.0
        %4771 = vmatprep.subr.mxu0 0.0
        %4772 = vmatpush1.xpose.msra.mxu0 0.0
        %4773 = vmatprep.subr.mxu0 0.0
        %4774 = vmatpush1.xpose.msra.mxu0 0.0
        %4775 = vmatprep.subr.mxu0 0.0
        %4776 = vmatpush1.xpose.msra.mxu0 0.0
        %4777 = vmatprep.subr.mxu0 0.0
        %4778 = vmatpush1.xpose.msra.mxu0 0.0
        %4779 = vmatprep.subr.mxu0 0.0
        %4780 = vmatpush1.xpose.msra.mxu0 0.0
        %4781 = vmatprep.subr.mxu0 0.0
        %4782 = vmatpush1.xpose.msra.mxu0 0.0
        %4783 = vmatprep.subr.mxu0 0.0
        %4784 = vmatpush1.xpose.msra.mxu0 0.0
        %4785 = vmatprep.subr.mxu0 0.0
        %4786 = vmatpush1.xpose.msra.mxu0 0.0
        %4787 = vmatprep.subr.mxu0 0.0
        %4788 = vmatpush1.xpose.msra.mxu0 0.0
        %4789 = vmatprep.subr.mxu0 0.0
        %4790 = vmatpush1.xpose.msra.mxu0 0.0
        %4791 = vmatprep.subr.mxu0 0.0
        %4792 = vmatpush1.xpose.msra.mxu0 0.0
        %4793 = vmatprep.subr.mxu0 0.0
        %4794 = vmatpush1.xpose.msra.mxu0 0.0
        %4795 = vmatprep.subr.mxu0 0.0
        %4796 = vmatpush1.xpose.msra.mxu0 0.0
        %4797 = vmatprep.subr.mxu0 0.0
        %4798 = vmatpush1.xpose.msra.mxu0 0.0
        %4799 = vmatprep.mubr.f32.mxu0 %v1090
        %4800 = vmatmul.mubr.f32.gmra.mrb[0].mxu0 %v1088
        %v4801 = vpop.f32.mrb[0].mxu0
        %v4802 = vadd.f32 %v4732, %v4801
        %v4803 = vpop.f32.mrb[0].mxu0
        %4804 = vdwg.mxu0
        %4805 = vmatprep.subr.mxu0 %v374
        %4806 = vmatpush1.xpose.msra.mxu0 %v373
        %4807 = vmatprep.subr.mxu0 %v566
        %4808 = vmatpush1.xpose.msra.mxu0 %v565
        %4809 = vmatprep.subr.mxu0 0.0
        %4810 = vmatpush1.xpose.msra.mxu0 0.0
        %4811 = vmatprep.subr.mxu0 0.0
        %4812 = vmatpush1.xpose.msra.mxu0 0.0
        %4813 = vmatprep.subr.mxu0 0.0
        %4814 = vmatpush1.xpose.msra.mxu0 0.0
        %4815 = vmatprep.subr.mxu0 0.0
        %4816 = vmatpush1.xpose.msra.mxu0 0.0
        %4817 = vmatprep.subr.mxu0 0.0
        %4818 = vmatpush1.xpose.msra.mxu0 0.0
        %4819 = vmatprep.subr.mxu0 0.0
        %4820 = vmatpush1.xpose.msra.mxu0 0.0
        %4821 = vmatprep.subr.mxu0 0.0
        %4822 = vmatpush1.xpose.msra.mxu0 0.0
        %4823 = vmatprep.subr.mxu0 0.0
        %4824 = vmatpush1.xpose.msra.mxu0 0.0
        %4825 = vmatprep.subr.mxu0 0.0
        %4826 = vmatpush1.xpose.msra.mxu0 0.0
        %4827 = vmatprep.subr.mxu0 0.0
        %4828 = vmatpush1.xpose.msra.mxu0 0.0
        %4829 = vmatprep.subr.mxu0 0.0
        %4830 = vmatpush1.xpose.msra.mxu0 0.0
        %4831 = vmatprep.subr.mxu0 0.0
        %4832 = vmatpush1.xpose.msra.mxu0 0.0
        %4833 = vmatprep.subr.mxu0 0.0
        %4834 = vmatpush1.xpose.msra.mxu0 0.0
        %4835 = vmatprep.subr.mxu0 0.0
        %4836 = vmatpush1.xpose.msra.mxu0 0.0
        %4837 = vmatprep.subr.mxu0 0.0
        %4838 = vmatpush1.xpose.msra.mxu0 0.0
        %4839 = vmatprep.subr.mxu0 0.0
        %4840 = vmatpush1.xpose.msra.mxu0 0.0
        %4841 = vmatprep.subr.mxu0 0.0
        %4842 = vmatpush1.xpose.msra.mxu0 0.0
        %4843 = vmatprep.subr.mxu0 0.0
        %4844 = vmatpush1.xpose.msra.mxu0 0.0
        %4845 = vmatprep.subr.mxu0 0.0
        %4846 = vmatpush1.xpose.msra.mxu0 0.0
        %4847 = vmatprep.subr.mxu0 0.0
        %4848 = vmatpush1.xpose.msra.mxu0 0.0
        %4849 = vmatprep.subr.mxu0 0.0
        %4850 = vmatpush1.xpose.msra.mxu0 0.0
        %4851 = vmatprep.subr.mxu0 0.0
        %4852 = vmatpush1.xpose.msra.mxu0 0.0
        %4853 = vmatprep.subr.mxu0 0.0
        %4854 = vmatpush1.xpose.msra.mxu0 0.0
        %4855 = vmatprep.subr.mxu0 0.0
        %4856 = vmatpush1.xpose.msra.mxu0 0.0
        %4857 = vmatprep.subr.mxu0 0.0
        %4858 = vmatpush1.xpose.msra.mxu0 0.0
        %4859 = vmatprep.subr.mxu0 0.0
        %4860 = vmatpush1.xpose.msra.mxu0 0.0
        %4861 = vmatprep.subr.mxu0 0.0
        %4862 = vmatpush1.xpose.msra.mxu0 0.0
        %4863 = vmatprep.subr.mxu0 0.0
        %4864 = vmatpush1.xpose.msra.mxu0 0.0
        %4865 = vmatprep.subr.mxu0 0.0
        %4866 = vmatpush1.xpose.msra.mxu0 0.0
        %4867 = vmatprep.subr.mxu0 0.0
        %4868 = vmatpush1.xpose.msra.mxu0 0.0
        %4869 = vmatprep.mubr.f32.mxu0 %v1106
        %4870 = vmatmul.mubr.f32.gmra.mrb[0].mxu0 %v1098
        %v4871 = vpop.f32.mrb[0].mxu0
        %v4872 = vadd.f32 %v4802, %v4871
        %v4873 = vpop.f32.mrb[0].mxu0
        %4874 = vdwg.mxu0
        %4875 = vmatprep.subr.mxu0 %v376
        %4876 = vmatpush1.xpose.msra.mxu0 %v375
        %4877 = vmatprep.subr.mxu0 %v568
        %4878 = vmatpush1.xpose.msra.mxu0 %v567
        %4879 = vmatprep.subr.mxu0 0.0
        %4880 = vmatpush1.xpose.msra.mxu0 0.0
        %4881 = vmatprep.subr.mxu0 0.0
        %4882 = vmatpush1.xpose.msra.mxu0 0.0
        %4883 = vmatprep.subr.mxu0 0.0
        %4884 = vmatpush1.xpose.msra.mxu0 0.0
        %4885 = vmatprep.subr.mxu0 0.0
        %4886 = vmatpush1.xpose.msra.mxu0 0.0
        %4887 = vmatprep.subr.mxu0 0.0
        %4888 = vmatpush1.xpose.msra.mxu0 0.0
        %4889 = vmatprep.subr.mxu0 0.0
        %4890 = vmatpush1.xpose.msra.mxu0 0.0
        %4891 = vmatprep.subr.mxu0 0.0
        %4892 = vmatpush1.xpose.msra.mxu0 0.0
        %4893 = vmatprep.subr.mxu0 0.0
        %4894 = vmatpush1.xpose.msra.mxu0 0.0
        %4895 = vmatprep.subr.mxu0 0.0
        %4896 = vmatpush1.xpose.msra.mxu0 0.0
        %4897 = vmatprep.subr.mxu0 0.0
        %4898 = vmatpush1.xpose.msra.mxu0 0.0
        %4899 = vmatprep.subr.mxu0 0.0
        %4900 = vmatpush1.xpose.msra.mxu0 0.0
        %4901 = vmatprep.subr.mxu0 0.0
        %4902 = vmatpush1.xpose.msra.mxu0 0.0
        %4903 = vmatprep.subr.mxu0 0.0
        %4904 = vmatpush1.xpose.msra.mxu0 0.0
        %4905 = vmatprep.subr.mxu0 0.0
        %4906 = vmatpush1.xpose.msra.mxu0 0.0
        %4907 = vmatprep.subr.mxu0 0.0
        %4908 = vmatpush1.xpose.msra.mxu0 0.0
        %4909 = vmatprep.subr.mxu0 0.0
        %4910 = vmatpush1.xpose.msra.mxu0 0.0
        %4911 = vmatprep.subr.mxu0 0.0
        %4912 = vmatpush1.xpose.msra.mxu0 0.0
        %4913 = vmatprep.subr.mxu0 0.0
        %4914 = vmatpush1.xpose.msra.mxu0 0.0
        %4915 = vmatprep.subr.mxu0 0.0
        %4916 = vmatpush1.xpose.msra.mxu0 0.0
        %4917 = vmatprep.subr.mxu0 0.0
        %4918 = vmatpush1.xpose.msra.mxu0 0.0
        %4919 = vmatprep.subr.mxu0 0.0
        %4920 = vmatpush1.xpose.msra.mxu0 0.0
        %4921 = vmatprep.subr.mxu0 0.0
        %4922 = vmatpush1.xpose.msra.mxu0 0.0
        %4923 = vmatprep.subr.mxu0 0.0
        %4924 = vmatpush1.xpose.msra.mxu0 0.0
        %4925 = vmatprep.subr.mxu0 0.0
        %4926 = vmatpush1.xpose.msra.mxu0 0.0
        %4927 = vmatprep.subr.mxu0 0.0
        %4928 = vmatpush1.xpose.msra.mxu0 0.0
        %4929 = vmatprep.subr.mxu0 0.0
        %4930 = vmatpush1.xpose.msra.mxu0 0.0
        %4931 = vmatprep.subr.mxu0 0.0
        %4932 = vmatpush1.xpose.msra.mxu0 0.0
        %4933 = vmatprep.subr.mxu0 0.0
        %4934 = vmatpush1.xpose.msra.mxu0 0.0
        %4935 = vmatprep.subr.mxu0 0.0
        %4936 = vmatpush1.xpose.msra.mxu0 0.0
        %4937 = vmatprep.subr.mxu0 0.0
        %4938 = vmatpush1.xpose.msra.mxu0 0.0
        %4939 = vmatprep.mubr.f32.mxu0 %v1107
        %4940 = vmatmul.mubr.f32.gmra.mrb[0].mxu0 %v1105
        %v4941 = vpop.f32.mrb[0].mxu0
        %v4942 = vadd.f32 %v4872, %v4941
        %v4943 = vpop.f32.mrb[0].mxu0
        %4944 = vdwg.mxu0
        %4945 = vmatprep.subr.mxu0 %v378
        %4946 = vmatpush1.xpose.msra.mxu0 %v377
        %4947 = vmatprep.subr.mxu0 %v570
        %4948 = vmatpush1.xpose.msra.mxu0 %v569
        %4949 = vmatprep.subr.mxu0 0.0
        %4950 = vmatpush1.xpose.msra.mxu0 0.0
        %4951 = vmatprep.subr.mxu0 0.0
        %4952 = vmatpush1.xpose.msra.mxu0 0.0
        %4953 = vmatprep.subr.mxu0 0.0
        %4954 = vmatpush1.xpose.msra.mxu0 0.0
        %4955 = vmatprep.subr.mxu0 0.0
        %4956 = vmatpush1.xpose.msra.mxu0 0.0
        %4957 = vmatprep.subr.mxu0 0.0
        %4958 = vmatpush1.xpose.msra.mxu0 0.0
        %4959 = vmatprep.subr.mxu0 0.0
        %4960 = vmatpush1.xpose.msra.mxu0 0.0
        %4961 = vmatprep.subr.mxu0 0.0
        %4962 = vmatpush1.xpose.msra.mxu0 0.0
        %4963 = vmatprep.subr.mxu0 0.0
        %4964 = vmatpush1.xpose.msra.mxu0 0.0
        %4965 = vmatprep.subr.mxu0 0.0
        %4966 = vmatpush1.xpose.msra.mxu0 0.0
        %4967 = vmatprep.subr.mxu0 0.0
        %4968 = vmatpush1.xpose.msra.mxu0 0.0
        %4969 = vmatprep.subr.mxu0 0.0
        %4970 = vmatpush1.xpose.msra.mxu0 0.0
        %4971 = vmatprep.subr.mxu0 0.0
        %4972 = vmatpush1.xpose.msra.mxu0 0.0
        %4973 = vmatprep.subr.mxu0 0.0
        %4974 = vmatpush1.xpose.msra.mxu0 0.0
        %4975 = vmatprep.subr.mxu0 0.0
        %4976 = vmatpush1.xpose.msra.mxu0 0.0
        %4977 = vmatprep.subr.mxu0 0.0
        %4978 = vmatpush1.xpose.msra.mxu0 0.0
        %4979 = vmatprep.subr.mxu0 0.0
        %4980 = vmatpush1.xpose.msra.mxu0 0.0
        %4981 = vmatprep.subr.mxu0 0.0
        %4982 = vmatpush1.xpose.msra.mxu0 0.0
        %4983 = vmatprep.subr.mxu0 0.0
        %4984 = vmatpush1.xpose.msra.mxu0 0.0
        %4985 = vmatprep.subr.mxu0 0.0
        %4986 = vmatpush1.xpose.msra.mxu0 0.0
        %4987 = vmatprep.subr.mxu0 0.0
        %4988 = vmatpush1.xpose.msra.mxu0 0.0
        %4989 = vmatprep.subr.mxu0 0.0
        %4990 = vmatpush1.xpose.msra.mxu0 0.0
        %4991 = vmatprep.subr.mxu0 0.0
        %4992 = vmatpush1.xpose.msra.mxu0 0.0
        %4993 = vmatprep.subr.mxu0 0.0
        %4994 = vmatpush1.xpose.msra.mxu0 0.0
        %4995 = vmatprep.subr.mxu0 0.0
        %4996 = vmatpush1.xpose.msra.mxu0 0.0
        %4997 = vmatprep.subr.mxu0 0.0
        %4998 = vmatpush1.xpose.msra.mxu0 0.0
        %4999 = vmatprep.subr.mxu0 0.0
        %5000 = vmatpush1.xpose.msra.mxu0 0.0
        %5001 = vmatprep.subr.mxu0 0.0
        %5002 = vmatpush1.xpose.msra.mxu0 0.0
        %5003 = vmatprep.subr.mxu0 0.0
        %5004 = vmatpush1.xpose.msra.mxu0 0.0
        %5005 = vmatprep.subr.mxu0 0.0
        %5006 = vmatpush1.xpose.msra.mxu0 0.0
        %5007 = vmatprep.subr.mxu0 0.0
        %5008 = vmatpush1.xpose.msra.mxu0 0.0
        %5009 = vmatprep.mubr.f32.mxu0 %v1123
        %5010 = vmatmul.mubr.f32.gmra.mrb[0].mxu0 %v1115
        %v5011 = vpop.f32.mrb[0].mxu0
        %v5012 = vadd.f32 %v4942, %v5011
        %v5013 = vpop.f32.mrb[0].mxu0
        %5014 = vdwg.mxu0
        %5015 = vmatprep.subr.mxu0 %v380
        %5016 = vmatpush1.xpose.msra.mxu0 %v379
        %5017 = vmatprep.subr.mxu0 %v572
        %5018 = vmatpush1.xpose.msra.mxu0 %v571
        %5019 = vmatprep.subr.mxu0 0.0
        %5020 = vmatpush1.xpose.msra.mxu0 0.0
        %5021 = vmatprep.subr.mxu0 0.0
        %5022 = vmatpush1.xpose.msra.mxu0 0.0
        %5023 = vmatprep.subr.mxu0 0.0
        %5024 = vmatpush1.xpose.msra.mxu0 0.0
        %5025 = vmatprep.subr.mxu0 0.0
        %5026 = vmatpush1.xpose.msra.mxu0 0.0
        %5027 = vmatprep.subr.mxu0 0.0
        %5028 = vmatpush1.xpose.msra.mxu0 0.0
        %5029 = vmatprep.subr.mxu0 0.0
        %5030 = vmatpush1.xpose.msra.mxu0 0.0
        %5031 = vmatprep.subr.mxu0 0.0
        %5032 = vmatpush1.xpose.msra.mxu0 0.0
        %5033 = vmatprep.subr.mxu0 0.0
        %5034 = vmatpush1.xpose.msra.mxu0 0.0
        %5035 = vmatprep.subr.mxu0 0.0
        %5036 = vmatpush1.xpose.msra.mxu0 0.0
        %5037 = vmatprep.subr.mxu0 0.0
        %5038 = vmatpush1.xpose.msra.mxu0 0.0
        %5039 = vmatprep.subr.mxu0 0.0
        %5040 = vmatpush1.xpose.msra.mxu0 0.0
        %5041 = vmatprep.subr.mxu0 0.0
        %5042 = vmatpush1.xpose.msra.mxu0 0.0
        %5043 = vmatprep.subr.mxu0 0.0
        %5044 = vmatpush1.xpose.msra.mxu0 0.0
        %5045 = vmatprep.subr.mxu0 0.0
        %5046 = vmatpush1.xpose.msra.mxu0 0.0
        %5047 = vmatprep.subr.mxu0 0.0
        %5048 = vmatpush1.xpose.msra.mxu0 0.0
        %5049 = vmatprep.subr.mxu0 0.0
        %5050 = vmatpush1.xpose.msra.mxu0 0.0
        %5051 = vmatprep.subr.mxu0 0.0
        %5052 = vmatpush1.xpose.msra.mxu0 0.0
        %5053 = vmatprep.subr.mxu0 0.0
        %5054 = vmatpush1.xpose.msra.mxu0 0.0
        %5055 = vmatprep.subr.mxu0 0.0
        %5056 = vmatpush1.xpose.msra.mxu0 0.0
        %5057 = vmatprep.subr.mxu0 0.0
        %5058 = vmatpush1.xpose.msra.mxu0 0.0
        %5059 = vmatprep.subr.mxu0 0.0
        %5060 = vmatpush1.xpose.msra.mxu0 0.0
        %5061 = vmatprep.subr.mxu0 0.0
        %5062 = vmatpush1.xpose.msra.mxu0 0.0
        %5063 = vmatprep.subr.mxu0 0.0
        %5064 = vmatpush1.xpose.msra.mxu0 0.0
        %5065 = vmatprep.subr.mxu0 0.0
        %5066 = vmatpush1.xpose.msra.mxu0 0.0
        %5067 = vmatprep.subr.mxu0 0.0
        %5068 = vmatpush1.xpose.msra.mxu0 0.0
        %5069 = vmatprep.subr.mxu0 0.0
        %5070 = vmatpush1.xpose.msra.mxu0 0.0
        %5071 = vmatprep.subr.mxu0 0.0
        %5072 = vmatpush1.xpose.msra.mxu0 0.0
        %5073 = vmatprep.subr.mxu0 0.0
        %5074 = vmatpush1.xpose.msra.mxu0 0.0
        %5075 = vmatprep.subr.mxu0 0.0
        %5076 = vmatpush1.xpose.msra.mxu0 0.0
        %5077 = vmatprep.subr.mxu0 0.0
        %5078 = vmatpush1.xpose.msra.mxu0 0.0
        %5079 = vmatprep.mubr.f32.mxu0 %v1124
        %5080 = vmatmul.mubr.f32.gmra.mrb[0].mxu0 %v1122
        %v5081 = vpop.f32.mrb[0].mxu0
        %v5082 = vadd.f32 %v5012, %v5081
        %v5083 = vpop.f32.mrb[0].mxu0
        %5084 = vdwg.mxu0
        %5085 = vmatprep.subr.mxu0 %v382
        %5086 = vmatpush1.xpose.msra.mxu0 %v381
        %5087 = vmatprep.subr.mxu0 %v574
        %5088 = vmatpush1.xpose.msra.mxu0 %v573
        %5089 = vmatprep.subr.mxu0 0.0
        %5090 = vmatpush1.xpose.msra.mxu0 0.0
        %5091 = vmatprep.subr.mxu0 0.0
        %5092 = vmatpush1.xpose.msra.mxu0 0.0
        %5093 = vmatprep.subr.mxu0 0.0
        %5094 = vmatpush1.xpose.msra.mxu0 0.0
        %5095 = vmatprep.subr.mxu0 0.0
        %5096 = vmatpush1.xpose.msra.mxu0 0.0
        %5097 = vmatprep.subr.mxu0 0.0
        %5098 = vmatpush1.xpose.msra.mxu0 0.0
        %5099 = vmatprep.subr.mxu0 0.0
        %5100 = vmatpush1.xpose.msra.mxu0 0.0
        %5101 = vmatprep.subr.mxu0 0.0
        %5102 = vmatpush1.xpose.msra.mxu0 0.0
        %5103 = vmatprep.subr.mxu0 0.0
        %5104 = vmatpush1.xpose.msra.mxu0 0.0
        %5105 = vmatprep.subr.mxu0 0.0
        %5106 = vmatpush1.xpose.msra.mxu0 0.0
        %5107 = vmatprep.subr.mxu0 0.0
        %5108 = vmatpush1.xpose.msra.mxu0 0.0
        %5109 = vmatprep.subr.mxu0 0.0
        %5110 = vmatpush1.xpose.msra.mxu0 0.0
        %5111 = vmatprep.subr.mxu0 0.0
        %5112 = vmatpush1.xpose.msra.mxu0 0.0
        %5113 = vmatprep.subr.mxu0 0.0
        %5114 = vmatpush1.xpose.msra.mxu0 0.0
        %5115 = vmatprep.subr.mxu0 0.0
        %5116 = vmatpush1.xpose.msra.mxu0 0.0
        %5117 = vmatprep.subr.mxu0 0.0
        %5118 = vmatpush1.xpose.msra.mxu0 0.0
        %5119 = vmatprep.subr.mxu0 0.0
        %5120 = vmatpush1.xpose.msra.mxu0 0.0
        %5121 = vmatprep.subr.mxu0 0.0
        %5122 = vmatpush1.xpose.msra.mxu0 0.0
        %5123 = vmatprep.subr.mxu0 0.0
        %5124 = vmatpush1.xpose.msra.mxu0 0.0
        %5125 = vmatprep.subr.mxu0 0.0
        %5126 = vmatpush1.xpose.msra.mxu0 0.0
        %5127 = vmatprep.subr.mxu0 0.0
        %5128 = vmatpush1.xpose.msra.mxu0 0.0
        %5129 = vmatprep.subr.mxu0 0.0
        %5130 = vmatpush1.xpose.msra.mxu0 0.0
        %5131 = vmatprep.subr.mxu0 0.0
        %5132 = vmatpush1.xpose.msra.mxu0 0.0
        %5133 = vmatprep.subr.mxu0 0.0
        %5134 = vmatpush1.xpose.msra.mxu0 0.0
        %5135 = vmatprep.subr.mxu0 0.0
        %5136 = vmatpush1.xpose.msra.mxu0 0.0
        %5137 = vmatprep.subr.mxu0 0.0
        %5138 = vmatpush1.xpose.msra.mxu0 0.0
        %5139 = vmatprep.subr.mxu0 0.0
        %5140 = vmatpush1.xpose.msra.mxu0 0.0
        %5141 = vmatprep.subr.mxu0 0.0
        %5142 = vmatpush1.xpose.msra.mxu0 0.0
        %5143 = vmatprep.subr.mxu0 0.0
        %5144 = vmatpush1.xpose.msra.mxu0 0.0
        %5145 = vmatprep.subr.mxu0 0.0
        %5146 = vmatpush1.xpose.msra.mxu0 0.0
        %5147 = vmatprep.subr.mxu0 0.0
        %5148 = vmatpush1.xpose.msra.mxu0 0.0
        %5149 = vmatprep.mubr.f32.mxu0 %v1140
        %5150 = vmatmul.mubr.f32.gmra.mrb[0].mxu0 %v1132
        %v5151 = vpop.f32.mrb[0].mxu0
        %v5152 = vadd.f32 %v5082, %v5151
        %v5153 = vpop.f32.mrb[0].mxu0
        %5154 = vdwg.mxu0
        %5155 = vmatprep.subr.mxu0 %v384
        %5156 = vmatpush1.xpose.msra.mxu0 %v383
        %5157 = vmatprep.subr.mxu0 %v576
        %5158 = vmatpush1.xpose.msra.mxu0 %v575
        %5159 = vmatprep.subr.mxu0 0.0
        %5160 = vmatpush1.xpose.msra.mxu0 0.0
        %5161 = vmatprep.subr.mxu0 0.0
        %5162 = vmatpush1.xpose.msra.mxu0 0.0
        %5163 = vmatprep.subr.mxu0 0.0
        %5164 = vmatpush1.xpose.msra.mxu0 0.0
        %5165 = vmatprep.subr.mxu0 0.0
        %5166 = vmatpush1.xpose.msra.mxu0 0.0
        %5167 = vmatprep.subr.mxu0 0.0
        %5168 = vmatpush1.xpose.msra.mxu0 0.0
        %5169 = vmatprep.subr.mxu0 0.0
        %5170 = vmatpush1.xpose.msra.mxu0 0.0
        %5171 = vmatprep.subr.mxu0 0.0
        %5172 = vmatpush1.xpose.msra.mxu0 0.0
        %5173 = vmatprep.subr.mxu0 0.0
        %5174 = vmatpush1.xpose.msra.mxu0 0.0
        %5175 = vmatprep.subr.mxu0 0.0
        %5176 = vmatpush1.xpose.msra.mxu0 0.0
        %5177 = vmatprep.subr.mxu0 0.0
        %5178 = vmatpush1.xpose.msra.mxu0 0.0
        %5179 = vmatprep.subr.mxu0 0.0
        %5180 = vmatpush1.xpose.msra.mxu0 0.0
        %5181 = vmatprep.subr.mxu0 0.0
        %5182 = vmatpush1.xpose.msra.mxu0 0.0
        %5183 = vmatprep.subr.mxu0 0.0
        %5184 = vmatpush1.xpose.msra.mxu0 0.0
        %5185 = vmatprep.subr.mxu0 0.0
        %5186 = vmatpush1.xpose.msra.mxu0 0.0
        %5187 = vmatprep.subr.mxu0 0.0
        %5188 = vmatpush1.xpose.msra.mxu0 0.0
        %5189 = vmatprep.subr.mxu0 0.0
        %5190 = vmatpush1.xpose.msra.mxu0 0.0
        %5191 = vmatprep.subr.mxu0 0.0
        %5192 = vmatpush1.xpose.msra.mxu0 0.0
        %5193 = vmatprep.subr.mxu0 0.0
        %5194 = vmatpush1.xpose.msra.mxu0 0.0
        %5195 = vmatprep.subr.mxu0 0.0
        %5196 = vmatpush1.xpose.msra.mxu0 0.0
        %5197 = vmatprep.subr.mxu0 0.0
        %5198 = vmatpush1.xpose.msra.mxu0 0.0
        %5199 = vmatprep.subr.mxu0 0.0
        %5200 = vmatpush1.xpose.msra.mxu0 0.0
        %5201 = vmatprep.subr.mxu0 0.0
        %5202 = vmatpush1.xpose.msra.mxu0 0.0
        %5203 = vmatprep.subr.mxu0 0.0
        %5204 = vmatpush1.xpose.msra.mxu0 0.0
        %5205 = vmatprep.subr.mxu0 0.0
        %5206 = vmatpush1.xpose.msra.mxu0 0.0
        %5207 = vmatprep.subr.mxu0 0.0
        %5208 = vmatpush1.xpose.msra.mxu0 0.0
        %5209 = vmatprep.subr.mxu0 0.0
        %5210 = vmatpush1.xpose.msra.mxu0 0.0
        %5211 = vmatprep.subr.mxu0 0.0
        %5212 = vmatpush1.xpose.msra.mxu0 0.0
        %5213 = vmatprep.subr.mxu0 0.0
        %5214 = vmatpush1.xpose.msra.mxu0 0.0
        %5215 = vmatprep.subr.mxu0 0.0
        %5216 = vmatpush1.xpose.msra.mxu0 0.0
        %5217 = vmatprep.subr.mxu0 0.0
        %5218 = vmatpush1.xpose.msra.mxu0 0.0
        %5219 = vmatprep.mubr.f32.mxu0 %v1141
        %5220 = vmatmul.mubr.f32.gmra.mrb[0].mxu0 %v1139
        %v5221 = vpop.f32.mrb[0].mxu0
        %v5222 = vadd.f32 %v5152, %v5221
        %v5223 = vpop.f32.mrb[0].mxu0
        %5224 = vdwg.mxu0
        %5225 = vmatprep.subr.mxu0 %v386
        %5226 = vmatpush1.xpose.msra.mxu0 %v385
        %5227 = vmatprep.subr.mxu0 %v578
        %5228 = vmatpush1.xpose.msra.mxu0 %v577
        %5229 = vmatprep.subr.mxu0 0.0
        %5230 = vmatpush1.xpose.msra.mxu0 0.0
        %5231 = vmatprep.subr.mxu0 0.0
        %5232 = vmatpush1.xpose.msra.mxu0 0.0
        %5233 = vmatprep.subr.mxu0 0.0
        %5234 = vmatpush1.xpose.msra.mxu0 0.0
        %5235 = vmatprep.subr.mxu0 0.0
        %5236 = vmatpush1.xpose.msra.mxu0 0.0
        %5237 = vmatprep.subr.mxu0 0.0
        %5238 = vmatpush1.xpose.msra.mxu0 0.0
        %5239 = vmatprep.subr.mxu0 0.0
        %5240 = vmatpush1.xpose.msra.mxu0 0.0
        %5241 = vmatprep.subr.mxu0 0.0
        %5242 = vmatpush1.xpose.msra.mxu0 0.0
        %5243 = vmatprep.subr.mxu0 0.0
        %5244 = vmatpush1.xpose.msra.mxu0 0.0
        %5245 = vmatprep.subr.mxu0 0.0
        %5246 = vmatpush1.xpose.msra.mxu0 0.0
        %5247 = vmatprep.subr.mxu0 0.0
        %5248 = vmatpush1.xpose.msra.mxu0 0.0
        %5249 = vmatprep.subr.mxu0 0.0
        %5250 = vmatpush1.xpose.msra.mxu0 0.0
        %5251 = vmatprep.subr.mxu0 0.0
        %5252 = vmatpush1.xpose.msra.mxu0 0.0
        %5253 = vmatprep.subr.mxu0 0.0
        %5254 = vmatpush1.xpose.msra.mxu0 0.0
        %5255 = vmatprep.subr.mxu0 0.0
        %5256 = vmatpush1.xpose.msra.mxu0 0.0
        %5257 = vmatprep.subr.mxu0 0.0
        %5258 = vmatpush1.xpose.msra.mxu0 0.0
        %5259 = vmatprep.subr.mxu0 0.0
        %5260 = vmatpush1.xpose.msra.mxu0 0.0
        %5261 = vmatprep.subr.mxu0 0.0
        %5262 = vmatpush1.xpose.msra.mxu0 0.0
        %5263 = vmatprep.subr.mxu0 0.0
        %5264 = vmatpush1.xpose.msra.mxu0 0.0
        %5265 = vmatprep.subr.mxu0 0.0
        %5266 = vmatpush1.xpose.msra.mxu0 0.0
        %5267 = vmatprep.subr.mxu0 0.0
        %5268 = vmatpush1.xpose.msra.mxu0 0.0
        %5269 = vmatprep.subr.mxu0 0.0
        %5270 = vmatpush1.xpose.msra.mxu0 0.0
        %5271 = vmatprep.subr.mxu0 0.0
        %5272 = vmatpush1.xpose.msra.mxu0 0.0
        %5273 = vmatprep.subr.mxu0 0.0
        %5274 = vmatpush1.xpose.msra.mxu0 0.0
        %5275 = vmatprep.subr.mxu0 0.0
        %5276 = vmatpush1.xpose.msra.mxu0 0.0
        %5277 = vmatprep.subr.mxu0 0.0
        %5278 = vmatpush1.xpose.msra.mxu0 0.0
        %5279 = vmatprep.subr.mxu0 0.0
        %5280 = vmatpush1.xpose.msra.mxu0 0.0
        %5281 = vmatprep.subr.mxu0 0.0
        %5282 = vmatpush1.xpose.msra.mxu0 0.0
        %5283 = vmatprep.subr.mxu0 0.0
        %5284 = vmatpush1.xpose.msra.mxu0 0.0
        %5285 = vmatprep.subr.mxu0 0.0
        %5286 = vmatpush1.xpose.msra.mxu0 0.0
        %5287 = vmatprep.subr.mxu0 0.0
        %5288 = vmatpush1.xpose.msra.mxu0 0.0
        %5289 = vmatprep.mubr.f32.mxu0 %v1157
        %5290 = vmatmul.mubr.f32.gmra.mrb[0].mxu0 %v1149
        %v5291 = vpop.f32.mrb[0].mxu0
        %v5292 = vadd.f32 %v5222, %v5291
        %v5293 = vpop.f32.mrb[0].mxu0
        %5294 = vdwg.mxu0
        %5295 = vmatprep.subr.mxu0 %v388
        %5296 = vmatpush1.xpose.msra.mxu0 %v387
        %5297 = vmatprep.subr.mxu0 %v580
        %5298 = vmatpush1.xpose.msra.mxu0 %v579
        %5299 = vmatprep.subr.mxu0 0.0
        %5300 = vmatpush1.xpose.msra.mxu0 0.0
        %5301 = vmatprep.subr.mxu0 0.0
        %5302 = vmatpush1.xpose.msra.mxu0 0.0
        %5303 = vmatprep.subr.mxu0 0.0
        %5304 = vmatpush1.xpose.msra.mxu0 0.0
        %5305 = vmatprep.subr.mxu0 0.0
        %5306 = vmatpush1.xpose.msra.mxu0 0.0
        %5307 = vmatprep.subr.mxu0 0.0
        %5308 = vmatpush1.xpose.msra.mxu0 0.0
        %5309 = vmatprep.subr.mxu0 0.0
        %5310 = vmatpush1.xpose.msra.mxu0 0.0
        %5311 = vmatprep.subr.mxu0 0.0
        %5312 = vmatpush1.xpose.msra.mxu0 0.0
        %5313 = vmatprep.subr.mxu0 0.0
        %5314 = vmatpush1.xpose.msra.mxu0 0.0
        %5315 = vmatprep.subr.mxu0 0.0
        %5316 = vmatpush1.xpose.msra.mxu0 0.0
        %5317 = vmatprep.subr.mxu0 0.0
        %5318 = vmatpush1.xpose.msra.mxu0 0.0
        %5319 = vmatprep.subr.mxu0 0.0
        %5320 = vmatpush1.xpose.msra.mxu0 0.0
        %5321 = vmatprep.subr.mxu0 0.0
        %5322 = vmatpush1.xpose.msra.mxu0 0.0
        %5323 = vmatprep.subr.mxu0 0.0
        %5324 = vmatpush1.xpose.msra.mxu0 0.0
        %5325 = vmatprep.subr.mxu0 0.0
        %5326 = vmatpush1.xpose.msra.mxu0 0.0
        %5327 = vmatprep.subr.mxu0 0.0
        %5328 = vmatpush1.xpose.msra.mxu0 0.0
        %5329 = vmatprep.subr.mxu0 0.0
        %5330 = vmatpush1.xpose.msra.mxu0 0.0
        %5331 = vmatprep.subr.mxu0 0.0
        %5332 = vmatpush1.xpose.msra.mxu0 0.0
        %5333 = vmatprep.subr.mxu0 0.0
        %5334 = vmatpush1.xpose.msra.mxu0 0.0
        %5335 = vmatprep.subr.mxu0 0.0
        %5336 = vmatpush1.xpose.msra.mxu0 0.0
        %5337 = vmatprep.subr.mxu0 0.0
        %5338 = vmatpush1.xpose.msra.mxu0 0.0
        %5339 = vmatprep.subr.mxu0 0.0
        %5340 = vmatpush1.xpose.msra.mxu0 0.0
        %5341 = vmatprep.subr.mxu0 0.0
        %5342 = vmatpush1.xpose.msra.mxu0 0.0
        %5343 = vmatprep.subr.mxu0 0.0
        %5344 = vmatpush1.xpose.msra.mxu0 0.0
        %5345 = vmatprep.subr.mxu0 0.0
        %5346 = vmatpush1.xpose.msra.mxu0 0.0
        %5347 = vmatprep.subr.mxu0 0.0
        %5348 = vmatpush1.xpose.msra.mxu0 0.0
        %5349 = vmatprep.subr.mxu0 0.0
        %5350 = vmatpush1.xpose.msra.mxu0 0.0
        %5351 = vmatprep.subr.mxu0 0.0
        %5352 = vmatpush1.xpose.msra.mxu0 0.0
        %5353 = vmatprep.subr.mxu0 0.0
        %5354 = vmatpush1.xpose.msra.mxu0 0.0
        %5355 = vmatprep.subr.mxu0 0.0
        %5356 = vmatpush1.xpose.msra.mxu0 0.0
        %5357 = vmatprep.subr.mxu0 0.0
        %5358 = vmatpush1.xpose.msra.mxu0 0.0
        %5359 = vmatprep.mubr.f32.mxu0 %v1158
        %5360 = vmatmul.mubr.f32.gmra.mrb[0].mxu0 %v1156
        %v5361 = vpop.f32.mrb[0].mxu0
        %v5362 = vadd.f32 %v5292, %v5361
        %v5363 = vpop.f32.mrb[0].mxu0
        %5364 = vdwg.mxu0
        %5365 = vmatprep.subr.mxu0 %v390
        %5366 = vmatpush1.xpose.msra.mxu0 %v389
        %5367 = vmatprep.subr.mxu0 %v582
        %5368 = vmatpush1.xpose.msra.mxu0 %v581
        %5369 = vmatprep.subr.mxu0 0.0
        %5370 = vmatpush1.xpose.msra.mxu0 0.0
        %5371 = vmatprep.subr.mxu0 0.0
        %5372 = vmatpush1.xpose.msra.mxu0 0.0
        %5373 = vmatprep.subr.mxu0 0.0
        %5374 = vmatpush1.xpose.msra.mxu0 0.0
        %5375 = vmatprep.subr.mxu0 0.0
        %5376 = vmatpush1.xpose.msra.mxu0 0.0
        %5377 = vmatprep.subr.mxu0 0.0
        %5378 = vmatpush1.xpose.msra.mxu0 0.0
        %5379 = vmatprep.subr.mxu0 0.0
        %5380 = vmatpush1.xpose.msra.mxu0 0.0
        %5381 = vmatprep.subr.mxu0 0.0
        %5382 = vmatpush1.xpose.msra.mxu0 0.0
        %5383 = vmatprep.subr.mxu0 0.0
        %5384 = vmatpush1.xpose.msra.mxu0 0.0
        %5385 = vmatprep.subr.mxu0 0.0
        %5386 = vmatpush1.xpose.msra.mxu0 0.0
        %5387 = vmatprep.subr.mxu0 0.0
        %5388 = vmatpush1.xpose.msra.mxu0 0.0
        %5389 = vmatprep.subr.mxu0 0.0
        %5390 = vmatpush1.xpose.msra.mxu0 0.0
        %5391 = vmatprep.subr.mxu0 0.0
        %5392 = vmatpush1.xpose.msra.mxu0 0.0
        %5393 = vmatprep.subr.mxu0 0.0
        %5394 = vmatpush1.xpose.msra.mxu0 0.0
        %5395 = vmatprep.subr.mxu0 0.0
        %5396 = vmatpush1.xpose.msra.mxu0 0.0
        %5397 = vmatprep.subr.mxu0 0.0
        %5398 = vmatpush1.xpose.msra.mxu0 0.0
        %5399 = vmatprep.subr.mxu0 0.0
        %5400 = vmatpush1.xpose.msra.mxu0 0.0
        %5401 = vmatprep.subr.mxu0 0.0
        %5402 = vmatpush1.xpose.msra.mxu0 0.0
        %5403 = vmatprep.subr.mxu0 0.0
        %5404 = vmatpush1.xpose.msra.mxu0 0.0
        %5405 = vmatprep.subr.mxu0 0.0
        %5406 = vmatpush1.xpose.msra.mxu0 0.0
        %5407 = vmatprep.subr.mxu0 0.0
        %5408 = vmatpush1.xpose.msra.mxu0 0.0
        %5409 = vmatprep.subr.mxu0 0.0
        %5410 = vmatpush1.xpose.msra.mxu0 0.0
        %5411 = vmatprep.subr.mxu0 0.0
        %5412 = vmatpush1.xpose.msra.mxu0 0.0
        %5413 = vmatprep.subr.mxu0 0.0
        %5414 = vmatpush1.xpose.msra.mxu0 0.0
        %5415 = vmatprep.subr.mxu0 0.0
        %5416 = vmatpush1.xpose.msra.mxu0 0.0
        %5417 = vmatprep.subr.mxu0 0.0
        %5418 = vmatpush1.xpose.msra.mxu0 0.0
        %5419 = vmatprep.subr.mxu0 0.0
        %5420 = vmatpush1.xpose.msra.mxu0 0.0
        %5421 = vmatprep.subr.mxu0 0.0
        %5422 = vmatpush1.xpose.msra.mxu0 0.0
        %5423 = vmatprep.subr.mxu0 0.0
        %5424 = vmatpush1.xpose.msra.mxu0 0.0
        %5425 = vmatprep.subr.mxu0 0.0
        %5426 = vmatpush1.xpose.msra.mxu0 0.0
        %5427 = vmatprep.subr.mxu0 0.0
        %5428 = vmatpush1.xpose.msra.mxu0 0.0
        %5429 = vmatprep.mubr.f32.mxu0 %v1174
        %5430 = vmatmul.mubr.f32.gmra.mrb[0].mxu0 %v1166
        %v5431 = vpop.f32.mrb[0].mxu0
        %v5432 = vadd.f32 %v5362, %v5431
        %v5433 = vpop.f32.mrb[0].mxu0
        %5434 = vdwg.mxu0
        %5435 = vmatprep.subr.mxu0 %v392
        %5436 = vmatpush1.xpose.msra.mxu0 %v391
        %5437 = vmatprep.subr.mxu0 %v584
        %5438 = vmatpush1.xpose.msra.mxu0 %v583
        %5439 = vmatprep.subr.mxu0 0.0
        %5440 = vmatpush1.xpose.msra.mxu0 0.0
        %5441 = vmatprep.subr.mxu0 0.0
        %5442 = vmatpush1.xpose.msra.mxu0 0.0
        %5443 = vmatprep.subr.mxu0 0.0
        %5444 = vmatpush1.xpose.msra.mxu0 0.0
        %5445 = vmatprep.subr.mxu0 0.0
        %5446 = vmatpush1.xpose.msra.mxu0 0.0
        %5447 = vmatprep.subr.mxu0 0.0
        %5448 = vmatpush1.xpose.msra.mxu0 0.0
        %5449 = vmatprep.subr.mxu0 0.0
        %5450 = vmatpush1.xpose.msra.mxu0 0.0
        %5451 = vmatprep.subr.mxu0 0.0
        %5452 = vmatpush1.xpose.msra.mxu0 0.0
        %5453 = vmatprep.subr.mxu0 0.0
        %5454 = vmatpush1.xpose.msra.mxu0 0.0
        %5455 = vmatprep.subr.mxu0 0.0
        %5456 = vmatpush1.xpose.msra.mxu0 0.0
        %5457 = vmatprep.subr.mxu0 0.0
        %5458 = vmatpush1.xpose.msra.mxu0 0.0
        %5459 = vmatprep.subr.mxu0 0.0
        %5460 = vmatpush1.xpose.msra.mxu0 0.0
        %5461 = vmatprep.subr.mxu0 0.0
        %5462 = vmatpush1.xpose.msra.mxu0 0.0
        %5463 = vmatprep.subr.mxu0 0.0
        %5464 = vmatpush1.xpose.msra.mxu0 0.0
        %5465 = vmatprep.subr.mxu0 0.0
        %5466 = vmatpush1.xpose.msra.mxu0 0.0
        %5467 = vmatprep.subr.mxu0 0.0
        %5468 = vmatpush1.xpose.msra.mxu0 0.0
        %5469 = vmatprep.subr.mxu0 0.0
        %5470 = vmatpush1.xpose.msra.mxu0 0.0
        %5471 = vmatprep.subr.mxu0 0.0
        %5472 = vmatpush1.xpose.msra.mxu0 0.0
        %5473 = vmatprep.subr.mxu0 0.0
        %5474 = vmatpush1.xpose.msra.mxu0 0.0
        %5475 = vmatprep.subr.mxu0 0.0
        %5476 = vmatpush1.xpose.msra.mxu0 0.0
        %5477 = vmatprep.subr.mxu0 0.0
        %5478 = vmatpush1.xpose.msra.mxu0 0.0
        %5479 = vmatprep.subr.mxu0 0.0
        %5480 = vmatpush1.xpose.msra.mxu0 0.0
        %5481 = vmatprep.subr.mxu0 0.0
        %5482 = vmatpush1.xpose.msra.mxu0 0.0
        %5483 = vmatprep.subr.mxu0 0.0
        %5484 = vmatpush1.xpose.msra.mxu0 0.0
        %5485 = vmatprep.subr.mxu0 0.0
        %5486 = vmatpush1.xpose.msra.mxu0 0.0
        %5487 = vmatprep.subr.mxu0 0.0
        %5488 = vmatpush1.xpose.msra.mxu0 0.0
        %5489 = vmatprep.subr.mxu0 0.0
        %5490 = vmatpush1.xpose.msra.mxu0 0.0
        %5491 = vmatprep.subr.mxu0 0.0
        %5492 = vmatpush1.xpose.msra.mxu0 0.0
        %5493 = vmatprep.subr.mxu0 0.0
        %5494 = vmatpush1.xpose.msra.mxu0 0.0
        %5495 = vmatprep.subr.mxu0 0.0
        %5496 = vmatpush1.xpose.msra.mxu0 0.0
        %5497 = vmatprep.subr.mxu0 0.0
        %5498 = vmatpush1.xpose.msra.mxu0 0.0
        %5499 = vmatprep.mubr.f32.mxu0 %v1175
        %5500 = vmatmul.mubr.f32.gmra.mrb[0].mxu0 %v1173
        %v5501 = vpop.f32.mrb[0].mxu0
        %v5502 = vadd.f32 %v5432, %v5501
        %v5503 = vpop.f32.mrb[0].mxu0
        %5504 = vdwg.mxu0
        %5505 = vmatprep.subr.mxu0 %v394
        %5506 = vmatpush1.xpose.msra.mxu0 %v393
        %5507 = vmatprep.subr.mxu0 %v586
        %5508 = vmatpush1.xpose.msra.mxu0 %v585
        %5509 = vmatprep.subr.mxu0 0.0
        %5510 = vmatpush1.xpose.msra.mxu0 0.0
        %5511 = vmatprep.subr.mxu0 0.0
        %5512 = vmatpush1.xpose.msra.mxu0 0.0
        %5513 = vmatprep.subr.mxu0 0.0
        %5514 = vmatpush1.xpose.msra.mxu0 0.0
        %5515 = vmatprep.subr.mxu0 0.0
        %5516 = vmatpush1.xpose.msra.mxu0 0.0
        %5517 = vmatprep.subr.mxu0 0.0
        %5518 = vmatpush1.xpose.msra.mxu0 0.0
        %5519 = vmatprep.subr.mxu0 0.0
        %5520 = vmatpush1.xpose.msra.mxu0 0.0
        %5521 = vmatprep.subr.mxu0 0.0
        %5522 = vmatpush1.xpose.msra.mxu0 0.0
        %5523 = vmatprep.subr.mxu0 0.0
        %5524 = vmatpush1.xpose.msra.mxu0 0.0
        %5525 = vmatprep.subr.mxu0 0.0
        %5526 = vmatpush1.xpose.msra.mxu0 0.0
        %5527 = vmatprep.subr.mxu0 0.0
        %5528 = vmatpush1.xpose.msra.mxu0 0.0
        %5529 = vmatprep.subr.mxu0 0.0
        %5530 = vmatpush1.xpose.msra.mxu0 0.0
        %5531 = vmatprep.subr.mxu0 0.0
        %5532 = vmatpush1.xpose.msra.mxu0 0.0
        %5533 = vmatprep.subr.mxu0 0.0
        %5534 = vmatpush1.xpose.msra.mxu0 0.0
        %5535 = vmatprep.subr.mxu0 0.0
        %5536 = vmatpush1.xpose.msra.mxu0 0.0
        %5537 = vmatprep.subr.mxu0 0.0
        %5538 = vmatpush1.xpose.msra.mxu0 0.0
        %5539 = vmatprep.subr.mxu0 0.0
        %5540 = vmatpush1.xpose.msra.mxu0 0.0
        %5541 = vmatprep.subr.mxu0 0.0
        %5542 = vmatpush1.xpose.msra.mxu0 0.0
        %5543 = vmatprep.subr.mxu0 0.0
        %5544 = vmatpush1.xpose.msra.mxu0 0.0
        %5545 = vmatprep.subr.mxu0 0.0
        %5546 = vmatpush1.xpose.msra.mxu0 0.0
        %5547 = vmatprep.subr.mxu0 0.0
        %5548 = vmatpush1.xpose.msra.mxu0 0.0
        %5549 = vmatprep.subr.mxu0 0.0
        %5550 = vmatpush1.xpose.msra.mxu0 0.0
        %5551 = vmatprep.subr.mxu0 0.0
        %5552 = vmatpush1.xpose.msra.mxu0 0.0
        %5553 = vmatprep.subr.mxu0 0.0
        %5554 = vmatpush1.xpose.msra.mxu0 0.0
        %5555 = vmatprep.subr.mxu0 0.0
        %5556 = vmatpush1.xpose.msra.mxu0 0.0
        %5557 = vmatprep.subr.mxu0 0.0
        %5558 = vmatpush1.xpose.msra.mxu0 0.0
        %5559 = vmatprep.subr.mxu0 0.0
        %5560 = vmatpush1.xpose.msra.mxu0 0.0
        %5561 = vmatprep.subr.mxu0 0.0
        %5562 = vmatpush1.xpose.msra.mxu0 0.0
        %5563 = vmatprep.subr.mxu0 0.0
        %5564 = vmatpush1.xpose.msra.mxu0 0.0
        %5565 = vmatprep.subr.mxu0 0.0
        %5566 = vmatpush1.xpose.msra.mxu0 0.0
        %5567 = vmatprep.subr.mxu0 0.0
        %5568 = vmatpush1.xpose.msra.mxu0 0.0
        %5569 = vmatprep.mubr.f32.mxu0 %v1191
        %5570 = vmatmul.mubr.f32.gmra.mrb[0].mxu0 %v1183
        %v5571 = vpop.f32.mrb[0].mxu0
        %v5572 = vadd.f32 %v5502, %v5571
        %v5573 = vpop.f32.mrb[0].mxu0
        %5574 = vdwg.mxu0
        %5575 = vmatprep.subr.mxu0 %v396
        %5576 = vmatpush1.xpose.msra.mxu0 %v395
        %5577 = vmatprep.subr.mxu0 %v588
        %5578 = vmatpush1.xpose.msra.mxu0 %v587
        %5579 = vmatprep.subr.mxu0 0.0
        %5580 = vmatpush1.xpose.msra.mxu0 0.0
        %5581 = vmatprep.subr.mxu0 0.0
        %5582 = vmatpush1.xpose.msra.mxu0 0.0
        %5583 = vmatprep.subr.mxu0 0.0
        %5584 = vmatpush1.xpose.msra.mxu0 0.0
        %5585 = vmatprep.subr.mxu0 0.0
        %5586 = vmatpush1.xpose.msra.mxu0 0.0
        %5587 = vmatprep.subr.mxu0 0.0
        %5588 = vmatpush1.xpose.msra.mxu0 0.0
        %5589 = vmatprep.subr.mxu0 0.0
        %5590 = vmatpush1.xpose.msra.mxu0 0.0
        %5591 = vmatprep.subr.mxu0 0.0
        %5592 = vmatpush1.xpose.msra.mxu0 0.0
        %5593 = vmatprep.subr.mxu0 0.0
        %5594 = vmatpush1.xpose.msra.mxu0 0.0
        %5595 = vmatprep.subr.mxu0 0.0
        %5596 = vmatpush1.xpose.msra.mxu0 0.0
        %5597 = vmatprep.subr.mxu0 0.0
        %5598 = vmatpush1.xpose.msra.mxu0 0.0
        %5599 = vmatprep.subr.mxu0 0.0
        %5600 = vmatpush1.xpose.msra.mxu0 0.0
        %5601 = vmatprep.subr.mxu0 0.0
        %5602 = vmatpush1.xpose.msra.mxu0 0.0
        %5603 = vmatprep.subr.mxu0 0.0
        %5604 = vmatpush1.xpose.msra.mxu0 0.0
        %5605 = vmatprep.subr.mxu0 0.0
        %5606 = vmatpush1.xpose.msra.mxu0 0.0
        %5607 = vmatprep.subr.mxu0 0.0
        %5608 = vmatpush1.xpose.msra.mxu0 0.0
        %5609 = vmatprep.subr.mxu0 0.0
        %5610 = vmatpush1.xpose.msra.mxu0 0.0
        %5611 = vmatprep.subr.mxu0 0.0
        %5612 = vmatpush1.xpose.msra.mxu0 0.0
        %5613 = vmatprep.subr.mxu0 0.0
        %5614 = vmatpush1.xpose.msra.mxu0 0.0
        %5615 = vmatprep.subr.mxu0 0.0
        %5616 = vmatpush1.xpose.msra.mxu0 0.0
        %5617 = vmatprep.subr.mxu0 0.0
        %5618 = vmatpush1.xpose.msra.mxu0 0.0
        %5619 = vmatprep.subr.mxu0 0.0
        %5620 = vmatpush1.xpose.msra.mxu0 0.0
        %5621 = vmatprep.subr.mxu0 0.0
        %5622 = vmatpush1.xpose.msra.mxu0 0.0
        %5623 = vmatprep.subr.mxu0 0.0
        %5624 = vmatpush1.xpose.msra.mxu0 0.0
        %5625 = vmatprep.subr.mxu0 0.0
        %5626 = vmatpush1.xpose.msra.mxu0 0.0
        %5627 = vmatprep.subr.mxu0 0.0
        %5628 = vmatpush1.xpose.msra.mxu0 0.0
        %5629 = vmatprep.subr.mxu0 0.0
        %5630 = vmatpush1.xpose.msra.mxu0 0.0
        %5631 = vmatprep.subr.mxu0 0.0
        %5632 = vmatpush1.xpose.msra.mxu0 0.0
        %5633 = vmatprep.subr.mxu0 0.0
        %5634 = vmatpush1.xpose.msra.mxu0 0.0
        %5635 = vmatprep.subr.mxu0 0.0
        %5636 = vmatpush1.xpose.msra.mxu0 0.0
        %5637 = vmatprep.subr.mxu0 0.0
        %5638 = vmatpush1.xpose.msra.mxu0 0.0
        %5639 = vmatprep.mubr.f32.mxu0 %v1192
        %5640 = vmatmul.mubr.f32.gmra.mrb[0].mxu0 %v1190
        %v5641 = vpop.f32.mrb[0].mxu0
        %v5642 = vadd.f32 %v5572, %v5641
        %v5643 = vpop.f32.mrb[0].mxu0
        %5644 = vdwg.mxu0
        %5645 = vmatprep.subr.mxu0 %v398
        %5646 = vmatpush1.xpose.msra.mxu0 %v397
        %5647 = vmatprep.subr.mxu0 %v590
        %5648 = vmatpush1.xpose.msra.mxu0 %v589
        %5649 = vmatprep.subr.mxu0 0.0
        %5650 = vmatpush1.xpose.msra.mxu0 0.0
        %5651 = vmatprep.subr.mxu0 0.0
        %5652 = vmatpush1.xpose.msra.mxu0 0.0
        %5653 = vmatprep.subr.mxu0 0.0
        %5654 = vmatpush1.xpose.msra.mxu0 0.0
        %5655 = vmatprep.subr.mxu0 0.0
        %5656 = vmatpush1.xpose.msra.mxu0 0.0
        %5657 = vmatprep.subr.mxu0 0.0
        %5658 = vmatpush1.xpose.msra.mxu0 0.0
        %5659 = vmatprep.subr.mxu0 0.0
        %5660 = vmatpush1.xpose.msra.mxu0 0.0
        %5661 = vmatprep.subr.mxu0 0.0
        %5662 = vmatpush1.xpose.msra.mxu0 0.0
        %5663 = vmatprep.subr.mxu0 0.0
        %5664 = vmatpush1.xpose.msra.mxu0 0.0
        %5665 = vmatprep.subr.mxu0 0.0
        %5666 = vmatpush1.xpose.msra.mxu0 0.0
        %5667 = vmatprep.subr.mxu0 0.0
        %5668 = vmatpush1.xpose.msra.mxu0 0.0
        %5669 = vmatprep.subr.mxu0 0.0
        %5670 = vmatpush1.xpose.msra.mxu0 0.0
        %5671 = vmatprep.subr.mxu0 0.0
        %5672 = vmatpush1.xpose.msra.mxu0 0.0
        %5673 = vmatprep.subr.mxu0 0.0
        %5674 = vmatpush1.xpose.msra.mxu0 0.0
        %5675 = vmatprep.subr.mxu0 0.0
        %5676 = vmatpush1.xpose.msra.mxu0 0.0
        %5677 = vmatprep.subr.mxu0 0.0
        %5678 = vmatpush1.xpose.msra.mxu0 0.0
        %5679 = vmatprep.subr.mxu0 0.0
        %5680 = vmatpush1.xpose.msra.mxu0 0.0
        %5681 = vmatprep.subr.mxu0 0.0
        %5682 = vmatpush1.xpose.msra.mxu0 0.0
        %5683 = vmatprep.subr.mxu0 0.0
        %5684 = vmatpush1.xpose.msra.mxu0 0.0
        %5685 = vmatprep.subr.mxu0 0.0
        %5686 = vmatpush1.xpose.msra.mxu0 0.0
        %5687 = vmatprep.subr.mxu0 0.0
        %5688 = vmatpush1.xpose.msra.mxu0 0.0
        %5689 = vmatprep.subr.mxu0 0.0
        %5690 = vmatpush1.xpose.msra.mxu0 0.0
        %5691 = vmatprep.subr.mxu0 0.0
        %5692 = vmatpush1.xpose.msra.mxu0 0.0
        %5693 = vmatprep.subr.mxu0 0.0
        %5694 = vmatpush1.xpose.msra.mxu0 0.0
        %5695 = vmatprep.subr.mxu0 0.0
        %5696 = vmatpush1.xpose.msra.mxu0 0.0
        %5697 = vmatprep.subr.mxu0 0.0
        %5698 = vmatpush1.xpose.msra.mxu0 0.0
        %5699 = vmatprep.subr.mxu0 0.0
        %5700 = vmatpush1.xpose.msra.mxu0 0.0
        %5701 = vmatprep.subr.mxu0 0.0
        %5702 = vmatpush1.xpose.msra.mxu0 0.0
        %5703 = vmatprep.subr.mxu0 0.0
        %5704 = vmatpush1.xpose.msra.mxu0 0.0
        %5705 = vmatprep.subr.mxu0 0.0
        %5706 = vmatpush1.xpose.msra.mxu0 0.0
        %5707 = vmatprep.subr.mxu0 0.0
        %5708 = vmatpush1.xpose.msra.mxu0 0.0
        %5709 = vmatprep.mubr.f32.mxu0 %v1208
        %5710 = vmatmul.mubr.f32.gmra.mrb[0].mxu0 %v1200
        %v5711 = vpop.f32.mrb[0].mxu0
        %v5712 = vadd.f32 %v5642, %v5711
        %v5713 = vpop.f32.mrb[0].mxu0
        %5714 = vdwg.mxu0
        %5715 = vmatprep.subr.mxu0 %v400
        %5716 = vmatpush1.xpose.msra.mxu0 %v399
        %5717 = vmatprep.subr.mxu0 %v592
        %5718 = vmatpush1.xpose.msra.mxu0 %v591
        %5719 = vmatprep.subr.mxu0 0.0
        %5720 = vmatpush1.xpose.msra.mxu0 0.0
        %5721 = vmatprep.subr.mxu0 0.0
        %5722 = vmatpush1.xpose.msra.mxu0 0.0
        %5723 = vmatprep.subr.mxu0 0.0
        %5724 = vmatpush1.xpose.msra.mxu0 0.0
        %5725 = vmatprep.subr.mxu0 0.0
        %5726 = vmatpush1.xpose.msra.mxu0 0.0
        %5727 = vmatprep.subr.mxu0 0.0
        %5728 = vmatpush1.xpose.msra.mxu0 0.0
        %5729 = vmatprep.subr.mxu0 0.0
        %5730 = vmatpush1.xpose.msra.mxu0 0.0
        %5731 = vmatprep.subr.mxu0 0.0
        %5732 = vmatpush1.xpose.msra.mxu0 0.0
        %5733 = vmatprep.subr.mxu0 0.0
        %5734 = vmatpush1.xpose.msra.mxu0 0.0
        %5735 = vmatprep.subr.mxu0 0.0
        %5736 = vmatpush1.xpose.msra.mxu0 0.0
        %5737 = vmatprep.subr.mxu0 0.0
        %5738 = vmatpush1.xpose.msra.mxu0 0.0
        %5739 = vmatprep.subr.mxu0 0.0
        %5740 = vmatpush1.xpose.msra.mxu0 0.0
        %5741 = vmatprep.subr.mxu0 0.0
        %5742 = vmatpush1.xpose.msra.mxu0 0.0
        %5743 = vmatprep.subr.mxu0 0.0
        %5744 = vmatpush1.xpose.msra.mxu0 0.0
        %5745 = vmatprep.subr.mxu0 0.0
        %5746 = vmatpush1.xpose.msra.mxu0 0.0
        %5747 = vmatprep.subr.mxu0 0.0
        %5748 = vmatpush1.xpose.msra.mxu0 0.0
        %5749 = vmatprep.subr.mxu0 0.0
        %5750 = vmatpush1.xpose.msra.mxu0 0.0
        %5751 = vmatprep.subr.mxu0 0.0
        %5752 = vmatpush1.xpose.msra.mxu0 0.0
        %5753 = vmatprep.subr.mxu0 0.0
        %5754 = vmatpush1.xpose.msra.mxu0 0.0
        %5755 = vmatprep.subr.mxu0 0.0
        %5756 = vmatpush1.xpose.msra.mxu0 0.0
        %5757 = vmatprep.subr.mxu0 0.0
        %5758 = vmatpush1.xpose.msra.mxu0 0.0
        %5759 = vmatprep.subr.mxu0 0.0
        %5760 = vmatpush1.xpose.msra.mxu0 0.0
        %5761 = vmatprep.subr.mxu0 0.0
        %5762 = vmatpush1.xpose.msra.mxu0 0.0
        %5763 = vmatprep.subr.mxu0 0.0
        %5764 = vmatpush1.xpose.msra.mxu0 0.0
        %5765 = vmatprep.subr.mxu0 0.0
        %5766 = vmatpush1.xpose.msra.mxu0 0.0
        %5767 = vmatprep.subr.mxu0 0.0
        %5768 = vmatpush1.xpose.msra.mxu0 0.0
        %5769 = vmatprep.subr.mxu0 0.0
        %5770 = vmatpush1.xpose.msra.mxu0 0.0
        %5771 = vmatprep.subr.mxu0 0.0
        %5772 = vmatpush1.xpose.msra.mxu0 0.0
        %5773 = vmatprep.subr.mxu0 0.0
        %5774 = vmatpush1.xpose.msra.mxu0 0.0
        %5775 = vmatprep.subr.mxu0 0.0
        %5776 = vmatpush1.xpose.msra.mxu0 0.0
        %5777 = vmatprep.subr.mxu0 0.0
        %5778 = vmatpush1.xpose.msra.mxu0 0.0
        %5779 = vmatprep.mubr.f32.mxu0 %v1209
        %5780 = vmatmul.mubr.f32.gmra.mrb[0].mxu0 %v1207
        %v5781 = vpop.f32.mrb[0].mxu0
        %v5782 = vadd.f32 %v5712, %v5781
        %v5783 = vpop.f32.mrb[0].mxu0
        %5784 = vdwg.mxu0
        %5785 = vmatprep.subr.mxu0 %v402
        %5786 = vmatpush1.xpose.msra.mxu0 %v401
        %5787 = vmatprep.subr.mxu0 %v594
        %5788 = vmatpush1.xpose.msra.mxu0 %v593
        %5789 = vmatprep.subr.mxu0 0.0
        %5790 = vmatpush1.xpose.msra.mxu0 0.0
        %5791 = vmatprep.subr.mxu0 0.0
        %5792 = vmatpush1.xpose.msra.mxu0 0.0
        %5793 = vmatprep.subr.mxu0 0.0
        %5794 = vmatpush1.xpose.msra.mxu0 0.0
        %5795 = vmatprep.subr.mxu0 0.0
        %5796 = vmatpush1.xpose.msra.mxu0 0.0
        %5797 = vmatprep.subr.mxu0 0.0
        %5798 = vmatpush1.xpose.msra.mxu0 0.0
        %5799 = vmatprep.subr.mxu0 0.0
        %5800 = vmatpush1.xpose.msra.mxu0 0.0
        %5801 = vmatprep.subr.mxu0 0.0
        %5802 = vmatpush1.xpose.msra.mxu0 0.0
        %5803 = vmatprep.subr.mxu0 0.0
        %5804 = vmatpush1.xpose.msra.mxu0 0.0
        %5805 = vmatprep.subr.mxu0 0.0
        %5806 = vmatpush1.xpose.msra.mxu0 0.0
        %5807 = vmatprep.subr.mxu0 0.0
        %5808 = vmatpush1.xpose.msra.mxu0 0.0
        %5809 = vmatprep.subr.mxu0 0.0
        %5810 = vmatpush1.xpose.msra.mxu0 0.0
        %5811 = vmatprep.subr.mxu0 0.0
        %5812 = vmatpush1.xpose.msra.mxu0 0.0
        %5813 = vmatprep.subr.mxu0 0.0
        %5814 = vmatpush1.xpose.msra.mxu0 0.0
        %5815 = vmatprep.subr.mxu0 0.0
        %5816 = vmatpush1.xpose.msra.mxu0 0.0
        %5817 = vmatprep.subr.mxu0 0.0
        %5818 = vmatpush1.xpose.msra.mxu0 0.0
        %5819 = vmatprep.subr.mxu0 0.0
        %5820 = vmatpush1.xpose.msra.mxu0 0.0
        %5821 = vmatprep.subr.mxu0 0.0
        %5822 = vmatpush1.xpose.msra.mxu0 0.0
        %5823 = vmatprep.subr.mxu0 0.0
        %5824 = vmatpush1.xpose.msra.mxu0 0.0
        %5825 = vmatprep.subr.mxu0 0.0
        %5826 = vmatpush1.xpose.msra.mxu0 0.0
        %5827 = vmatprep.subr.mxu0 0.0
        %5828 = vmatpush1.xpose.msra.mxu0 0.0
        %5829 = vmatprep.subr.mxu0 0.0
        %5830 = vmatpush1.xpose.msra.mxu0 0.0
        %5831 = vmatprep.subr.mxu0 0.0
        %5832 = vmatpush1.xpose.msra.mxu0 0.0
        %5833 = vmatprep.subr.mxu0 0.0
        %5834 = vmatpush1.xpose.msra.mxu0 0.0
        %5835 = vmatprep.subr.mxu0 0.0
        %5836 = vmatpush1.xpose.msra.mxu0 0.0
        %5837 = vmatprep.subr.mxu0 0.0
        %5838 = vmatpush1.xpose.msra.mxu0 0.0
        %5839 = vmatprep.subr.mxu0 0.0
        %5840 = vmatpush1.xpose.msra.mxu0 0.0
        %5841 = vmatprep.subr.mxu0 0.0
        %5842 = vmatpush1.xpose.msra.mxu0 0.0
        %5843 = vmatprep.subr.mxu0 0.0
        %5844 = vmatpush1.xpose.msra.mxu0 0.0
        %5845 = vmatprep.subr.mxu0 0.0
        %5846 = vmatpush1.xpose.msra.mxu0 0.0
        %5847 = vmatprep.subr.mxu0 0.0
        %5848 = vmatpush1.xpose.msra.mxu0 0.0
        %5849 = vmatprep.mubr.f32.mxu0 %v1225
        %5850 = vmatmul.mubr.f32.gmra.mrb[0].mxu0 %v1217
        %v5851 = vpop.f32.mrb[0].mxu0
        %v5852 = vadd.f32 %v5782, %v5851
        %v5853 = vpop.f32.mrb[0].mxu0
        %5854 = vdwg.mxu0
        %5855 = vmatprep.subr.mxu0 %v404
        %5856 = vmatpush1.xpose.msra.mxu0 %v403
        %5857 = vmatprep.subr.mxu0 %v596
        %5858 = vmatpush1.xpose.msra.mxu0 %v595
        %5859 = vmatprep.subr.mxu0 0.0
        %5860 = vmatpush1.xpose.msra.mxu0 0.0
        %5861 = vmatprep.subr.mxu0 0.0
        %5862 = vmatpush1.xpose.msra.mxu0 0.0
        %5863 = vmatprep.subr.mxu0 0.0
        %5864 = vmatpush1.xpose.msra.mxu0 0.0
        %5865 = vmatprep.subr.mxu0 0.0
        %5866 = vmatpush1.xpose.msra.mxu0 0.0
        %5867 = vmatprep.subr.mxu0 0.0
        %5868 = vmatpush1.xpose.msra.mxu0 0.0
        %5869 = vmatprep.subr.mxu0 0.0
        %5870 = vmatpush1.xpose.msra.mxu0 0.0
        %5871 = vmatprep.subr.mxu0 0.0
        %5872 = vmatpush1.xpose.msra.mxu0 0.0
        %5873 = vmatprep.subr.mxu0 0.0
        %5874 = vmatpush1.xpose.msra.mxu0 0.0
        %5875 = vmatprep.subr.mxu0 0.0
        %5876 = vmatpush1.xpose.msra.mxu0 0.0
        %5877 = vmatprep.subr.mxu0 0.0
        %5878 = vmatpush1.xpose.msra.mxu0 0.0
        %5879 = vmatprep.subr.mxu0 0.0
        %5880 = vmatpush1.xpose.msra.mxu0 0.0
        %5881 = vmatprep.subr.mxu0 0.0
        %5882 = vmatpush1.xpose.msra.mxu0 0.0
        %5883 = vmatprep.subr.mxu0 0.0
        %5884 = vmatpush1.xpose.msra.mxu0 0.0
        %5885 = vmatprep.subr.mxu0 0.0
        %5886 = vmatpush1.xpose.msra.mxu0 0.0
        %5887 = vmatprep.subr.mxu0 0.0
        %5888 = vmatpush1.xpose.msra.mxu0 0.0
        %5889 = vmatprep.subr.mxu0 0.0
        %5890 = vmatpush1.xpose.msra.mxu0 0.0
        %5891 = vmatprep.subr.mxu0 0.0
        %5892 = vmatpush1.xpose.msra.mxu0 0.0
        %5893 = vmatprep.subr.mxu0 0.0
        %5894 = vmatpush1.xpose.msra.mxu0 0.0
        %5895 = vmatprep.subr.mxu0 0.0
        %5896 = vmatpush1.xpose.msra.mxu0 0.0
        %5897 = vmatprep.subr.mxu0 0.0
        %5898 = vmatpush1.xpose.msra.mxu0 0.0
        %5899 = vmatprep.subr.mxu0 0.0
        %5900 = vmatpush1.xpose.msra.mxu0 0.0
        %5901 = vmatprep.subr.mxu0 0.0
        %5902 = vmatpush1.xpose.msra.mxu0 0.0
        %5903 = vmatprep.subr.mxu0 0.0
        %5904 = vmatpush1.xpose.msra.mxu0 0.0
        %5905 = vmatprep.subr.mxu0 0.0
        %5906 = vmatpush1.xpose.msra.mxu0 0.0
        %5907 = vmatprep.subr.mxu0 0.0
        %5908 = vmatpush1.xpose.msra.mxu0 0.0
        %5909 = vmatprep.subr.mxu0 0.0
        %5910 = vmatpush1.xpose.msra.mxu0 0.0
        %5911 = vmatprep.subr.mxu0 0.0
        %5912 = vmatpush1.xpose.msra.mxu0 0.0
        %5913 = vmatprep.subr.mxu0 0.0
        %5914 = vmatpush1.xpose.msra.mxu0 0.0
        %5915 = vmatprep.subr.mxu0 0.0
        %5916 = vmatpush1.xpose.msra.mxu0 0.0
        %5917 = vmatprep.subr.mxu0 0.0
        %5918 = vmatpush1.xpose.msra.mxu0 0.0
        %5919 = vmatprep.mubr.f32.mxu0 %v1226
        %5920 = vmatmul.mubr.f32.gmra.mrb[0].mxu0 %v1224
        %v5921 = vpop.f32.mrb[0].mxu0
        %v5922 = vadd.f32 %v5852, %v5921
        %v5923 = vpop.f32.mrb[0].mxu0
        %5924 = vdwg.mxu0
        %5925 = vmatprep.subr.mxu0 %v406
        %5926 = vmatpush1.xpose.msra.mxu0 %v405
        %5927 = vmatprep.subr.mxu0 %v598
        %5928 = vmatpush1.xpose.msra.mxu0 %v597
        %5929 = vmatprep.subr.mxu0 0.0
        %5930 = vmatpush1.xpose.msra.mxu0 0.0
        %5931 = vmatprep.subr.mxu0 0.0
        %5932 = vmatpush1.xpose.msra.mxu0 0.0
        %5933 = vmatprep.subr.mxu0 0.0
        %5934 = vmatpush1.xpose.msra.mxu0 0.0
        %5935 = vmatprep.subr.mxu0 0.0
        %5936 = vmatpush1.xpose.msra.mxu0 0.0
        %5937 = vmatprep.subr.mxu0 0.0
        %5938 = vmatpush1.xpose.msra.mxu0 0.0
        %5939 = vmatprep.subr.mxu0 0.0
        %5940 = vmatpush1.xpose.msra.mxu0 0.0
        %5941 = vmatprep.subr.mxu0 0.0
        %5942 = vmatpush1.xpose.msra.mxu0 0.0
        %5943 = vmatprep.subr.mxu0 0.0
        %5944 = vmatpush1.xpose.msra.mxu0 0.0
        %5945 = vmatprep.subr.mxu0 0.0
        %5946 = vmatpush1.xpose.msra.mxu0 0.0
        %5947 = vmatprep.subr.mxu0 0.0
        %5948 = vmatpush1.xpose.msra.mxu0 0.0
        %5949 = vmatprep.subr.mxu0 0.0
        %5950 = vmatpush1.xpose.msra.mxu0 0.0
        %5951 = vmatprep.subr.mxu0 0.0
        %5952 = vmatpush1.xpose.msra.mxu0 0.0
        %5953 = vmatprep.subr.mxu0 0.0
        %5954 = vmatpush1.xpose.msra.mxu0 0.0
        %5955 = vmatprep.subr.mxu0 0.0
        %5956 = vmatpush1.xpose.msra.mxu0 0.0
        %5957 = vmatprep.subr.mxu0 0.0
        %5958 = vmatpush1.xpose.msra.mxu0 0.0
        %5959 = vmatprep.subr.mxu0 0.0
        %5960 = vmatpush1.xpose.msra.mxu0 0.0
        %5961 = vmatprep.subr.mxu0 0.0
        %5962 = vmatpush1.xpose.msra.mxu0 0.0
        %5963 = vmatprep.subr.mxu0 0.0
        %5964 = vmatpush1.xpose.msra.mxu0 0.0
        %5965 = vmatprep.subr.mxu0 0.0
        %5966 = vmatpush1.xpose.msra.mxu0 0.0
        %5967 = vmatprep.subr.mxu0 0.0
        %5968 = vmatpush1.xpose.msra.mxu0 0.0
        %5969 = vmatprep.subr.mxu0 0.0
        %5970 = vmatpush1.xpose.msra.mxu0 0.0
        %5971 = vmatprep.subr.mxu0 0.0
        %5972 = vmatpush1.xpose.msra.mxu0 0.0
        %5973 = vmatprep.subr.mxu0 0.0
        %5974 = vmatpush1.xpose.msra.mxu0 0.0
        %5975 = vmatprep.subr.mxu0 0.0
        %5976 = vmatpush1.xpose.msra.mxu0 0.0
        %5977 = vmatprep.subr.mxu0 0.0
        %5978 = vmatpush1.xpose.msra.mxu0 0.0
        %5979 = vmatprep.subr.mxu0 0.0
        %5980 = vmatpush1.xpose.msra.mxu0 0.0
        %5981 = vmatprep.subr.mxu0 0.0
        %5982 = vmatpush1.xpose.msra.mxu0 0.0
        %5983 = vmatprep.subr.mxu0 0.0
        %5984 = vmatpush1.xpose.msra.mxu0 0.0
        %5985 = vmatprep.subr.mxu0 0.0
        %5986 = vmatpush1.xpose.msra.mxu0 0.0
        %5987 = vmatprep.subr.mxu0 0.0
        %5988 = vmatpush1.xpose.msra.mxu0 0.0
        %5989 = vmatprep.mubr.f32.mxu0 %v1242
        %5990 = vmatmul.mubr.f32.gmra.mrb[0].mxu0 %v1234
        %v5991 = vpop.f32.mrb[0].mxu0
        %v5992 = vadd.f32 %v5922, %v5991
        %v5993 = vpop.f32.mrb[0].mxu0
        %5994 = vdwg.mxu0
        %5995 = vmatprep.subr.mxu0 %v408
        %5996 = vmatpush1.xpose.msra.mxu0 %v407
        %5997 = vmatprep.subr.mxu0 %v600
        %5998 = vmatpush1.xpose.msra.mxu0 %v599
        %5999 = vmatprep.subr.mxu0 0.0
        %6000 = vmatpush1.xpose.msra.mxu0 0.0
        %6001 = vmatprep.subr.mxu0 0.0
        %6002 = vmatpush1.xpose.msra.mxu0 0.0
        %6003 = vmatprep.subr.mxu0 0.0
        %6004 = vmatpush1.xpose.msra.mxu0 0.0
        %6005 = vmatprep.subr.mxu0 0.0
        %6006 = vmatpush1.xpose.msra.mxu0 0.0
        %6007 = vmatprep.subr.mxu0 0.0
        %6008 = vmatpush1.xpose.msra.mxu0 0.0
        %6009 = vmatprep.subr.mxu0 0.0
        %6010 = vmatpush1.xpose.msra.mxu0 0.0
        %6011 = vmatprep.subr.mxu0 0.0
        %6012 = vmatpush1.xpose.msra.mxu0 0.0
        %6013 = vmatprep.subr.mxu0 0.0
        %6014 = vmatpush1.xpose.msra.mxu0 0.0
        %6015 = vmatprep.subr.mxu0 0.0
        %6016 = vmatpush1.xpose.msra.mxu0 0.0
        %6017 = vmatprep.subr.mxu0 0.0
        %6018 = vmatpush1.xpose.msra.mxu0 0.0
        %6019 = vmatprep.subr.mxu0 0.0
        %6020 = vmatpush1.xpose.msra.mxu0 0.0
        %6021 = vmatprep.subr.mxu0 0.0
        %6022 = vmatpush1.xpose.msra.mxu0 0.0
        %6023 = vmatprep.subr.mxu0 0.0
        %6024 = vmatpush1.xpose.msra.mxu0 0.0
        %6025 = vmatprep.subr.mxu0 0.0
        %6026 = vmatpush1.xpose.msra.mxu0 0.0
        %6027 = vmatprep.subr.mxu0 0.0
        %6028 = vmatpush1.xpose.msra.mxu0 0.0
        %6029 = vmatprep.subr.mxu0 0.0
        %6030 = vmatpush1.xpose.msra.mxu0 0.0
        %6031 = vmatprep.subr.mxu0 0.0
        %6032 = vmatpush1.xpose.msra.mxu0 0.0
        %6033 = vmatprep.subr.mxu0 0.0
        %6034 = vmatpush1.xpose.msra.mxu0 0.0
        %6035 = vmatprep.subr.mxu0 0.0
        %6036 = vmatpush1.xpose.msra.mxu0 0.0
        %6037 = vmatprep.subr.mxu0 0.0
        %6038 = vmatpush1.xpose.msra.mxu0 0.0
        %6039 = vmatprep.subr.mxu0 0.0
        %6040 = vmatpush1.xpose.msra.mxu0 0.0
        %6041 = vmatprep.subr.mxu0 0.0
        %6042 = vmatpush1.xpose.msra.mxu0 0.0
        %6043 = vmatprep.subr.mxu0 0.0
        %6044 = vmatpush1.xpose.msra.mxu0 0.0
        %6045 = vmatprep.subr.mxu0 0.0
        %6046 = vmatpush1.xpose.msra.mxu0 0.0
        %6047 = vmatprep.subr.mxu0 0.0
        %6048 = vmatpush1.xpose.msra.mxu0 0.0
        %6049 = vmatprep.subr.mxu0 0.0
        %6050 = vmatpush1.xpose.msra.mxu0 0.0
        %6051 = vmatprep.subr.mxu0 0.0
        %6052 = vmatpush1.xpose.msra.mxu0 0.0
        %6053 = vmatprep.subr.mxu0 0.0
        %6054 = vmatpush1.xpose.msra.mxu0 0.0
        %6055 = vmatprep.subr.mxu0 0.0
        %6056 = vmatpush1.xpose.msra.mxu0 0.0
        %6057 = vmatprep.subr.mxu0 0.0
        %6058 = vmatpush1.xpose.msra.mxu0 0.0
        %6059 = vmatprep.mubr.f32.mxu0 %v1243
        %6060 = vmatmul.mubr.f32.gmra.mrb[0].mxu0 %v1241
        %v6061 = vpop.f32.mrb[0].mxu0
        %v6062 = vadd.f32 %v5992, %v6061
        %v6063 = vpop.f32.mrb[0].mxu0
        %6064 = vdwg.mxu0
        %6065 = vmatprep.subr.mxu0 %v410
        %6066 = vmatpush1.xpose.msra.mxu0 %v409
        %6067 = vmatprep.subr.mxu0 %v602
        %6068 = vmatpush1.xpose.msra.mxu0 %v601
        %6069 = vmatprep.subr.mxu0 0.0
        %6070 = vmatpush1.xpose.msra.mxu0 0.0
        %6071 = vmatprep.subr.mxu0 0.0
        %6072 = vmatpush1.xpose.msra.mxu0 0.0
        %6073 = vmatprep.subr.mxu0 0.0
        %6074 = vmatpush1.xpose.msra.mxu0 0.0
        %6075 = vmatprep.subr.mxu0 0.0
        %6076 = vmatpush1.xpose.msra.mxu0 0.0
        %6077 = vmatprep.subr.mxu0 0.0
        %6078 = vmatpush1.xpose.msra.mxu0 0.0
        %6079 = vmatprep.subr.mxu0 0.0
        %6080 = vmatpush1.xpose.msra.mxu0 0.0
        %6081 = vmatprep.subr.mxu0 0.0
        %6082 = vmatpush1.xpose.msra.mxu0 0.0
        %6083 = vmatprep.subr.mxu0 0.0
        %6084 = vmatpush1.xpose.msra.mxu0 0.0
        %6085 = vmatprep.subr.mxu0 0.0
        %6086 = vmatpush1.xpose.msra.mxu0 0.0
        %6087 = vmatprep.subr.mxu0 0.0
        %6088 = vmatpush1.xpose.msra.mxu0 0.0
        %6089 = vmatprep.subr.mxu0 0.0
        %6090 = vmatpush1.xpose.msra.mxu0 0.0
        %6091 = vmatprep.subr.mxu0 0.0
        %6092 = vmatpush1.xpose.msra.mxu0 0.0
        %6093 = vmatprep.subr.mxu0 0.0
        %6094 = vmatpush1.xpose.msra.mxu0 0.0
        %6095 = vmatprep.subr.mxu0 0.0
        %6096 = vmatpush1.xpose.msra.mxu0 0.0
        %6097 = vmatprep.subr.mxu0 0.0
        %6098 = vmatpush1.xpose.msra.mxu0 0.0
        %6099 = vmatprep.subr.mxu0 0.0
        %6100 = vmatpush1.xpose.msra.mxu0 0.0
        %6101 = vmatprep.subr.mxu0 0.0
        %6102 = vmatpush1.xpose.msra.mxu0 0.0
        %6103 = vmatprep.subr.mxu0 0.0
        %6104 = vmatpush1.xpose.msra.mxu0 0.0
        %6105 = vmatprep.subr.mxu0 0.0
        %6106 = vmatpush1.xpose.msra.mxu0 0.0
        %6107 = vmatprep.subr.mxu0 0.0
        %6108 = vmatpush1.xpose.msra.mxu0 0.0
        %6109 = vmatprep.subr.mxu0 0.0
        %6110 = vmatpush1.xpose.msra.mxu0 0.0
        %6111 = vmatprep.subr.mxu0 0.0
        %6112 = vmatpush1.xpose.msra.mxu0 0.0
        %6113 = vmatprep.subr.mxu0 0.0
        %6114 = vmatpush1.xpose.msra.mxu0 0.0
        %6115 = vmatprep.subr.mxu0 0.0
        %6116 = vmatpush1.xpose.msra.mxu0 0.0
        %6117 = vmatprep.subr.mxu0 0.0
        %6118 = vmatpush1.xpose.msra.mxu0 0.0
        %6119 = vmatprep.subr.mxu0 0.0
        %6120 = vmatpush1.xpose.msra.mxu0 0.0
        %6121 = vmatprep.subr.mxu0 0.0
        %6122 = vmatpush1.xpose.msra.mxu0 0.0
        %6123 = vmatprep.subr.mxu0 0.0
        %6124 = vmatpush1.xpose.msra.mxu0 0.0
        %6125 = vmatprep.subr.mxu0 0.0
        %6126 = vmatpush1.xpose.msra.mxu0 0.0
        %6127 = vmatprep.subr.mxu0 0.0
        %6128 = vmatpush1.xpose.msra.mxu0 0.0
        %6129 = vmatprep.mubr.f32.mxu0 %v1259
        %6130 = vmatmul.mubr.f32.gmra.mrb[0].mxu0 %v1251
        %v6131 = vpop.f32.mrb[0].mxu0
        %v6132 = vadd.f32 %v6062, %v6131
        %v6133 = vpop.f32.mrb[0].mxu0
        %6134 = vdwg.mxu0
        %6135 = vmatprep.subr.mxu0 %v412
        %6136 = vmatpush1.xpose.msra.mxu0 %v411
        %6137 = vmatprep.subr.mxu0 %v604
        %6138 = vmatpush1.xpose.msra.mxu0 %v603
        %6139 = vmatprep.subr.mxu0 0.0
        %6140 = vmatpush1.xpose.msra.mxu0 0.0
        %6141 = vmatprep.subr.mxu0 0.0
        %6142 = vmatpush1.xpose.msra.mxu0 0.0
        %6143 = vmatprep.subr.mxu0 0.0
        %6144 = vmatpush1.xpose.msra.mxu0 0.0
        %6145 = vmatprep.subr.mxu0 0.0
        %6146 = vmatpush1.xpose.msra.mxu0 0.0
        %6147 = vmatprep.subr.mxu0 0.0
        %6148 = vmatpush1.xpose.msra.mxu0 0.0
        %6149 = vmatprep.subr.mxu0 0.0
        %6150 = vmatpush1.xpose.msra.mxu0 0.0
        %6151 = vmatprep.subr.mxu0 0.0
        %6152 = vmatpush1.xpose.msra.mxu0 0.0
        %6153 = vmatprep.subr.mxu0 0.0
        %6154 = vmatpush1.xpose.msra.mxu0 0.0
        %6155 = vmatprep.subr.mxu0 0.0
        %6156 = vmatpush1.xpose.msra.mxu0 0.0
        %6157 = vmatprep.subr.mxu0 0.0
        %6158 = vmatpush1.xpose.msra.mxu0 0.0
        %6159 = vmatprep.subr.mxu0 0.0
        %6160 = vmatpush1.xpose.msra.mxu0 0.0
        %6161 = vmatprep.subr.mxu0 0.0
        %6162 = vmatpush1.xpose.msra.mxu0 0.0
        %6163 = vmatprep.subr.mxu0 0.0
        %6164 = vmatpush1.xpose.msra.mxu0 0.0
        %6165 = vmatprep.subr.mxu0 0.0
        %6166 = vmatpush1.xpose.msra.mxu0 0.0
        %6167 = vmatprep.subr.mxu0 0.0
        %6168 = vmatpush1.xpose.msra.mxu0 0.0
        %6169 = vmatprep.subr.mxu0 0.0
        %6170 = vmatpush1.xpose.msra.mxu0 0.0
        %6171 = vmatprep.subr.mxu0 0.0
        %6172 = vmatpush1.xpose.msra.mxu0 0.0
        %6173 = vmatprep.subr.mxu0 0.0
        %6174 = vmatpush1.xpose.msra.mxu0 0.0
        %6175 = vmatprep.subr.mxu0 0.0
        %6176 = vmatpush1.xpose.msra.mxu0 0.0
        %6177 = vmatprep.subr.mxu0 0.0
        %6178 = vmatpush1.xpose.msra.mxu0 0.0
        %6179 = vmatprep.subr.mxu0 0.0
        %6180 = vmatpush1.xpose.msra.mxu0 0.0
        %6181 = vmatprep.subr.mxu0 0.0
        %6182 = vmatpush1.xpose.msra.mxu0 0.0
        %6183 = vmatprep.subr.mxu0 0.0
        %6184 = vmatpush1.xpose.msra.mxu0 0.0
        %6185 = vmatprep.subr.mxu0 0.0
        %6186 = vmatpush1.xpose.msra.mxu0 0.0
        %6187 = vmatprep.subr.mxu0 0.0
        %6188 = vmatpush1.xpose.msra.mxu0 0.0
        %6189 = vmatprep.subr.mxu0 0.0
        %6190 = vmatpush1.xpose.msra.mxu0 0.0
        %6191 = vmatprep.subr.mxu0 0.0
        %6192 = vmatpush1.xpose.msra.mxu0 0.0
        %6193 = vmatprep.subr.mxu0 0.0
        %6194 = vmatpush1.xpose.msra.mxu0 0.0
        %6195 = vmatprep.subr.mxu0 0.0
        %6196 = vmatpush1.xpose.msra.mxu0 0.0
        %6197 = vmatprep.subr.mxu0 0.0
        %6198 = vmatpush1.xpose.msra.mxu0 0.0
        %6199 = vmatprep.mubr.f32.mxu0 %v1260
        %6200 = vmatmul.mubr.f32.gmra.mrb[0].mxu0 %v1258
        %v6201 = vpop.f32.mrb[0].mxu0
        %v6202 = vadd.f32 %v6132, %v6201
        %v6203 = vpop.f32.mrb[0].mxu0
        %6204 = vdwg.mxu0
        %6205 = vmatprep.subr.mxu0 %v414
        %6206 = vmatpush1.xpose.msra.mxu0 %v413
        %6207 = vmatprep.subr.mxu0 %v606
        %6208 = vmatpush1.xpose.msra.mxu0 %v605
        %6209 = vmatprep.subr.mxu0 0.0
        %6210 = vmatpush1.xpose.msra.mxu0 0.0
        %6211 = vmatprep.subr.mxu0 0.0
        %6212 = vmatpush1.xpose.msra.mxu0 0.0
        %6213 = vmatprep.subr.mxu0 0.0
        %6214 = vmatpush1.xpose.msra.mxu0 0.0
        %6215 = vmatprep.subr.mxu0 0.0
        %6216 = vmatpush1.xpose.msra.mxu0 0.0
        %6217 = vmatprep.subr.mxu0 0.0
        %6218 = vmatpush1.xpose.msra.mxu0 0.0
        %6219 = vmatprep.subr.mxu0 0.0
        %6220 = vmatpush1.xpose.msra.mxu0 0.0
        %6221 = vmatprep.subr.mxu0 0.0
        %6222 = vmatpush1.xpose.msra.mxu0 0.0
        %6223 = vmatprep.subr.mxu0 0.0
        %6224 = vmatpush1.xpose.msra.mxu0 0.0
        %6225 = vmatprep.subr.mxu0 0.0
        %6226 = vmatpush1.xpose.msra.mxu0 0.0
        %6227 = vmatprep.subr.mxu0 0.0
        %6228 = vmatpush1.xpose.msra.mxu0 0.0
        %6229 = vmatprep.subr.mxu0 0.0
        %6230 = vmatpush1.xpose.msra.mxu0 0.0
        %6231 = vmatprep.subr.mxu0 0.0
        %6232 = vmatpush1.xpose.msra.mxu0 0.0
        %6233 = vmatprep.subr.mxu0 0.0
        %6234 = vmatpush1.xpose.msra.mxu0 0.0
        %6235 = vmatprep.subr.mxu0 0.0
        %6236 = vmatpush1.xpose.msra.mxu0 0.0
        %6237 = vmatprep.subr.mxu0 0.0
        %6238 = vmatpush1.xpose.msra.mxu0 0.0
        %6239 = vmatprep.subr.mxu0 0.0
        %6240 = vmatpush1.xpose.msra.mxu0 0.0
        %6241 = vmatprep.subr.mxu0 0.0
        %6242 = vmatpush1.xpose.msra.mxu0 0.0
        %6243 = vmatprep.subr.mxu0 0.0
        %6244 = vmatpush1.xpose.msra.mxu0 0.0
        %6245 = vmatprep.subr.mxu0 0.0
        %6246 = vmatpush1.xpose.msra.mxu0 0.0
        %6247 = vmatprep.subr.mxu0 0.0
        %6248 = vmatpush1.xpose.msra.mxu0 0.0
        %6249 = vmatprep.subr.mxu0 0.0
        %6250 = vmatpush1.xpose.msra.mxu0 0.0
        %6251 = vmatprep.subr.mxu0 0.0
        %6252 = vmatpush1.xpose.msra.mxu0 0.0
        %6253 = vmatprep.subr.mxu0 0.0
        %6254 = vmatpush1.xpose.msra.mxu0 0.0
        %6255 = vmatprep.subr.mxu0 0.0
        %6256 = vmatpush1.xpose.msra.mxu0 0.0
        %6257 = vmatprep.subr.mxu0 0.0
        %6258 = vmatpush1.xpose.msra.mxu0 0.0
        %6259 = vmatprep.subr.mxu0 0.0
        %6260 = vmatpush1.xpose.msra.mxu0 0.0
        %6261 = vmatprep.subr.mxu0 0.0
        %6262 = vmatpush1.xpose.msra.mxu0 0.0
        %6263 = vmatprep.subr.mxu0 0.0
        %6264 = vmatpush1.xpose.msra.mxu0 0.0
        %6265 = vmatprep.subr.mxu0 0.0
        %6266 = vmatpush1.xpose.msra.mxu0 0.0
        %6267 = vmatprep.subr.mxu0 0.0
        %6268 = vmatpush1.xpose.msra.mxu0 0.0
        %6269 = vmatprep.mubr.f32.mxu0 %v1276
        %6270 = vmatmul.mubr.f32.gmra.mrb[0].mxu0 %v1268
        %v6271 = vpop.f32.mrb[0].mxu0
        %v6272 = vadd.f32 %v6202, %v6271
        %v6273 = vpop.f32.mrb[0].mxu0
        %6274 = vdwg.mxu0
        %6275 = vmatprep.subr.mxu0 %v416
        %6276 = vmatpush1.xpose.msra.mxu0 %v415
        %6277 = vmatprep.subr.mxu0 %v608
        %6278 = vmatpush1.xpose.msra.mxu0 %v607
        %6279 = vmatprep.subr.mxu0 0.0
        %6280 = vmatpush1.xpose.msra.mxu0 0.0
        %6281 = vmatprep.subr.mxu0 0.0
        %6282 = vmatpush1.xpose.msra.mxu0 0.0
        %6283 = vmatprep.subr.mxu0 0.0
        %6284 = vmatpush1.xpose.msra.mxu0 0.0
        %6285 = vmatprep.subr.mxu0 0.0
        %6286 = vmatpush1.xpose.msra.mxu0 0.0
        %6287 = vmatprep.subr.mxu0 0.0
        %6288 = vmatpush1.xpose.msra.mxu0 0.0
        %6289 = vmatprep.subr.mxu0 0.0
        %6290 = vmatpush1.xpose.msra.mxu0 0.0
        %6291 = vmatprep.subr.mxu0 0.0
        %6292 = vmatpush1.xpose.msra.mxu0 0.0
        %6293 = vmatprep.subr.mxu0 0.0
        %6294 = vmatpush1.xpose.msra.mxu0 0.0
        %6295 = vmatprep.subr.mxu0 0.0
        %6296 = vmatpush1.xpose.msra.mxu0 0.0
        %6297 = vmatprep.subr.mxu0 0.0
        %6298 = vmatpush1.xpose.msra.mxu0 0.0
        %6299 = vmatprep.subr.mxu0 0.0
        %6300 = vmatpush1.xpose.msra.mxu0 0.0
        %6301 = vmatprep.subr.mxu0 0.0
        %6302 = vmatpush1.xpose.msra.mxu0 0.0
        %6303 = vmatprep.subr.mxu0 0.0
        %6304 = vmatpush1.xpose.msra.mxu0 0.0
        %6305 = vmatprep.subr.mxu0 0.0
        %6306 = vmatpush1.xpose.msra.mxu0 0.0
        %6307 = vmatprep.subr.mxu0 0.0
        %6308 = vmatpush1.xpose.msra.mxu0 0.0
        %6309 = vmatprep.subr.mxu0 0.0
        %6310 = vmatpush1.xpose.msra.mxu0 0.0
        %6311 = vmatprep.subr.mxu0 0.0
        %6312 = vmatpush1.xpose.msra.mxu0 0.0
        %6313 = vmatprep.subr.mxu0 0.0
        %6314 = vmatpush1.xpose.msra.mxu0 0.0
        %6315 = vmatprep.subr.mxu0 0.0
        %6316 = vmatpush1.xpose.msra.mxu0 0.0
        %6317 = vmatprep.subr.mxu0 0.0
        %6318 = vmatpush1.xpose.msra.mxu0 0.0
        %6319 = vmatprep.subr.mxu0 0.0
        %6320 = vmatpush1.xpose.msra.mxu0 0.0
        %6321 = vmatprep.subr.mxu0 0.0
        %6322 = vmatpush1.xpose.msra.mxu0 0.0
        %6323 = vmatprep.subr.mxu0 0.0
        %6324 = vmatpush1.xpose.msra.mxu0 0.0
        %6325 = vmatprep.subr.mxu0 0.0
        %6326 = vmatpush1.xpose.msra.mxu0 0.0
        %6327 = vmatprep.subr.mxu0 0.0
        %6328 = vmatpush1.xpose.msra.mxu0 0.0
        %6329 = vmatprep.subr.mxu0 0.0
        %6330 = vmatpush1.xpose.msra.mxu0 0.0
        %6331 = vmatprep.subr.mxu0 0.0
        %6332 = vmatpush1.xpose.msra.mxu0 0.0
        %6333 = vmatprep.subr.mxu0 0.0
        %6334 = vmatpush1.xpose.msra.mxu0 0.0
        %6335 = vmatprep.subr.mxu0 0.0
        %6336 = vmatpush1.xpose.msra.mxu0 0.0
        %6337 = vmatprep.subr.mxu0 0.0
        %6338 = vmatpush1.xpose.msra.mxu0 0.0
        %6339 = vmatprep.mubr.f32.mxu0 %v1277
        %6340 = vmatmul.mubr.f32.gmra.mrb[0].mxu0 %v1275
        %v6341 = vpop.f32.mrb[0].mxu0
        %v6342 = vadd.f32 %v6272, %v6341
        %v6343 = vpop.f32.mrb[0].mxu0
        %6344 = vdwg.mxu0
        %6345 = vmatprep.subr.mxu0 %v418
        %6346 = vmatpush1.xpose.msra.mxu0 %v417
        %6347 = vmatprep.subr.mxu0 %v610
        %6348 = vmatpush1.xpose.msra.mxu0 %v609
        %6349 = vmatprep.subr.mxu0 0.0
        %6350 = vmatpush1.xpose.msra.mxu0 0.0
        %6351 = vmatprep.subr.mxu0 0.0
        %6352 = vmatpush1.xpose.msra.mxu0 0.0
        %6353 = vmatprep.subr.mxu0 0.0
        %6354 = vmatpush1.xpose.msra.mxu0 0.0
        %6355 = vmatprep.subr.mxu0 0.0
        %6356 = vmatpush1.xpose.msra.mxu0 0.0
        %6357 = vmatprep.subr.mxu0 0.0
        %6358 = vmatpush1.xpose.msra.mxu0 0.0
        %6359 = vmatprep.subr.mxu0 0.0
        %6360 = vmatpush1.xpose.msra.mxu0 0.0
        %6361 = vmatprep.subr.mxu0 0.0
        %6362 = vmatpush1.xpose.msra.mxu0 0.0
        %6363 = vmatprep.subr.mxu0 0.0
        %6364 = vmatpush1.xpose.msra.mxu0 0.0
        %6365 = vmatprep.subr.mxu0 0.0
        %6366 = vmatpush1.xpose.msra.mxu0 0.0
        %6367 = vmatprep.subr.mxu0 0.0
        %6368 = vmatpush1.xpose.msra.mxu0 0.0
        %6369 = vmatprep.subr.mxu0 0.0
        %6370 = vmatpush1.xpose.msra.mxu0 0.0
        %6371 = vmatprep.subr.mxu0 0.0
        %6372 = vmatpush1.xpose.msra.mxu0 0.0
        %6373 = vmatprep.subr.mxu0 0.0
        %6374 = vmatpush1.xpose.msra.mxu0 0.0
        %6375 = vmatprep.subr.mxu0 0.0
        %6376 = vmatpush1.xpose.msra.mxu0 0.0
        %6377 = vmatprep.subr.mxu0 0.0
        %6378 = vmatpush1.xpose.msra.mxu0 0.0
        %6379 = vmatprep.subr.mxu0 0.0
        %6380 = vmatpush1.xpose.msra.mxu0 0.0
        %6381 = vmatprep.subr.mxu0 0.0
        %6382 = vmatpush1.xpose.msra.mxu0 0.0
        %6383 = vmatprep.subr.mxu0 0.0
        %6384 = vmatpush1.xpose.msra.mxu0 0.0
        %6385 = vmatprep.subr.mxu0 0.0
        %6386 = vmatpush1.xpose.msra.mxu0 0.0
        %6387 = vmatprep.subr.mxu0 0.0
        %6388 = vmatpush1.xpose.msra.mxu0 0.0
        %6389 = vmatprep.subr.mxu0 0.0
        %6390 = vmatpush1.xpose.msra.mxu0 0.0
        %6391 = vmatprep.subr.mxu0 0.0
        %6392 = vmatpush1.xpose.msra.mxu0 0.0
        %6393 = vmatprep.subr.mxu0 0.0
        %6394 = vmatpush1.xpose.msra.mxu0 0.0
        %6395 = vmatprep.subr.mxu0 0.0
        %6396 = vmatpush1.xpose.msra.mxu0 0.0
        %6397 = vmatprep.subr.mxu0 0.0
        %6398 = vmatpush1.xpose.msra.mxu0 0.0
        %6399 = vmatprep.subr.mxu0 0.0
        %6400 = vmatpush1.xpose.msra.mxu0 0.0
        %6401 = vmatprep.subr.mxu0 0.0
        %6402 = vmatpush1.xpose.msra.mxu0 0.0
        %6403 = vmatprep.subr.mxu0 0.0
        %6404 = vmatpush1.xpose.msra.mxu0 0.0
        %6405 = vmatprep.subr.mxu0 0.0
        %6406 = vmatpush1.xpose.msra.mxu0 0.0
        %6407 = vmatprep.subr.mxu0 0.0
        %6408 = vmatpush1.xpose.msra.mxu0 0.0
        %6409 = vmatprep.mubr.f32.mxu0 %v1293
        %6410 = vmatmul.mubr.f32.gmra.mrb[0].mxu0 %v1285
        %v6411 = vpop.f32.mrb[0].mxu0
        %v6412 = vadd.f32 %v6342, %v6411
        %v6413 = vpop.f32.mrb[0].mxu0
        %6414 = vdwg.mxu0
        %6415 = vmatprep.subr.mxu0 %v420
        %6416 = vmatpush1.xpose.msra.mxu0 %v419
        %6417 = vmatprep.subr.mxu0 %v612
        %6418 = vmatpush1.xpose.msra.mxu0 %v611
        %6419 = vmatprep.subr.mxu0 0.0
        %6420 = vmatpush1.xpose.msra.mxu0 0.0
        %6421 = vmatprep.subr.mxu0 0.0
        %6422 = vmatpush1.xpose.msra.mxu0 0.0
        %6423 = vmatprep.subr.mxu0 0.0
        %6424 = vmatpush1.xpose.msra.mxu0 0.0
        %6425 = vmatprep.subr.mxu0 0.0
        %6426 = vmatpush1.xpose.msra.mxu0 0.0
        %6427 = vmatprep.subr.mxu0 0.0
        %6428 = vmatpush1.xpose.msra.mxu0 0.0
        %6429 = vmatprep.subr.mxu0 0.0
        %6430 = vmatpush1.xpose.msra.mxu0 0.0
        %6431 = vmatprep.subr.mxu0 0.0
        %6432 = vmatpush1.xpose.msra.mxu0 0.0
        %6433 = vmatprep.subr.mxu0 0.0
        %6434 = vmatpush1.xpose.msra.mxu0 0.0
        %6435 = vmatprep.subr.mxu0 0.0
        %6436 = vmatpush1.xpose.msra.mxu0 0.0
        %6437 = vmatprep.subr.mxu0 0.0
        %6438 = vmatpush1.xpose.msra.mxu0 0.0
        %6439 = vmatprep.subr.mxu0 0.0
        %6440 = vmatpush1.xpose.msra.mxu0 0.0
        %6441 = vmatprep.subr.mxu0 0.0
        %6442 = vmatpush1.xpose.msra.mxu0 0.0
        %6443 = vmatprep.subr.mxu0 0.0
        %6444 = vmatpush1.xpose.msra.mxu0 0.0
        %6445 = vmatprep.subr.mxu0 0.0
        %6446 = vmatpush1.xpose.msra.mxu0 0.0
        %6447 = vmatprep.subr.mxu0 0.0
        %6448 = vmatpush1.xpose.msra.mxu0 0.0
        %6449 = vmatprep.subr.mxu0 0.0
        %6450 = vmatpush1.xpose.msra.mxu0 0.0
        %6451 = vmatprep.subr.mxu0 0.0
        %6452 = vmatpush1.xpose.msra.mxu0 0.0
        %6453 = vmatprep.subr.mxu0 0.0
        %6454 = vmatpush1.xpose.msra.mxu0 0.0
        %6455 = vmatprep.subr.mxu0 0.0
        %6456 = vmatpush1.xpose.msra.mxu0 0.0
        %6457 = vmatprep.subr.mxu0 0.0
        %6458 = vmatpush1.xpose.msra.mxu0 0.0
        %6459 = vmatprep.subr.mxu0 0.0
        %6460 = vmatpush1.xpose.msra.mxu0 0.0
        %6461 = vmatprep.subr.mxu0 0.0
        %6462 = vmatpush1.xpose.msra.mxu0 0.0
        %6463 = vmatprep.subr.mxu0 0.0
        %6464 = vmatpush1.xpose.msra.mxu0 0.0
        %6465 = vmatprep.subr.mxu0 0.0
        %6466 = vmatpush1.xpose.msra.mxu0 0.0
        %6467 = vmatprep.subr.mxu0 0.0
        %6468 = vmatpush1.xpose.msra.mxu0 0.0
        %6469 = vmatprep.subr.mxu0 0.0
        %6470 = vmatpush1.xpose.msra.mxu0 0.0
        %6471 = vmatprep.subr.mxu0 0.0
        %6472 = vmatpush1.xpose.msra.mxu0 0.0
        %6473 = vmatprep.subr.mxu0 0.0
        %6474 = vmatpush1.xpose.msra.mxu0 0.0
        %6475 = vmatprep.subr.mxu0 0.0
        %6476 = vmatpush1.xpose.msra.mxu0 0.0
        %6477 = vmatprep.subr.mxu0 0.0
        %6478 = vmatpush1.xpose.msra.mxu0 0.0
        %6479 = vmatprep.mubr.f32.mxu0 %v1294
        %6480 = vmatmul.mubr.f32.gmra.mrb[0].mxu0 %v1292
        %v6481 = vpop.f32.mrb[0].mxu0
        %v6482 = vadd.f32 %v6412, %v6481
        %v6483 = vpop.f32.mrb[0].mxu0
        %6484 = vdwg.mxu0
        %6485 = vmatprep.subr.mxu0 %v422
        %6486 = vmatpush1.xpose.msra.mxu0 %v421
        %6487 = vmatprep.subr.mxu0 %v614
        %6488 = vmatpush1.xpose.msra.mxu0 %v613
        %6489 = vmatprep.subr.mxu0 0.0
        %6490 = vmatpush1.xpose.msra.mxu0 0.0
        %6491 = vmatprep.subr.mxu0 0.0
        %6492 = vmatpush1.xpose.msra.mxu0 0.0
        %6493 = vmatprep.subr.mxu0 0.0
        %6494 = vmatpush1.xpose.msra.mxu0 0.0
        %6495 = vmatprep.subr.mxu0 0.0
        %6496 = vmatpush1.xpose.msra.mxu0 0.0
        %6497 = vmatprep.subr.mxu0 0.0
        %6498 = vmatpush1.xpose.msra.mxu0 0.0
        %6499 = vmatprep.subr.mxu0 0.0
        %6500 = vmatpush1.xpose.msra.mxu0 0.0
        %6501 = vmatprep.subr.mxu0 0.0
        %6502 = vmatpush1.xpose.msra.mxu0 0.0
        %6503 = vmatprep.subr.mxu0 0.0
        %6504 = vmatpush1.xpose.msra.mxu0 0.0
        %6505 = vmatprep.subr.mxu0 0.0
        %6506 = vmatpush1.xpose.msra.mxu0 0.0
        %6507 = vmatprep.subr.mxu0 0.0
        %6508 = vmatpush1.xpose.msra.mxu0 0.0
        %6509 = vmatprep.subr.mxu0 0.0
        %6510 = vmatpush1.xpose.msra.mxu0 0.0
        %6511 = vmatprep.subr.mxu0 0.0
        %6512 = vmatpush1.xpose.msra.mxu0 0.0
        %6513 = vmatprep.subr.mxu0 0.0
        %6514 = vmatpush1.xpose.msra.mxu0 0.0
        %6515 = vmatprep.subr.mxu0 0.0
        %6516 = vmatpush1.xpose.msra.mxu0 0.0
        %6517 = vmatprep.subr.mxu0 0.0
        %6518 = vmatpush1.xpose.msra.mxu0 0.0
        %6519 = vmatprep.subr.mxu0 0.0
        %6520 = vmatpush1.xpose.msra.mxu0 0.0
        %6521 = vmatprep.subr.mxu0 0.0
        %6522 = vmatpush1.xpose.msra.mxu0 0.0
        %6523 = vmatprep.subr.mxu0 0.0
        %6524 = vmatpush1.xpose.msra.mxu0 0.0
        %6525 = vmatprep.subr.mxu0 0.0
        %6526 = vmatpush1.xpose.msra.mxu0 0.0
        %6527 = vmatprep.subr.mxu0 0.0
        %6528 = vmatpush1.xpose.msra.mxu0 0.0
        %6529 = vmatprep.subr.mxu0 0.0
        %6530 = vmatpush1.xpose.msra.mxu0 0.0
        %6531 = vmatprep.subr.mxu0 0.0
        %6532 = vmatpush1.xpose.msra.mxu0 0.0
        %6533 = vmatprep.subr.mxu0 0.0
        %6534 = vmatpush1.xpose.msra.mxu0 0.0
        %6535 = vmatprep.subr.mxu0 0.0
        %6536 = vmatpush1.xpose.msra.mxu0 0.0
        %6537 = vmatprep.subr.mxu0 0.0
        %6538 = vmatpush1.xpose.msra.mxu0 0.0
        %6539 = vmatprep.subr.mxu0 0.0
        %6540 = vmatpush1.xpose.msra.mxu0 0.0
        %6541 = vmatprep.subr.mxu0 0.0
        %6542 = vmatpush1.xpose.msra.mxu0 0.0
        %6543 = vmatprep.subr.mxu0 0.0
        %6544 = vmatpush1.xpose.msra.mxu0 0.0
        %6545 = vmatprep.subr.mxu0 0.0
        %6546 = vmatpush1.xpose.msra.mxu0 0.0
        %6547 = vmatprep.subr.mxu0 0.0
        %6548 = vmatpush1.xpose.msra.mxu0 0.0
        %6549 = vmatprep.mubr.f32.mxu0 %v1310
        %6550 = vmatmul.mubr.f32.gmra.mrb[0].mxu0 %v1302
        %v6551 = vpop.f32.mrb[0].mxu0
        %v6552 = vadd.f32 %v6482, %v6551
        %v6553 = vpop.f32.mrb[0].mxu0
        %6554 = vdwg.mxu0
        %6555 = vmatprep.subr.mxu0 %v424
        %6556 = vmatpush1.xpose.msra.mxu0 %v423
        %6557 = vmatprep.subr.mxu0 %v616
        %6558 = vmatpush1.xpose.msra.mxu0 %v615
        %6559 = vmatprep.subr.mxu0 0.0
        %6560 = vmatpush1.xpose.msra.mxu0 0.0
        %6561 = vmatprep.subr.mxu0 0.0
        %6562 = vmatpush1.xpose.msra.mxu0 0.0
        %6563 = vmatprep.subr.mxu0 0.0
        %6564 = vmatpush1.xpose.msra.mxu0 0.0
        %6565 = vmatprep.subr.mxu0 0.0
        %6566 = vmatpush1.xpose.msra.mxu0 0.0
        %6567 = vmatprep.subr.mxu0 0.0
        %6568 = vmatpush1.xpose.msra.mxu0 0.0
        %6569 = vmatprep.subr.mxu0 0.0
        %6570 = vmatpush1.xpose.msra.mxu0 0.0
        %6571 = vmatprep.subr.mxu0 0.0
        %6572 = vmatpush1.xpose.msra.mxu0 0.0
        %6573 = vmatprep.subr.mxu0 0.0
        %6574 = vmatpush1.xpose.msra.mxu0 0.0
        %6575 = vmatprep.subr.mxu0 0.0
        %6576 = vmatpush1.xpose.msra.mxu0 0.0
        %6577 = vmatprep.subr.mxu0 0.0
        %6578 = vmatpush1.xpose.msra.mxu0 0.0
        %6579 = vmatprep.subr.mxu0 0.0
        %6580 = vmatpush1.xpose.msra.mxu0 0.0
        %6581 = vmatprep.subr.mxu0 0.0
        %6582 = vmatpush1.xpose.msra.mxu0 0.0
        %6583 = vmatprep.subr.mxu0 0.0
        %6584 = vmatpush1.xpose.msra.mxu0 0.0
        %6585 = vmatprep.subr.mxu0 0.0
        %6586 = vmatpush1.xpose.msra.mxu0 0.0
        %6587 = vmatprep.subr.mxu0 0.0
        %6588 = vmatpush1.xpose.msra.mxu0 0.0
        %6589 = vmatprep.subr.mxu0 0.0
        %6590 = vmatpush1.xpose.msra.mxu0 0.0
        %6591 = vmatprep.subr.mxu0 0.0
        %6592 = vmatpush1.xpose.msra.mxu0 0.0
        %6593 = vmatprep.subr.mxu0 0.0
        %6594 = vmatpush1.xpose.msra.mxu0 0.0
        %6595 = vmatprep.subr.mxu0 0.0
        %6596 = vmatpush1.xpose.msra.mxu0 0.0
        %6597 = vmatprep.subr.mxu0 0.0
        %6598 = vmatpush1.xpose.msra.mxu0 0.0
        %6599 = vmatprep.subr.mxu0 0.0
        %6600 = vmatpush1.xpose.msra.mxu0 0.0
        %6601 = vmatprep.subr.mxu0 0.0
        %6602 = vmatpush1.xpose.msra.mxu0 0.0
        %6603 = vmatprep.subr.mxu0 0.0
        %6604 = vmatpush1.xpose.msra.mxu0 0.0
        %6605 = vmatprep.subr.mxu0 0.0
        %6606 = vmatpush1.xpose.msra.mxu0 0.0
        %6607 = vmatprep.subr.mxu0 0.0
        %6608 = vmatpush1.xpose.msra.mxu0 0.0
        %6609 = vmatprep.subr.mxu0 0.0
        %6610 = vmatpush1.xpose.msra.mxu0 0.0
        %6611 = vmatprep.subr.mxu0 0.0
        %6612 = vmatpush1.xpose.msra.mxu0 0.0
        %6613 = vmatprep.subr.mxu0 0.0
        %6614 = vmatpush1.xpose.msra.mxu0 0.0
        %6615 = vmatprep.subr.mxu0 0.0
        %6616 = vmatpush1.xpose.msra.mxu0 0.0
        %6617 = vmatprep.subr.mxu0 0.0
        %6618 = vmatpush1.xpose.msra.mxu0 0.0
        %6619 = vmatprep.mubr.f32.mxu0 %v1311
        %6620 = vmatmul.mubr.f32.gmra.mrb[0].mxu0 %v1309
        %v6621 = vpop.f32.mrb[0].mxu0
        %v6622 = vadd.f32 %v6552, %v6621
        %v6623 = vpop.f32.mrb[0].mxu0
        %6624 = vdwg.mxu0
        %6625 = vmatprep.subr.mxu0 %v426
        %6626 = vmatpush1.xpose.msra.mxu0 %v425
        %6627 = vmatprep.subr.mxu0 %v618
        %6628 = vmatpush1.xpose.msra.mxu0 %v617
        %6629 = vmatprep.subr.mxu0 0.0
        %6630 = vmatpush1.xpose.msra.mxu0 0.0
        %6631 = vmatprep.subr.mxu0 0.0
        %6632 = vmatpush1.xpose.msra.mxu0 0.0
        %6633 = vmatprep.subr.mxu0 0.0
        %6634 = vmatpush1.xpose.msra.mxu0 0.0
        %6635 = vmatprep.subr.mxu0 0.0
        %6636 = vmatpush1.xpose.msra.mxu0 0.0
        %6637 = vmatprep.subr.mxu0 0.0
        %6638 = vmatpush1.xpose.msra.mxu0 0.0
        %6639 = vmatprep.subr.mxu0 0.0
        %6640 = vmatpush1.xpose.msra.mxu0 0.0
        %6641 = vmatprep.subr.mxu0 0.0
        %6642 = vmatpush1.xpose.msra.mxu0 0.0
        %6643 = vmatprep.subr.mxu0 0.0
        %6644 = vmatpush1.xpose.msra.mxu0 0.0
        %6645 = vmatprep.subr.mxu0 0.0
        %6646 = vmatpush1.xpose.msra.mxu0 0.0
        %6647 = vmatprep.subr.mxu0 0.0
        %6648 = vmatpush1.xpose.msra.mxu0 0.0
        %6649 = vmatprep.subr.mxu0 0.0
        %6650 = vmatpush1.xpose.msra.mxu0 0.0
        %6651 = vmatprep.subr.mxu0 0.0
        %6652 = vmatpush1.xpose.msra.mxu0 0.0
        %6653 = vmatprep.subr.mxu0 0.0
        %6654 = vmatpush1.xpose.msra.mxu0 0.0
        %6655 = vmatprep.subr.mxu0 0.0
        %6656 = vmatpush1.xpose.msra.mxu0 0.0
        %6657 = vmatprep.subr.mxu0 0.0
        %6658 = vmatpush1.xpose.msra.mxu0 0.0
        %6659 = vmatprep.subr.mxu0 0.0
        %6660 = vmatpush1.xpose.msra.mxu0 0.0
        %6661 = vmatprep.subr.mxu0 0.0
        %6662 = vmatpush1.xpose.msra.mxu0 0.0
        %6663 = vmatprep.subr.mxu0 0.0
        %6664 = vmatpush1.xpose.msra.mxu0 0.0
        %6665 = vmatprep.subr.mxu0 0.0
        %6666 = vmatpush1.xpose.msra.mxu0 0.0
        %6667 = vmatprep.subr.mxu0 0.0
        %6668 = vmatpush1.xpose.msra.mxu0 0.0
        %6669 = vmatprep.subr.mxu0 0.0
        %6670 = vmatpush1.xpose.msra.mxu0 0.0
        %6671 = vmatprep.subr.mxu0 0.0
        %6672 = vmatpush1.xpose.msra.mxu0 0.0
        %6673 = vmatprep.subr.mxu0 0.0
        %6674 = vmatpush1.xpose.msra.mxu0 0.0
        %6675 = vmatprep.subr.mxu0 0.0
        %6676 = vmatpush1.xpose.msra.mxu0 0.0
        %6677 = vmatprep.subr.mxu0 0.0
        %6678 = vmatpush1.xpose.msra.mxu0 0.0
        %6679 = vmatprep.subr.mxu0 0.0
        %6680 = vmatpush1.xpose.msra.mxu0 0.0
        %6681 = vmatprep.subr.mxu0 0.0
        %6682 = vmatpush1.xpose.msra.mxu0 0.0
        %6683 = vmatprep.subr.mxu0 0.0
        %6684 = vmatpush1.xpose.msra.mxu0 0.0
        %6685 = vmatprep.subr.mxu0 0.0
        %6686 = vmatpush1.xpose.msra.mxu0 0.0
        %6687 = vmatprep.subr.mxu0 0.0
        %6688 = vmatpush1.xpose.msra.mxu0 0.0
        %6689 = vmatprep.mubr.f32.mxu0 %v1327
        %6690 = vmatmul.mubr.f32.gmra.mrb[0].mxu0 %v1319
        %v6691 = vpop.f32.mrb[0].mxu0
        %v6692 = vadd.f32 %v6622, %v6691
        %v6693 = vpop.f32.mrb[0].mxu0
        %6694 = vdwg.mxu0
        %6695 = vmatprep.subr.mxu0 %v428
        %6696 = vmatpush1.xpose.msra.mxu0 %v427
        %6697 = vmatprep.subr.mxu0 %v620
        %6698 = vmatpush1.xpose.msra.mxu0 %v619
        %6699 = vmatprep.subr.mxu0 0.0
        %6700 = vmatpush1.xpose.msra.mxu0 0.0
        %6701 = vmatprep.subr.mxu0 0.0
        %6702 = vmatpush1.xpose.msra.mxu0 0.0
        %6703 = vmatprep.subr.mxu0 0.0
        %6704 = vmatpush1.xpose.msra.mxu0 0.0
        %6705 = vmatprep.subr.mxu0 0.0
        %6706 = vmatpush1.xpose.msra.mxu0 0.0
        %6707 = vmatprep.subr.mxu0 0.0
        %6708 = vmatpush1.xpose.msra.mxu0 0.0
        %6709 = vmatprep.subr.mxu0 0.0
        %6710 = vmatpush1.xpose.msra.mxu0 0.0
        %6711 = vmatprep.subr.mxu0 0.0
        %6712 = vmatpush1.xpose.msra.mxu0 0.0
        %6713 = vmatprep.subr.mxu0 0.0
        %6714 = vmatpush1.xpose.msra.mxu0 0.0
        %6715 = vmatprep.subr.mxu0 0.0
        %6716 = vmatpush1.xpose.msra.mxu0 0.0
        %6717 = vmatprep.subr.mxu0 0.0
        %6718 = vmatpush1.xpose.msra.mxu0 0.0
        %6719 = vmatprep.subr.mxu0 0.0
        %6720 = vmatpush1.xpose.msra.mxu0 0.0
        %6721 = vmatprep.subr.mxu0 0.0
        %6722 = vmatpush1.xpose.msra.mxu0 0.0
        %6723 = vmatprep.subr.mxu0 0.0
        %6724 = vmatpush1.xpose.msra.mxu0 0.0
        %6725 = vmatprep.subr.mxu0 0.0
        %6726 = vmatpush1.xpose.msra.mxu0 0.0
        %6727 = vmatprep.subr.mxu0 0.0
        %6728 = vmatpush1.xpose.msra.mxu0 0.0
        %6729 = vmatprep.subr.mxu0 0.0
        %6730 = vmatpush1.xpose.msra.mxu0 0.0
        %6731 = vmatprep.subr.mxu0 0.0
        %6732 = vmatpush1.xpose.msra.mxu0 0.0
        %6733 = vmatprep.subr.mxu0 0.0
        %6734 = vmatpush1.xpose.msra.mxu0 0.0
        %6735 = vmatprep.subr.mxu0 0.0
        %6736 = vmatpush1.xpose.msra.mxu0 0.0
        %6737 = vmatprep.subr.mxu0 0.0
        %6738 = vmatpush1.xpose.msra.mxu0 0.0
        %6739 = vmatprep.subr.mxu0 0.0
        %6740 = vmatpush1.xpose.msra.mxu0 0.0
        %6741 = vmatprep.subr.mxu0 0.0
        %6742 = vmatpush1.xpose.msra.mxu0 0.0
        %6743 = vmatprep.subr.mxu0 0.0
        %6744 = vmatpush1.xpose.msra.mxu0 0.0
        %6745 = vmatprep.subr.mxu0 0.0
        %6746 = vmatpush1.xpose.msra.mxu0 0.0
        %6747 = vmatprep.subr.mxu0 0.0
        %6748 = vmatpush1.xpose.msra.mxu0 0.0
        %6749 = vmatprep.subr.mxu0 0.0
        %6750 = vmatpush1.xpose.msra.mxu0 0.0
        %6751 = vmatprep.subr.mxu0 0.0
        %6752 = vmatpush1.xpose.msra.mxu0 0.0
        %6753 = vmatprep.subr.mxu0 0.0
        %6754 = vmatpush1.xpose.msra.mxu0 0.0
        %6755 = vmatprep.subr.mxu0 0.0
        %6756 = vmatpush1.xpose.msra.mxu0 0.0
        %6757 = vmatprep.subr.mxu0 0.0
        %6758 = vmatpush1.xpose.msra.mxu0 0.0
        %6759 = vmatprep.mubr.f32.mxu0 %v1328
        %6760 = vmatmul.mubr.f32.gmra.mrb[0].mxu0 %v1326
        %v6761 = vpop.f32.mrb[0].mxu0
        %v6762 = vadd.f32 %v6692, %v6761
        %v6763 = vpop.f32.mrb[0].mxu0
        %6764 = vdwg.mxu0
        %6765 = vmatprep.subr.mxu0 %v430
        %6766 = vmatpush1.xpose.msra.mxu0 %v429
        %6767 = vmatprep.subr.mxu0 %v622
        %6768 = vmatpush1.xpose.msra.mxu0 %v621
        %6769 = vmatprep.subr.mxu0 0.0
        %6770 = vmatpush1.xpose.msra.mxu0 0.0
        %6771 = vmatprep.subr.mxu0 0.0
        %6772 = vmatpush1.xpose.msra.mxu0 0.0
        %6773 = vmatprep.subr.mxu0 0.0
        %6774 = vmatpush1.xpose.msra.mxu0 0.0
        %6775 = vmatprep.subr.mxu0 0.0
        %6776 = vmatpush1.xpose.msra.mxu0 0.0
        %6777 = vmatprep.subr.mxu0 0.0
        %6778 = vmatpush1.xpose.msra.mxu0 0.0
        %6779 = vmatprep.subr.mxu0 0.0
        %6780 = vmatpush1.xpose.msra.mxu0 0.0
        %6781 = vmatprep.subr.mxu0 0.0
        %6782 = vmatpush1.xpose.msra.mxu0 0.0
        %6783 = vmatprep.subr.mxu0 0.0
        %6784 = vmatpush1.xpose.msra.mxu0 0.0
        %6785 = vmatprep.subr.mxu0 0.0
        %6786 = vmatpush1.xpose.msra.mxu0 0.0
        %6787 = vmatprep.subr.mxu0 0.0
        %6788 = vmatpush1.xpose.msra.mxu0 0.0
        %6789 = vmatprep.subr.mxu0 0.0
        %6790 = vmatpush1.xpose.msra.mxu0 0.0
        %6791 = vmatprep.subr.mxu0 0.0
        %6792 = vmatpush1.xpose.msra.mxu0 0.0
        %6793 = vmatprep.subr.mxu0 0.0
        %6794 = vmatpush1.xpose.msra.mxu0 0.0
        %6795 = vmatprep.subr.mxu0 0.0
        %6796 = vmatpush1.xpose.msra.mxu0 0.0
        %6797 = vmatprep.subr.mxu0 0.0
        %6798 = vmatpush1.xpose.msra.mxu0 0.0
        %6799 = vmatprep.subr.mxu0 0.0
        %6800 = vmatpush1.xpose.msra.mxu0 0.0
        %6801 = vmatprep.subr.mxu0 0.0
        %6802 = vmatpush1.xpose.msra.mxu0 0.0
        %6803 = vmatprep.subr.mxu0 0.0
        %6804 = vmatpush1.xpose.msra.mxu0 0.0
        %6805 = vmatprep.subr.mxu0 0.0
        %6806 = vmatpush1.xpose.msra.mxu0 0.0
        %6807 = vmatprep.subr.mxu0 0.0
        %6808 = vmatpush1.xpose.msra.mxu0 0.0
        %6809 = vmatprep.subr.mxu0 0.0
        %6810 = vmatpush1.xpose.msra.mxu0 0.0
        %6811 = vmatprep.subr.mxu0 0.0
        %6812 = vmatpush1.xpose.msra.mxu0 0.0
        %6813 = vmatprep.subr.mxu0 0.0
        %6814 = vmatpush1.xpose.msra.mxu0 0.0
        %6815 = vmatprep.subr.mxu0 0.0
        %6816 = vmatpush1.xpose.msra.mxu0 0.0
        %6817 = vmatprep.subr.mxu0 0.0
        %6818 = vmatpush1.xpose.msra.mxu0 0.0
        %6819 = vmatprep.subr.mxu0 0.0
        %6820 = vmatpush1.xpose.msra.mxu0 0.0
        %6821 = vmatprep.subr.mxu0 0.0
        %6822 = vmatpush1.xpose.msra.mxu0 0.0
        %6823 = vmatprep.subr.mxu0 0.0
        %6824 = vmatpush1.xpose.msra.mxu0 0.0
        %6825 = vmatprep.subr.mxu0 0.0
        %6826 = vmatpush1.xpose.msra.mxu0 0.0
        %6827 = vmatprep.subr.mxu0 0.0
        %6828 = vmatpush1.xpose.msra.mxu0 0.0
        %6829 = vmatprep.mubr.f32.mxu0 %v1344
        %6830 = vmatmul.mubr.f32.gmra.mrb[0].mxu0 %v1336
        %v6831 = vpop.f32.mrb[0].mxu0
        %v6832 = vadd.f32 %v6762, %v6831
        %v6833 = vpop.f32.mrb[0].mxu0
        %6834 = vdwg.mxu0
        %6835 = vmatprep.subr.mxu0 %v432
        %6836 = vmatpush1.xpose.msra.mxu0 %v431
        %6837 = vmatprep.subr.mxu0 %v624
        %6838 = vmatpush1.xpose.msra.mxu0 %v623
        %6839 = vmatprep.subr.mxu0 0.0
        %6840 = vmatpush1.xpose.msra.mxu0 0.0
        %6841 = vmatprep.subr.mxu0 0.0
        %6842 = vmatpush1.xpose.msra.mxu0 0.0
        %6843 = vmatprep.subr.mxu0 0.0
        %6844 = vmatpush1.xpose.msra.mxu0 0.0
        %6845 = vmatprep.subr.mxu0 0.0
        %6846 = vmatpush1.xpose.msra.mxu0 0.0
        %6847 = vmatprep.subr.mxu0 0.0
        %6848 = vmatpush1.xpose.msra.mxu0 0.0
        %6849 = vmatprep.subr.mxu0 0.0
        %6850 = vmatpush1.xpose.msra.mxu0 0.0
        %6851 = vmatprep.subr.mxu0 0.0
        %6852 = vmatpush1.xpose.msra.mxu0 0.0
        %6853 = vmatprep.subr.mxu0 0.0
        %6854 = vmatpush1.xpose.msra.mxu0 0.0
        %6855 = vmatprep.subr.mxu0 0.0
        %6856 = vmatpush1.xpose.msra.mxu0 0.0
        %6857 = vmatprep.subr.mxu0 0.0
        %6858 = vmatpush1.xpose.msra.mxu0 0.0
        %6859 = vmatprep.subr.mxu0 0.0
        %6860 = vmatpush1.xpose.msra.mxu0 0.0
        %6861 = vmatprep.subr.mxu0 0.0
        %6862 = vmatpush1.xpose.msra.mxu0 0.0
        %6863 = vmatprep.subr.mxu0 0.0
        %6864 = vmatpush1.xpose.msra.mxu0 0.0
        %6865 = vmatprep.subr.mxu0 0.0
        %6866 = vmatpush1.xpose.msra.mxu0 0.0
        %6867 = vmatprep.subr.mxu0 0.0
        %6868 = vmatpush1.xpose.msra.mxu0 0.0
        %6869 = vmatprep.subr.mxu0 0.0
        %6870 = vmatpush1.xpose.msra.mxu0 0.0
        %6871 = vmatprep.subr.mxu0 0.0
        %6872 = vmatpush1.xpose.msra.mxu0 0.0
        %6873 = vmatprep.subr.mxu0 0.0
        %6874 = vmatpush1.xpose.msra.mxu0 0.0
        %6875 = vmatprep.subr.mxu0 0.0
        %6876 = vmatpush1.xpose.msra.mxu0 0.0
        %6877 = vmatprep.subr.mxu0 0.0
        %6878 = vmatpush1.xpose.msra.mxu0 0.0
        %6879 = vmatprep.subr.mxu0 0.0
        %6880 = vmatpush1.xpose.msra.mxu0 0.0
        %6881 = vmatprep.subr.mxu0 0.0
        %6882 = vmatpush1.xpose.msra.mxu0 0.0
        %6883 = vmatprep.subr.mxu0 0.0
        %6884 = vmatpush1.xpose.msra.mxu0 0.0
        %6885 = vmatprep.subr.mxu0 0.0
        %6886 = vmatpush1.xpose.msra.mxu0 0.0
        %6887 = vmatprep.subr.mxu0 0.0
        %6888 = vmatpush1.xpose.msra.mxu0 0.0
        %6889 = vmatprep.subr.mxu0 0.0
        %6890 = vmatpush1.xpose.msra.mxu0 0.0
        %6891 = vmatprep.subr.mxu0 0.0
        %6892 = vmatpush1.xpose.msra.mxu0 0.0
        %6893 = vmatprep.subr.mxu0 0.0
        %6894 = vmatpush1.xpose.msra.mxu0 0.0
        %6895 = vmatprep.subr.mxu0 0.0
        %6896 = vmatpush1.xpose.msra.mxu0 0.0
        %6897 = vmatprep.subr.mxu0 0.0
        %6898 = vmatpush1.xpose.msra.mxu0 0.0
        %6899 = vmatprep.mubr.f32.mxu0 %v1345
        %6900 = vmatmul.mubr.f32.gmra.mrb[0].mxu0 %v1343
        %v6901 = vpop.f32.mrb[0].mxu0
        %v6902 = vadd.f32 %v6832, %v6901
        %v6903 = vpop.f32.mrb[0].mxu0
        %6904 = vdwg.mxu0
        %6905 = vmatprep.subr.mxu0 %v434
        %6906 = vmatpush1.xpose.msra.mxu0 %v433
        %6907 = vmatprep.subr.mxu0 %v626
        %6908 = vmatpush1.xpose.msra.mxu0 %v625
        %6909 = vmatprep.subr.mxu0 0.0
        %6910 = vmatpush1.xpose.msra.mxu0 0.0
        %6911 = vmatprep.subr.mxu0 0.0
        %6912 = vmatpush1.xpose.msra.mxu0 0.0
        %6913 = vmatprep.subr.mxu0 0.0
        %6914 = vmatpush1.xpose.msra.mxu0 0.0
        %6915 = vmatprep.subr.mxu0 0.0
        %6916 = vmatpush1.xpose.msra.mxu0 0.0
        %6917 = vmatprep.subr.mxu0 0.0
        %6918 = vmatpush1.xpose.msra.mxu0 0.0
        %6919 = vmatprep.subr.mxu0 0.0
        %6920 = vmatpush1.xpose.msra.mxu0 0.0
        %6921 = vmatprep.subr.mxu0 0.0
        %6922 = vmatpush1.xpose.msra.mxu0 0.0
        %6923 = vmatprep.subr.mxu0 0.0
        %6924 = vmatpush1.xpose.msra.mxu0 0.0
        %6925 = vmatprep.subr.mxu0 0.0
        %6926 = vmatpush1.xpose.msra.mxu0 0.0
        %6927 = vmatprep.subr.mxu0 0.0
        %6928 = vmatpush1.xpose.msra.mxu0 0.0
        %6929 = vmatprep.subr.mxu0 0.0
        %6930 = vmatpush1.xpose.msra.mxu0 0.0
        %6931 = vmatprep.subr.mxu0 0.0
        %6932 = vmatpush1.xpose.msra.mxu0 0.0
        %6933 = vmatprep.subr.mxu0 0.0
        %6934 = vmatpush1.xpose.msra.mxu0 0.0
        %6935 = vmatprep.subr.mxu0 0.0
        %6936 = vmatpush1.xpose.msra.mxu0 0.0
        %6937 = vmatprep.subr.mxu0 0.0
        %6938 = vmatpush1.xpose.msra.mxu0 0.0
        %6939 = vmatprep.subr.mxu0 0.0
        %6940 = vmatpush1.xpose.msra.mxu0 0.0
        %6941 = vmatprep.subr.mxu0 0.0
        %6942 = vmatpush1.xpose.msra.mxu0 0.0
        %6943 = vmatprep.subr.mxu0 0.0
        %6944 = vmatpush1.xpose.msra.mxu0 0.0
        %6945 = vmatprep.subr.mxu0 0.0
        %6946 = vmatpush1.xpose.msra.mxu0 0.0
        %6947 = vmatprep.subr.mxu0 0.0
        %6948 = vmatpush1.xpose.msra.mxu0 0.0
        %6949 = vmatprep.subr.mxu0 0.0
        %6950 = vmatpush1.xpose.msra.mxu0 0.0
        %6951 = vmatprep.subr.mxu0 0.0
        %6952 = vmatpush1.xpose.msra.mxu0 0.0
        %6953 = vmatprep.subr.mxu0 0.0
        %6954 = vmatpush1.xpose.msra.mxu0 0.0
        %6955 = vmatprep.subr.mxu0 0.0
        %6956 = vmatpush1.xpose.msra.mxu0 0.0
        %6957 = vmatprep.subr.mxu0 0.0
        %6958 = vmatpush1.xpose.msra.mxu0 0.0
        %6959 = vmatprep.subr.mxu0 0.0
        %6960 = vmatpush1.xpose.msra.mxu0 0.0
        %6961 = vmatprep.subr.mxu0 0.0
        %6962 = vmatpush1.xpose.msra.mxu0 0.0
        %6963 = vmatprep.subr.mxu0 0.0
        %6964 = vmatpush1.xpose.msra.mxu0 0.0
        %6965 = vmatprep.subr.mxu0 0.0
        %6966 = vmatpush1.xpose.msra.mxu0 0.0
        %6967 = vmatprep.subr.mxu0 0.0
        %6968 = vmatpush1.xpose.msra.mxu0 0.0
        %6969 = vmatprep.mubr.f32.mxu0 %v1361
        %6970 = vmatmul.mubr.f32.gmra.mrb[0].mxu0 %v1353
        %v6971 = vpop.f32.mrb[0].mxu0
        %v6972 = vadd.f32 %v6902, %v6971
        %v6973 = vpop.f32.mrb[0].mxu0
        %6974 = vdwg.mxu0
        %6975 = vmatprep.subr.mxu0 %v436
        %6976 = vmatpush1.xpose.msra.mxu0 %v435
        %6977 = vmatprep.subr.mxu0 %v628
        %6978 = vmatpush1.xpose.msra.mxu0 %v627
        %6979 = vmatprep.subr.mxu0 0.0
        %6980 = vmatpush1.xpose.msra.mxu0 0.0
        %6981 = vmatprep.subr.mxu0 0.0
        %6982 = vmatpush1.xpose.msra.mxu0 0.0
        %6983 = vmatprep.subr.mxu0 0.0
        %6984 = vmatpush1.xpose.msra.mxu0 0.0
        %6985 = vmatprep.subr.mxu0 0.0
        %6986 = vmatpush1.xpose.msra.mxu0 0.0
        %6987 = vmatprep.subr.mxu0 0.0
        %6988 = vmatpush1.xpose.msra.mxu0 0.0
        %6989 = vmatprep.subr.mxu0 0.0
        %6990 = vmatpush1.xpose.msra.mxu0 0.0
        %6991 = vmatprep.subr.mxu0 0.0
        %6992 = vmatpush1.xpose.msra.mxu0 0.0
        %6993 = vmatprep.subr.mxu0 0.0
        %6994 = vmatpush1.xpose.msra.mxu0 0.0
        %6995 = vmatprep.subr.mxu0 0.0
        %6996 = vmatpush1.xpose.msra.mxu0 0.0
        %6997 = vmatprep.subr.mxu0 0.0
        %6998 = vmatpush1.xpose.msra.mxu0 0.0
        %6999 = vmatprep.subr.mxu0 0.0
        %7000 = vmatpush1.xpose.msra.mxu0 0.0
        %7001 = vmatprep.subr.mxu0 0.0
        %7002 = vmatpush1.xpose.msra.mxu0 0.0
        %7003 = vmatprep.subr.mxu0 0.0
        %7004 = vmatpush1.xpose.msra.mxu0 0.0
        %7005 = vmatprep.subr.mxu0 0.0
        %7006 = vmatpush1.xpose.msra.mxu0 0.0
        %7007 = vmatprep.subr.mxu0 0.0
        %7008 = vmatpush1.xpose.msra.mxu0 0.0
        %7009 = vmatprep.subr.mxu0 0.0
        %7010 = vmatpush1.xpose.msra.mxu0 0.0
        %7011 = vmatprep.subr.mxu0 0.0
        %7012 = vmatpush1.xpose.msra.mxu0 0.0
        %7013 = vmatprep.subr.mxu0 0.0
        %7014 = vmatpush1.xpose.msra.mxu0 0.0
        %7015 = vmatprep.subr.mxu0 0.0
        %7016 = vmatpush1.xpose.msra.mxu0 0.0
        %7017 = vmatprep.subr.mxu0 0.0
        %7018 = vmatpush1.xpose.msra.mxu0 0.0
        %7019 = vmatprep.subr.mxu0 0.0
        %7020 = vmatpush1.xpose.msra.mxu0 0.0
        %7021 = vmatprep.subr.mxu0 0.0
        %7022 = vmatpush1.xpose.msra.mxu0 0.0
        %7023 = vmatprep.subr.mxu0 0.0
        %7024 = vmatpush1.xpose.msra.mxu0 0.0
        %7025 = vmatprep.subr.mxu0 0.0
        %7026 = vmatpush1.xpose.msra.mxu0 0.0
        %7027 = vmatprep.subr.mxu0 0.0
        %7028 = vmatpush1.xpose.msra.mxu0 0.0
        %7029 = vmatprep.subr.mxu0 0.0
        %7030 = vmatpush1.xpose.msra.mxu0 0.0
        %7031 = vmatprep.subr.mxu0 0.0
        %7032 = vmatpush1.xpose.msra.mxu0 0.0
        %7033 = vmatprep.subr.mxu0 0.0
        %7034 = vmatpush1.xpose.msra.mxu0 0.0
        %7035 = vmatprep.subr.mxu0 0.0
        %7036 = vmatpush1.xpose.msra.mxu0 0.0
        %7037 = vmatprep.subr.mxu0 0.0
        %7038 = vmatpush1.xpose.msra.mxu0 0.0
        %7039 = vmatprep.mubr.f32.mxu0 %v1362
        %7040 = vmatmul.mubr.f32.gmra.mrb[0].mxu0 %v1360
        %v7041 = vpop.f32.mrb[0].mxu0
        %v7042 = vadd.f32 %v6972, %v7041
        %v7043 = vpop.f32.mrb[0].mxu0
        %7044 = vdwg.mxu0
        %7045 = vmatprep.subr.mxu0 %v438
        %7046 = vmatpush1.xpose.msra.mxu0 %v437
        %7047 = vmatprep.subr.mxu0 %v630
        %7048 = vmatpush1.xpose.msra.mxu0 %v629
        %7049 = vmatprep.subr.mxu0 0.0
        %7050 = vmatpush1.xpose.msra.mxu0 0.0
        %7051 = vmatprep.subr.mxu0 0.0
        %7052 = vmatpush1.xpose.msra.mxu0 0.0
        %7053 = vmatprep.subr.mxu0 0.0
        %7054 = vmatpush1.xpose.msra.mxu0 0.0
        %7055 = vmatprep.subr.mxu0 0.0
        %7056 = vmatpush1.xpose.msra.mxu0 0.0
        %7057 = vmatprep.subr.mxu0 0.0
        %7058 = vmatpush1.xpose.msra.mxu0 0.0
        %7059 = vmatprep.subr.mxu0 0.0
        %7060 = vmatpush1.xpose.msra.mxu0 0.0
        %7061 = vmatprep.subr.mxu0 0.0
        %7062 = vmatpush1.xpose.msra.mxu0 0.0
        %7063 = vmatprep.subr.mxu0 0.0
        %7064 = vmatpush1.xpose.msra.mxu0 0.0
        %7065 = vmatprep.subr.mxu0 0.0
        %7066 = vmatpush1.xpose.msra.mxu0 0.0
        %7067 = vmatprep.subr.mxu0 0.0
        %7068 = vmatpush1.xpose.msra.mxu0 0.0
        %7069 = vmatprep.subr.mxu0 0.0
        %7070 = vmatpush1.xpose.msra.mxu0 0.0
        %7071 = vmatprep.subr.mxu0 0.0
        %7072 = vmatpush1.xpose.msra.mxu0 0.0
        %7073 = vmatprep.subr.mxu0 0.0
        %7074 = vmatpush1.xpose.msra.mxu0 0.0
        %7075 = vmatprep.subr.mxu0 0.0
        %7076 = vmatpush1.xpose.msra.mxu0 0.0
        %7077 = vmatprep.subr.mxu0 0.0
        %7078 = vmatpush1.xpose.msra.mxu0 0.0
        %7079 = vmatprep.subr.mxu0 0.0
        %7080 = vmatpush1.xpose.msra.mxu0 0.0
        %7081 = vmatprep.subr.mxu0 0.0
        %7082 = vmatpush1.xpose.msra.mxu0 0.0
        %7083 = vmatprep.subr.mxu0 0.0
        %7084 = vmatpush1.xpose.msra.mxu0 0.0
        %7085 = vmatprep.subr.mxu0 0.0
        %7086 = vmatpush1.xpose.msra.mxu0 0.0
        %7087 = vmatprep.subr.mxu0 0.0
        %7088 = vmatpush1.xpose.msra.mxu0 0.0
        %7089 = vmatprep.subr.mxu0 0.0
        %7090 = vmatpush1.xpose.msra.mxu0 0.0
        %7091 = vmatprep.subr.mxu0 0.0
        %7092 = vmatpush1.xpose.msra.mxu0 0.0
        %7093 = vmatprep.subr.mxu0 0.0
        %7094 = vmatpush1.xpose.msra.mxu0 0.0
        %7095 = vmatprep.subr.mxu0 0.0
        %7096 = vmatpush1.xpose.msra.mxu0 0.0
        %7097 = vmatprep.subr.mxu0 0.0
        %7098 = vmatpush1.xpose.msra.mxu0 0.0
        %7099 = vmatprep.subr.mxu0 0.0
        %7100 = vmatpush1.xpose.msra.mxu0 0.0
        %7101 = vmatprep.subr.mxu0 0.0
        %7102 = vmatpush1.xpose.msra.mxu0 0.0
        %7103 = vmatprep.subr.mxu0 0.0
        %7104 = vmatpush1.xpose.msra.mxu0 0.0
        %7105 = vmatprep.subr.mxu0 0.0
        %7106 = vmatpush1.xpose.msra.mxu0 0.0
        %7107 = vmatprep.subr.mxu0 0.0
        %7108 = vmatpush1.xpose.msra.mxu0 0.0
        %7109 = vmatprep.mubr.f32.mxu0 %v1378
        %7110 = vmatmul.mubr.f32.gmra.mrb[0].mxu0 %v1370
        %v7111 = vpop.f32.mrb[0].mxu0
        %v7112 = vadd.f32 %v7042, %v7111
        %v7113 = vpop.f32.mrb[0].mxu0
        %7114 = vdwg.mxu0
        %7115 = vmatprep.subr.mxu0 %v440
        %7116 = vmatpush1.xpose.msra.mxu0 %v439
        %7117 = vmatprep.subr.mxu0 %v632
        %7118 = vmatpush1.xpose.msra.mxu0 %v631
        %7119 = vmatprep.subr.mxu0 0.0
        %7120 = vmatpush1.xpose.msra.mxu0 0.0
        %7121 = vmatprep.subr.mxu0 0.0
        %7122 = vmatpush1.xpose.msra.mxu0 0.0
        %7123 = vmatprep.subr.mxu0 0.0
        %7124 = vmatpush1.xpose.msra.mxu0 0.0
        %7125 = vmatprep.subr.mxu0 0.0
        %7126 = vmatpush1.xpose.msra.mxu0 0.0
        %7127 = vmatprep.subr.mxu0 0.0
        %7128 = vmatpush1.xpose.msra.mxu0 0.0
        %7129 = vmatprep.subr.mxu0 0.0
        %7130 = vmatpush1.xpose.msra.mxu0 0.0
        %7131 = vmatprep.subr.mxu0 0.0
        %7132 = vmatpush1.xpose.msra.mxu0 0.0
        %7133 = vmatprep.subr.mxu0 0.0
        %7134 = vmatpush1.xpose.msra.mxu0 0.0
        %7135 = vmatprep.subr.mxu0 0.0
        %7136 = vmatpush1.xpose.msra.mxu0 0.0
        %7137 = vmatprep.subr.mxu0 0.0
        %7138 = vmatpush1.xpose.msra.mxu0 0.0
        %7139 = vmatprep.subr.mxu0 0.0
        %7140 = vmatpush1.xpose.msra.mxu0 0.0
        %7141 = vmatprep.subr.mxu0 0.0
        %7142 = vmatpush1.xpose.msra.mxu0 0.0
        %7143 = vmatprep.subr.mxu0 0.0
        %7144 = vmatpush1.xpose.msra.mxu0 0.0
        %7145 = vmatprep.subr.mxu0 0.0
        %7146 = vmatpush1.xpose.msra.mxu0 0.0
        %7147 = vmatprep.subr.mxu0 0.0
        %7148 = vmatpush1.xpose.msra.mxu0 0.0
        %7149 = vmatprep.subr.mxu0 0.0
        %7150 = vmatpush1.xpose.msra.mxu0 0.0
        %7151 = vmatprep.subr.mxu0 0.0
        %7152 = vmatpush1.xpose.msra.mxu0 0.0
        %7153 = vmatprep.subr.mxu0 0.0
        %7154 = vmatpush1.xpose.msra.mxu0 0.0
        %7155 = vmatprep.subr.mxu0 0.0
        %7156 = vmatpush1.xpose.msra.mxu0 0.0
        %7157 = vmatprep.subr.mxu0 0.0
        %7158 = vmatpush1.xpose.msra.mxu0 0.0
        %7159 = vmatprep.subr.mxu0 0.0
        %7160 = vmatpush1.xpose.msra.mxu0 0.0
        %7161 = vmatprep.subr.mxu0 0.0
        %7162 = vmatpush1.xpose.msra.mxu0 0.0
        %7163 = vmatprep.subr.mxu0 0.0
        %7164 = vmatpush1.xpose.msra.mxu0 0.0
        %7165 = vmatprep.subr.mxu0 0.0
        %7166 = vmatpush1.xpose.msra.mxu0 0.0
        %7167 = vmatprep.subr.mxu0 0.0
        %7168 = vmatpush1.xpose.msra.mxu0 0.0
        %7169 = vmatprep.subr.mxu0 0.0
        %7170 = vmatpush1.xpose.msra.mxu0 0.0
        %7171 = vmatprep.subr.mxu0 0.0
        %7172 = vmatpush1.xpose.msra.mxu0 0.0
        %7173 = vmatprep.subr.mxu0 0.0
        %7174 = vmatpush1.xpose.msra.mxu0 0.0
        %7175 = vmatprep.subr.mxu0 0.0
        %7176 = vmatpush1.xpose.msra.mxu0 0.0
        %7177 = vmatprep.subr.mxu0 0.0
        %7178 = vmatpush1.xpose.msra.mxu0 0.0
        %7179 = vmatprep.mubr.f32.mxu0 %v1379
        %7180 = vmatmul.mubr.f32.gmra.mrb[0].mxu0 %v1377
        %v7181 = vpop.f32.mrb[0].mxu0
        %v7182 = vadd.f32 %v7112, %v7181
        %v7183 = vpop.f32.mrb[0].mxu0
        %7184 = vdwg.mxu0
        %7185 = vmatprep.subr.mxu0 %v442
        %7186 = vmatpush1.xpose.msra.mxu0 %v441
        %7187 = vmatprep.subr.mxu0 %v634
        %7188 = vmatpush1.xpose.msra.mxu0 %v633
        %7189 = vmatprep.subr.mxu0 0.0
        %7190 = vmatpush1.xpose.msra.mxu0 0.0
        %7191 = vmatprep.subr.mxu0 0.0
        %7192 = vmatpush1.xpose.msra.mxu0 0.0
        %7193 = vmatprep.subr.mxu0 0.0
        %7194 = vmatpush1.xpose.msra.mxu0 0.0
        %7195 = vmatprep.subr.mxu0 0.0
        %7196 = vmatpush1.xpose.msra.mxu0 0.0
        %7197 = vmatprep.subr.mxu0 0.0
        %7198 = vmatpush1.xpose.msra.mxu0 0.0
        %7199 = vmatprep.subr.mxu0 0.0
        %7200 = vmatpush1.xpose.msra.mxu0 0.0
        %7201 = vmatprep.subr.mxu0 0.0
        %7202 = vmatpush1.xpose.msra.mxu0 0.0
        %7203 = vmatprep.subr.mxu0 0.0
        %7204 = vmatpush1.xpose.msra.mxu0 0.0
        %7205 = vmatprep.subr.mxu0 0.0
        %7206 = vmatpush1.xpose.msra.mxu0 0.0
        %7207 = vmatprep.subr.mxu0 0.0
        %7208 = vmatpush1.xpose.msra.mxu0 0.0
        %7209 = vmatprep.subr.mxu0 0.0
        %7210 = vmatpush1.xpose.msra.mxu0 0.0
        %7211 = vmatprep.subr.mxu0 0.0
        %7212 = vmatpush1.xpose.msra.mxu0 0.0
        %7213 = vmatprep.subr.mxu0 0.0
        %7214 = vmatpush1.xpose.msra.mxu0 0.0
        %7215 = vmatprep.subr.mxu0 0.0
        %7216 = vmatpush1.xpose.msra.mxu0 0.0
        %7217 = vmatprep.subr.mxu0 0.0
        %7218 = vmatpush1.xpose.msra.mxu0 0.0
        %7219 = vmatprep.subr.mxu0 0.0
        %7220 = vmatpush1.xpose.msra.mxu0 0.0
        %7221 = vmatprep.subr.mxu0 0.0
        %7222 = vmatpush1.xpose.msra.mxu0 0.0
        %7223 = vmatprep.subr.mxu0 0.0
        %7224 = vmatpush1.xpose.msra.mxu0 0.0
        %7225 = vmatprep.subr.mxu0 0.0
        %7226 = vmatpush1.xpose.msra.mxu0 0.0
        %7227 = vmatprep.subr.mxu0 0.0
        %7228 = vmatpush1.xpose.msra.mxu0 0.0
        %7229 = vmatprep.subr.mxu0 0.0
        %7230 = vmatpush1.xpose.msra.mxu0 0.0
        %7231 = vmatprep.subr.mxu0 0.0
        %7232 = vmatpush1.xpose.msra.mxu0 0.0
        %7233 = vmatprep.subr.mxu0 0.0
        %7234 = vmatpush1.xpose.msra.mxu0 0.0
        %7235 = vmatprep.subr.mxu0 0.0
        %7236 = vmatpush1.xpose.msra.mxu0 0.0
        %7237 = vmatprep.subr.mxu0 0.0
        %7238 = vmatpush1.xpose.msra.mxu0 0.0
        %7239 = vmatprep.subr.mxu0 0.0
        %7240 = vmatpush1.xpose.msra.mxu0 0.0
        %7241 = vmatprep.subr.mxu0 0.0
        %7242 = vmatpush1.xpose.msra.mxu0 0.0
        %7243 = vmatprep.subr.mxu0 0.0
        %7244 = vmatpush1.xpose.msra.mxu0 0.0
        %7245 = vmatprep.subr.mxu0 0.0
        %7246 = vmatpush1.xpose.msra.mxu0 0.0
        %7247 = vmatprep.subr.mxu0 0.0
        %7248 = vmatpush1.xpose.msra.mxu0 0.0
        %7249 = vmatprep.mubr.f32.mxu0 %v1395
        %7250 = vmatmul.mubr.f32.gmra.mrb[0].mxu0 %v1387
        %v7251 = vpop.f32.mrb[0].mxu0
        %v7252 = vadd.f32 %v7182, %v7251
        %v7253 = vpop.f32.mrb[0].mxu0
        %7254 = vdwg.mxu0
        %7255 = vmatprep.subr.mxu0 %v444
        %7256 = vmatpush1.xpose.msra.mxu0 %v443
        %7257 = vmatprep.subr.mxu0 %v636
        %7258 = vmatpush1.xpose.msra.mxu0 %v635
        %7259 = vmatprep.subr.mxu0 0.0
        %7260 = vmatpush1.xpose.msra.mxu0 0.0
        %7261 = vmatprep.subr.mxu0 0.0
        %7262 = vmatpush1.xpose.msra.mxu0 0.0
        %7263 = vmatprep.subr.mxu0 0.0
        %7264 = vmatpush1.xpose.msra.mxu0 0.0
        %7265 = vmatprep.subr.mxu0 0.0
        %7266 = vmatpush1.xpose.msra.mxu0 0.0
        %7267 = vmatprep.subr.mxu0 0.0
        %7268 = vmatpush1.xpose.msra.mxu0 0.0
        %7269 = vmatprep.subr.mxu0 0.0
        %7270 = vmatpush1.xpose.msra.mxu0 0.0
        %7271 = vmatprep.subr.mxu0 0.0
        %7272 = vmatpush1.xpose.msra.mxu0 0.0
        %7273 = vmatprep.subr.mxu0 0.0
        %7274 = vmatpush1.xpose.msra.mxu0 0.0
        %7275 = vmatprep.subr.mxu0 0.0
        %7276 = vmatpush1.xpose.msra.mxu0 0.0
        %7277 = vmatprep.subr.mxu0 0.0
        %7278 = vmatpush1.xpose.msra.mxu0 0.0
        %7279 = vmatprep.subr.mxu0 0.0
        %7280 = vmatpush1.xpose.msra.mxu0 0.0
        %7281 = vmatprep.subr.mxu0 0.0
        %7282 = vmatpush1.xpose.msra.mxu0 0.0
        %7283 = vmatprep.subr.mxu0 0.0
        %7284 = vmatpush1.xpose.msra.mxu0 0.0
        %7285 = vmatprep.subr.mxu0 0.0
        %7286 = vmatpush1.xpose.msra.mxu0 0.0
        %7287 = vmatprep.subr.mxu0 0.0
        %7288 = vmatpush1.xpose.msra.mxu0 0.0
        %7289 = vmatprep.subr.mxu0 0.0
        %7290 = vmatpush1.xpose.msra.mxu0 0.0
        %7291 = vmatprep.subr.mxu0 0.0
        %7292 = vmatpush1.xpose.msra.mxu0 0.0
        %7293 = vmatprep.subr.mxu0 0.0
        %7294 = vmatpush1.xpose.msra.mxu0 0.0
        %7295 = vmatprep.subr.mxu0 0.0
        %7296 = vmatpush1.xpose.msra.mxu0 0.0
        %7297 = vmatprep.subr.mxu0 0.0
        %7298 = vmatpush1.xpose.msra.mxu0 0.0
        %7299 = vmatprep.subr.mxu0 0.0
        %7300 = vmatpush1.xpose.msra.mxu0 0.0
        %7301 = vmatprep.subr.mxu0 0.0
        %7302 = vmatpush1.xpose.msra.mxu0 0.0
        %7303 = vmatprep.subr.mxu0 0.0
        %7304 = vmatpush1.xpose.msra.mxu0 0.0
        %7305 = vmatprep.subr.mxu0 0.0
        %7306 = vmatpush1.xpose.msra.mxu0 0.0
        %7307 = vmatprep.subr.mxu0 0.0
        %7308 = vmatpush1.xpose.msra.mxu0 0.0
        %7309 = vmatprep.subr.mxu0 0.0
        %7310 = vmatpush1.xpose.msra.mxu0 0.0
        %7311 = vmatprep.subr.mxu0 0.0
        %7312 = vmatpush1.xpose.msra.mxu0 0.0
        %7313 = vmatprep.subr.mxu0 0.0
        %7314 = vmatpush1.xpose.msra.mxu0 0.0
        %7315 = vmatprep.subr.mxu0 0.0
        %7316 = vmatpush1.xpose.msra.mxu0 0.0
        %7317 = vmatprep.subr.mxu0 0.0
        %7318 = vmatpush1.xpose.msra.mxu0 0.0
        %7319 = vmatprep.mubr.f32.mxu0 %v1396
        %7320 = vmatmul.mubr.f32.gmra.mrb[0].mxu0 %v1394
        %v7321 = vpop.f32.mrb[0].mxu0
        %v7322 = vadd.f32 %v7252, %v7321
        %v7323 = vpop.f32.mrb[0].mxu0
        %7324 = vdwg.mxu0
        %7325 = vmatprep.subr.mxu0 %v446
        %7326 = vmatpush1.xpose.msra.mxu0 %v445
        %7327 = vmatprep.subr.mxu0 %v638
        %7328 = vmatpush1.xpose.msra.mxu0 %v637
        %7329 = vmatprep.subr.mxu0 0.0
        %7330 = vmatpush1.xpose.msra.mxu0 0.0
        %7331 = vmatprep.subr.mxu0 0.0
        %7332 = vmatpush1.xpose.msra.mxu0 0.0
        %7333 = vmatprep.subr.mxu0 0.0
        %7334 = vmatpush1.xpose.msra.mxu0 0.0
        %7335 = vmatprep.subr.mxu0 0.0
        %7336 = vmatpush1.xpose.msra.mxu0 0.0
        %7337 = vmatprep.subr.mxu0 0.0
        %7338 = vmatpush1.xpose.msra.mxu0 0.0
        %7339 = vmatprep.subr.mxu0 0.0
        %7340 = vmatpush1.xpose.msra.mxu0 0.0
        %7341 = vmatprep.subr.mxu0 0.0
        %7342 = vmatpush1.xpose.msra.mxu0 0.0
        %7343 = vmatprep.subr.mxu0 0.0
        %7344 = vmatpush1.xpose.msra.mxu0 0.0
        %7345 = vmatprep.subr.mxu0 0.0
        %7346 = vmatpush1.xpose.msra.mxu0 0.0
        %7347 = vmatprep.subr.mxu0 0.0
        %7348 = vmatpush1.xpose.msra.mxu0 0.0
        %7349 = vmatprep.subr.mxu0 0.0
        %7350 = vmatpush1.xpose.msra.mxu0 0.0
        %7351 = vmatprep.subr.mxu0 0.0
        %7352 = vmatpush1.xpose.msra.mxu0 0.0
        %7353 = vmatprep.subr.mxu0 0.0
        %7354 = vmatpush1.xpose.msra.mxu0 0.0
        %7355 = vmatprep.subr.mxu0 0.0
        %7356 = vmatpush1.xpose.msra.mxu0 0.0
        %7357 = vmatprep.subr.mxu0 0.0
        %7358 = vmatpush1.xpose.msra.mxu0 0.0
        %7359 = vmatprep.subr.mxu0 0.0
        %7360 = vmatpush1.xpose.msra.mxu0 0.0
        %7361 = vmatprep.subr.mxu0 0.0
        %7362 = vmatpush1.xpose.msra.mxu0 0.0
        %7363 = vmatprep.subr.mxu0 0.0
        %7364 = vmatpush1.xpose.msra.mxu0 0.0
        %7365 = vmatprep.subr.mxu0 0.0
        %7366 = vmatpush1.xpose.msra.mxu0 0.0
        %7367 = vmatprep.subr.mxu0 0.0
        %7368 = vmatpush1.xpose.msra.mxu0 0.0
        %7369 = vmatprep.subr.mxu0 0.0
        %7370 = vmatpush1.xpose.msra.mxu0 0.0
        %7371 = vmatprep.subr.mxu0 0.0
        %7372 = vmatpush1.xpose.msra.mxu0 0.0
        %7373 = vmatprep.subr.mxu0 0.0
        %7374 = vmatpush1.xpose.msra.mxu0 0.0
        %7375 = vmatprep.subr.mxu0 0.0
        %7376 = vmatpush1.xpose.msra.mxu0 0.0
        %7377 = vmatprep.subr.mxu0 0.0
        %7378 = vmatpush1.xpose.msra.mxu0 0.0
        %7379 = vmatprep.subr.mxu0 0.0
        %7380 = vmatpush1.xpose.msra.mxu0 0.0
        %7381 = vmatprep.subr.mxu0 0.0
        %7382 = vmatpush1.xpose.msra.mxu0 0.0
        %7383 = vmatprep.subr.mxu0 0.0
        %7384 = vmatpush1.xpose.msra.mxu0 0.0
        %7385 = vmatprep.subr.mxu0 0.0
        %7386 = vmatpush1.xpose.msra.mxu0 0.0
        %7387 = vmatprep.subr.mxu0 0.0
        %7388 = vmatpush1.xpose.msra.mxu0 0.0
        %7389 = vmatprep.mubr.f32.mxu0 %v1412
        %7390 = vmatmul.mubr.f32.gmra.mrb[0].mxu0 %v1404
        %v7391 = vpop.f32.mrb[0].mxu0
        %v7392 = vadd.f32 %v7322, %v7391
        %v7393 = vpop.f32.mrb[0].mxu0
        %7394 = vdwg.mxu0
        %7395 = vmatprep.subr.mxu0 %v448
        %7396 = vmatpush1.xpose.msra.mxu0 %v447
        %7397 = vmatprep.subr.mxu0 %v640
        %7398 = vmatpush1.xpose.msra.mxu0 %v639
        %7399 = vmatprep.subr.mxu0 0.0
        %7400 = vmatpush1.xpose.msra.mxu0 0.0
        %7401 = vmatprep.subr.mxu0 0.0
        %7402 = vmatpush1.xpose.msra.mxu0 0.0
        %7403 = vmatprep.subr.mxu0 0.0
        %7404 = vmatpush1.xpose.msra.mxu0 0.0
        %7405 = vmatprep.subr.mxu0 0.0
        %7406 = vmatpush1.xpose.msra.mxu0 0.0
        %7407 = vmatprep.subr.mxu0 0.0
        %7408 = vmatpush1.xpose.msra.mxu0 0.0
        %7409 = vmatprep.subr.mxu0 0.0
        %7410 = vmatpush1.xpose.msra.mxu0 0.0
        %7411 = vmatprep.subr.mxu0 0.0
        %7412 = vmatpush1.xpose.msra.mxu0 0.0
        %7413 = vmatprep.subr.mxu0 0.0
        %7414 = vmatpush1.xpose.msra.mxu0 0.0
        %7415 = vmatprep.subr.mxu0 0.0
        %7416 = vmatpush1.xpose.msra.mxu0 0.0
        %7417 = vmatprep.subr.mxu0 0.0
        %7418 = vmatpush1.xpose.msra.mxu0 0.0
        %7419 = vmatprep.subr.mxu0 0.0
        %7420 = vmatpush1.xpose.msra.mxu0 0.0
        %7421 = vmatprep.subr.mxu0 0.0
        %7422 = vmatpush1.xpose.msra.mxu0 0.0
        %7423 = vmatprep.subr.mxu0 0.0
        %7424 = vmatpush1.xpose.msra.mxu0 0.0
        %7425 = vmatprep.subr.mxu0 0.0
        %7426 = vmatpush1.xpose.msra.mxu0 0.0
        %7427 = vmatprep.subr.mxu0 0.0
        %7428 = vmatpush1.xpose.msra.mxu0 0.0
        %7429 = vmatprep.subr.mxu0 0.0
        %7430 = vmatpush1.xpose.msra.mxu0 0.0
        %7431 = vmatprep.subr.mxu0 0.0
        %7432 = vmatpush1.xpose.msra.mxu0 0.0
        %7433 = vmatprep.subr.mxu0 0.0
        %7434 = vmatpush1.xpose.msra.mxu0 0.0
        %7435 = vmatprep.subr.mxu0 0.0
        %7436 = vmatpush1.xpose.msra.mxu0 0.0
        %7437 = vmatprep.subr.mxu0 0.0
        %7438 = vmatpush1.xpose.msra.mxu0 0.0
        %7439 = vmatprep.subr.mxu0 0.0
        %7440 = vmatpush1.xpose.msra.mxu0 0.0
        %7441 = vmatprep.subr.mxu0 0.0
        %7442 = vmatpush1.xpose.msra.mxu0 0.0
        %7443 = vmatprep.subr.mxu0 0.0
        %7444 = vmatpush1.xpose.msra.mxu0 0.0
        %7445 = vmatprep.subr.mxu0 0.0
        %7446 = vmatpush1.xpose.msra.mxu0 0.0
        %7447 = vmatprep.subr.mxu0 0.0
        %7448 = vmatpush1.xpose.msra.mxu0 0.0
        %7449 = vmatprep.subr.mxu0 0.0
        %7450 = vmatpush1.xpose.msra.mxu0 0.0
        %7451 = vmatprep.subr.mxu0 0.0
        %7452 = vmatpush1.xpose.msra.mxu0 0.0
        %7453 = vmatprep.subr.mxu0 0.0
        %7454 = vmatpush1.xpose.msra.mxu0 0.0
        %7455 = vmatprep.subr.mxu0 0.0
        %7456 = vmatpush1.xpose.msra.mxu0 0.0
        %7457 = vmatprep.subr.mxu0 0.0
        %7458 = vmatpush1.xpose.msra.mxu0 0.0
        %7459 = vmatprep.mubr.f32.mxu0 %v1413
        %7460 = vmatmul.mubr.f32.gmra.mrb[0].mxu0 %v1411
        %v7461 = vpop.f32.mrb[0].mxu0
        %v7462 = vadd.f32 %v7392, %v7461
        %v7463 = vpop.f32.mrb[0].mxu0
        %7464 = vdwg.mxu0
        %7465 = vmatprep.subr.mxu0 %v450
        %7466 = vmatpush1.xpose.msra.mxu0 %v449
        %7467 = vmatprep.subr.mxu0 %v642
        %7468 = vmatpush1.xpose.msra.mxu0 %v641
        %7469 = vmatprep.subr.mxu0 0.0
        %7470 = vmatpush1.xpose.msra.mxu0 0.0
        %7471 = vmatprep.subr.mxu0 0.0
        %7472 = vmatpush1.xpose.msra.mxu0 0.0
        %7473 = vmatprep.subr.mxu0 0.0
        %7474 = vmatpush1.xpose.msra.mxu0 0.0
        %7475 = vmatprep.subr.mxu0 0.0
        %7476 = vmatpush1.xpose.msra.mxu0 0.0
        %7477 = vmatprep.subr.mxu0 0.0
        %7478 = vmatpush1.xpose.msra.mxu0 0.0
        %7479 = vmatprep.subr.mxu0 0.0
        %7480 = vmatpush1.xpose.msra.mxu0 0.0
        %7481 = vmatprep.subr.mxu0 0.0
        %7482 = vmatpush1.xpose.msra.mxu0 0.0
        %7483 = vmatprep.subr.mxu0 0.0
        %7484 = vmatpush1.xpose.msra.mxu0 0.0
        %7485 = vmatprep.subr.mxu0 0.0
        %7486 = vmatpush1.xpose.msra.mxu0 0.0
        %7487 = vmatprep.subr.mxu0 0.0
        %7488 = vmatpush1.xpose.msra.mxu0 0.0
        %7489 = vmatprep.subr.mxu0 0.0
        %7490 = vmatpush1.xpose.msra.mxu0 0.0
        %7491 = vmatprep.subr.mxu0 0.0
        %7492 = vmatpush1.xpose.msra.mxu0 0.0
        %7493 = vmatprep.subr.mxu0 0.0
        %7494 = vmatpush1.xpose.msra.mxu0 0.0
        %7495 = vmatprep.subr.mxu0 0.0
        %7496 = vmatpush1.xpose.msra.mxu0 0.0
        %7497 = vmatprep.subr.mxu0 0.0
        %7498 = vmatpush1.xpose.msra.mxu0 0.0
        %7499 = vmatprep.subr.mxu0 0.0
        %7500 = vmatpush1.xpose.msra.mxu0 0.0
        %7501 = vmatprep.subr.mxu0 0.0
        %7502 = vmatpush1.xpose.msra.mxu0 0.0
        %7503 = vmatprep.subr.mxu0 0.0
        %7504 = vmatpush1.xpose.msra.mxu0 0.0
        %7505 = vmatprep.subr.mxu0 0.0
        %7506 = vmatpush1.xpose.msra.mxu0 0.0
        %7507 = vmatprep.subr.mxu0 0.0
        %7508 = vmatpush1.xpose.msra.mxu0 0.0
        %7509 = vmatprep.subr.mxu0 0.0
        %7510 = vmatpush1.xpose.msra.mxu0 0.0
        %7511 = vmatprep.subr.mxu0 0.0
        %7512 = vmatpush1.xpose.msra.mxu0 0.0
        %7513 = vmatprep.subr.mxu0 0.0
        %7514 = vmatpush1.xpose.msra.mxu0 0.0
        %7515 = vmatprep.subr.mxu0 0.0
        %7516 = vmatpush1.xpose.msra.mxu0 0.0
        %7517 = vmatprep.subr.mxu0 0.0
        %7518 = vmatpush1.xpose.msra.mxu0 0.0
        %7519 = vmatprep.subr.mxu0 0.0
        %7520 = vmatpush1.xpose.msra.mxu0 0.0
        %7521 = vmatprep.subr.mxu0 0.0
        %7522 = vmatpush1.xpose.msra.mxu0 0.0
        %7523 = vmatprep.subr.mxu0 0.0
        %7524 = vmatpush1.xpose.msra.mxu0 0.0
        %7525 = vmatprep.subr.mxu0 0.0
        %7526 = vmatpush1.xpose.msra.mxu0 0.0
        %7527 = vmatprep.subr.mxu0 0.0
        %7528 = vmatpush1.xpose.msra.mxu0 0.0
        %7529 = vmatprep.mubr.f32.mxu0 %v1429
        %7530 = vmatmul.mubr.f32.gmra.mrb[0].mxu0 %v1421
        %v7531 = vpop.f32.mrb[0].mxu0
        %v7532 = vadd.f32 %v7462, %v7531
        %v7533 = vpop.f32.mrb[0].mxu0
        %7534 = vdwg.mxu0
        %7535 = vmatprep.subr.mxu0 %v452
        %7536 = vmatpush1.xpose.msra.mxu0 %v451
        %7537 = vmatprep.subr.mxu0 %v644
        %7538 = vmatpush1.xpose.msra.mxu0 %v643
        %7539 = vmatprep.subr.mxu0 0.0
        %7540 = vmatpush1.xpose.msra.mxu0 0.0
        %7541 = vmatprep.subr.mxu0 0.0
        %7542 = vmatpush1.xpose.msra.mxu0 0.0
        %7543 = vmatprep.subr.mxu0 0.0
        %7544 = vmatpush1.xpose.msra.mxu0 0.0
        %7545 = vmatprep.subr.mxu0 0.0
        %7546 = vmatpush1.xpose.msra.mxu0 0.0
        %7547 = vmatprep.subr.mxu0 0.0
        %7548 = vmatpush1.xpose.msra.mxu0 0.0
        %7549 = vmatprep.subr.mxu0 0.0
        %7550 = vmatpush1.xpose.msra.mxu0 0.0
        %7551 = vmatprep.subr.mxu0 0.0
        %7552 = vmatpush1.xpose.msra.mxu0 0.0
        %7553 = vmatprep.subr.mxu0 0.0
        %7554 = vmatpush1.xpose.msra.mxu0 0.0
        %7555 = vmatprep.subr.mxu0 0.0
        %7556 = vmatpush1.xpose.msra.mxu0 0.0
        %7557 = vmatprep.subr.mxu0 0.0
        %7558 = vmatpush1.xpose.msra.mxu0 0.0
        %7559 = vmatprep.subr.mxu0 0.0
        %7560 = vmatpush1.xpose.msra.mxu0 0.0
        %7561 = vmatprep.subr.mxu0 0.0
        %7562 = vmatpush1.xpose.msra.mxu0 0.0
        %7563 = vmatprep.subr.mxu0 0.0
        %7564 = vmatpush1.xpose.msra.mxu0 0.0
        %7565 = vmatprep.subr.mxu0 0.0
        %7566 = vmatpush1.xpose.msra.mxu0 0.0
        %7567 = vmatprep.subr.mxu0 0.0
        %7568 = vmatpush1.xpose.msra.mxu0 0.0
        %7569 = vmatprep.subr.mxu0 0.0
        %7570 = vmatpush1.xpose.msra.mxu0 0.0
        %7571 = vmatprep.subr.mxu0 0.0
        %7572 = vmatpush1.xpose.msra.mxu0 0.0
        %7573 = vmatprep.subr.mxu0 0.0
        %7574 = vmatpush1.xpose.msra.mxu0 0.0
        %7575 = vmatprep.subr.mxu0 0.0
        %7576 = vmatpush1.xpose.msra.mxu0 0.0
        %7577 = vmatprep.subr.mxu0 0.0
        %7578 = vmatpush1.xpose.msra.mxu0 0.0
        %7579 = vmatprep.subr.mxu0 0.0
        %7580 = vmatpush1.xpose.msra.mxu0 0.0
        %7581 = vmatprep.subr.mxu0 0.0
        %7582 = vmatpush1.xpose.msra.mxu0 0.0
        %7583 = vmatprep.subr.mxu0 0.0
        %7584 = vmatpush1.xpose.msra.mxu0 0.0
        %7585 = vmatprep.subr.mxu0 0.0
        %7586 = vmatpush1.xpose.msra.mxu0 0.0
        %7587 = vmatprep.subr.mxu0 0.0
        %7588 = vmatpush1.xpose.msra.mxu0 0.0
        %7589 = vmatprep.subr.mxu0 0.0
        %7590 = vmatpush1.xpose.msra.mxu0 0.0
        %7591 = vmatprep.subr.mxu0 0.0
        %7592 = vmatpush1.xpose.msra.mxu0 0.0
        %7593 = vmatprep.subr.mxu0 0.0
        %7594 = vmatpush1.xpose.msra.mxu0 0.0
        %7595 = vmatprep.subr.mxu0 0.0
        %7596 = vmatpush1.xpose.msra.mxu0 0.0
        %7597 = vmatprep.subr.mxu0 0.0
        %7598 = vmatpush1.xpose.msra.mxu0 0.0
        %7599 = vmatprep.mubr.f32.mxu0 %v1430
        %7600 = vmatmul.mubr.f32.gmra.mrb[0].mxu0 %v1428
        %v7601 = vpop.f32.mrb[0].mxu0
        %v7602 = vadd.f32 %v7532, %v7601
        %v7603 = vpop.f32.mrb[0].mxu0
        %7604 = vdwg.mxu0
        %7605 = vmatprep.subr.mxu0 %v454
        %7606 = vmatpush1.xpose.msra.mxu0 %v453
        %7607 = vmatprep.subr.mxu0 %v646
        %7608 = vmatpush1.xpose.msra.mxu0 %v645
        %7609 = vmatprep.subr.mxu0 0.0
        %7610 = vmatpush1.xpose.msra.mxu0 0.0
        %7611 = vmatprep.subr.mxu0 0.0
        %7612 = vmatpush1.xpose.msra.mxu0 0.0
        %7613 = vmatprep.subr.mxu0 0.0
        %7614 = vmatpush1.xpose.msra.mxu0 0.0
        %7615 = vmatprep.subr.mxu0 0.0
        %7616 = vmatpush1.xpose.msra.mxu0 0.0
        %7617 = vmatprep.subr.mxu0 0.0
        %7618 = vmatpush1.xpose.msra.mxu0 0.0
        %7619 = vmatprep.subr.mxu0 0.0
        %7620 = vmatpush1.xpose.msra.mxu0 0.0
        %7621 = vmatprep.subr.mxu0 0.0
        %7622 = vmatpush1.xpose.msra.mxu0 0.0
        %7623 = vmatprep.subr.mxu0 0.0
        %7624 = vmatpush1.xpose.msra.mxu0 0.0
        %7625 = vmatprep.subr.mxu0 0.0
        %7626 = vmatpush1.xpose.msra.mxu0 0.0
        %7627 = vmatprep.subr.mxu0 0.0
        %7628 = vmatpush1.xpose.msra.mxu0 0.0
        %7629 = vmatprep.subr.mxu0 0.0
        %7630 = vmatpush1.xpose.msra.mxu0 0.0
        %7631 = vmatprep.subr.mxu0 0.0
        %7632 = vmatpush1.xpose.msra.mxu0 0.0
        %7633 = vmatprep.subr.mxu0 0.0
        %7634 = vmatpush1.xpose.msra.mxu0 0.0
        %7635 = vmatprep.subr.mxu0 0.0
        %7636 = vmatpush1.xpose.msra.mxu0 0.0
        %7637 = vmatprep.subr.mxu0 0.0
        %7638 = vmatpush1.xpose.msra.mxu0 0.0
        %7639 = vmatprep.subr.mxu0 0.0
        %7640 = vmatpush1.xpose.msra.mxu0 0.0
        %7641 = vmatprep.subr.mxu0 0.0
        %7642 = vmatpush1.xpose.msra.mxu0 0.0
        %7643 = vmatprep.subr.mxu0 0.0
        %7644 = vmatpush1.xpose.msra.mxu0 0.0
        %7645 = vmatprep.subr.mxu0 0.0
        %7646 = vmatpush1.xpose.msra.mxu0 0.0
        %7647 = vmatprep.subr.mxu0 0.0
        %7648 = vmatpush1.xpose.msra.mxu0 0.0
        %7649 = vmatprep.subr.mxu0 0.0
        %7650 = vmatpush1.xpose.msra.mxu0 0.0
        %7651 = vmatprep.subr.mxu0 0.0
        %7652 = vmatpush1.xpose.msra.mxu0 0.0
        %7653 = vmatprep.subr.mxu0 0.0
        %7654 = vmatpush1.xpose.msra.mxu0 0.0
        %7655 = vmatprep.subr.mxu0 0.0
        %7656 = vmatpush1.xpose.msra.mxu0 0.0
        %7657 = vmatprep.subr.mxu0 0.0
        %7658 = vmatpush1.xpose.msra.mxu0 0.0
        %7659 = vmatprep.subr.mxu0 0.0
        %7660 = vmatpush1.xpose.msra.mxu0 0.0
        %7661 = vmatprep.subr.mxu0 0.0
        %7662 = vmatpush1.xpose.msra.mxu0 0.0
        %7663 = vmatprep.subr.mxu0 0.0
        %7664 = vmatpush1.xpose.msra.mxu0 0.0
        %7665 = vmatprep.subr.mxu0 0.0
        %7666 = vmatpush1.xpose.msra.mxu0 0.0
        %7667 = vmatprep.subr.mxu0 0.0
        %7668 = vmatpush1.xpose.msra.mxu0 0.0
        %7669 = vmatprep.mubr.f32.mxu0 %v1446
        %7670 = vmatmul.mubr.f32.gmra.mrb[0].mxu0 %v1438
        %v7671 = vpop.f32.mrb[0].mxu0
        %v7672 = vadd.f32 %v7602, %v7671
        %v7673 = vpop.f32.mrb[0].mxu0
        %7674 = vdwg.mxu0
        %7675 = vmatprep.subr.mxu0 %v456
        %7676 = vmatpush1.xpose.msra.mxu0 %v455
        %7677 = vmatprep.subr.mxu0 %v648
        %7678 = vmatpush1.xpose.msra.mxu0 %v647
        %7679 = vmatprep.subr.mxu0 0.0
        %7680 = vmatpush1.xpose.msra.mxu0 0.0
        %7681 = vmatprep.subr.mxu0 0.0
        %7682 = vmatpush1.xpose.msra.mxu0 0.0
        %7683 = vmatprep.subr.mxu0 0.0
        %7684 = vmatpush1.xpose.msra.mxu0 0.0
        %7685 = vmatprep.subr.mxu0 0.0
        %7686 = vmatpush1.xpose.msra.mxu0 0.0
        %7687 = vmatprep.subr.mxu0 0.0
        %7688 = vmatpush1.xpose.msra.mxu0 0.0
        %7689 = vmatprep.subr.mxu0 0.0
        %7690 = vmatpush1.xpose.msra.mxu0 0.0
        %7691 = vmatprep.subr.mxu0 0.0
        %7692 = vmatpush1.xpose.msra.mxu0 0.0
        %7693 = vmatprep.subr.mxu0 0.0
        %7694 = vmatpush1.xpose.msra.mxu0 0.0
        %7695 = vmatprep.subr.mxu0 0.0
        %7696 = vmatpush1.xpose.msra.mxu0 0.0
        %7697 = vmatprep.subr.mxu0 0.0
        %7698 = vmatpush1.xpose.msra.mxu0 0.0
        %7699 = vmatprep.subr.mxu0 0.0
        %7700 = vmatpush1.xpose.msra.mxu0 0.0
        %7701 = vmatprep.subr.mxu0 0.0
        %7702 = vmatpush1.xpose.msra.mxu0 0.0
        %7703 = vmatprep.subr.mxu0 0.0
        %7704 = vmatpush1.xpose.msra.mxu0 0.0
        %7705 = vmatprep.subr.mxu0 0.0
        %7706 = vmatpush1.xpose.msra.mxu0 0.0
        %7707 = vmatprep.subr.mxu0 0.0
        %7708 = vmatpush1.xpose.msra.mxu0 0.0
        %7709 = vmatprep.subr.mxu0 0.0
        %7710 = vmatpush1.xpose.msra.mxu0 0.0
        %7711 = vmatprep.subr.mxu0 0.0
        %7712 = vmatpush1.xpose.msra.mxu0 0.0
        %7713 = vmatprep.subr.mxu0 0.0
        %7714 = vmatpush1.xpose.msra.mxu0 0.0
        %7715 = vmatprep.subr.mxu0 0.0
        %7716 = vmatpush1.xpose.msra.mxu0 0.0
        %7717 = vmatprep.subr.mxu0 0.0
        %7718 = vmatpush1.xpose.msra.mxu0 0.0
        %7719 = vmatprep.subr.mxu0 0.0
        %7720 = vmatpush1.xpose.msra.mxu0 0.0
        %7721 = vmatprep.subr.mxu0 0.0
        %7722 = vmatpush1.xpose.msra.mxu0 0.0
        %7723 = vmatprep.subr.mxu0 0.0
        %7724 = vmatpush1.xpose.msra.mxu0 0.0
        %7725 = vmatprep.subr.mxu0 0.0
        %7726 = vmatpush1.xpose.msra.mxu0 0.0
        %7727 = vmatprep.subr.mxu0 0.0
        %7728 = vmatpush1.xpose.msra.mxu0 0.0
        %7729 = vmatprep.subr.mxu0 0.0
        %7730 = vmatpush1.xpose.msra.mxu0 0.0
        %7731 = vmatprep.subr.mxu0 0.0
        %7732 = vmatpush1.xpose.msra.mxu0 0.0
        %7733 = vmatprep.subr.mxu0 0.0
        %7734 = vmatpush1.xpose.msra.mxu0 0.0
        %7735 = vmatprep.subr.mxu0 0.0
        %7736 = vmatpush1.xpose.msra.mxu0 0.0
        %7737 = vmatprep.subr.mxu0 0.0
        %7738 = vmatpush1.xpose.msra.mxu0 0.0
        %7739 = vmatprep.mubr.f32.mxu0 %v1447
        %7740 = vmatmul.mubr.f32.gmra.mrb[0].mxu0 %v1445
        %v7741 = vpop.f32.mrb[0].mxu0
        %v7742 = vadd.f32 %v7672, %v7741
        %v7743 = vpop.f32.mrb[0].mxu0
        %7744 = vdwg.mxu0
        %7745 = vmatprep.subr.mxu0 %v458
        %7746 = vmatpush1.xpose.msra.mxu0 %v457
        %7747 = vmatprep.subr.mxu0 %v650
        %7748 = vmatpush1.xpose.msra.mxu0 %v649
        %7749 = vmatprep.subr.mxu0 0.0
        %7750 = vmatpush1.xpose.msra.mxu0 0.0
        %7751 = vmatprep.subr.mxu0 0.0
        %7752 = vmatpush1.xpose.msra.mxu0 0.0
        %7753 = vmatprep.subr.mxu0 0.0
        %7754 = vmatpush1.xpose.msra.mxu0 0.0
        %7755 = vmatprep.subr.mxu0 0.0
        %7756 = vmatpush1.xpose.msra.mxu0 0.0
        %7757 = vmatprep.subr.mxu0 0.0
        %7758 = vmatpush1.xpose.msra.mxu0 0.0
        %7759 = vmatprep.subr.mxu0 0.0
        %7760 = vmatpush1.xpose.msra.mxu0 0.0
        %7761 = vmatprep.subr.mxu0 0.0
        %7762 = vmatpush1.xpose.msra.mxu0 0.0
        %7763 = vmatprep.subr.mxu0 0.0
        %7764 = vmatpush1.xpose.msra.mxu0 0.0
        %7765 = vmatprep.subr.mxu0 0.0
        %7766 = vmatpush1.xpose.msra.mxu0 0.0
        %7767 = vmatprep.subr.mxu0 0.0
        %7768 = vmatpush1.xpose.msra.mxu0 0.0
        %7769 = vmatprep.subr.mxu0 0.0
        %7770 = vmatpush1.xpose.msra.mxu0 0.0
        %7771 = vmatprep.subr.mxu0 0.0
        %7772 = vmatpush1.xpose.msra.mxu0 0.0
        %7773 = vmatprep.subr.mxu0 0.0
        %7774 = vmatpush1.xpose.msra.mxu0 0.0
        %7775 = vmatprep.subr.mxu0 0.0
        %7776 = vmatpush1.xpose.msra.mxu0 0.0
        %7777 = vmatprep.subr.mxu0 0.0
        %7778 = vmatpush1.xpose.msra.mxu0 0.0
        %7779 = vmatprep.subr.mxu0 0.0
        %7780 = vmatpush1.xpose.msra.mxu0 0.0
        %7781 = vmatprep.subr.mxu0 0.0
        %7782 = vmatpush1.xpose.msra.mxu0 0.0
        %7783 = vmatprep.subr.mxu0 0.0
        %7784 = vmatpush1.xpose.msra.mxu0 0.0
        %7785 = vmatprep.subr.mxu0 0.0
        %7786 = vmatpush1.xpose.msra.mxu0 0.0
        %7787 = vmatprep.subr.mxu0 0.0
        %7788 = vmatpush1.xpose.msra.mxu0 0.0
        %7789 = vmatprep.subr.mxu0 0.0
        %7790 = vmatpush1.xpose.msra.mxu0 0.0
        %7791 = vmatprep.subr.mxu0 0.0
        %7792 = vmatpush1.xpose.msra.mxu0 0.0
        %7793 = vmatprep.subr.mxu0 0.0
        %7794 = vmatpush1.xpose.msra.mxu0 0.0
        %7795 = vmatprep.subr.mxu0 0.0
        %7796 = vmatpush1.xpose.msra.mxu0 0.0
        %7797 = vmatprep.subr.mxu0 0.0
        %7798 = vmatpush1.xpose.msra.mxu0 0.0
        %7799 = vmatprep.subr.mxu0 0.0
        %7800 = vmatpush1.xpose.msra.mxu0 0.0
        %7801 = vmatprep.subr.mxu0 0.0
        %7802 = vmatpush1.xpose.msra.mxu0 0.0
        %7803 = vmatprep.subr.mxu0 0.0
        %7804 = vmatpush1.xpose.msra.mxu0 0.0
        %7805 = vmatprep.subr.mxu0 0.0
        %7806 = vmatpush1.xpose.msra.mxu0 0.0
        %7807 = vmatprep.subr.mxu0 0.0
        %7808 = vmatpush1.xpose.msra.mxu0 0.0
        %7809 = vmatprep.mubr.f32.mxu0 %v1463
        %7810 = vmatmul.mubr.f32.gmra.mrb[0].mxu0 %v1455
        %v7811 = vpop.f32.mrb[0].mxu0
        %v7812 = vadd.f32 %v7742, %v7811
        %v7813 = vpop.f32.mrb[0].mxu0
        %7814 = vdwg.mxu0
        %7815 = vmatprep.subr.mxu0 %v460
        %7816 = vmatpush1.xpose.msra.mxu0 %v459
        %7817 = vmatprep.subr.mxu0 %v652
        %7818 = vmatpush1.xpose.msra.mxu0 %v651
        %7819 = vmatprep.subr.mxu0 0.0
        %7820 = vmatpush1.xpose.msra.mxu0 0.0
        %7821 = vmatprep.subr.mxu0 0.0
        %7822 = vmatpush1.xpose.msra.mxu0 0.0
        %7823 = vmatprep.subr.mxu0 0.0
        %7824 = vmatpush1.xpose.msra.mxu0 0.0
        %7825 = vmatprep.subr.mxu0 0.0
        %7826 = vmatpush1.xpose.msra.mxu0 0.0
        %7827 = vmatprep.subr.mxu0 0.0
        %7828 = vmatpush1.xpose.msra.mxu0 0.0
        %7829 = vmatprep.subr.mxu0 0.0
        %7830 = vmatpush1.xpose.msra.mxu0 0.0
        %7831 = vmatprep.subr.mxu0 0.0
        %7832 = vmatpush1.xpose.msra.mxu0 0.0
        %7833 = vmatprep.subr.mxu0 0.0
        %7834 = vmatpush1.xpose.msra.mxu0 0.0
        %7835 = vmatprep.subr.mxu0 0.0
        %7836 = vmatpush1.xpose.msra.mxu0 0.0
        %7837 = vmatprep.subr.mxu0 0.0
        %7838 = vmatpush1.xpose.msra.mxu0 0.0
        %7839 = vmatprep.subr.mxu0 0.0
        %7840 = vmatpush1.xpose.msra.mxu0 0.0
        %7841 = vmatprep.subr.mxu0 0.0
        %7842 = vmatpush1.xpose.msra.mxu0 0.0
        %7843 = vmatprep.subr.mxu0 0.0
        %7844 = vmatpush1.xpose.msra.mxu0 0.0
        %7845 = vmatprep.subr.mxu0 0.0
        %7846 = vmatpush1.xpose.msra.mxu0 0.0
        %7847 = vmatprep.subr.mxu0 0.0
        %7848 = vmatpush1.xpose.msra.mxu0 0.0
        %7849 = vmatprep.subr.mxu0 0.0
        %7850 = vmatpush1.xpose.msra.mxu0 0.0
        %7851 = vmatprep.subr.mxu0 0.0
        %7852 = vmatpush1.xpose.msra.mxu0 0.0
        %7853 = vmatprep.subr.mxu0 0.0
        %7854 = vmatpush1.xpose.msra.mxu0 0.0
        %7855 = vmatprep.subr.mxu0 0.0
        %7856 = vmatpush1.xpose.msra.mxu0 0.0
        %7857 = vmatprep.subr.mxu0 0.0
        %7858 = vmatpush1.xpose.msra.mxu0 0.0
        %7859 = vmatprep.subr.mxu0 0.0
        %7860 = vmatpush1.xpose.msra.mxu0 0.0
        %7861 = vmatprep.subr.mxu0 0.0
        %7862 = vmatpush1.xpose.msra.mxu0 0.0
        %7863 = vmatprep.subr.mxu0 0.0
        %7864 = vmatpush1.xpose.msra.mxu0 0.0
        %7865 = vmatprep.subr.mxu0 0.0
        %7866 = vmatpush1.xpose.msra.mxu0 0.0
        %7867 = vmatprep.subr.mxu0 0.0
        %7868 = vmatpush1.xpose.msra.mxu0 0.0
        %7869 = vmatprep.subr.mxu0 0.0
        %7870 = vmatpush1.xpose.msra.mxu0 0.0
        %7871 = vmatprep.subr.mxu0 0.0
        %7872 = vmatpush1.xpose.msra.mxu0 0.0
        %7873 = vmatprep.subr.mxu0 0.0
        %7874 = vmatpush1.xpose.msra.mxu0 0.0
        %7875 = vmatprep.subr.mxu0 0.0
        %7876 = vmatpush1.xpose.msra.mxu0 0.0
        %7877 = vmatprep.subr.mxu0 0.0
        %7878 = vmatpush1.xpose.msra.mxu0 0.0
        %7879 = vmatprep.mubr.f32.mxu0 %v1464
        %7880 = vmatmul.mubr.f32.gmra.mrb[0].mxu0 %v1462
        %v7881 = vpop.f32.mrb[0].mxu0
        %v7882 = vadd.f32 %v7812, %v7881
        %v7883 = vpop.f32.mrb[0].mxu0
        %7884 = vdwg.mxu0
        %7885 = vmatprep.subr.mxu0 %v462
        %7886 = vmatpush1.xpose.msra.mxu0 %v461
        %7887 = vmatprep.subr.mxu0 %v654
        %7888 = vmatpush1.xpose.msra.mxu0 %v653
        %7889 = vmatprep.subr.mxu0 0.0
        %7890 = vmatpush1.xpose.msra.mxu0 0.0
        %7891 = vmatprep.subr.mxu0 0.0
        %7892 = vmatpush1.xpose.msra.mxu0 0.0
        %7893 = vmatprep.subr.mxu0 0.0
        %7894 = vmatpush1.xpose.msra.mxu0 0.0
        %7895 = vmatprep.subr.mxu0 0.0
        %7896 = vmatpush1.xpose.msra.mxu0 0.0
        %7897 = vmatprep.subr.mxu0 0.0
        %7898 = vmatpush1.xpose.msra.mxu0 0.0
        %7899 = vmatprep.subr.mxu0 0.0
        %7900 = vmatpush1.xpose.msra.mxu0 0.0
        %7901 = vmatprep.subr.mxu0 0.0
        %7902 = vmatpush1.xpose.msra.mxu0 0.0
        %7903 = vmatprep.subr.mxu0 0.0
        %7904 = vmatpush1.xpose.msra.mxu0 0.0
        %7905 = vmatprep.subr.mxu0 0.0
        %7906 = vmatpush1.xpose.msra.mxu0 0.0
        %7907 = vmatprep.subr.mxu0 0.0
        %7908 = vmatpush1.xpose.msra.mxu0 0.0
        %7909 = vmatprep.subr.mxu0 0.0
        %7910 = vmatpush1.xpose.msra.mxu0 0.0
        %7911 = vmatprep.subr.mxu0 0.0
        %7912 = vmatpush1.xpose.msra.mxu0 0.0
        %7913 = vmatprep.subr.mxu0 0.0
        %7914 = vmatpush1.xpose.msra.mxu0 0.0
        %7915 = vmatprep.subr.mxu0 0.0
        %7916 = vmatpush1.xpose.msra.mxu0 0.0
        %7917 = vmatprep.subr.mxu0 0.0
        %7918 = vmatpush1.xpose.msra.mxu0 0.0
        %7919 = vmatprep.subr.mxu0 0.0
        %7920 = vmatpush1.xpose.msra.mxu0 0.0
        %7921 = vmatprep.subr.mxu0 0.0
        %7922 = vmatpush1.xpose.msra.mxu0 0.0
        %7923 = vmatprep.subr.mxu0 0.0
        %7924 = vmatpush1.xpose.msra.mxu0 0.0
        %7925 = vmatprep.subr.mxu0 0.0
        %7926 = vmatpush1.xpose.msra.mxu0 0.0
        %7927 = vmatprep.subr.mxu0 0.0
        %7928 = vmatpush1.xpose.msra.mxu0 0.0
        %7929 = vmatprep.subr.mxu0 0.0
        %7930 = vmatpush1.xpose.msra.mxu0 0.0
        %7931 = vmatprep.subr.mxu0 0.0
        %7932 = vmatpush1.xpose.msra.mxu0 0.0
        %7933 = vmatprep.subr.mxu0 0.0
        %7934 = vmatpush1.xpose.msra.mxu0 0.0
        %7935 = vmatprep.subr.mxu0 0.0
        %7936 = vmatpush1.xpose.msra.mxu0 0.0
        %7937 = vmatprep.subr.mxu0 0.0
        %7938 = vmatpush1.xpose.msra.mxu0 0.0
        %7939 = vmatprep.subr.mxu0 0.0
        %7940 = vmatpush1.xpose.msra.mxu0 0.0
        %7941 = vmatprep.subr.mxu0 0.0
        %7942 = vmatpush1.xpose.msra.mxu0 0.0
        %7943 = vmatprep.subr.mxu0 0.0
        %7944 = vmatpush1.xpose.msra.mxu0 0.0
        %7945 = vmatprep.subr.mxu0 0.0
        %7946 = vmatpush1.xpose.msra.mxu0 0.0
        %7947 = vmatprep.subr.mxu0 0.0
        %7948 = vmatpush1.xpose.msra.mxu0 0.0
        %7949 = vmatprep.mubr.f32.mxu0 %v1480
        %7950 = vmatmul.mubr.f32.gmra.mrb[0].mxu0 %v1472
        %v7951 = vpop.f32.mrb[0].mxu0
        %v7952 = vadd.f32 %v7882, %v7951
        %v7953 = vpop.f32.mrb[0].mxu0
        %7954 = vdwg.mxu0
        %7955 = vmatprep.subr.mxu0 %v464
        %7956 = vmatpush1.xpose.msra.mxu0 %v463
        %7957 = vmatprep.subr.mxu0 %v656
        %7958 = vmatpush1.xpose.msra.mxu0 %v655
        %7959 = vmatprep.subr.mxu0 0.0
        %7960 = vmatpush1.xpose.msra.mxu0 0.0
        %7961 = vmatprep.subr.mxu0 0.0
        %7962 = vmatpush1.xpose.msra.mxu0 0.0
        %7963 = vmatprep.subr.mxu0 0.0
        %7964 = vmatpush1.xpose.msra.mxu0 0.0
        %7965 = vmatprep.subr.mxu0 0.0
        %7966 = vmatpush1.xpose.msra.mxu0 0.0
        %7967 = vmatprep.subr.mxu0 0.0
        %7968 = vmatpush1.xpose.msra.mxu0 0.0
        %7969 = vmatprep.subr.mxu0 0.0
        %7970 = vmatpush1.xpose.msra.mxu0 0.0
        %7971 = vmatprep.subr.mxu0 0.0
        %7972 = vmatpush1.xpose.msra.mxu0 0.0
        %7973 = vmatprep.subr.mxu0 0.0
        %7974 = vmatpush1.xpose.msra.mxu0 0.0
        %7975 = vmatprep.subr.mxu0 0.0
        %7976 = vmatpush1.xpose.msra.mxu0 0.0
        %7977 = vmatprep.subr.mxu0 0.0
        %7978 = vmatpush1.xpose.msra.mxu0 0.0
        %7979 = vmatprep.subr.mxu0 0.0
        %7980 = vmatpush1.xpose.msra.mxu0 0.0
        %7981 = vmatprep.subr.mxu0 0.0
        %7982 = vmatpush1.xpose.msra.mxu0 0.0
        %7983 = vmatprep.subr.mxu0 0.0
        %7984 = vmatpush1.xpose.msra.mxu0 0.0
        %7985 = vmatprep.subr.mxu0 0.0
        %7986 = vmatpush1.xpose.msra.mxu0 0.0
        %7987 = vmatprep.subr.mxu0 0.0
        %7988 = vmatpush1.xpose.msra.mxu0 0.0
        %7989 = vmatprep.subr.mxu0 0.0
        %7990 = vmatpush1.xpose.msra.mxu0 0.0
        %7991 = vmatprep.subr.mxu0 0.0
        %7992 = vmatpush1.xpose.msra.mxu0 0.0
        %7993 = vmatprep.subr.mxu0 0.0
        %7994 = vmatpush1.xpose.msra.mxu0 0.0
        %7995 = vmatprep.subr.mxu0 0.0
        %7996 = vmatpush1.xpose.msra.mxu0 0.0
        %7997 = vmatprep.subr.mxu0 0.0
        %7998 = vmatpush1.xpose.msra.mxu0 0.0
        %7999 = vmatprep.subr.mxu0 0.0
        %8000 = vmatpush1.xpose.msra.mxu0 0.0
        %8001 = vmatprep.subr.mxu0 0.0
        %8002 = vmatpush1.xpose.msra.mxu0 0.0
        %8003 = vmatprep.subr.mxu0 0.0
        %8004 = vmatpush1.xpose.msra.mxu0 0.0
        %8005 = vmatprep.subr.mxu0 0.0
        %8006 = vmatpush1.xpose.msra.mxu0 0.0
        %8007 = vmatprep.subr.mxu0 0.0
        %8008 = vmatpush1.xpose.msra.mxu0 0.0
        %8009 = vmatprep.subr.mxu0 0.0
        %8010 = vmatpush1.xpose.msra.mxu0 0.0
        %8011 = vmatprep.subr.mxu0 0.0
        %8012 = vmatpush1.xpose.msra.mxu0 0.0
        %8013 = vmatprep.subr.mxu0 0.0
        %8014 = vmatpush1.xpose.msra.mxu0 0.0
        %8015 = vmatprep.subr.mxu0 0.0
        %8016 = vmatpush1.xpose.msra.mxu0 0.0
        %8017 = vmatprep.subr.mxu0 0.0
        %8018 = vmatpush1.xpose.msra.mxu0 0.0
        %8019 = vmatprep.mubr.f32.mxu0 %v1481
        %8020 = vmatmul.mubr.f32.gmra.mrb[0].mxu0 %v1479
        %v8021 = vpop.f32.mrb[0].mxu0
        %v8022 = vadd.f32 %v7952, %v8021
        %v8023 = vpop.f32.mrb[0].mxu0
        %8024 = vdwg.mxu0
        %8025 = vmatprep.subr.mxu0 %v466
        %8026 = vmatpush1.xpose.msra.mxu0 %v465
        %8027 = vmatprep.subr.mxu0 %v658
        %8028 = vmatpush1.xpose.msra.mxu0 %v657
        %8029 = vmatprep.subr.mxu0 0.0
        %8030 = vmatpush1.xpose.msra.mxu0 0.0
        %8031 = vmatprep.subr.mxu0 0.0
        %8032 = vmatpush1.xpose.msra.mxu0 0.0
        %8033 = vmatprep.subr.mxu0 0.0
        %8034 = vmatpush1.xpose.msra.mxu0 0.0
        %8035 = vmatprep.subr.mxu0 0.0
        %8036 = vmatpush1.xpose.msra.mxu0 0.0
        %8037 = vmatprep.subr.mxu0 0.0
        %8038 = vmatpush1.xpose.msra.mxu0 0.0
        %8039 = vmatprep.subr.mxu0 0.0
        %8040 = vmatpush1.xpose.msra.mxu0 0.0
        %8041 = vmatprep.subr.mxu0 0.0
        %8042 = vmatpush1.xpose.msra.mxu0 0.0
        %8043 = vmatprep.subr.mxu0 0.0
        %8044 = vmatpush1.xpose.msra.mxu0 0.0
        %8045 = vmatprep.subr.mxu0 0.0
        %8046 = vmatpush1.xpose.msra.mxu0 0.0
        %8047 = vmatprep.subr.mxu0 0.0
        %8048 = vmatpush1.xpose.msra.mxu0 0.0
        %8049 = vmatprep.subr.mxu0 0.0
        %8050 = vmatpush1.xpose.msra.mxu0 0.0
        %8051 = vmatprep.subr.mxu0 0.0
        %8052 = vmatpush1.xpose.msra.mxu0 0.0
        %8053 = vmatprep.subr.mxu0 0.0
        %8054 = vmatpush1.xpose.msra.mxu0 0.0
        %8055 = vmatprep.subr.mxu0 0.0
        %8056 = vmatpush1.xpose.msra.mxu0 0.0
        %8057 = vmatprep.subr.mxu0 0.0
        %8058 = vmatpush1.xpose.msra.mxu0 0.0
        %8059 = vmatprep.subr.mxu0 0.0
        %8060 = vmatpush1.xpose.msra.mxu0 0.0
        %8061 = vmatprep.subr.mxu0 0.0
        %8062 = vmatpush1.xpose.msra.mxu0 0.0
        %8063 = vmatprep.subr.mxu0 0.0
        %8064 = vmatpush1.xpose.msra.mxu0 0.0
        %8065 = vmatprep.subr.mxu0 0.0
        %8066 = vmatpush1.xpose.msra.mxu0 0.0
        %8067 = vmatprep.subr.mxu0 0.0
        %8068 = vmatpush1.xpose.msra.mxu0 0.0
        %8069 = vmatprep.subr.mxu0 0.0
        %8070 = vmatpush1.xpose.msra.mxu0 0.0
        %8071 = vmatprep.subr.mxu0 0.0
        %8072 = vmatpush1.xpose.msra.mxu0 0.0
        %8073 = vmatprep.subr.mxu0 0.0
        %8074 = vmatpush1.xpose.msra.mxu0 0.0
        %8075 = vmatprep.subr.mxu0 0.0
        %8076 = vmatpush1.xpose.msra.mxu0 0.0
        %8077 = vmatprep.subr.mxu0 0.0
        %8078 = vmatpush1.xpose.msra.mxu0 0.0
        %8079 = vmatprep.subr.mxu0 0.0
        %8080 = vmatpush1.xpose.msra.mxu0 0.0
        %8081 = vmatprep.subr.mxu0 0.0
        %8082 = vmatpush1.xpose.msra.mxu0 0.0
        %8083 = vmatprep.subr.mxu0 0.0
        %8084 = vmatpush1.xpose.msra.mxu0 0.0
        %8085 = vmatprep.subr.mxu0 0.0
        %8086 = vmatpush1.xpose.msra.mxu0 0.0
        %8087 = vmatprep.subr.mxu0 0.0
        %8088 = vmatpush1.xpose.msra.mxu0 0.0
        %8089 = vmatprep.mubr.f32.mxu0 %v1497
        %8090 = vmatmul.mubr.f32.gmra.mrb[0].mxu0 %v1489
        %v8091 = vpop.f32.mrb[0].mxu0
        %v8092 = vadd.f32 %v8022, %v8091
        %v8093 = vpop.f32.mrb[0].mxu0
        %8094 = vdwg.mxu0
        %8095 = vmatprep.subr.mxu0 %v468
        %8096 = vmatpush1.xpose.msra.mxu0 %v467
        %8097 = vmatprep.subr.mxu0 %v660
        %8098 = vmatpush1.xpose.msra.mxu0 %v659
        %8099 = vmatprep.subr.mxu0 0.0
        %8100 = vmatpush1.xpose.msra.mxu0 0.0
        %8101 = vmatprep.subr.mxu0 0.0
        %8102 = vmatpush1.xpose.msra.mxu0 0.0
        %8103 = vmatprep.subr.mxu0 0.0
        %8104 = vmatpush1.xpose.msra.mxu0 0.0
        %8105 = vmatprep.subr.mxu0 0.0
        %8106 = vmatpush1.xpose.msra.mxu0 0.0
        %8107 = vmatprep.subr.mxu0 0.0
        %8108 = vmatpush1.xpose.msra.mxu0 0.0
        %8109 = vmatprep.subr.mxu0 0.0
        %8110 = vmatpush1.xpose.msra.mxu0 0.0
        %8111 = vmatprep.subr.mxu0 0.0
        %8112 = vmatpush1.xpose.msra.mxu0 0.0
        %8113 = vmatprep.subr.mxu0 0.0
        %8114 = vmatpush1.xpose.msra.mxu0 0.0
        %8115 = vmatprep.subr.mxu0 0.0
        %8116 = vmatpush1.xpose.msra.mxu0 0.0
        %8117 = vmatprep.subr.mxu0 0.0
        %8118 = vmatpush1.xpose.msra.mxu0 0.0
        %8119 = vmatprep.subr.mxu0 0.0
        %8120 = vmatpush1.xpose.msra.mxu0 0.0
        %8121 = vmatprep.subr.mxu0 0.0
        %8122 = vmatpush1.xpose.msra.mxu0 0.0
        %8123 = vmatprep.subr.mxu0 0.0
        %8124 = vmatpush1.xpose.msra.mxu0 0.0
        %8125 = vmatprep.subr.mxu0 0.0
        %8126 = vmatpush1.xpose.msra.mxu0 0.0
        %8127 = vmatprep.subr.mxu0 0.0
        %8128 = vmatpush1.xpose.msra.mxu0 0.0
        %8129 = vmatprep.subr.mxu0 0.0
        %8130 = vmatpush1.xpose.msra.mxu0 0.0
        %8131 = vmatprep.subr.mxu0 0.0
        %8132 = vmatpush1.xpose.msra.mxu0 0.0
        %8133 = vmatprep.subr.mxu0 0.0
        %8134 = vmatpush1.xpose.msra.mxu0 0.0
        %8135 = vmatprep.subr.mxu0 0.0
        %8136 = vmatpush1.xpose.msra.mxu0 0.0
        %8137 = vmatprep.subr.mxu0 0.0
        %8138 = vmatpush1.xpose.msra.mxu0 0.0
        %8139 = vmatprep.subr.mxu0 0.0
        %8140 = vmatpush1.xpose.msra.mxu0 0.0
        %8141 = vmatprep.subr.mxu0 0.0
        %8142 = vmatpush1.xpose.msra.mxu0 0.0
        %8143 = vmatprep.subr.mxu0 0.0
        %8144 = vmatpush1.xpose.msra.mxu0 0.0
        %8145 = vmatprep.subr.mxu0 0.0
        %8146 = vmatpush1.xpose.msra.mxu0 0.0
        %8147 = vmatprep.subr.mxu0 0.0
        %8148 = vmatpush1.xpose.msra.mxu0 0.0
        %8149 = vmatprep.subr.mxu0 0.0
        %8150 = vmatpush1.xpose.msra.mxu0 0.0
        %8151 = vmatprep.subr.mxu0 0.0
        %8152 = vmatpush1.xpose.msra.mxu0 0.0
        %8153 = vmatprep.subr.mxu0 0.0
        %8154 = vmatpush1.xpose.msra.mxu0 0.0
        %8155 = vmatprep.subr.mxu0 0.0
        %8156 = vmatpush1.xpose.msra.mxu0 0.0
        %8157 = vmatprep.subr.mxu0 0.0
        %8158 = vmatpush1.xpose.msra.mxu0 0.0
        %8159 = vmatprep.mubr.f32.mxu0 %v1498
        %8160 = vmatmul.mubr.f32.gmra.mrb[0].mxu0 %v1496
        %v8161 = vpop.f32.mrb[0].mxu0
        %v8162 = vadd.f32 %v8092, %v8161
        %v8163 = vpop.f32.mrb[0].mxu0
        %8164 = vdwg.mxu0
        %8165 = vmatprep.subr.mxu0 %v470
        %8166 = vmatpush1.xpose.msra.mxu0 %v469
        %8167 = vmatprep.subr.mxu0 %v662
        %8168 = vmatpush1.xpose.msra.mxu0 %v661
        %8169 = vmatprep.subr.mxu0 0.0
        %8170 = vmatpush1.xpose.msra.mxu0 0.0
        %8171 = vmatprep.subr.mxu0 0.0
        %8172 = vmatpush1.xpose.msra.mxu0 0.0
        %8173 = vmatprep.subr.mxu0 0.0
        %8174 = vmatpush1.xpose.msra.mxu0 0.0
        %8175 = vmatprep.subr.mxu0 0.0
        %8176 = vmatpush1.xpose.msra.mxu0 0.0
        %8177 = vmatprep.subr.mxu0 0.0
        %8178 = vmatpush1.xpose.msra.mxu0 0.0
        %8179 = vmatprep.subr.mxu0 0.0
        %8180 = vmatpush1.xpose.msra.mxu0 0.0
        %8181 = vmatprep.subr.mxu0 0.0
        %8182 = vmatpush1.xpose.msra.mxu0 0.0
        %8183 = vmatprep.subr.mxu0 0.0
        %8184 = vmatpush1.xpose.msra.mxu0 0.0
        %8185 = vmatprep.subr.mxu0 0.0
        %8186 = vmatpush1.xpose.msra.mxu0 0.0
        %8187 = vmatprep.subr.mxu0 0.0
        %8188 = vmatpush1.xpose.msra.mxu0 0.0
        %8189 = vmatprep.subr.mxu0 0.0
        %8190 = vmatpush1.xpose.msra.mxu0 0.0
        %8191 = vmatprep.subr.mxu0 0.0
        %8192 = vmatpush1.xpose.msra.mxu0 0.0
        %8193 = vmatprep.subr.mxu0 0.0
        %8194 = vmatpush1.xpose.msra.mxu0 0.0
        %8195 = vmatprep.subr.mxu0 0.0
        %8196 = vmatpush1.xpose.msra.mxu0 0.0
        %8197 = vmatprep.subr.mxu0 0.0
        %8198 = vmatpush1.xpose.msra.mxu0 0.0
        %8199 = vmatprep.subr.mxu0 0.0
        %8200 = vmatpush1.xpose.msra.mxu0 0.0
        %8201 = vmatprep.subr.mxu0 0.0
        %8202 = vmatpush1.xpose.msra.mxu0 0.0
        %8203 = vmatprep.subr.mxu0 0.0
        %8204 = vmatpush1.xpose.msra.mxu0 0.0
        %8205 = vmatprep.subr.mxu0 0.0
        %8206 = vmatpush1.xpose.msra.mxu0 0.0
        %8207 = vmatprep.subr.mxu0 0.0
        %8208 = vmatpush1.xpose.msra.mxu0 0.0
        %8209 = vmatprep.subr.mxu0 0.0
        %8210 = vmatpush1.xpose.msra.mxu0 0.0
        %8211 = vmatprep.subr.mxu0 0.0
        %8212 = vmatpush1.xpose.msra.mxu0 0.0
        %8213 = vmatprep.subr.mxu0 0.0
        %8214 = vmatpush1.xpose.msra.mxu0 0.0
        %8215 = vmatprep.subr.mxu0 0.0
        %8216 = vmatpush1.xpose.msra.mxu0 0.0
        %8217 = vmatprep.subr.mxu0 0.0
        %8218 = vmatpush1.xpose.msra.mxu0 0.0
        %8219 = vmatprep.subr.mxu0 0.0
        %8220 = vmatpush1.xpose.msra.mxu0 0.0
        %8221 = vmatprep.subr.mxu0 0.0
        %8222 = vmatpush1.xpose.msra.mxu0 0.0
        %8223 = vmatprep.subr.mxu0 0.0
        %8224 = vmatpush1.xpose.msra.mxu0 0.0
        %8225 = vmatprep.subr.mxu0 0.0
        %8226 = vmatpush1.xpose.msra.mxu0 0.0
        %8227 = vmatprep.subr.mxu0 0.0
        %8228 = vmatpush1.xpose.msra.mxu0 0.0
        %8229 = vmatprep.mubr.f32.mxu0 %v1514
        %8230 = vmatmul.mubr.f32.gmra.mrb[0].mxu0 %v1506
        %v8231 = vpop.f32.mrb[0].mxu0
        %v8232 = vadd.f32 %v8162, %v8231
        %v8233 = vpop.f32.mrb[0].mxu0
        %8234 = vdwg.mxu0
        %8235 = vmatprep.subr.mxu0 %v472
        %8236 = vmatpush1.xpose.msra.mxu0 %v471
        %8237 = vmatprep.subr.mxu0 %v664
        %8238 = vmatpush1.xpose.msra.mxu0 %v663
        %8239 = vmatprep.subr.mxu0 0.0
        %8240 = vmatpush1.xpose.msra.mxu0 0.0
        %8241 = vmatprep.subr.mxu0 0.0
        %8242 = vmatpush1.xpose.msra.mxu0 0.0
        %8243 = vmatprep.subr.mxu0 0.0
        %8244 = vmatpush1.xpose.msra.mxu0 0.0
        %8245 = vmatprep.subr.mxu0 0.0
        %8246 = vmatpush1.xpose.msra.mxu0 0.0
        %8247 = vmatprep.subr.mxu0 0.0
        %8248 = vmatpush1.xpose.msra.mxu0 0.0
        %8249 = vmatprep.subr.mxu0 0.0
        %8250 = vmatpush1.xpose.msra.mxu0 0.0
        %8251 = vmatprep.subr.mxu0 0.0
        %8252 = vmatpush1.xpose.msra.mxu0 0.0
        %8253 = vmatprep.subr.mxu0 0.0
        %8254 = vmatpush1.xpose.msra.mxu0 0.0
        %8255 = vmatprep.subr.mxu0 0.0
        %8256 = vmatpush1.xpose.msra.mxu0 0.0
        %8257 = vmatprep.subr.mxu0 0.0
        %8258 = vmatpush1.xpose.msra.mxu0 0.0
        %8259 = vmatprep.subr.mxu0 0.0
        %8260 = vmatpush1.xpose.msra.mxu0 0.0
        %8261 = vmatprep.subr.mxu0 0.0
        %8262 = vmatpush1.xpose.msra.mxu0 0.0
        %8263 = vmatprep.subr.mxu0 0.0
        %8264 = vmatpush1.xpose.msra.mxu0 0.0
        %8265 = vmatprep.subr.mxu0 0.0
        %8266 = vmatpush1.xpose.msra.mxu0 0.0
        %8267 = vmatprep.subr.mxu0 0.0
        %8268 = vmatpush1.xpose.msra.mxu0 0.0
        %8269 = vmatprep.subr.mxu0 0.0
        %8270 = vmatpush1.xpose.msra.mxu0 0.0
        %8271 = vmatprep.subr.mxu0 0.0
        %8272 = vmatpush1.xpose.msra.mxu0 0.0
        %8273 = vmatprep.subr.mxu0 0.0
        %8274 = vmatpush1.xpose.msra.mxu0 0.0
        %8275 = vmatprep.subr.mxu0 0.0
        %8276 = vmatpush1.xpose.msra.mxu0 0.0
        %8277 = vmatprep.subr.mxu0 0.0
        %8278 = vmatpush1.xpose.msra.mxu0 0.0
        %8279 = vmatprep.subr.mxu0 0.0
        %8280 = vmatpush1.xpose.msra.mxu0 0.0
        %8281 = vmatprep.subr.mxu0 0.0
        %8282 = vmatpush1.xpose.msra.mxu0 0.0
        %8283 = vmatprep.subr.mxu0 0.0
        %8284 = vmatpush1.xpose.msra.mxu0 0.0
        %8285 = vmatprep.subr.mxu0 0.0
        %8286 = vmatpush1.xpose.msra.mxu0 0.0
        %8287 = vmatprep.subr.mxu0 0.0
        %8288 = vmatpush1.xpose.msra.mxu0 0.0
        %8289 = vmatprep.subr.mxu0 0.0
        %8290 = vmatpush1.xpose.msra.mxu0 0.0
        %8291 = vmatprep.subr.mxu0 0.0
        %8292 = vmatpush1.xpose.msra.mxu0 0.0
        %8293 = vmatprep.subr.mxu0 0.0
        %8294 = vmatpush1.xpose.msra.mxu0 0.0
        %8295 = vmatprep.subr.mxu0 0.0
        %8296 = vmatpush1.xpose.msra.mxu0 0.0
        %8297 = vmatprep.subr.mxu0 0.0
        %8298 = vmatpush1.xpose.msra.mxu0 0.0
        %8299 = vmatprep.mubr.f32.mxu0 %v1515
        %8300 = vmatmul.mubr.f32.gmra.mrb[0].mxu0 %v1513
        %v8301 = vpop.f32.mrb[0].mxu0
        %v8302 = vadd.f32 %v8232, %v8301
        %v8303 = vpop.f32.mrb[0].mxu0
        %8304 = vdwg.mxu0
        %8305 = vmatprep.subr.mxu0 %v474
        %8306 = vmatpush1.xpose.msra.mxu0 %v473
        %8307 = vmatprep.subr.mxu0 %v666
        %8308 = vmatpush1.xpose.msra.mxu0 %v665
        %8309 = vmatprep.subr.mxu0 0.0
        %8310 = vmatpush1.xpose.msra.mxu0 0.0
        %8311 = vmatprep.subr.mxu0 0.0
        %8312 = vmatpush1.xpose.msra.mxu0 0.0
        %8313 = vmatprep.subr.mxu0 0.0
        %8314 = vmatpush1.xpose.msra.mxu0 0.0
        %8315 = vmatprep.subr.mxu0 0.0
        %8316 = vmatpush1.xpose.msra.mxu0 0.0
        %8317 = vmatprep.subr.mxu0 0.0
        %8318 = vmatpush1.xpose.msra.mxu0 0.0
        %8319 = vmatprep.subr.mxu0 0.0
        %8320 = vmatpush1.xpose.msra.mxu0 0.0
        %8321 = vmatprep.subr.mxu0 0.0
        %8322 = vmatpush1.xpose.msra.mxu0 0.0
        %8323 = vmatprep.subr.mxu0 0.0
        %8324 = vmatpush1.xpose.msra.mxu0 0.0
        %8325 = vmatprep.subr.mxu0 0.0
        %8326 = vmatpush1.xpose.msra.mxu0 0.0
        %8327 = vmatprep.subr.mxu0 0.0
        %8328 = vmatpush1.xpose.msra.mxu0 0.0
        %8329 = vmatprep.subr.mxu0 0.0
        %8330 = vmatpush1.xpose.msra.mxu0 0.0
        %8331 = vmatprep.subr.mxu0 0.0
        %8332 = vmatpush1.xpose.msra.mxu0 0.0
        %8333 = vmatprep.subr.mxu0 0.0
        %8334 = vmatpush1.xpose.msra.mxu0 0.0
        %8335 = vmatprep.subr.mxu0 0.0
        %8336 = vmatpush1.xpose.msra.mxu0 0.0
        %8337 = vmatprep.subr.mxu0 0.0
        %8338 = vmatpush1.xpose.msra.mxu0 0.0
        %8339 = vmatprep.subr.mxu0 0.0
        %8340 = vmatpush1.xpose.msra.mxu0 0.0
        %8341 = vmatprep.subr.mxu0 0.0
        %8342 = vmatpush1.xpose.msra.mxu0 0.0
        %8343 = vmatprep.subr.mxu0 0.0
        %8344 = vmatpush1.xpose.msra.mxu0 0.0
        %8345 = vmatprep.subr.mxu0 0.0
        %8346 = vmatpush1.xpose.msra.mxu0 0.0
        %8347 = vmatprep.subr.mxu0 0.0
        %8348 = vmatpush1.xpose.msra.mxu0 0.0
        %8349 = vmatprep.subr.mxu0 0.0
        %8350 = vmatpush1.xpose.msra.mxu0 0.0
        %8351 = vmatprep.subr.mxu0 0.0
        %8352 = vmatpush1.xpose.msra.mxu0 0.0
        %8353 = vmatprep.subr.mxu0 0.0
        %8354 = vmatpush1.xpose.msra.mxu0 0.0
        %8355 = vmatprep.subr.mxu0 0.0
        %8356 = vmatpush1.xpose.msra.mxu0 0.0
        %8357 = vmatprep.subr.mxu0 0.0
        %8358 = vmatpush1.xpose.msra.mxu0 0.0
        %8359 = vmatprep.subr.mxu0 0.0
        %8360 = vmatpush1.xpose.msra.mxu0 0.0
        %8361 = vmatprep.subr.mxu0 0.0
        %8362 = vmatpush1.xpose.msra.mxu0 0.0
        %8363 = vmatprep.subr.mxu0 0.0
        %8364 = vmatpush1.xpose.msra.mxu0 0.0
        %8365 = vmatprep.subr.mxu0 0.0
        %8366 = vmatpush1.xpose.msra.mxu0 0.0
        %8367 = vmatprep.subr.mxu0 0.0
        %8368 = vmatpush1.xpose.msra.mxu0 0.0
        %8369 = vmatprep.mubr.f32.mxu0 %v1531
        %8370 = vmatmul.mubr.f32.gmra.mrb[0].mxu0 %v1523
        %v8371 = vpop.f32.mrb[0].mxu0
        %v8372 = vadd.f32 %v8302, %v8371
        %v8373 = vpop.f32.mrb[0].mxu0
        %8374 = vdwg.mxu0
        %8375 = vmatprep.subr.mxu0 %v476
        %8376 = vmatpush1.xpose.msra.mxu0 %v475
        %8377 = vmatprep.subr.mxu0 %v668
        %8378 = vmatpush1.xpose.msra.mxu0 %v667
        %8379 = vmatprep.subr.mxu0 0.0
        %8380 = vmatpush1.xpose.msra.mxu0 0.0
        %8381 = vmatprep.subr.mxu0 0.0
        %8382 = vmatpush1.xpose.msra.mxu0 0.0
        %8383 = vmatprep.subr.mxu0 0.0
        %8384 = vmatpush1.xpose.msra.mxu0 0.0
        %8385 = vmatprep.subr.mxu0 0.0
        %8386 = vmatpush1.xpose.msra.mxu0 0.0
        %8387 = vmatprep.subr.mxu0 0.0
        %8388 = vmatpush1.xpose.msra.mxu0 0.0
        %8389 = vmatprep.subr.mxu0 0.0
        %8390 = vmatpush1.xpose.msra.mxu0 0.0
        %8391 = vmatprep.subr.mxu0 0.0
        %8392 = vmatpush1.xpose.msra.mxu0 0.0
        %8393 = vmatprep.subr.mxu0 0.0
        %8394 = vmatpush1.xpose.msra.mxu0 0.0
        %8395 = vmatprep.subr.mxu0 0.0
        %8396 = vmatpush1.xpose.msra.mxu0 0.0
        %8397 = vmatprep.subr.mxu0 0.0
        %8398 = vmatpush1.xpose.msra.mxu0 0.0
        %8399 = vmatprep.subr.mxu0 0.0
        %8400 = vmatpush1.xpose.msra.mxu0 0.0
        %8401 = vmatprep.subr.mxu0 0.0
        %8402 = vmatpush1.xpose.msra.mxu0 0.0
        %8403 = vmatprep.subr.mxu0 0.0
        %8404 = vmatpush1.xpose.msra.mxu0 0.0
        %8405 = vmatprep.subr.mxu0 0.0
        %8406 = vmatpush1.xpose.msra.mxu0 0.0
        %8407 = vmatprep.subr.mxu0 0.0
        %8408 = vmatpush1.xpose.msra.mxu0 0.0
        %8409 = vmatprep.subr.mxu0 0.0
        %8410 = vmatpush1.xpose.msra.mxu0 0.0
        %8411 = vmatprep.subr.mxu0 0.0
        %8412 = vmatpush1.xpose.msra.mxu0 0.0
        %8413 = vmatprep.subr.mxu0 0.0
        %8414 = vmatpush1.xpose.msra.mxu0 0.0
        %8415 = vmatprep.subr.mxu0 0.0
        %8416 = vmatpush1.xpose.msra.mxu0 0.0
        %8417 = vmatprep.subr.mxu0 0.0
        %8418 = vmatpush1.xpose.msra.mxu0 0.0
        %8419 = vmatprep.subr.mxu0 0.0
        %8420 = vmatpush1.xpose.msra.mxu0 0.0
        %8421 = vmatprep.subr.mxu0 0.0
        %8422 = vmatpush1.xpose.msra.mxu0 0.0
        %8423 = vmatprep.subr.mxu0 0.0
        %8424 = vmatpush1.xpose.msra.mxu0 0.0
        %8425 = vmatprep.subr.mxu0 0.0
        %8426 = vmatpush1.xpose.msra.mxu0 0.0
        %8427 = vmatprep.subr.mxu0 0.0
        %8428 = vmatpush1.xpose.msra.mxu0 0.0
        %8429 = vmatprep.subr.mxu0 0.0
        %8430 = vmatpush1.xpose.msra.mxu0 0.0
        %8431 = vmatprep.subr.mxu0 0.0
        %8432 = vmatpush1.xpose.msra.mxu0 0.0
        %8433 = vmatprep.subr.mxu0 0.0
        %8434 = vmatpush1.xpose.msra.mxu0 0.0
        %8435 = vmatprep.subr.mxu0 0.0
        %8436 = vmatpush1.xpose.msra.mxu0 0.0
        %8437 = vmatprep.subr.mxu0 0.0
        %8438 = vmatpush1.xpose.msra.mxu0 0.0
        %8439 = vmatprep.mubr.f32.mxu0 %v1532
        %8440 = vmatmul.mubr.f32.gmra.mrb[0].mxu0 %v1530
        %v8441 = vpop.f32.mrb[0].mxu0
        %v8442 = vadd.f32 %v8372, %v8441
        %v8443 = vpop.f32.mrb[0].mxu0
        %8444 = vdwg.mxu0
        %v8445 = vadd.f32 %v236, %v8442
        %vm8446 = vcmask 74752
        %8447 = vst.msk [vmem:[%s223] sm:$0x3] %vm8446, %v8445
        %s8448 = sand.u32 %s102, 1
        %s8449 = scalar_lea.sflag [#allocation4], %s8448
        %s8450 = sand.u32 %s102, 1
        %s8451 = smul.addr %s8450, 2
        %s8452 = scalar_lea.vmem [#allocation7], %s8451
        // Predicated region
        $region41: #{tpu_custom_call.1} parent=27 // pred_check
          %p8453 = pneg %p112
        $region42: #{tpu_custom_call.1} parent=27 // pred_check_branch
          %8455 = sbr.rel (%p8453) target = $region44
        $region43: #{tpu_custom_call.1} parent=27 // pred_region
          %s8457 = ssub.s32 32, 32
          %8458 = vsyncadd %s8449, %s8457
          %s8459 = smul.addr %s26, 32
          %s8460 = scalar_lea.hbm %s2, %s8459
          %s8462 = sshll.u32 %s8452, 4
          %s8463 = int_to_ptr.vmem [resolvable:$true] %s8462
          %8465 = dma.vmem_to_hbm [thread:$0]  %s8463, 32, %s8460, %s8449
        $region44: #{tpu_custom_call.1} parent=27 // pred_fallthru
          _
      $region28: #{tpu_custom_call.1} parent=5 // pred_fallthru
        _
      %p8466 = scmp.le.s32.totalorder 2, %s17
      // Predicated region
      $region45: #{tpu_custom_call.1} parent=5 // pred_check
        %p8467 = pneg %p8466
      $region46: #{tpu_custom_call.1} parent=5 // pred_check_branch
        %8469 = sbr.rel (%p8467) target = $region48
      $region47: #{tpu_custom_call.1} parent=5 // pred_region
        %s8470 = ssub.s32 %s17, 2
        // Predicated region
        $region49: #{tpu_custom_call.1} parent=47 // pred_check
          %p8471 = pneg %p118
        $region50: #{tpu_custom_call.1} parent=47 // pred_check_branch
          %8473 = sbr.rel (%p8471) target = $region52
        $region51: #{tpu_custom_call.1} parent=47 // pred_region
          %s8474 = sand.u32 %s103, 1
          %s8475 = scalar_lea.sflag [#allocation4], %s8474
          %s8476 = sand.u32 %s103, 1
          %s8477 = smul.addr %s8476, 2
          %s8478 = scalar_lea.vmem [#allocation7], %s8477
          %8479 = dma.done %s8475, 32
        $region52: #{tpu_custom_call.1} parent=47 // pred_fallthru
          _
      $region48: #{tpu_custom_call.1} parent=5 // pred_fallthru
        _
    $region6: #{tpu_custom_call.1} parent=1 // loop_footer
      %s21 = sadd.s32 1, %s17
    $region7: #{tpu_custom_call.1} parent=1 // loop_footer_branch
      %16 = sbr.rel target = $region3
    $region8: #{tpu_custom_call.1} parent=1 // loop_exit
      _
    %8480 = vsyncpa [#allocation3], 1
    %s8481 = scalar_lea.sflag [#allocation3], 1
    %8482 = vsyncpa %s8481, 1
    %8483 = vsyncpa [#allocation6], 1
    %s8484 = scalar_lea.sflag [#allocation6], 1
    %8485 = vsyncpa %s8484, 1
    %8486 = vsyncpa [#allocation4], 1
    %s8487 = scalar_lea.sflag [#allocation4], 1
    %8488 = vsyncpa %s8487, 1

</llo_original>
